<compile_context>
chip_gen: v7x
topology: tpu7x:2x2x1
jax: 0.10.0
libtpu: 0.0.40
codegen_flags: <defaults>
</compile_context>

<pallas_src>
import math

import jax
import jax.numpy as jnp
from jax import lax
from jax.experimental import pallas as pl
from jax.experimental.pallas import tpu as pltpu

# model hyper-parameters (defaults of the PyTorch module)
D_MODEL = 64
N_HEADS = 8
D_FF = 256
N_LAYERS = 4
HEAD_DIM = D_MODEL // N_HEADS
MORPH_DIM = 30
SE_HIDDEN = D_MODEL // 4
LN_EPS = 1e-5
NEG_INF = -1e9


# ----------------------------- fused Pallas kernel -------------------------

def _layernorm(x, g, b):
    mu = jnp.mean(x, axis=-1, keepdims=True)
    var = jnp.mean((x - mu) ** 2, axis=-1, keepdims=True)
    return (x - mu) * lax.rsqrt(var + LN_EPS) * g + b


def _bf(x):
    return x.astype(jnp.bfloat16)


def teacher_fused_kernel(
        # data
        ppg_ref, morph_ref, pe_ref, mask_ref,
        # informer value embedding
        we_ref, be_ref,
        # informer encoder layers (stacked over the layer axis, QKV fused, scale folded)
        wqkv_ref, bqkv_ref, wo_ref, bo_ref,
        g1_ref, be1_ref, w1_ref, b1_ref, w2_ref, b2_ref, g2_ref, be2_ref,
        # morph branch (SE-ResNet style)
        wmi_ref, bmi_ref, wm1_ref, bm1_ref, wm2_ref, bm2_ref,
        ws1_ref, bs1_ref, ws2_ref, bs2_ref,
        # fusion head
        wf1a_ref, wf1b_ref, bf1_ref, wf2_ref, bf2_ref,
        # output
        o_ref):
    """Single grid step: full model on the flattened (B*S, D) batch."""
    N = ppg_ref.shape[0]          # B * S
    B = morph_ref.shape[0]
    S = N // B

    # ---- value embedding Linear(1, D) (broadcast mul-add) + positional encoding
    x = ppg_ref[...] * we_ref[...] + be_ref[...] + pe_ref[...]          # (N, D) f32
    mask = mask_ref[...]                                                # (N, N) block-diag

    for l in range(N_LAYERS):                                           # static unroll
        # ---- fused QKV projection: one (N,D)@(D,3D) bf16 matmul, f32 accumulate
        qkv = jnp.dot(_bf(x), wqkv_ref[l],
                      preferred_element_type=jnp.float32) + bqkv_ref[l]  # (N, 3D)
        # head split via a 2-D transpose + leading-dim reshape (no minor-dim reshape)
        qkv_t = qkv.T                                                    # (3D, N)
        qh = qkv_t[0 * D_MODEL:1 * D_MODEL].reshape(N_HEADS, HEAD_DIM, N)
        kh = qkv_t[1 * D_MODEL:2 * D_MODEL].reshape(N_HEADS, HEAD_DIM, N)
        vh = qkv_t[2 * D_MODEL:3 * D_MODEL].reshape(N_HEADS, HEAD_DIM, N)

        # ---- attention scores with block-diagonal batch mask (scale already in Wq)
        s = jnp.einsum('hdq,hdk->hqk', _bf(qh), _bf(kh),
                       preferred_element_type=jnp.float32) + mask        # (H, N, N)
        s = s - jnp.max(s, axis=-1, keepdims=True)
        p = jnp.exp(s)
        p = p / jnp.sum(p, axis=-1, keepdims=True)                       # exact softmax
        ov = jnp.einsum('hqk,hdk->hqd', _bf(p), _bf(vh),
                        preferred_element_type=jnp.float32)              # (H, N, Dh)
        # re-concatenate heads: (H,N,Dh) -> (H,Dh,N) -> (D,N) -> (N,D)
        ctx = jnp.swapaxes(ov, 1, 2).reshape(D_MODEL, N).T               # (N, D)
        attn = jnp.dot(_bf(ctx), wo_ref[l],
                       preferred_element_type=jnp.float32) + bo_ref[l]   # (N, D)

        # ---- residual + LayerNorm, FFN(ReLU), residual + LayerNorm (dropout == id)
        y = _layernorm(x + attn, g1_ref[l], be1_ref[l])
        h1 = jnp.maximum(jnp.dot(_bf(y), w1_ref[l],
                                 preferred_element_type=jnp.float32) + b1_ref[l], 0.0)
        ff = jnp.dot(_bf(h1), w2_ref[l],
                     preferred_element_type=jnp.float32) + b2_ref[l]
        x = _layernorm(y + ff, g2_ref[l], be2_ref[l])

    feats = x                                                            # (N, D)

    # ---- morph branch: SE-ResNet style feature extractor on (B, MORPH_DIM)
    m = morph_ref[...]
    h0 = jnp.maximum(jnp.dot(_bf(m), wmi_ref[...],
                             preferred_element_type=jnp.float32) + bmi_ref[...], 0.0)
    r = jnp.maximum(jnp.dot(_bf(h0), wm1_ref[...],
                            preferred_element_type=jnp.float32) + bm1_ref[...], 0.0)
    r = jnp.dot(_bf(r), wm2_ref[...],
                preferred_element_type=jnp.float32) + bm2_ref[...]
    z = jnp.maximum(jnp.dot(_bf(r), ws1_ref[...],
                            preferred_element_type=jnp.float32) + bs1_ref[...], 0.0)
    z = jnp.dot(_bf(z), ws2_ref[...],
                preferred_element_type=jnp.float32) + bs2_ref[...]
    se = 1.0 / (1.0 + jnp.exp(-z))                                       # exact sigmoid
    morph_emb = jnp.maximum(h0 + r * se, 0.0)                            # (B, D)

    # ---- fusion head: concat([feats, morph_rep]) @ W1 == feats@W1a + morph@W1b
    # project the (B, D) morph embedding first, then broadcast per-sequence rows
    morph_proj = jnp.dot(_bf(morph_emb), wf1b_ref[...],
                         preferred_element_type=jnp.float32)             # (B, D)
    rows = [jnp.broadcast_to(morph_proj[b:b + 1, :], (S, D_MODEL)) for b in range(B)]
    morph_rows = rows[0] if B == 1 else jnp.concatenate(rows, axis=0)    # (N, D)

    fh = jnp.maximum(jnp.dot(_bf(feats), wf1a_ref[...],
                             preferred_element_type=jnp.float32)
                     + morph_rows + bf1_ref[...], 0.0)                   # (N, D)
    # Linear(D, 1) as a (1,D) x (N,D)^T contraction -> lane-major (1, N) output row
    bp = lax.dot_general(wf2_ref[...], _bf(fh), (((1,), (1,)), ((), ())),
                         preferred_element_type=jnp.float32) + bf2_ref[...]
    o_ref[...] = bp


# ----------------------------- parameters ----------------------------------

def _dense_init(key, fan_in, fan_out):
    """Match torch.nn.Linear default init: U(-1/sqrt(fan_in), 1/sqrt(fan_in))."""
    lim = 1.0 / math.sqrt(fan_in)
    kw, kb = jax.random.split(key)
    w = jax.random.uniform(kw, (fan_in, fan_out), jnp.float32, -lim, lim)
    b = jax.random.uniform(kb, (1, fan_out), jnp.float32, -lim, lim)
    return w, b


def init_params(key):
    """Kernel-ready parameters: fused QKV (scale folded), bf16 matmul weights."""
    kemb, *klayers, kmorph, kfus = jax.random.split(key, 1 + N_LAYERS + 2)

    # Informer value embedding Linear(1, D) — used on the VPU, keep f32
    we, be = _dense_init(kemb, 1, D_MODEL)

    scale = 1.0 / math.sqrt(HEAD_DIM)
    names = ("WQKV", "BQKV", "WO", "BO", "G1", "BE1",
             "W1", "B1", "W2", "B2", "G2", "BE2")
    acc = {n: [] for n in names}
    for lk in klayers:
        k = jax.random.split(lk, 6)
        wq, bq = _dense_init(k[0], D_MODEL, D_MODEL)
        wk, bk = _dense_init(k[1], D_MODEL, D_MODEL)
        wv, bv = _dense_init(k[2], D_MODEL, D_MODEL)
        wo, bo = _dense_init(k[3], D_MODEL, D_MODEL)
        w1, b1 = _dense_init(k[4], D_MODEL, D_FF)
        w2, b2 = _dense_init(k[5], D_FF, D_MODEL)
        # fuse Q/K/V along the output dim; fold 1/sqrt(Dh) into the Q slice
        acc["WQKV"].append(jnp.concatenate([wq * scale, wk, wv], axis=1))   # (D, 3D)
        acc["BQKV"].append(jnp.concatenate([bq * scale, bk, bv], axis=1))   # (1, 3D)
        acc["WO"].append(wo); acc["BO"].append(bo)
        acc["G1"].append(jnp.ones((1, D_MODEL), jnp.float32))
        acc["BE1"].append(jnp.zeros((1, D_MODEL), jnp.float32))
        acc["W1"].append(w1); acc["B1"].append(b1)
        acc["W2"].append(w2); acc["B2"].append(b2)
        acc["G2"].append(jnp.ones((1, D_MODEL), jnp.float32))
        acc["BE2"].append(jnp.zeros((1, D_MODEL), jnp.float32))
    st = {n: jnp.stack(v) for n, v in acc.items()}

    # morph branch (SE-ResNet style): input proj + one SE residual block
    km = jax.random.split(kmorph, 5)
    wmi, bmi = _dense_init(km[0], MORPH_DIM, D_MODEL)
    wm1, bm1 = _dense_init(km[1], D_MODEL, D_MODEL)
    wm2, bm2 = _dense_init(km[2], D_MODEL, D_MODEL)
    ws1, bs1 = _dense_init(km[3], D_MODEL, SE_HIDDEN)
    ws2, bs2 = _dense_init(km[4], SE_HIDDEN, D_MODEL)

    # fusion head: Linear(2D, D) split into feats/morph halves, ReLU, Linear(D, 1)
    kf = jax.random.split(kfus, 2)
    wf1, bf1 = _dense_init(kf[0], 2 * D_MODEL, D_MODEL)
    wf2, bf2 = _dense_init(kf[1], D_MODEL, 1)
    wf1a, wf1b = wf1[:D_MODEL], wf1[D_MODEL:]
    wf2_row = wf2.T                                    # (1, D) for the lane-major reduce

    bf16 = jnp.bfloat16
    return (we, be,
            st["WQKV"].astype(bf16), st["BQKV"],
            st["WO"].astype(bf16), st["BO"],
            st["G1"], st["BE1"],
            st["W1"].astype(bf16), st["B1"],
            st["W2"].astype(bf16), st["B2"],
            st["G2"], st["BE2"],
            wmi.astype(bf16), bmi, wm1.astype(bf16), bm1, wm2.astype(bf16), bm2,
            ws1.astype(bf16), bs1, ws2.astype(bf16), bs2,
            wf1a.astype(bf16), wf1b.astype(bf16), bf1, wf2_row.astype(bf16), bf2)


def sinusoidal_pe(S, D):
    pos = jnp.arange(S, dtype=jnp.float32)[:, None]
    div = jnp.exp(jnp.arange(0, D, 2, dtype=jnp.float32) * (-math.log(10000.0) / D))
    pe = jnp.zeros((S, D), jnp.float32)
    pe = pe.at[:, 0::2].set(jnp.sin(pos * div))
    pe = pe.at[:, 1::2].set(jnp.cos(pos * div))
    return pe


# ----------------------------- forward pass --------------------------------

def _full_spec(arr):
    zeros = (0,) * arr.ndim
    return pl.BlockSpec(arr.shape, lambda i, _z=zeros: _z)   # whole array, one step


@jax.jit
def teacher_forward(ppg, morph, params):
    """ppg: (B, S, 1) f32, morph: (B, MORPH_DIM) f32 -> (B, S) f32."""
    B, S, _ = ppg.shape
    N = B * S
    pe = jnp.tile(sinusoidal_pe(S, D_MODEL), (B, 1))                    # (N, D)
    ids = jnp.arange(N, dtype=jnp.int32) // S
    mask = jnp.where(ids[:, None] == ids[None, :], 0.0, NEG_INF).astype(jnp.float32)
    ppg_flat = ppg.reshape(N, 1)

    inputs = (ppg_flat, morph, pe, mask) + tuple(params)
    in_specs = [_full_spec(a) for a in inputs]

    out = pl.pallas_call(
        teacher_fused_kernel,
        grid=(1,),
        in_specs=in_specs,
        out_specs=pl.BlockSpec((1, N), lambda i: (0, 0)),
        out_shape=jax.ShapeDtypeStruct((1, N), jnp.float32),
        compiler_params=pltpu.CompilerParams(dimension_semantics=("arbitrary",)),
    )(*inputs)
    return out.reshape(B, S)


if __name__ == "__main__":
    root = jax.random.PRNGKey(0)
    pkey, xkey, mkey = jax.random.split(root, 3)

    params = init_params(pkey)                                    # deterministic weights
    ppg = jax.random.normal(xkey, (2, 8, 1), jnp.float32)         # (batch=2, seq_len=8, 1)
    morph = jax.random.normal(mkey, (2, MORPH_DIM), jnp.float32)  # (batch=2, 30)

    out = teacher_forward(ppg, morph, params)
    jax.block_until_ready(out)
    assert out.shape == (2, 8) and out.dtype == jnp.float32
    print("KERNEL_OK")
</pallas_src>

<mosaic_0001>
module attributes {stable_mosaic.version = 11 : i64} {
  func.func @teacher_fused_kernel(%arg0: i32, %arg1: memref<16x1xf32, #tpu.memory_space<vmem>>, %arg2: memref<2x30xf32, #tpu.memory_space<vmem>>, %arg3: memref<16x64xf32, #tpu.memory_space<vmem>>, %arg4: memref<16x16xf32, #tpu.memory_space<vmem>>, %arg5: memref<1x64xf32, #tpu.memory_space<vmem>>, %arg6: memref<1x64xf32, #tpu.memory_space<vmem>>, %arg7: memref<4x64x192xbf16, #tpu.memory_space<vmem>>, %arg8: memref<4x1x192xf32, #tpu.memory_space<vmem>>, %arg9: memref<4x64x64xbf16, #tpu.memory_space<vmem>>, %arg10: memref<4x1x64xf32, #tpu.memory_space<vmem>>, %arg11: memref<4x1x64xf32, #tpu.memory_space<vmem>>, %arg12: memref<4x1x64xf32, #tpu.memory_space<vmem>>, %arg13: memref<4x64x256xbf16, #tpu.memory_space<vmem>>, %arg14: memref<4x1x256xf32, #tpu.memory_space<vmem>>, %arg15: memref<4x256x64xbf16, #tpu.memory_space<vmem>>, %arg16: memref<4x1x64xf32, #tpu.memory_space<vmem>>, %arg17: memref<4x1x64xf32, #tpu.memory_space<vmem>>, %arg18: memref<4x1x64xf32, #tpu.memory_space<vmem>>, %arg19: memref<30x64xbf16, #tpu.memory_space<vmem>>, %arg20: memref<1x64xf32, #tpu.memory_space<vmem>>, %arg21: memref<64x64xbf16, #tpu.memory_space<vmem>>, %arg22: memref<1x64xf32, #tpu.memory_space<vmem>>, %arg23: memref<64x64xbf16, #tpu.memory_space<vmem>>, %arg24: memref<1x64xf32, #tpu.memory_space<vmem>>, %arg25: memref<64x16xbf16, #tpu.memory_space<vmem>>, %arg26: memref<1x16xf32, #tpu.memory_space<vmem>>, %arg27: memref<16x64xbf16, #tpu.memory_space<vmem>>, %arg28: memref<1x64xf32, #tpu.memory_space<vmem>>, %arg29: memref<64x64xbf16, #tpu.memory_space<vmem>>, %arg30: memref<64x64xbf16, #tpu.memory_space<vmem>>, %arg31: memref<1x64xf32, #tpu.memory_space<vmem>>, %arg32: memref<1x64xbf16, #tpu.memory_space<vmem>>, %arg33: memref<1x1xf32, #tpu.memory_space<vmem>>, %arg34: memref<1x16xf32, #tpu.memory_space<vmem>>) attributes {dimension_semantics = [#tpu.dimension_semantics<arbitrary>], iteration_bounds = array<i64: 1>, scalar_prefetch = 0 : i64, scratch_operands = 0 : i64, tpu.core_type = #tpu.core_type<tc>, window_params = [{pipeline_mode = #tpu.pipeline_mode<synchronous>, transform_indices = @transform_0, window_bounds = array<i64: 16, 1>}, {pipeline_mode = #tpu.pipeline_mode<synchronous>, transform_indices = @transform_1, window_bounds = array<i64: 2, 30>}, {pipeline_mode = #tpu.pipeline_mode<synchronous>, transform_indices = @transform_2, window_bounds = array<i64: 16, 64>}, {pipeline_mode = #tpu.pipeline_mode<synchronous>, transform_indices = @transform_3, window_bounds = array<i64: 16, 16>}, {pipeline_mode = #tpu.pipeline_mode<synchronous>, transform_indices = @transform_4, window_bounds = array<i64: 1, 64>}, {pipeline_mode = #tpu.pipeline_mode<synchronous>, transform_indices = @transform_5, window_bounds = array<i64: 1, 64>}, {pipeline_mode = #tpu.pipeline_mode<synchronous>, transform_indices = @transform_6, window_bounds = array<i64: 4, 64, 192>}, {pipeline_mode = #tpu.pipeline_mode<synchronous>, transform_indices = @transform_7, window_bounds = array<i64: 4, 1, 192>}, {pipeline_mode = #tpu.pipeline_mode<synchronous>, transform_indices = @transform_8, window_bounds = array<i64: 4, 64, 64>}, {pipeline_mode = #tpu.pipeline_mode<synchronous>, transform_indices = @transform_9, window_bounds = array<i64: 4, 1, 64>}, {pipeline_mode = #tpu.pipeline_mode<synchronous>, transform_indices = @transform_10, window_bounds = array<i64: 4, 1, 64>}, {pipeline_mode = #tpu.pipeline_mode<synchronous>, transform_indices = @transform_11, window_bounds = array<i64: 4, 1, 64>}, {pipeline_mode = #tpu.pipeline_mode<synchronous>, transform_indices = @transform_12, window_bounds = array<i64: 4, 64, 256>}, {pipeline_mode = #tpu.pipeline_mode<synchronous>, transform_indices = @transform_13, window_bounds = array<i64: 4, 1, 256>}, {pipeline_mode = #tpu.pipeline_mode<synchronous>, transform_indices = @transform_14, window_bounds = array<i64: 4, 256, 64>}, {pipeline_mode = #tpu.pipeline_mode<synchronous>, transform_indices = @transform_15, window_bounds = array<i64: 4, 1, 64>}, {pipeline_mode = #tpu.pipeline_mode<synchronous>, transform_indices = @transform_16, window_bounds = array<i64: 4, 1, 64>}, {pipeline_mode = #tpu.pipeline_mode<synchronous>, transform_indices = @transform_17, window_bounds = array<i64: 4, 1, 64>}, {pipeline_mode = #tpu.pipeline_mode<synchronous>, transform_indices = @transform_18, window_bounds = array<i64: 30, 64>}, {pipeline_mode = #tpu.pipeline_mode<synchronous>, transform_indices = @transform_19, window_bounds = array<i64: 1, 64>}, {pipeline_mode = #tpu.pipeline_mode<synchronous>, transform_indices = @transform_20, window_bounds = array<i64: 64, 64>}, {pipeline_mode = #tpu.pipeline_mode<synchronous>, transform_indices = @transform_21, window_bounds = array<i64: 1, 64>}, {pipeline_mode = #tpu.pipeline_mode<synchronous>, transform_indices = @transform_22, window_bounds = array<i64: 64, 64>}, {pipeline_mode = #tpu.pipeline_mode<synchronous>, transform_indices = @transform_23, window_bounds = array<i64: 1, 64>}, {pipeline_mode = #tpu.pipeline_mode<synchronous>, transform_indices = @transform_24, window_bounds = array<i64: 64, 16>}, {pipeline_mode = #tpu.pipeline_mode<synchronous>, transform_indices = @transform_25, window_bounds = array<i64: 1, 16>}, {pipeline_mode = #tpu.pipeline_mode<synchronous>, transform_indices = @transform_26, window_bounds = array<i64: 16, 64>}, {pipeline_mode = #tpu.pipeline_mode<synchronous>, transform_indices = @transform_27, window_bounds = array<i64: 1, 64>}, {pipeline_mode = #tpu.pipeline_mode<synchronous>, transform_indices = @transform_28, window_bounds = array<i64: 64, 64>}, {pipeline_mode = #tpu.pipeline_mode<synchronous>, transform_indices = @transform_29, window_bounds = array<i64: 64, 64>}, {pipeline_mode = #tpu.pipeline_mode<synchronous>, transform_indices = @transform_30, window_bounds = array<i64: 1, 64>}, {pipeline_mode = #tpu.pipeline_mode<synchronous>, transform_indices = @transform_31, window_bounds = array<i64: 1, 64>}, {pipeline_mode = #tpu.pipeline_mode<synchronous>, transform_indices = @transform_32, window_bounds = array<i64: 1, 1>}, {pipeline_mode = #tpu.pipeline_mode<synchronous>, transform_indices = @transform_33, window_bounds = array<i64: 1, 16>}]} {
    %c0 = arith.constant 0 : index
    %c0_0 = arith.constant 0 : index
    %0 = vector.load %arg1[%c0, %c0_0] : memref<16x1xf32, #tpu.memory_space<vmem>>, vector<16x1xf32>
    %c0_1 = arith.constant 0 : index
    %c0_2 = arith.constant 0 : index
    %1 = vector.load %arg5[%c0_1, %c0_2] : memref<1x64xf32, #tpu.memory_space<vmem>>, vector<1x64xf32>
    %2 = vector.broadcast %0 : vector<16x1xf32> to vector<16x64xf32>
    %3 = vector.broadcast %1 : vector<1x64xf32> to vector<16x64xf32>
    %4 = arith.mulf %2, %3 : vector<16x64xf32>
    %c0_3 = arith.constant 0 : index
    %c0_4 = arith.constant 0 : index
    %5 = vector.load %arg6[%c0_3, %c0_4] : memref<1x64xf32, #tpu.memory_space<vmem>>, vector<1x64xf32>
    %6 = vector.broadcast %5 : vector<1x64xf32> to vector<16x64xf32>
    %7 = arith.addf %4, %6 : vector<16x64xf32>
    %c0_5 = arith.constant 0 : index
    %c0_6 = arith.constant 0 : index
    %8 = vector.load %arg3[%c0_5, %c0_6] : memref<16x64xf32, #tpu.memory_space<vmem>>, vector<16x64xf32>
    %9 = arith.addf %7, %8 : vector<16x64xf32>
    %c0_7 = arith.constant 0 : index
    %c0_8 = arith.constant 0 : index
    %10 = vector.load %arg4[%c0_7, %c0_8] : memref<16x16xf32, #tpu.memory_space<vmem>>, vector<16x16xf32>
    %11 = arith.truncf %9 : vector<16x64xf32> to vector<16x64xbf16>
    %c0_9 = arith.constant 0 : index
    %c0_10 = arith.constant 0 : index
    %c0_11 = arith.constant 0 : index
    %12 = vector.load %arg7[%c0_9, %c0_10, %c0_11] : memref<4x64x192xbf16, #tpu.memory_space<vmem>>, vector<1x64x192xbf16>
    %13 = vector.shape_cast %12 : vector<1x64x192xbf16> to vector<64x192xbf16>
    %cst = arith.constant dense<0.000000e+00> : vector<16x192xf32>
    %14 = tpu.matmul %11, %13, %cst {dimension_numbers = #tpu.dot_dimension_numbers<[1], [0], [0], [1], [0, 0, 1, 1], [], []>} : vector<16x64xbf16>, vector<64x192xbf16>, vector<16x192xf32> -> vector<16x192xf32>
    %c0_12 = arith.constant 0 : index
    %c0_13 = arith.constant 0 : index
    %c0_14 = arith.constant 0 : index
    %15 = vector.load %arg8[%c0_12, %c0_13, %c0_14] : memref<4x1x192xf32, #tpu.memory_space<vmem>>, vector<1x1x192xf32>
    %16 = vector.shape_cast %15 : vector<1x1x192xf32> to vector<1x192xf32>
    %17 = vector.broadcast %16 : vector<1x192xf32> to vector<16x192xf32>
    %18 = arith.addf %14, %17 : vector<16x192xf32>
    %19 = tpu.transpose %18, [1, 0] : vector<16x192xf32> -> vector<192x16xf32>
    %20 = vector.extract_strided_slice %19 {offsets = [0, 0], sizes = [64, 16], strides = [1, 1]} : vector<192x16xf32> to vector<64x16xf32>
    %21 = vector.shape_cast %20 : vector<64x16xf32> to vector<8x8x16xf32>
    %22 = vector.extract_strided_slice %19 {offsets = [64, 0], sizes = [64, 16], strides = [1, 1]} : vector<192x16xf32> to vector<64x16xf32>
    %23 = vector.shape_cast %22 : vector<64x16xf32> to vector<8x8x16xf32>
    %24 = vector.extract_strided_slice %19 {offsets = [128, 0], sizes = [64, 16], strides = [1, 1]} : vector<192x16xf32> to vector<64x16xf32>
    %25 = vector.shape_cast %24 : vector<64x16xf32> to vector<8x8x16xf32>
    %26 = arith.truncf %21 : vector<8x8x16xf32> to vector<8x8x16xbf16>
    %27 = arith.truncf %23 : vector<8x8x16xf32> to vector<8x8x16xbf16>
    "tpu.trace_start"() <{level = 10 : i32, message = "hdq,hdk->hqk"}> : () -> ()
    %cst_15 = arith.constant dense<0.000000e+00> : vector<8x16x16xf32>
    %28 = tpu.matmul %26, %27, %cst_15 {dimension_numbers = #tpu.dot_dimension_numbers<[1], [1], [2], [2], [0, 0, 0, 2, 1, 2], [0], [0]>} : vector<8x8x16xbf16>, vector<8x8x16xbf16>, vector<8x16x16xf32> -> vector<8x16x16xf32>
    "tpu.trace_stop"() : () -> ()
    %29 = vector.shape_cast %10 : vector<16x16xf32> to vector<1x16x16xf32>
    %30 = vector.broadcast %29 : vector<1x16x16xf32> to vector<8x16x16xf32>
    %31 = arith.addf %28, %30 : vector<8x16x16xf32>
    %cst_16 = arith.constant dense<0xFF800000> : vector<8x16xf32>
    %32 = vector.multi_reduction <maximumf>, %31, %cst_16 [2] : vector<8x16x16xf32> to vector<8x16xf32>
    %33 = vector.shape_cast %32 : vector<8x16xf32> to vector<8x16x1xf32>
    %34 = vector.broadcast %33 : vector<8x16x1xf32> to vector<8x16x16xf32>
    %35 = arith.subf %31, %34 : vector<8x16x16xf32>
    %36 = math.exp %35 : vector<8x16x16xf32>
    %cst_17 = arith.constant dense<0.000000e+00> : vector<8x16xf32>
    %37 = vector.multi_reduction <add>, %36, %cst_17 [2] : vector<8x16x16xf32> to vector<8x16xf32>
    %38 = vector.shape_cast %37 : vector<8x16xf32> to vector<8x16x1xf32>
    %39 = vector.broadcast %38 : vector<8x16x1xf32> to vector<8x16x16xf32>
    %40 = arith.divf %36, %39 : vector<8x16x16xf32>
    %41 = arith.truncf %40 : vector<8x16x16xf32> to vector<8x16x16xbf16>
    %42 = arith.truncf %25 : vector<8x8x16xf32> to vector<8x8x16xbf16>
    "tpu.trace_start"() <{level = 10 : i32, message = "hqk,hdk->hqd"}> : () -> ()
    %cst_18 = arith.constant dense<0.000000e+00> : vector<8x16x8xf32>
    %43 = tpu.matmul %41, %42, %cst_18 {dimension_numbers = #tpu.dot_dimension_numbers<[2], [2], [1], [1], [0, 0, 0, 1, 1, 1], [0], [0]>} : vector<8x16x16xbf16>, vector<8x8x16xbf16>, vector<8x16x8xf32> -> vector<8x16x8xf32>
    "tpu.trace_stop"() : () -> ()
    %44 = tpu.transpose %43, [0, 2, 1] : vector<8x16x8xf32> -> vector<8x8x16xf32>
    %45 = vector.shape_cast %44 : vector<8x8x16xf32> to vector<64x16xf32>
    %46 = tpu.transpose %45, [1, 0] : vector<64x16xf32> -> vector<16x64xf32>
    %47 = arith.truncf %46 : vector<16x64xf32> to vector<16x64xbf16>
    %c0_19 = arith.constant 0 : index
    %c0_20 = arith.constant 0 : index
    %c0_21 = arith.constant 0 : index
    %48 = vector.load %arg9[%c0_19, %c0_20, %c0_21] : memref<4x64x64xbf16, #tpu.memory_space<vmem>>, vector<1x64x64xbf16>
    %49 = vector.shape_cast %48 : vector<1x64x64xbf16> to vector<64x64xbf16>
    %cst_22 = arith.constant dense<0.000000e+00> : vector<16x64xf32>
    %50 = tpu.matmul %47, %49, %cst_22 {dimension_numbers = #tpu.dot_dimension_numbers<[1], [0], [0], [1], [0, 0, 1, 1], [], []>} : vector<16x64xbf16>, vector<64x64xbf16>, vector<16x64xf32> -> vector<16x64xf32>
    %c0_23 = arith.constant 0 : index
    %c0_24 = arith.constant 0 : index
    %c0_25 = arith.constant 0 : index
    %51 = vector.load %arg10[%c0_23, %c0_24, %c0_25] : memref<4x1x64xf32, #tpu.memory_space<vmem>>, vector<1x1x64xf32>
    %52 = vector.shape_cast %51 : vector<1x1x64xf32> to vector<1x64xf32>
    %53 = vector.broadcast %52 : vector<1x64xf32> to vector<16x64xf32>
    %54 = arith.addf %50, %53 : vector<16x64xf32>
    %55 = arith.addf %9, %54 : vector<16x64xf32>
    %c0_26 = arith.constant 0 : index
    %c0_27 = arith.constant 0 : index
    %c0_28 = arith.constant 0 : index
    %56 = vector.load %arg11[%c0_26, %c0_27, %c0_28] : memref<4x1x64xf32, #tpu.memory_space<vmem>>, vector<1x1x64xf32>
    %57 = vector.shape_cast %56 : vector<1x1x64xf32> to vector<1x64xf32>
    %c0_29 = arith.constant 0 : index
    %c0_30 = arith.constant 0 : index
    %c0_31 = arith.constant 0 : index
    %58 = vector.load %arg12[%c0_29, %c0_30, %c0_31] : memref<4x1x64xf32, #tpu.memory_space<vmem>>, vector<1x1x64xf32>
    %59 = vector.shape_cast %58 : vector<1x1x64xf32> to vector<1x64xf32>
    %cst_32 = arith.constant dense<0.000000e+00> : vector<16xf32>
    %60 = vector.multi_reduction <add>, %55, %cst_32 [1] : vector<16x64xf32> to vector<16xf32>
    %61 = vector.shape_cast %60 : vector<16xf32> to vector<16x1xf32>
    %cst_33 = arith.constant 6.400000e+01 : f32
    %62 = vector.broadcast %cst_33 : f32 to vector<16x1xf32>
    %63 = arith.divf %61, %62 : vector<16x1xf32>
    %64 = vector.broadcast %63 : vector<16x1xf32> to vector<16x64xf32>
    %65 = arith.subf %55, %64 : vector<16x64xf32>
    %66 = arith.mulf %65, %65 : vector<16x64xf32>
    %cst_34 = arith.constant dense<0.000000e+00> : vector<16xf32>
    %67 = vector.multi_reduction <add>, %66, %cst_34 [1] : vector<16x64xf32> to vector<16xf32>
    %68 = vector.shape_cast %67 : vector<16xf32> to vector<16x1xf32>
    %cst_35 = arith.constant 6.400000e+01 : f32
    %69 = vector.broadcast %cst_35 : f32 to vector<16x1xf32>
    %70 = arith.divf %68, %69 : vector<16x1xf32>
    %71 = vector.broadcast %63 : vector<16x1xf32> to vector<16x64xf32>
    %72 = arith.subf %55, %71 : vector<16x64xf32>
    %cst_36 = arith.constant 9.99999974E-6 : f32
    %73 = vector.broadcast %cst_36 : f32 to vector<16x1xf32>
    %74 = arith.addf %70, %73 : vector<16x1xf32>
    %75 = math.rsqrt %74 : vector<16x1xf32>
    %76 = vector.broadcast %75 : vector<16x1xf32> to vector<16x64xf32>
    %77 = arith.mulf %72, %76 : vector<16x64xf32>
    %78 = vector.broadcast %57 : vector<1x64xf32> to vector<16x64xf32>
    %79 = arith.mulf %77, %78 : vector<16x64xf32>
    %80 = vector.broadcast %59 : vector<1x64xf32> to vector<16x64xf32>
    %81 = arith.addf %79, %80 : vector<16x64xf32>
    %82 = arith.truncf %81 : vector<16x64xf32> to vector<16x64xbf16>
    %c0_37 = arith.constant 0 : index
    %c0_38 = arith.constant 0 : index
    %c0_39 = arith.constant 0 : index
    %83 = vector.load %arg13[%c0_37, %c0_38, %c0_39] : memref<4x64x256xbf16, #tpu.memory_space<vmem>>, vector<1x64x256xbf16>
    %84 = vector.shape_cast %83 : vector<1x64x256xbf16> to vector<64x256xbf16>
    %cst_40 = arith.constant dense<0.000000e+00> : vector<16x256xf32>
    %85 = tpu.matmul %82, %84, %cst_40 {dimension_numbers = #tpu.dot_dimension_numbers<[1], [0], [0], [1], [0, 0, 1, 1], [], []>} : vector<16x64xbf16>, vector<64x256xbf16>, vector<16x256xf32> -> vector<16x256xf32>
    %c0_41 = arith.constant 0 : index
    %c0_42 = arith.constant 0 : index
    %c0_43 = arith.constant 0 : index
    %86 = vector.load %arg14[%c0_41, %c0_42, %c0_43] : memref<4x1x256xf32, #tpu.memory_space<vmem>>, vector<1x1x256xf32>
    %87 = vector.shape_cast %86 : vector<1x1x256xf32> to vector<1x256xf32>
    %88 = vector.broadcast %87 : vector<1x256xf32> to vector<16x256xf32>
    %89 = arith.addf %85, %88 : vector<16x256xf32>
    %cst_44 = arith.constant 0.000000e+00 : f32
    %90 = vector.broadcast %cst_44 : f32 to vector<16x256xf32>
    %91 = arith.maximumf %89, %90 : vector<16x256xf32>
    %92 = arith.truncf %91 : vector<16x256xf32> to vector<16x256xbf16>
    %c0_45 = arith.constant 0 : index
    %c0_46 = arith.constant 0 : index
    %c0_47 = arith.constant 0 : index
    %93 = vector.load %arg15[%c0_45, %c0_46, %c0_47] : memref<4x256x64xbf16, #tpu.memory_space<vmem>>, vector<1x256x64xbf16>
    %94 = vector.shape_cast %93 : vector<1x256x64xbf16> to vector<256x64xbf16>
    %cst_48 = arith.constant dense<0.000000e+00> : vector<16x64xf32>
    %95 = tpu.matmul %92, %94, %cst_48 {dimension_numbers = #tpu.dot_dimension_numbers<[1], [0], [0], [1], [0, 0, 1, 1], [], []>} : vector<16x256xbf16>, vector<256x64xbf16>, vector<16x64xf32> -> vector<16x64xf32>
    %c0_49 = arith.constant 0 : index
    %c0_50 = arith.constant 0 : index
    %c0_51 = arith.constant 0 : index
    %96 = vector.load %arg16[%c0_49, %c0_50, %c0_51] : memref<4x1x64xf32, #tpu.memory_space<vmem>>, vector<1x1x64xf32>
    %97 = vector.shape_cast %96 : vector<1x1x64xf32> to vector<1x64xf32>
    %98 = vector.broadcast %97 : vector<1x64xf32> to vector<16x64xf32>
    %99 = arith.addf %95, %98 : vector<16x64xf32>
    %100 = arith.addf %81, %99 : vector<16x64xf32>
    %c0_52 = arith.constant 0 : index
    %c0_53 = arith.constant 0 : index
    %c0_54 = arith.constant 0 : index
    %101 = vector.load %arg17[%c0_52, %c0_53, %c0_54] : memref<4x1x64xf32, #tpu.memory_space<vmem>>, vector<1x1x64xf32>
    %102 = vector.shape_cast %101 : vector<1x1x64xf32> to vector<1x64xf32>
    %c0_55 = arith.constant 0 : index
    %c0_56 = arith.constant 0 : index
    %c0_57 = arith.constant 0 : index
    %103 = vector.load %arg18[%c0_55, %c0_56, %c0_57] : memref<4x1x64xf32, #tpu.memory_space<vmem>>, vector<1x1x64xf32>
    %104 = vector.shape_cast %103 : vector<1x1x64xf32> to vector<1x64xf32>
    %cst_58 = arith.constant dense<0.000000e+00> : vector<16xf32>
    %105 = vector.multi_reduction <add>, %100, %cst_58 [1] : vector<16x64xf32> to vector<16xf32>
    %106 = vector.shape_cast %105 : vector<16xf32> to vector<16x1xf32>
    %cst_59 = arith.constant 6.400000e+01 : f32
    %107 = vector.broadcast %cst_59 : f32 to vector<16x1xf32>
    %108 = arith.divf %106, %107 : vector<16x1xf32>
    %109 = vector.broadcast %108 : vector<16x1xf32> to vector<16x64xf32>
    %110 = arith.subf %100, %109 : vector<16x64xf32>
    %111 = arith.mulf %110, %110 : vector<16x64xf32>
    %cst_60 = arith.constant dense<0.000000e+00> : vector<16xf32>
    %112 = vector.multi_reduction <add>, %111, %cst_60 [1] : vector<16x64xf32> to vector<16xf32>
    %113 = vector.shape_cast %112 : vector<16xf32> to vector<16x1xf32>
    %cst_61 = arith.constant 6.400000e+01 : f32
    %114 = vector.broadcast %cst_61 : f32 to vector<16x1xf32>
    %115 = arith.divf %113, %114 : vector<16x1xf32>
    %116 = vector.broadcast %108 : vector<16x1xf32> to vector<16x64xf32>
    %117 = arith.subf %100, %116 : vector<16x64xf32>
    %cst_62 = arith.constant 9.99999974E-6 : f32
    %118 = vector.broadcast %cst_62 : f32 to vector<16x1xf32>
    %119 = arith.addf %115, %118 : vector<16x1xf32>
    %120 = math.rsqrt %119 : vector<16x1xf32>
    %121 = vector.broadcast %120 : vector<16x1xf32> to vector<16x64xf32>
    %122 = arith.mulf %117, %121 : vector<16x64xf32>
    %123 = vector.broadcast %102 : vector<1x64xf32> to vector<16x64xf32>
    %124 = arith.mulf %122, %123 : vector<16x64xf32>
    %125 = vector.broadcast %104 : vector<1x64xf32> to vector<16x64xf32>
    %126 = arith.addf %124, %125 : vector<16x64xf32>
    %127 = arith.truncf %126 : vector<16x64xf32> to vector<16x64xbf16>
    %c1 = arith.constant 1 : index
    %c0_63 = arith.constant 0 : index
    %c0_64 = arith.constant 0 : index
    %128 = vector.load %arg7[%c1, %c0_63, %c0_64] : memref<4x64x192xbf16, #tpu.memory_space<vmem>>, vector<1x64x192xbf16>
    %129 = vector.shape_cast %128 : vector<1x64x192xbf16> to vector<64x192xbf16>
    %cst_65 = arith.constant dense<0.000000e+00> : vector<16x192xf32>
    %130 = tpu.matmul %127, %129, %cst_65 {dimension_numbers = #tpu.dot_dimension_numbers<[1], [0], [0], [1], [0, 0, 1, 1], [], []>} : vector<16x64xbf16>, vector<64x192xbf16>, vector<16x192xf32> -> vector<16x192xf32>
    %c1_66 = arith.constant 1 : index
    %c0_67 = arith.constant 0 : index
    %c0_68 = arith.constant 0 : index
    %131 = vector.load %arg8[%c1_66, %c0_67, %c0_68] : memref<4x1x192xf32, #tpu.memory_space<vmem>>, vector<1x1x192xf32>
    %132 = vector.shape_cast %131 : vector<1x1x192xf32> to vector<1x192xf32>
    %133 = vector.broadcast %132 : vector<1x192xf32> to vector<16x192xf32>
    %134 = arith.addf %130, %133 : vector<16x192xf32>
    %135 = tpu.transpose %134, [1, 0] : vector<16x192xf32> -> vector<192x16xf32>
    %136 = vector.extract_strided_slice %135 {offsets = [0, 0], sizes = [64, 16], strides = [1, 1]} : vector<192x16xf32> to vector<64x16xf32>
    %137 = vector.shape_cast %136 : vector<64x16xf32> to vector<8x8x16xf32>
    %138 = vector.extract_strided_slice %135 {offsets = [64, 0], sizes = [64, 16], strides = [1, 1]} : vector<192x16xf32> to vector<64x16xf32>
    %139 = vector.shape_cast %138 : vector<64x16xf32> to vector<8x8x16xf32>
    %140 = vector.extract_strided_slice %135 {offsets = [128, 0], sizes = [64, 16], strides = [1, 1]} : vector<192x16xf32> to vector<64x16xf32>
    %141 = vector.shape_cast %140 : vector<64x16xf32> to vector<8x8x16xf32>
    %142 = arith.truncf %137 : vector<8x8x16xf32> to vector<8x8x16xbf16>
    %143 = arith.truncf %139 : vector<8x8x16xf32> to vector<8x8x16xbf16>
    "tpu.trace_start"() <{level = 10 : i32, message = "hdq,hdk->hqk"}> : () -> ()
    %cst_69 = arith.constant dense<0.000000e+00> : vector<8x16x16xf32>
    %144 = tpu.matmul %142, %143, %cst_69 {dimension_numbers = #tpu.dot_dimension_numbers<[1], [1], [2], [2], [0, 0, 0, 2, 1, 2], [0], [0]>} : vector<8x8x16xbf16>, vector<8x8x16xbf16>, vector<8x16x16xf32> -> vector<8x16x16xf32>
    "tpu.trace_stop"() : () -> ()
    %145 = vector.shape_cast %10 : vector<16x16xf32> to vector<1x16x16xf32>
    %146 = vector.broadcast %145 : vector<1x16x16xf32> to vector<8x16x16xf32>
    %147 = arith.addf %144, %146 : vector<8x16x16xf32>
    %cst_70 = arith.constant dense<0xFF800000> : vector<8x16xf32>
    %148 = vector.multi_reduction <maximumf>, %147, %cst_70 [2] : vector<8x16x16xf32> to vector<8x16xf32>
    %149 = vector.shape_cast %148 : vector<8x16xf32> to vector<8x16x1xf32>
    %150 = vector.broadcast %149 : vector<8x16x1xf32> to vector<8x16x16xf32>
    %151 = arith.subf %147, %150 : vector<8x16x16xf32>
    %152 = math.exp %151 : vector<8x16x16xf32>
    %cst_71 = arith.constant dense<0.000000e+00> : vector<8x16xf32>
    %153 = vector.multi_reduction <add>, %152, %cst_71 [2] : vector<8x16x16xf32> to vector<8x16xf32>
    %154 = vector.shape_cast %153 : vector<8x16xf32> to vector<8x16x1xf32>
    %155 = vector.broadcast %154 : vector<8x16x1xf32> to vector<8x16x16xf32>
    %156 = arith.divf %152, %155 : vector<8x16x16xf32>
    %157 = arith.truncf %156 : vector<8x16x16xf32> to vector<8x16x16xbf16>
    %158 = arith.truncf %141 : vector<8x8x16xf32> to vector<8x8x16xbf16>
    "tpu.trace_start"() <{level = 10 : i32, message = "hqk,hdk->hqd"}> : () -> ()
    %cst_72 = arith.constant dense<0.000000e+00> : vector<8x16x8xf32>
    %159 = tpu.matmul %157, %158, %cst_72 {dimension_numbers = #tpu.dot_dimension_numbers<[2], [2], [1], [1], [0, 0, 0, 1, 1, 1], [0], [0]>} : vector<8x16x16xbf16>, vector<8x8x16xbf16>, vector<8x16x8xf32> -> vector<8x16x8xf32>
    "tpu.trace_stop"() : () -> ()
    %160 = tpu.transpose %159, [0, 2, 1] : vector<8x16x8xf32> -> vector<8x8x16xf32>
    %161 = vector.shape_cast %160 : vector<8x8x16xf32> to vector<64x16xf32>
    %162 = tpu.transpose %161, [1, 0] : vector<64x16xf32> -> vector<16x64xf32>
    %163 = arith.truncf %162 : vector<16x64xf32> to vector<16x64xbf16>
    %c1_73 = arith.constant 1 : index
    %c0_74 = arith.constant 0 : index
    %c0_75 = arith.constant 0 : index
    %164 = vector.load %arg9[%c1_73, %c0_74, %c0_75] : memref<4x64x64xbf16, #tpu.memory_space<vmem>>, vector<1x64x64xbf16>
    %165 = vector.shape_cast %164 : vector<1x64x64xbf16> to vector<64x64xbf16>
    %cst_76 = arith.constant dense<0.000000e+00> : vector<16x64xf32>
    %166 = tpu.matmul %163, %165, %cst_76 {dimension_numbers = #tpu.dot_dimension_numbers<[1], [0], [0], [1], [0, 0, 1, 1], [], []>} : vector<16x64xbf16>, vector<64x64xbf16>, vector<16x64xf32> -> vector<16x64xf32>
    %c1_77 = arith.constant 1 : index
    %c0_78 = arith.constant 0 : index
    %c0_79 = arith.constant 0 : index
    %167 = vector.load %arg10[%c1_77, %c0_78, %c0_79] : memref<4x1x64xf32, #tpu.memory_space<vmem>>, vector<1x1x64xf32>
    %168 = vector.shape_cast %167 : vector<1x1x64xf32> to vector<1x64xf32>
    %169 = vector.broadcast %168 : vector<1x64xf32> to vector<16x64xf32>
    %170 = arith.addf %166, %169 : vector<16x64xf32>
    %171 = arith.addf %126, %170 : vector<16x64xf32>
    %c1_80 = arith.constant 1 : index
    %c0_81 = arith.constant 0 : index
    %c0_82 = arith.constant 0 : index
    %172 = vector.load %arg11[%c1_80, %c0_81, %c0_82] : memref<4x1x64xf32, #tpu.memory_space<vmem>>, vector<1x1x64xf32>
    %173 = vector.shape_cast %172 : vector<1x1x64xf32> to vector<1x64xf32>
    %c1_83 = arith.constant 1 : index
    %c0_84 = arith.constant 0 : index
    %c0_85 = arith.constant 0 : index
    %174 = vector.load %arg12[%c1_83, %c0_84, %c0_85] : memref<4x1x64xf32, #tpu.memory_space<vmem>>, vector<1x1x64xf32>
    %175 = vector.shape_cast %174 : vector<1x1x64xf32> to vector<1x64xf32>
    %cst_86 = arith.constant dense<0.000000e+00> : vector<16xf32>
    %176 = vector.multi_reduction <add>, %171, %cst_86 [1] : vector<16x64xf32> to vector<16xf32>
    %177 = vector.shape_cast %176 : vector<16xf32> to vector<16x1xf32>
    %cst_87 = arith.constant 6.400000e+01 : f32
    %178 = vector.broadcast %cst_87 : f32 to vector<16x1xf32>
    %179 = arith.divf %177, %178 : vector<16x1xf32>
    %180 = vector.broadcast %179 : vector<16x1xf32> to vector<16x64xf32>
    %181 = arith.subf %171, %180 : vector<16x64xf32>
    %182 = arith.mulf %181, %181 : vector<16x64xf32>
    %cst_88 = arith.constant dense<0.000000e+00> : vector<16xf32>
    %183 = vector.multi_reduction <add>, %182, %cst_88 [1] : vector<16x64xf32> to vector<16xf32>
    %184 = vector.shape_cast %183 : vector<16xf32> to vector<16x1xf32>
    %cst_89 = arith.constant 6.400000e+01 : f32
    %185 = vector.broadcast %cst_89 : f32 to vector<16x1xf32>
    %186 = arith.divf %184, %185 : vector<16x1xf32>
    %187 = vector.broadcast %179 : vector<16x1xf32> to vector<16x64xf32>
    %188 = arith.subf %171, %187 : vector<16x64xf32>
    %cst_90 = arith.constant 9.99999974E-6 : f32
    %189 = vector.broadcast %cst_90 : f32 to vector<16x1xf32>
    %190 = arith.addf %186, %189 : vector<16x1xf32>
    %191 = math.rsqrt %190 : vector<16x1xf32>
    %192 = vector.broadcast %191 : vector<16x1xf32> to vector<16x64xf32>
    %193 = arith.mulf %188, %192 : vector<16x64xf32>
    %194 = vector.broadcast %173 : vector<1x64xf32> to vector<16x64xf32>
    %195 = arith.mulf %193, %194 : vector<16x64xf32>
    %196 = vector.broadcast %175 : vector<1x64xf32> to vector<16x64xf32>
    %197 = arith.addf %195, %196 : vector<16x64xf32>
    %198 = arith.truncf %197 : vector<16x64xf32> to vector<16x64xbf16>
    %c1_91 = arith.constant 1 : index
    %c0_92 = arith.constant 0 : index
    %c0_93 = arith.constant 0 : index
    %199 = vector.load %arg13[%c1_91, %c0_92, %c0_93] : memref<4x64x256xbf16, #tpu.memory_space<vmem>>, vector<1x64x256xbf16>
    %200 = vector.shape_cast %199 : vector<1x64x256xbf16> to vector<64x256xbf16>
    %cst_94 = arith.constant dense<0.000000e+00> : vector<16x256xf32>
    %201 = tpu.matmul %198, %200, %cst_94 {dimension_numbers = #tpu.dot_dimension_numbers<[1], [0], [0], [1], [0, 0, 1, 1], [], []>} : vector<16x64xbf16>, vector<64x256xbf16>, vector<16x256xf32> -> vector<16x256xf32>
    %c1_95 = arith.constant 1 : index
    %c0_96 = arith.constant 0 : index
    %c0_97 = arith.constant 0 : index
    %202 = vector.load %arg14[%c1_95, %c0_96, %c0_97] : memref<4x1x256xf32, #tpu.memory_space<vmem>>, vector<1x1x256xf32>
    %203 = vector.shape_cast %202 : vector<1x1x256xf32> to vector<1x256xf32>
    %204 = vector.broadcast %203 : vector<1x256xf32> to vector<16x256xf32>
    %205 = arith.addf %201, %204 : vector<16x256xf32>
    %cst_98 = arith.constant 0.000000e+00 : f32
    %206 = vector.broadcast %cst_98 : f32 to vector<16x256xf32>
    %207 = arith.maximumf %205, %206 : vector<16x256xf32>
    %208 = arith.truncf %207 : vector<16x256xf32> to vector<16x256xbf16>
    %c1_99 = arith.constant 1 : index
    %c0_100 = arith.constant 0 : index
    %c0_101 = arith.constant 0 : index
    %209 = vector.load %arg15[%c1_99, %c0_100, %c0_101] : memref<4x256x64xbf16, #tpu.memory_space<vmem>>, vector<1x256x64xbf16>
    %210 = vector.shape_cast %209 : vector<1x256x64xbf16> to vector<256x64xbf16>
    %cst_102 = arith.constant dense<0.000000e+00> : vector<16x64xf32>
    %211 = tpu.matmul %208, %210, %cst_102 {dimension_numbers = #tpu.dot_dimension_numbers<[1], [0], [0], [1], [0, 0, 1, 1], [], []>} : vector<16x256xbf16>, vector<256x64xbf16>, vector<16x64xf32> -> vector<16x64xf32>
    %c1_103 = arith.constant 1 : index
    %c0_104 = arith.constant 0 : index
    %c0_105 = arith.constant 0 : index
    %212 = vector.load %arg16[%c1_103, %c0_104, %c0_105] : memref<4x1x64xf32, #tpu.memory_space<vmem>>, vector<1x1x64xf32>
    %213 = vector.shape_cast %212 : vector<1x1x64xf32> to vector<1x64xf32>
    %214 = vector.broadcast %213 : vector<1x64xf32> to vector<16x64xf32>
    %215 = arith.addf %211, %214 : vector<16x64xf32>
    %216 = arith.addf %197, %215 : vector<16x64xf32>
    %c1_106 = arith.constant 1 : index
    %c0_107 = arith.constant 0 : index
    %c0_108 = arith.constant 0 : index
    %217 = vector.load %arg17[%c1_106, %c0_107, %c0_108] : memref<4x1x64xf32, #tpu.memory_space<vmem>>, vector<1x1x64xf32>
    %218 = vector.shape_cast %217 : vector<1x1x64xf32> to vector<1x64xf32>
    %c1_109 = arith.constant 1 : index
    %c0_110 = arith.constant 0 : index
    %c0_111 = arith.constant 0 : index
    %219 = vector.load %arg18[%c1_109, %c0_110, %c0_111] : memref<4x1x64xf32, #tpu.memory_space<vmem>>, vector<1x1x64xf32>
    %220 = vector.shape_cast %219 : vector<1x1x64xf32> to vector<1x64xf32>
    %cst_112 = arith.constant dense<0.000000e+00> : vector<16xf32>
    %221 = vector.multi_reduction <add>, %216, %cst_112 [1] : vector<16x64xf32> to vector<16xf32>
    %222 = vector.shape_cast %221 : vector<16xf32> to vector<16x1xf32>
    %cst_113 = arith.constant 6.400000e+01 : f32
    %223 = vector.broadcast %cst_113 : f32 to vector<16x1xf32>
    %224 = arith.divf %222, %223 : vector<16x1xf32>
    %225 = vector.broadcast %224 : vector<16x1xf32> to vector<16x64xf32>
    %226 = arith.subf %216, %225 : vector<16x64xf32>
    %227 = arith.mulf %226, %226 : vector<16x64xf32>
    %cst_114 = arith.constant dense<0.000000e+00> : vector<16xf32>
    %228 = vector.multi_reduction <add>, %227, %cst_114 [1] : vector<16x64xf32> to vector<16xf32>
    %229 = vector.shape_cast %228 : vector<16xf32> to vector<16x1xf32>
    %cst_115 = arith.constant 6.400000e+01 : f32
    %230 = vector.broadcast %cst_115 : f32 to vector<16x1xf32>
    %231 = arith.divf %229, %230 : vector<16x1xf32>
    %232 = vector.broadcast %224 : vector<16x1xf32> to vector<16x64xf32>
    %233 = arith.subf %216, %232 : vector<16x64xf32>
    %cst_116 = arith.constant 9.99999974E-6 : f32
    %234 = vector.broadcast %cst_116 : f32 to vector<16x1xf32>
    %235 = arith.addf %231, %234 : vector<16x1xf32>
    %236 = math.rsqrt %235 : vector<16x1xf32>
    %237 = vector.broadcast %236 : vector<16x1xf32> to vector<16x64xf32>
    %238 = arith.mulf %233, %237 : vector<16x64xf32>
    %239 = vector.broadcast %218 : vector<1x64xf32> to vector<16x64xf32>
    %240 = arith.mulf %238, %239 : vector<16x64xf32>
    %241 = vector.broadcast %220 : vector<1x64xf32> to vector<16x64xf32>
    %242 = arith.addf %240, %241 : vector<16x64xf32>
    %243 = arith.truncf %242 : vector<16x64xf32> to vector<16x64xbf16>
    %c2 = arith.constant 2 : index
    %c0_117 = arith.constant 0 : index
    %c0_118 = arith.constant 0 : index
    %244 = vector.load %arg7[%c2, %c0_117, %c0_118] : memref<4x64x192xbf16, #tpu.memory_space<vmem>>, vector<1x64x192xbf16>
    %245 = vector.shape_cast %244 : vector<1x64x192xbf16> to vector<64x192xbf16>
    %cst_119 = arith.constant dense<0.000000e+00> : vector<16x192xf32>
    %246 = tpu.matmul %243, %245, %cst_119 {dimension_numbers = #tpu.dot_dimension_numbers<[1], [0], [0], [1], [0, 0, 1, 1], [], []>} : vector<16x64xbf16>, vector<64x192xbf16>, vector<16x192xf32> -> vector<16x192xf32>
    %c2_120 = arith.constant 2 : index
    %c0_121 = arith.constant 0 : index
    %c0_122 = arith.constant 0 : index
    %247 = vector.load %arg8[%c2_120, %c0_121, %c0_122] : memref<4x1x192xf32, #tpu.memory_space<vmem>>, vector<1x1x192xf32>
    %248 = vector.shape_cast %247 : vector<1x1x192xf32> to vector<1x192xf32>
    %249 = vector.broadcast %248 : vector<1x192xf32> to vector<16x192xf32>
    %250 = arith.addf %246, %249 : vector<16x192xf32>
    %251 = tpu.transpose %250, [1, 0] : vector<16x192xf32> -> vector<192x16xf32>
    %252 = vector.extract_strided_slice %251 {offsets = [0, 0], sizes = [64, 16], strides = [1, 1]} : vector<192x16xf32> to vector<64x16xf32>
    %253 = vector.shape_cast %252 : vector<64x16xf32> to vector<8x8x16xf32>
    %254 = vector.extract_strided_slice %251 {offsets = [64, 0], sizes = [64, 16], strides = [1, 1]} : vector<192x16xf32> to vector<64x16xf32>
    %255 = vector.shape_cast %254 : vector<64x16xf32> to vector<8x8x16xf32>
    %256 = vector.extract_strided_slice %251 {offsets = [128, 0], sizes = [64, 16], strides = [1, 1]} : vector<192x16xf32> to vector<64x16xf32>
    %257 = vector.shape_cast %256 : vector<64x16xf32> to vector<8x8x16xf32>
    %258 = arith.truncf %253 : vector<8x8x16xf32> to vector<8x8x16xbf16>
    %259 = arith.truncf %255 : vector<8x8x16xf32> to vector<8x8x16xbf16>
    "tpu.trace_start"() <{level = 10 : i32, message = "hdq,hdk->hqk"}> : () -> ()
    %cst_123 = arith.constant dense<0.000000e+00> : vector<8x16x16xf32>
    %260 = tpu.matmul %258, %259, %cst_123 {dimension_numbers = #tpu.dot_dimension_numbers<[1], [1], [2], [2], [0, 0, 0, 2, 1, 2], [0], [0]>} : vector<8x8x16xbf16>, vector<8x8x16xbf16>, vector<8x16x16xf32> -> vector<8x16x16xf32>
    "tpu.trace_stop"() : () -> ()
    %261 = vector.shape_cast %10 : vector<16x16xf32> to vector<1x16x16xf32>
    %262 = vector.broadcast %261 : vector<1x16x16xf32> to vector<8x16x16xf32>
    %263 = arith.addf %260, %262 : vector<8x16x16xf32>
    %cst_124 = arith.constant dense<0xFF800000> : vector<8x16xf32>
    %264 = vector.multi_reduction <maximumf>, %263, %cst_124 [2] : vector<8x16x16xf32> to vector<8x16xf32>
    %265 = vector.shape_cast %264 : vector<8x16xf32> to vector<8x16x1xf32>
    %266 = vector.broadcast %265 : vector<8x16x1xf32> to vector<8x16x16xf32>
    %267 = arith.subf %263, %266 : vector<8x16x16xf32>
    %268 = math.exp %267 : vector<8x16x16xf32>
    %cst_125 = arith.constant dense<0.000000e+00> : vector<8x16xf32>
    %269 = vector.multi_reduction <add>, %268, %cst_125 [2] : vector<8x16x16xf32> to vector<8x16xf32>
    %270 = vector.shape_cast %269 : vector<8x16xf32> to vector<8x16x1xf32>
    %271 = vector.broadcast %270 : vector<8x16x1xf32> to vector<8x16x16xf32>
    %272 = arith.divf %268, %271 : vector<8x16x16xf32>
    %273 = arith.truncf %272 : vector<8x16x16xf32> to vector<8x16x16xbf16>
    %274 = arith.truncf %257 : vector<8x8x16xf32> to vector<8x8x16xbf16>
    "tpu.trace_start"() <{level = 10 : i32, message = "hqk,hdk->hqd"}> : () -> ()
    %cst_126 = arith.constant dense<0.000000e+00> : vector<8x16x8xf32>
    %275 = tpu.matmul %273, %274, %cst_126 {dimension_numbers = #tpu.dot_dimension_numbers<[2], [2], [1], [1], [0, 0, 0, 1, 1, 1], [0], [0]>} : vector<8x16x16xbf16>, vector<8x8x16xbf16>, vector<8x16x8xf32> -> vector<8x16x8xf32>
    "tpu.trace_stop"() : () -> ()
    %276 = tpu.transpose %275, [0, 2, 1] : vector<8x16x8xf32> -> vector<8x8x16xf32>
    %277 = vector.shape_cast %276 : vector<8x8x16xf32> to vector<64x16xf32>
    %278 = tpu.transpose %277, [1, 0] : vector<64x16xf32> -> vector<16x64xf32>
    %279 = arith.truncf %278 : vector<16x64xf32> to vector<16x64xbf16>
    %c2_127 = arith.constant 2 : index
    %c0_128 = arith.constant 0 : index
    %c0_129 = arith.constant 0 : index
    %280 = vector.load %arg9[%c2_127, %c0_128, %c0_129] : memref<4x64x64xbf16, #tpu.memory_space<vmem>>, vector<1x64x64xbf16>
    %281 = vector.shape_cast %280 : vector<1x64x64xbf16> to vector<64x64xbf16>
    %cst_130 = arith.constant dense<0.000000e+00> : vector<16x64xf32>
    %282 = tpu.matmul %279, %281, %cst_130 {dimension_numbers = #tpu.dot_dimension_numbers<[1], [0], [0], [1], [0, 0, 1, 1], [], []>} : vector<16x64xbf16>, vector<64x64xbf16>, vector<16x64xf32> -> vector<16x64xf32>
    %c2_131 = arith.constant 2 : index
    %c0_132 = arith.constant 0 : index
    %c0_133 = arith.constant 0 : index
    %283 = vector.load %arg10[%c2_131, %c0_132, %c0_133] : memref<4x1x64xf32, #tpu.memory_space<vmem>>, vector<1x1x64xf32>
    %284 = vector.shape_cast %283 : vector<1x1x64xf32> to vector<1x64xf32>
    %285 = vector.broadcast %284 : vector<1x64xf32> to vector<16x64xf32>
    %286 = arith.addf %282, %285 : vector<16x64xf32>
    %287 = arith.addf %242, %286 : vector<16x64xf32>
    %c2_134 = arith.constant 2 : index
    %c0_135 = arith.constant 0 : index
    %c0_136 = arith.constant 0 : index
    %288 = vector.load %arg11[%c2_134, %c0_135, %c0_136] : memref<4x1x64xf32, #tpu.memory_space<vmem>>, vector<1x1x64xf32>
    %289 = vector.shape_cast %288 : vector<1x1x64xf32> to vector<1x64xf32>
    %c2_137 = arith.constant 2 : index
    %c0_138 = arith.constant 0 : index
    %c0_139 = arith.constant 0 : index
    %290 = vector.load %arg12[%c2_137, %c0_138, %c0_139] : memref<4x1x64xf32, #tpu.memory_space<vmem>>, vector<1x1x64xf32>
    %291 = vector.shape_cast %290 : vector<1x1x64xf32> to vector<1x64xf32>
    %cst_140 = arith.constant dense<0.000000e+00> : vector<16xf32>
    %292 = vector.multi_reduction <add>, %287, %cst_140 [1] : vector<16x64xf32> to vector<16xf32>
    %293 = vector.shape_cast %292 : vector<16xf32> to vector<16x1xf32>
    %cst_141 = arith.constant 6.400000e+01 : f32
    %294 = vector.broadcast %cst_141 : f32 to vector<16x1xf32>
    %295 = arith.divf %293, %294 : vector<16x1xf32>
    %296 = vector.broadcast %295 : vector<16x1xf32> to vector<16x64xf32>
    %297 = arith.subf %287, %296 : vector<16x64xf32>
    %298 = arith.mulf %297, %297 : vector<16x64xf32>
    %cst_142 = arith.constant dense<0.000000e+00> : vector<16xf32>
    %299 = vector.multi_reduction <add>, %298, %cst_142 [1] : vector<16x64xf32> to vector<16xf32>
    %300 = vector.shape_cast %299 : vector<16xf32> to vector<16x1xf32>
    %cst_143 = arith.constant 6.400000e+01 : f32
    %301 = vector.broadcast %cst_143 : f32 to vector<16x1xf32>
    %302 = arith.divf %300, %301 : vector<16x1xf32>
    %303 = vector.broadcast %295 : vector<16x1xf32> to vector<16x64xf32>
    %304 = arith.subf %287, %303 : vector<16x64xf32>
    %cst_144 = arith.constant 9.99999974E-6 : f32
    %305 = vector.broadcast %cst_144 : f32 to vector<16x1xf32>
    %306 = arith.addf %302, %305 : vector<16x1xf32>
    %307 = math.rsqrt %306 : vector<16x1xf32>
    %308 = vector.broadcast %307 : vector<16x1xf32> to vector<16x64xf32>
    %309 = arith.mulf %304, %308 : vector<16x64xf32>
    %310 = vector.broadcast %289 : vector<1x64xf32> to vector<16x64xf32>
    %311 = arith.mulf %309, %310 : vector<16x64xf32>
    %312 = vector.broadcast %291 : vector<1x64xf32> to vector<16x64xf32>
    %313 = arith.addf %311, %312 : vector<16x64xf32>
    %314 = arith.truncf %313 : vector<16x64xf32> to vector<16x64xbf16>
    %c2_145 = arith.constant 2 : index
    %c0_146 = arith.constant 0 : index
    %c0_147 = arith.constant 0 : index
    %315 = vector.load %arg13[%c2_145, %c0_146, %c0_147] : memref<4x64x256xbf16, #tpu.memory_space<vmem>>, vector<1x64x256xbf16>
    %316 = vector.shape_cast %315 : vector<1x64x256xbf16> to vector<64x256xbf16>
    %cst_148 = arith.constant dense<0.000000e+00> : vector<16x256xf32>
    %317 = tpu.matmul %314, %316, %cst_148 {dimension_numbers = #tpu.dot_dimension_numbers<[1], [0], [0], [1], [0, 0, 1, 1], [], []>} : vector<16x64xbf16>, vector<64x256xbf16>, vector<16x256xf32> -> vector<16x256xf32>
    %c2_149 = arith.constant 2 : index
    %c0_150 = arith.constant 0 : index
    %c0_151 = arith.constant 0 : index
    %318 = vector.load %arg14[%c2_149, %c0_150, %c0_151] : memref<4x1x256xf32, #tpu.memory_space<vmem>>, vector<1x1x256xf32>
    %319 = vector.shape_cast %318 : vector<1x1x256xf32> to vector<1x256xf32>
    %320 = vector.broadcast %319 : vector<1x256xf32> to vector<16x256xf32>
    %321 = arith.addf %317, %320 : vector<16x256xf32>
    %cst_152 = arith.constant 0.000000e+00 : f32
    %322 = vector.broadcast %cst_152 : f32 to vector<16x256xf32>
    %323 = arith.maximumf %321, %322 : vector<16x256xf32>
    %324 = arith.truncf %323 : vector<16x256xf32> to vector<16x256xbf16>
    %c2_153 = arith.constant 2 : index
    %c0_154 = arith.constant 0 : index
    %c0_155 = arith.constant 0 : index
    %325 = vector.load %arg15[%c2_153, %c0_154, %c0_155] : memref<4x256x64xbf16, #tpu.memory_space<vmem>>, vector<1x256x64xbf16>
    %326 = vector.shape_cast %325 : vector<1x256x64xbf16> to vector<256x64xbf16>
    %cst_156 = arith.constant dense<0.000000e+00> : vector<16x64xf32>
    %327 = tpu.matmul %324, %326, %cst_156 {dimension_numbers = #tpu.dot_dimension_numbers<[1], [0], [0], [1], [0, 0, 1, 1], [], []>} : vector<16x256xbf16>, vector<256x64xbf16>, vector<16x64xf32> -> vector<16x64xf32>
    %c2_157 = arith.constant 2 : index
    %c0_158 = arith.constant 0 : index
    %c0_159 = arith.constant 0 : index
    %328 = vector.load %arg16[%c2_157, %c0_158, %c0_159] : memref<4x1x64xf32, #tpu.memory_space<vmem>>, vector<1x1x64xf32>
    %329 = vector.shape_cast %328 : vector<1x1x64xf32> to vector<1x64xf32>
    %330 = vector.broadcast %329 : vector<1x64xf32> to vector<16x64xf32>
    %331 = arith.addf %327, %330 : vector<16x64xf32>
    %332 = arith.addf %313, %331 : vector<16x64xf32>
    %c2_160 = arith.constant 2 : index
    %c0_161 = arith.constant 0 : index
    %c0_162 = arith.constant 0 : index
    %333 = vector.load %arg17[%c2_160, %c0_161, %c0_162] : memref<4x1x64xf32, #tpu.memory_space<vmem>>, vector<1x1x64xf32>
    %334 = vector.shape_cast %333 : vector<1x1x64xf32> to vector<1x64xf32>
    %c2_163 = arith.constant 2 : index
    %c0_164 = arith.constant 0 : index
    %c0_165 = arith.constant 0 : index
    %335 = vector.load %arg18[%c2_163, %c0_164, %c0_165] : memref<4x1x64xf32, #tpu.memory_space<vmem>>, vector<1x1x64xf32>
    %336 = vector.shape_cast %335 : vector<1x1x64xf32> to vector<1x64xf32>
    %cst_166 = arith.constant dense<0.000000e+00> : vector<16xf32>
    %337 = vector.multi_reduction <add>, %332, %cst_166 [1] : vector<16x64xf32> to vector<16xf32>
    %338 = vector.shape_cast %337 : vector<16xf32> to vector<16x1xf32>
    %cst_167 = arith.constant 6.400000e+01 : f32
    %339 = vector.broadcast %cst_167 : f32 to vector<16x1xf32>
    %340 = arith.divf %338, %339 : vector<16x1xf32>
    %341 = vector.broadcast %340 : vector<16x1xf32> to vector<16x64xf32>
    %342 = arith.subf %332, %341 : vector<16x64xf32>
    %343 = arith.mulf %342, %342 : vector<16x64xf32>
    %cst_168 = arith.constant dense<0.000000e+00> : vector<16xf32>
    %344 = vector.multi_reduction <add>, %343, %cst_168 [1] : vector<16x64xf32> to vector<16xf32>
    %345 = vector.shape_cast %344 : vector<16xf32> to vector<16x1xf32>
    %cst_169 = arith.constant 6.400000e+01 : f32
    %346 = vector.broadcast %cst_169 : f32 to vector<16x1xf32>
    %347 = arith.divf %345, %346 : vector<16x1xf32>
    %348 = vector.broadcast %340 : vector<16x1xf32> to vector<16x64xf32>
    %349 = arith.subf %332, %348 : vector<16x64xf32>
    %cst_170 = arith.constant 9.99999974E-6 : f32
    %350 = vector.broadcast %cst_170 : f32 to vector<16x1xf32>
    %351 = arith.addf %347, %350 : vector<16x1xf32>
    %352 = math.rsqrt %351 : vector<16x1xf32>
    %353 = vector.broadcast %352 : vector<16x1xf32> to vector<16x64xf32>
    %354 = arith.mulf %349, %353 : vector<16x64xf32>
    %355 = vector.broadcast %334 : vector<1x64xf32> to vector<16x64xf32>
    %356 = arith.mulf %354, %355 : vector<16x64xf32>
    %357 = vector.broadcast %336 : vector<1x64xf32> to vector<16x64xf32>
    %358 = arith.addf %356, %357 : vector<16x64xf32>
    %359 = arith.truncf %358 : vector<16x64xf32> to vector<16x64xbf16>
    %c3 = arith.constant 3 : index
    %c0_171 = arith.constant 0 : index
    %c0_172 = arith.constant 0 : index
    %360 = vector.load %arg7[%c3, %c0_171, %c0_172] : memref<4x64x192xbf16, #tpu.memory_space<vmem>>, vector<1x64x192xbf16>
    %361 = vector.shape_cast %360 : vector<1x64x192xbf16> to vector<64x192xbf16>
    %cst_173 = arith.constant dense<0.000000e+00> : vector<16x192xf32>
    %362 = tpu.matmul %359, %361, %cst_173 {dimension_numbers = #tpu.dot_dimension_numbers<[1], [0], [0], [1], [0, 0, 1, 1], [], []>} : vector<16x64xbf16>, vector<64x192xbf16>, vector<16x192xf32> -> vector<16x192xf32>
    %c3_174 = arith.constant 3 : index
    %c0_175 = arith.constant 0 : index
    %c0_176 = arith.constant 0 : index
    %363 = vector.load %arg8[%c3_174, %c0_175, %c0_176] : memref<4x1x192xf32, #tpu.memory_space<vmem>>, vector<1x1x192xf32>
    %364 = vector.shape_cast %363 : vector<1x1x192xf32> to vector<1x192xf32>
    %365 = vector.broadcast %364 : vector<1x192xf32> to vector<16x192xf32>
    %366 = arith.addf %362, %365 : vector<16x192xf32>
    %367 = tpu.transpose %366, [1, 0] : vector<16x192xf32> -> vector<192x16xf32>
    %368 = vector.extract_strided_slice %367 {offsets = [0, 0], sizes = [64, 16], strides = [1, 1]} : vector<192x16xf32> to vector<64x16xf32>
    %369 = vector.shape_cast %368 : vector<64x16xf32> to vector<8x8x16xf32>
    %370 = vector.extract_strided_slice %367 {offsets = [64, 0], sizes = [64, 16], strides = [1, 1]} : vector<192x16xf32> to vector<64x16xf32>
    %371 = vector.shape_cast %370 : vector<64x16xf32> to vector<8x8x16xf32>
    %372 = vector.extract_strided_slice %367 {offsets = [128, 0], sizes = [64, 16], strides = [1, 1]} : vector<192x16xf32> to vector<64x16xf32>
    %373 = vector.shape_cast %372 : vector<64x16xf32> to vector<8x8x16xf32>
    %374 = arith.truncf %369 : vector<8x8x16xf32> to vector<8x8x16xbf16>
    %375 = arith.truncf %371 : vector<8x8x16xf32> to vector<8x8x16xbf16>
    "tpu.trace_start"() <{level = 10 : i32, message = "hdq,hdk->hqk"}> : () -> ()
    %cst_177 = arith.constant dense<0.000000e+00> : vector<8x16x16xf32>
    %376 = tpu.matmul %374, %375, %cst_177 {dimension_numbers = #tpu.dot_dimension_numbers<[1], [1], [2], [2], [0, 0, 0, 2, 1, 2], [0], [0]>} : vector<8x8x16xbf16>, vector<8x8x16xbf16>, vector<8x16x16xf32> -> vector<8x16x16xf32>
    "tpu.trace_stop"() : () -> ()
    %377 = vector.shape_cast %10 : vector<16x16xf32> to vector<1x16x16xf32>
    %378 = vector.broadcast %377 : vector<1x16x16xf32> to vector<8x16x16xf32>
    %379 = arith.addf %376, %378 : vector<8x16x16xf32>
    %cst_178 = arith.constant dense<0xFF800000> : vector<8x16xf32>
    %380 = vector.multi_reduction <maximumf>, %379, %cst_178 [2] : vector<8x16x16xf32> to vector<8x16xf32>
    %381 = vector.shape_cast %380 : vector<8x16xf32> to vector<8x16x1xf32>
    %382 = vector.broadcast %381 : vector<8x16x1xf32> to vector<8x16x16xf32>
    %383 = arith.subf %379, %382 : vector<8x16x16xf32>
    %384 = math.exp %383 : vector<8x16x16xf32>
    %cst_179 = arith.constant dense<0.000000e+00> : vector<8x16xf32>
    %385 = vector.multi_reduction <add>, %384, %cst_179 [2] : vector<8x16x16xf32> to vector<8x16xf32>
    %386 = vector.shape_cast %385 : vector<8x16xf32> to vector<8x16x1xf32>
    %387 = vector.broadcast %386 : vector<8x16x1xf32> to vector<8x16x16xf32>
    %388 = arith.divf %384, %387 : vector<8x16x16xf32>
    %389 = arith.truncf %388 : vector<8x16x16xf32> to vector<8x16x16xbf16>
    %390 = arith.truncf %373 : vector<8x8x16xf32> to vector<8x8x16xbf16>
    "tpu.trace_start"() <{level = 10 : i32, message = "hqk,hdk->hqd"}> : () -> ()
    %cst_180 = arith.constant dense<0.000000e+00> : vector<8x16x8xf32>
    %391 = tpu.matmul %389, %390, %cst_180 {dimension_numbers = #tpu.dot_dimension_numbers<[2], [2], [1], [1], [0, 0, 0, 1, 1, 1], [0], [0]>} : vector<8x16x16xbf16>, vector<8x8x16xbf16>, vector<8x16x8xf32> -> vector<8x16x8xf32>
    "tpu.trace_stop"() : () -> ()
    %392 = tpu.transpose %391, [0, 2, 1] : vector<8x16x8xf32> -> vector<8x8x16xf32>
    %393 = vector.shape_cast %392 : vector<8x8x16xf32> to vector<64x16xf32>
    %394 = tpu.transpose %393, [1, 0] : vector<64x16xf32> -> vector<16x64xf32>
    %395 = arith.truncf %394 : vector<16x64xf32> to vector<16x64xbf16>
    %c3_181 = arith.constant 3 : index
    %c0_182 = arith.constant 0 : index
    %c0_183 = arith.constant 0 : index
    %396 = vector.load %arg9[%c3_181, %c0_182, %c0_183] : memref<4x64x64xbf16, #tpu.memory_space<vmem>>, vector<1x64x64xbf16>
    %397 = vector.shape_cast %396 : vector<1x64x64xbf16> to vector<64x64xbf16>
    %cst_184 = arith.constant dense<0.000000e+00> : vector<16x64xf32>
    %398 = tpu.matmul %395, %397, %cst_184 {dimension_numbers = #tpu.dot_dimension_numbers<[1], [0], [0], [1], [0, 0, 1, 1], [], []>} : vector<16x64xbf16>, vector<64x64xbf16>, vector<16x64xf32> -> vector<16x64xf32>
    %c3_185 = arith.constant 3 : index
    %c0_186 = arith.constant 0 : index
    %c0_187 = arith.constant 0 : index
    %399 = vector.load %arg10[%c3_185, %c0_186, %c0_187] : memref<4x1x64xf32, #tpu.memory_space<vmem>>, vector<1x1x64xf32>
    %400 = vector.shape_cast %399 : vector<1x1x64xf32> to vector<1x64xf32>
    %401 = vector.broadcast %400 : vector<1x64xf32> to vector<16x64xf32>
    %402 = arith.addf %398, %401 : vector<16x64xf32>
    %403 = arith.addf %358, %402 : vector<16x64xf32>
    %c3_188 = arith.constant 3 : index
    %c0_189 = arith.constant 0 : index
    %c0_190 = arith.constant 0 : index
    %404 = vector.load %arg11[%c3_188, %c0_189, %c0_190] : memref<4x1x64xf32, #tpu.memory_space<vmem>>, vector<1x1x64xf32>
    %405 = vector.shape_cast %404 : vector<1x1x64xf32> to vector<1x64xf32>
    %c3_191 = arith.constant 3 : index
    %c0_192 = arith.constant 0 : index
    %c0_193 = arith.constant 0 : index
    %406 = vector.load %arg12[%c3_191, %c0_192, %c0_193] : memref<4x1x64xf32, #tpu.memory_space<vmem>>, vector<1x1x64xf32>
    %407 = vector.shape_cast %406 : vector<1x1x64xf32> to vector<1x64xf32>
    %cst_194 = arith.constant dense<0.000000e+00> : vector<16xf32>
    %408 = vector.multi_reduction <add>, %403, %cst_194 [1] : vector<16x64xf32> to vector<16xf32>
    %409 = vector.shape_cast %408 : vector<16xf32> to vector<16x1xf32>
    %cst_195 = arith.constant 6.400000e+01 : f32
    %410 = vector.broadcast %cst_195 : f32 to vector<16x1xf32>
    %411 = arith.divf %409, %410 : vector<16x1xf32>
    %412 = vector.broadcast %411 : vector<16x1xf32> to vector<16x64xf32>
    %413 = arith.subf %403, %412 : vector<16x64xf32>
    %414 = arith.mulf %413, %413 : vector<16x64xf32>
    %cst_196 = arith.constant dense<0.000000e+00> : vector<16xf32>
    %415 = vector.multi_reduction <add>, %414, %cst_196 [1] : vector<16x64xf32> to vector<16xf32>
    %416 = vector.shape_cast %415 : vector<16xf32> to vector<16x1xf32>
    %cst_197 = arith.constant 6.400000e+01 : f32
    %417 = vector.broadcast %cst_197 : f32 to vector<16x1xf32>
    %418 = arith.divf %416, %417 : vector<16x1xf32>
    %419 = vector.broadcast %411 : vector<16x1xf32> to vector<16x64xf32>
    %420 = arith.subf %403, %419 : vector<16x64xf32>
    %cst_198 = arith.constant 9.99999974E-6 : f32
    %421 = vector.broadcast %cst_198 : f32 to vector<16x1xf32>
    %422 = arith.addf %418, %421 : vector<16x1xf32>
    %423 = math.rsqrt %422 : vector<16x1xf32>
    %424 = vector.broadcast %423 : vector<16x1xf32> to vector<16x64xf32>
    %425 = arith.mulf %420, %424 : vector<16x64xf32>
    %426 = vector.broadcast %405 : vector<1x64xf32> to vector<16x64xf32>
    %427 = arith.mulf %425, %426 : vector<16x64xf32>
    %428 = vector.broadcast %407 : vector<1x64xf32> to vector<16x64xf32>
    %429 = arith.addf %427, %428 : vector<16x64xf32>
    %430 = arith.truncf %429 : vector<16x64xf32> to vector<16x64xbf16>
    %c3_199 = arith.constant 3 : index
    %c0_200 = arith.constant 0 : index
    %c0_201 = arith.constant 0 : index
    %431 = vector.load %arg13[%c3_199, %c0_200, %c0_201] : memref<4x64x256xbf16, #tpu.memory_space<vmem>>, vector<1x64x256xbf16>
    %432 = vector.shape_cast %431 : vector<1x64x256xbf16> to vector<64x256xbf16>
    %cst_202 = arith.constant dense<0.000000e+00> : vector<16x256xf32>
    %433 = tpu.matmul %430, %432, %cst_202 {dimension_numbers = #tpu.dot_dimension_numbers<[1], [0], [0], [1], [0, 0, 1, 1], [], []>} : vector<16x64xbf16>, vector<64x256xbf16>, vector<16x256xf32> -> vector<16x256xf32>
    %c3_203 = arith.constant 3 : index
    %c0_204 = arith.constant 0 : index
    %c0_205 = arith.constant 0 : index
    %434 = vector.load %arg14[%c3_203, %c0_204, %c0_205] : memref<4x1x256xf32, #tpu.memory_space<vmem>>, vector<1x1x256xf32>
    %435 = vector.shape_cast %434 : vector<1x1x256xf32> to vector<1x256xf32>
    %436 = vector.broadcast %435 : vector<1x256xf32> to vector<16x256xf32>
    %437 = arith.addf %433, %436 : vector<16x256xf32>
    %cst_206 = arith.constant 0.000000e+00 : f32
    %438 = vector.broadcast %cst_206 : f32 to vector<16x256xf32>
    %439 = arith.maximumf %437, %438 : vector<16x256xf32>
    %440 = arith.truncf %439 : vector<16x256xf32> to vector<16x256xbf16>
    %c3_207 = arith.constant 3 : index
    %c0_208 = arith.constant 0 : index
    %c0_209 = arith.constant 0 : index
    %441 = vector.load %arg15[%c3_207, %c0_208, %c0_209] : memref<4x256x64xbf16, #tpu.memory_space<vmem>>, vector<1x256x64xbf16>
    %442 = vector.shape_cast %441 : vector<1x256x64xbf16> to vector<256x64xbf16>
    %cst_210 = arith.constant dense<0.000000e+00> : vector<16x64xf32>
    %443 = tpu.matmul %440, %442, %cst_210 {dimension_numbers = #tpu.dot_dimension_numbers<[1], [0], [0], [1], [0, 0, 1, 1], [], []>} : vector<16x256xbf16>, vector<256x64xbf16>, vector<16x64xf32> -> vector<16x64xf32>
    %c3_211 = arith.constant 3 : index
    %c0_212 = arith.constant 0 : index
    %c0_213 = arith.constant 0 : index
    %444 = vector.load %arg16[%c3_211, %c0_212, %c0_213] : memref<4x1x64xf32, #tpu.memory_space<vmem>>, vector<1x1x64xf32>
    %445 = vector.shape_cast %444 : vector<1x1x64xf32> to vector<1x64xf32>
    %446 = vector.broadcast %445 : vector<1x64xf32> to vector<16x64xf32>
    %447 = arith.addf %443, %446 : vector<16x64xf32>
    %448 = arith.addf %429, %447 : vector<16x64xf32>
    %c3_214 = arith.constant 3 : index
    %c0_215 = arith.constant 0 : index
    %c0_216 = arith.constant 0 : index
    %449 = vector.load %arg17[%c3_214, %c0_215, %c0_216] : memref<4x1x64xf32, #tpu.memory_space<vmem>>, vector<1x1x64xf32>
    %450 = vector.shape_cast %449 : vector<1x1x64xf32> to vector<1x64xf32>
    %c3_217 = arith.constant 3 : index
    %c0_218 = arith.constant 0 : index
    %c0_219 = arith.constant 0 : index
    %451 = vector.load %arg18[%c3_217, %c0_218, %c0_219] : memref<4x1x64xf32, #tpu.memory_space<vmem>>, vector<1x1x64xf32>
    %452 = vector.shape_cast %451 : vector<1x1x64xf32> to vector<1x64xf32>
    %cst_220 = arith.constant dense<0.000000e+00> : vector<16xf32>
    %453 = vector.multi_reduction <add>, %448, %cst_220 [1] : vector<16x64xf32> to vector<16xf32>
    %454 = vector.shape_cast %453 : vector<16xf32> to vector<16x1xf32>
    %cst_221 = arith.constant 6.400000e+01 : f32
    %455 = vector.broadcast %cst_221 : f32 to vector<16x1xf32>
    %456 = arith.divf %454, %455 : vector<16x1xf32>
    %457 = vector.broadcast %456 : vector<16x1xf32> to vector<16x64xf32>
    %458 = arith.subf %448, %457 : vector<16x64xf32>
    %459 = arith.mulf %458, %458 : vector<16x64xf32>
    %cst_222 = arith.constant dense<0.000000e+00> : vector<16xf32>
    %460 = vector.multi_reduction <add>, %459, %cst_222 [1] : vector<16x64xf32> to vector<16xf32>
    %461 = vector.shape_cast %460 : vector<16xf32> to vector<16x1xf32>
    %cst_223 = arith.constant 6.400000e+01 : f32
    %462 = vector.broadcast %cst_223 : f32 to vector<16x1xf32>
    %463 = arith.divf %461, %462 : vector<16x1xf32>
    %464 = vector.broadcast %456 : vector<16x1xf32> to vector<16x64xf32>
    %465 = arith.subf %448, %464 : vector<16x64xf32>
    %cst_224 = arith.constant 9.99999974E-6 : f32
    %466 = vector.broadcast %cst_224 : f32 to vector<16x1xf32>
    %467 = arith.addf %463, %466 : vector<16x1xf32>
    %468 = math.rsqrt %467 : vector<16x1xf32>
    %469 = vector.broadcast %468 : vector<16x1xf32> to vector<16x64xf32>
    %470 = arith.mulf %465, %469 : vector<16x64xf32>
    %471 = vector.broadcast %450 : vector<1x64xf32> to vector<16x64xf32>
    %472 = arith.mulf %470, %471 : vector<16x64xf32>
    %473 = vector.broadcast %452 : vector<1x64xf32> to vector<16x64xf32>
    %474 = arith.addf %472, %473 : vector<16x64xf32>
    %c0_225 = arith.constant 0 : index
    %c0_226 = arith.constant 0 : index
    %475 = vector.load %arg2[%c0_225, %c0_226] : memref<2x30xf32, #tpu.memory_space<vmem>>, vector<2x30xf32>
    %476 = arith.truncf %475 : vector<2x30xf32> to vector<2x30xbf16>
    %c0_227 = arith.constant 0 : index
    %c0_228 = arith.constant 0 : index
    %477 = vector.load %arg19[%c0_227, %c0_228] : memref<30x64xbf16, #tpu.memory_space<vmem>>, vector<30x64xbf16>
    %cst_229 = arith.constant dense<0.000000e+00> : vector<2x64xf32>
    %478 = tpu.matmul %476, %477, %cst_229 {dimension_numbers = #tpu.dot_dimension_numbers<[1], [0], [0], [1], [0, 0, 1, 1], [], []>} : vector<2x30xbf16>, vector<30x64xbf16>, vector<2x64xf32> -> vector<2x64xf32>
    %c0_230 = arith.constant 0 : index
    %c0_231 = arith.constant 0 : index
    %479 = vector.load %arg20[%c0_230, %c0_231] : memref<1x64xf32, #tpu.memory_space<vmem>>, vector<1x64xf32>
    %480 = vector.broadcast %479 : vector<1x64xf32> to vector<2x64xf32>
    %481 = arith.addf %478, %480 : vector<2x64xf32>
    %cst_232 = arith.constant 0.000000e+00 : f32
    %482 = vector.broadcast %cst_232 : f32 to vector<2x64xf32>
    %483 = arith.maximumf %481, %482 : vector<2x64xf32>
    %484 = arith.truncf %483 : vector<2x64xf32> to vector<2x64xbf16>
    %c0_233 = arith.constant 0 : index
    %c0_234 = arith.constant 0 : index
    %485 = vector.load %arg21[%c0_233, %c0_234] : memref<64x64xbf16, #tpu.memory_space<vmem>>, vector<64x64xbf16>
    %cst_235 = arith.constant dense<0.000000e+00> : vector<2x64xf32>
    %486 = tpu.matmul %484, %485, %cst_235 {dimension_numbers = #tpu.dot_dimension_numbers<[1], [0], [0], [1], [0, 0, 1, 1], [], []>} : vector<2x64xbf16>, vector<64x64xbf16>, vector<2x64xf32> -> vector<2x64xf32>
    %c0_236 = arith.constant 0 : index
    %c0_237 = arith.constant 0 : index
    %487 = vector.load %arg22[%c0_236, %c0_237] : memref<1x64xf32, #tpu.memory_space<vmem>>, vector<1x64xf32>
    %488 = vector.broadcast %487 : vector<1x64xf32> to vector<2x64xf32>
    %489 = arith.addf %486, %488 : vector<2x64xf32>
    %cst_238 = arith.constant 0.000000e+00 : f32
    %490 = vector.broadcast %cst_238 : f32 to vector<2x64xf32>
    %491 = arith.maximumf %489, %490 : vector<2x64xf32>
    %492 = arith.truncf %491 : vector<2x64xf32> to vector<2x64xbf16>
    %c0_239 = arith.constant 0 : index
    %c0_240 = arith.constant 0 : index
    %493 = vector.load %arg23[%c0_239, %c0_240] : memref<64x64xbf16, #tpu.memory_space<vmem>>, vector<64x64xbf16>
    %cst_241 = arith.constant dense<0.000000e+00> : vector<2x64xf32>
    %494 = tpu.matmul %492, %493, %cst_241 {dimension_numbers = #tpu.dot_dimension_numbers<[1], [0], [0], [1], [0, 0, 1, 1], [], []>} : vector<2x64xbf16>, vector<64x64xbf16>, vector<2x64xf32> -> vector<2x64xf32>
    %c0_242 = arith.constant 0 : index
    %c0_243 = arith.constant 0 : index
    %495 = vector.load %arg24[%c0_242, %c0_243] : memref<1x64xf32, #tpu.memory_space<vmem>>, vector<1x64xf32>
    %496 = vector.broadcast %495 : vector<1x64xf32> to vector<2x64xf32>
    %497 = arith.addf %494, %496 : vector<2x64xf32>
    %498 = arith.truncf %497 : vector<2x64xf32> to vector<2x64xbf16>
    %c0_244 = arith.constant 0 : index
    %c0_245 = arith.constant 0 : index
    %499 = vector.load %arg25[%c0_244, %c0_245] : memref<64x16xbf16, #tpu.memory_space<vmem>>, vector<64x16xbf16>
    %cst_246 = arith.constant dense<0.000000e+00> : vector<2x16xf32>
    %500 = tpu.matmul %498, %499, %cst_246 {dimension_numbers = #tpu.dot_dimension_numbers<[1], [0], [0], [1], [0, 0, 1, 1], [], []>} : vector<2x64xbf16>, vector<64x16xbf16>, vector<2x16xf32> -> vector<2x16xf32>
    %c0_247 = arith.constant 0 : index
    %c0_248 = arith.constant 0 : index
    %501 = vector.load %arg26[%c0_247, %c0_248] : memref<1x16xf32, #tpu.memory_space<vmem>>, vector<1x16xf32>
    %502 = vector.broadcast %501 : vector<1x16xf32> to vector<2x16xf32>
    %503 = arith.addf %500, %502 : vector<2x16xf32>
    %cst_249 = arith.constant 0.000000e+00 : f32
    %504 = vector.broadcast %cst_249 : f32 to vector<2x16xf32>
    %505 = arith.maximumf %503, %504 : vector<2x16xf32>
    %506 = arith.truncf %505 : vector<2x16xf32> to vector<2x16xbf16>
    %c0_250 = arith.constant 0 : index
    %c0_251 = arith.constant 0 : index
    %507 = vector.load %arg27[%c0_250, %c0_251] : memref<16x64xbf16, #tpu.memory_space<vmem>>, vector<16x64xbf16>
    %cst_252 = arith.constant dense<0.000000e+00> : vector<2x64xf32>
    %508 = tpu.matmul %506, %507, %cst_252 {dimension_numbers = #tpu.dot_dimension_numbers<[1], [0], [0], [1], [0, 0, 1, 1], [], []>} : vector<2x16xbf16>, vector<16x64xbf16>, vector<2x64xf32> -> vector<2x64xf32>
    %c0_253 = arith.constant 0 : index
    %c0_254 = arith.constant 0 : index
    %509 = vector.load %arg28[%c0_253, %c0_254] : memref<1x64xf32, #tpu.memory_space<vmem>>, vector<1x64xf32>
    %510 = vector.broadcast %509 : vector<1x64xf32> to vector<2x64xf32>
    %511 = arith.addf %508, %510 : vector<2x64xf32>
    %cst_255 = arith.constant 0.000000e+00 : f32
    %512 = vector.broadcast %cst_255 : f32 to vector<2x64xf32>
    %513 = arith.subf %512, %511 : vector<2x64xf32>
    %514 = math.exp %513 : vector<2x64xf32>
    %cst_256 = arith.constant 1.000000e+00 : f32
    %515 = vector.broadcast %cst_256 : f32 to vector<2x64xf32>
    %516 = arith.addf %515, %514 : vector<2x64xf32>
    %cst_257 = arith.constant 1.000000e+00 : f32
    %517 = vector.broadcast %cst_257 : f32 to vector<2x64xf32>
    %518 = arith.divf %517, %516 : vector<2x64xf32>
    %519 = arith.mulf %497, %518 : vector<2x64xf32>
    %520 = arith.addf %483, %519 : vector<2x64xf32>
    %cst_258 = arith.constant 0.000000e+00 : f32
    %521 = vector.broadcast %cst_258 : f32 to vector<2x64xf32>
    %522 = arith.maximumf %520, %521 : vector<2x64xf32>
    %523 = arith.truncf %522 : vector<2x64xf32> to vector<2x64xbf16>
    %c0_259 = arith.constant 0 : index
    %c0_260 = arith.constant 0 : index
    %524 = vector.load %arg30[%c0_259, %c0_260] : memref<64x64xbf16, #tpu.memory_space<vmem>>, vector<64x64xbf16>
    %cst_261 = arith.constant dense<0.000000e+00> : vector<2x64xf32>
    %525 = tpu.matmul %523, %524, %cst_261 {dimension_numbers = #tpu.dot_dimension_numbers<[1], [0], [0], [1], [0, 0, 1, 1], [], []>} : vector<2x64xbf16>, vector<64x64xbf16>, vector<2x64xf32> -> vector<2x64xf32>
    %526 = vector.extract_strided_slice %525 {offsets = [0, 0], sizes = [1, 64], strides = [1, 1]} : vector<2x64xf32> to vector<1x64xf32>
    %527 = vector.shape_cast %526 : vector<1x64xf32> to vector<1x64xf32>
    %528 = vector.broadcast %527 : vector<1x64xf32> to vector<8x64xf32>
    %529 = vector.extract_strided_slice %525 {offsets = [1, 0], sizes = [1, 64], strides = [1, 1]} : vector<2x64xf32> to vector<1x64xf32>
    %530 = vector.shape_cast %529 : vector<1x64xf32> to vector<1x64xf32>
    %531 = vector.broadcast %530 : vector<1x64xf32> to vector<8x64xf32>
    %532 = tpu.concatenate %528, %531 in 0 : vector<8x64xf32>, vector<8x64xf32> -> vector<16x64xf32>
    %533 = arith.truncf %474 : vector<16x64xf32> to vector<16x64xbf16>
    %c0_262 = arith.constant 0 : index
    %c0_263 = arith.constant 0 : index
    %534 = vector.load %arg29[%c0_262, %c0_263] : memref<64x64xbf16, #tpu.memory_space<vmem>>, vector<64x64xbf16>
    %cst_264 = arith.constant dense<0.000000e+00> : vector<16x64xf32>
    %535 = tpu.matmul %533, %534, %cst_264 {dimension_numbers = #tpu.dot_dimension_numbers<[1], [0], [0], [1], [0, 0, 1, 1], [], []>} : vector<16x64xbf16>, vector<64x64xbf16>, vector<16x64xf32> -> vector<16x64xf32>
    %536 = arith.addf %535, %532 : vector<16x64xf32>
    %c0_265 = arith.constant 0 : index
    %c0_266 = arith.constant 0 : index
    %537 = vector.load %arg31[%c0_265, %c0_266] : memref<1x64xf32, #tpu.memory_space<vmem>>, vector<1x64xf32>
    %538 = vector.broadcast %537 : vector<1x64xf32> to vector<16x64xf32>
    %539 = arith.addf %536, %538 : vector<16x64xf32>
    %cst_267 = arith.constant 0.000000e+00 : f32
    %540 = vector.broadcast %cst_267 : f32 to vector<16x64xf32>
    %541 = arith.maximumf %539, %540 : vector<16x64xf32>
    %c0_268 = arith.constant 0 : index
    %c0_269 = arith.constant 0 : index
    %542 = vector.load %arg32[%c0_268, %c0_269] : memref<1x64xbf16, #tpu.memory_space<vmem>>, vector<1x64xbf16>
    %543 = arith.truncf %541 : vector<16x64xf32> to vector<16x64xbf16>
    %cst_270 = arith.constant dense<0.000000e+00> : vector<1x16xf32>
    %544 = tpu.matmul %542, %543, %cst_270 {dimension_numbers = #tpu.dot_dimension_numbers<[1], [1], [0], [0], [0, 0, 1, 0], [], []>} : vector<1x64xbf16>, vector<16x64xbf16>, vector<1x16xf32> -> vector<1x16xf32>
    %c0_271 = arith.constant 0 : index
    %c0_272 = arith.constant 0 : index
    %545 = vector.load %arg33[%c0_271, %c0_272] : memref<1x1xf32, #tpu.memory_space<vmem>>, vector<1x1xf32>
    %546 = vector.broadcast %545 : vector<1x1xf32> to vector<1x16xf32>
    %547 = arith.addf %544, %546 : vector<1x16xf32>
    %c0_273 = arith.constant 0 : index
    %c0_274 = arith.constant 0 : index
    %548 = vector.load %arg34[%c0_273, %c0_274] : memref<1x16xf32, #tpu.memory_space<vmem>>, vector<1x16xf32>
    tpu.vector_store %arg34[%c0_273, %c0_274], %547 {strides = array<i32>} : memref<1x16xf32, #tpu.memory_space<vmem>>, vector<1x16xf32>,
    return
  }
  func.func @transform_0(%arg0: i32) -> (i32, i32) {
    %c0_i32 = arith.constant 0 : i32
    %c0_i32_0 = arith.constant 0 : i32
    %c0_i32_1 = arith.constant 0 : i32
    return %c0_i32, %c0_i32_0 : i32, i32
  }
  func.func @transform_1(%arg0: i32) -> (i32, i32) {
    %c0_i32 = arith.constant 0 : i32
    %c0_i32_0 = arith.constant 0 : i32
    %c0_i32_1 = arith.constant 0 : i32
    return %c0_i32, %c0_i32_0 : i32, i32
  }
  func.func @transform_2(%arg0: i32) -> (i32, i32) {
    %c0_i32 = arith.constant 0 : i32
    %c0_i32_0 = arith.constant 0 : i32
    %c0_i32_1 = arith.constant 0 : i32
    return %c0_i32, %c0_i32_0 : i32, i32
  }
  func.func @transform_3(%arg0: i32) -> (i32, i32) {
    %c0_i32 = arith.constant 0 : i32
    %c0_i32_0 = arith.constant 0 : i32
    %c0_i32_1 = arith.constant 0 : i32
    return %c0_i32, %c0_i32_0 : i32, i32
  }
  func.func @transform_4(%arg0: i32) -> (i32, i32) {
    %c0_i32 = arith.constant 0 : i32
    %c0_i32_0 = arith.constant 0 : i32
    %c0_i32_1 = arith.constant 0 : i32
    return %c0_i32, %c0_i32_0 : i32, i32
  }
  func.func @transform_5(%arg0: i32) -> (i32, i32) {
    %c0_i32 = arith.constant 0 : i32
    %c0_i32_0 = arith.constant 0 : i32
    %c0_i32_1 = arith.constant 0 : i32
    return %c0_i32, %c0_i32_0 : i32, i32
  }
  func.func @transform_6(%arg0: i32) -> (i32, i32, i32) {
    %c0_i32 = arith.constant 0 : i32
    %c0_i32_0 = arith.constant 0 : i32
    %c0_i32_1 = arith.constant 0 : i32
    %c0_i32_2 = arith.constant 0 : i32
    return %c0_i32, %c0_i32_0, %c0_i32_1 : i32, i32, i32
  }
  func.func @transform_7(%arg0: i32) -> (i32, i32, i32) {
    %c0_i32 = arith.constant 0 : i32
    %c0_i32_0 = arith.constant 0 : i32
    %c0_i32_1 = arith.constant 0 : i32
    %c0_i32_2 = arith.constant 0 : i32
    return %c0_i32, %c0_i32_0, %c0_i32_1 : i32, i32, i32
  }
  func.func @transform_8(%arg0: i32) -> (i32, i32, i32) {
    %c0_i32 = arith.constant 0 : i32
    %c0_i32_0 = arith.constant 0 : i32
    %c0_i32_1 = arith.constant 0 : i32
    %c0_i32_2 = arith.constant 0 : i32
    return %c0_i32, %c0_i32_0, %c0_i32_1 : i32, i32, i32
  }
  func.func @transform_9(%arg0: i32) -> (i32, i32, i32) {
    %c0_i32 = arith.constant 0 : i32
    %c0_i32_0 = arith.constant 0 : i32
    %c0_i32_1 = arith.constant 0 : i32
    %c0_i32_2 = arith.constant 0 : i32
    return %c0_i32, %c0_i32_0, %c0_i32_1 : i32, i32, i32
  }
  func.func @transform_10(%arg0: i32) -> (i32, i32, i32) {
    %c0_i32 = arith.constant 0 : i32
    %c0_i32_0 = arith.constant 0 : i32
    %c0_i32_1 = arith.constant 0 : i32
    %c0_i32_2 = arith.constant 0 : i32
    return %c0_i32, %c0_i32_0, %c0_i32_1 : i32, i32, i32
  }
  func.func @transform_11(%arg0: i32) -> (i32, i32, i32) {
    %c0_i32 = arith.constant 0 : i32
    %c0_i32_0 = arith.constant 0 : i32
    %c0_i32_1 = arith.constant 0 : i32
    %c0_i32_2 = arith.constant 0 : i32
    return %c0_i32, %c0_i32_0, %c0_i32_1 : i32, i32, i32
  }
  func.func @transform_12(%arg0: i32) -> (i32, i32, i32) {
    %c0_i32 = arith.constant 0 : i32
    %c0_i32_0 = arith.constant 0 : i32
    %c0_i32_1 = arith.constant 0 : i32
    %c0_i32_2 = arith.constant 0 : i32
    return %c0_i32, %c0_i32_0, %c0_i32_1 : i32, i32, i32
  }
  func.func @transform_13(%arg0: i32) -> (i32, i32, i32) {
    %c0_i32 = arith.constant 0 : i32
    %c0_i32_0 = arith.constant 0 : i32
    %c0_i32_1 = arith.constant 0 : i32
    %c0_i32_2 = arith.constant 0 : i32
    return %c0_i32, %c0_i32_0, %c0_i32_1 : i32, i32, i32
  }
  func.func @transform_14(%arg0: i32) -> (i32, i32, i32) {
    %c0_i32 = arith.constant 0 : i32
    %c0_i32_0 = arith.constant 0 : i32
    %c0_i32_1 = arith.constant 0 : i32
    %c0_i32_2 = arith.constant 0 : i32
    return %c0_i32, %c0_i32_0, %c0_i32_1 : i32, i32, i32
  }
  func.func @transform_15(%arg0: i32) -> (i32, i32, i32) {
    %c0_i32 = arith.constant 0 : i32
    %c0_i32_0 = arith.constant 0 : i32
    %c0_i32_1 = arith.constant 0 : i32
    %c0_i32_2 = arith.constant 0 : i32
    return %c0_i32, %c0_i32_0, %c0_i32_1 : i32, i32, i32
  }
  func.func @transform_16(%arg0: i32) -> (i32, i32, i32) {
    %c0_i32 = arith.constant 0 : i32
    %c0_i32_0 = arith.constant 0 : i32
    %c0_i32_1 = arith.constant 0 : i32
    %c0_i32_2 = arith.constant 0 : i32
    return %c0_i32, %c0_i32_0, %c0_i32_1 : i32, i32, i32
  }
  func.func @transform_17(%arg0: i32) -> (i32, i32, i32) {
    %c0_i32 = arith.constant 0 : i32
    %c0_i32_0 = arith.constant 0 : i32
    %c0_i32_1 = arith.constant 0 : i32
    %c0_i32_2 = arith.constant 0 : i32
    return %c0_i32, %c0_i32_0, %c0_i32_1 : i32, i32, i32
  }
  func.func @transform_18(%arg0: i32) -> (i32, i32) {
    %c0_i32 = arith.constant 0 : i32
    %c0_i32_0 = arith.constant 0 : i32
    %c0_i32_1 = arith.constant 0 : i32
    return %c0_i32, %c0_i32_0 : i32, i32
  }
  func.func @transform_19(%arg0: i32) -> (i32, i32) {
    %c0_i32 = arith.constant 0 : i32
    %c0_i32_0 = arith.constant 0 : i32
    %c0_i32_1 = arith.constant 0 : i32
    return %c0_i32, %c0_i32_0 : i32, i32
  }
  func.func @transform_20(%arg0: i32) -> (i32, i32) {
    %c0_i32 = arith.constant 0 : i32
    %c0_i32_0 = arith.constant 0 : i32
    %c0_i32_1 = arith.constant 0 : i32
    return %c0_i32, %c0_i32_0 : i32, i32
  }
  func.func @transform_21(%arg0: i32) -> (i32, i32) {
    %c0_i32 = arith.constant 0 : i32
    %c0_i32_0 = arith.constant 0 : i32
    %c0_i32_1 = arith.constant 0 : i32
    return %c0_i32, %c0_i32_0 : i32, i32
  }
  func.func @transform_22(%arg0: i32) -> (i32, i32) {
    %c0_i32 = arith.constant 0 : i32
    %c0_i32_0 = arith.constant 0 : i32
    %c0_i32_1 = arith.constant 0 : i32
    return %c0_i32, %c0_i32_0 : i32, i32
  }
  func.func @transform_23(%arg0: i32) -> (i32, i32) {
    %c0_i32 = arith.constant 0 : i32
    %c0_i32_0 = arith.constant 0 : i32
    %c0_i32_1 = arith.constant 0 : i32
    return %c0_i32, %c0_i32_0 : i32, i32
  }
  func.func @transform_24(%arg0: i32) -> (i32, i32) {
    %c0_i32 = arith.constant 0 : i32
    %c0_i32_0 = arith.constant 0 : i32
    %c0_i32_1 = arith.constant 0 : i32
    return %c0_i32, %c0_i32_0 : i32, i32
  }
  func.func @transform_25(%arg0: i32) -> (i32, i32) {
    %c0_i32 = arith.constant 0 : i32
    %c0_i32_0 = arith.constant 0 : i32
    %c0_i32_1 = arith.constant 0 : i32
    return %c0_i32, %c0_i32_0 : i32, i32
  }
  func.func @transform_26(%arg0: i32) -> (i32, i32) {
    %c0_i32 = arith.constant 0 : i32
    %c0_i32_0 = arith.constant 0 : i32
    %c0_i32_1 = arith.constant 0 : i32
    return %c0_i32, %c0_i32_0 : i32, i32
  }
  func.func @transform_27(%arg0: i32) -> (i32, i32) {
    %c0_i32 = arith.constant 0 : i32
    %c0_i32_0 = arith.constant 0 : i32
    %c0_i32_1 = arith.constant 0 : i32
    return %c0_i32, %c0_i32_0 : i32, i32
  }
  func.func @transform_28(%arg0: i32) -> (i32, i32) {
    %c0_i32 = arith.constant 0 : i32
    %c0_i32_0 = arith.constant 0 : i32
    %c0_i32_1 = arith.constant 0 : i32
    return %c0_i32, %c0_i32_0 : i32, i32
  }
  func.func @transform_29(%arg0: i32) -> (i32, i32) {
    %c0_i32 = arith.constant 0 : i32
    %c0_i32_0 = arith.constant 0 : i32
    %c0_i32_1 = arith.constant 0 : i32
    return %c0_i32, %c0_i32_0 : i32, i32
  }
  func.func @transform_30(%arg0: i32) -> (i32, i32) {
    %c0_i32 = arith.constant 0 : i32
    %c0_i32_0 = arith.constant 0 : i32
    %c0_i32_1 = arith.constant 0 : i32
    return %c0_i32, %c0_i32_0 : i32, i32
  }
  func.func @transform_31(%arg0: i32) -> (i32, i32) {
    %c0_i32 = arith.constant 0 : i32
    %c0_i32_0 = arith.constant 0 : i32
    %c0_i32_1 = arith.constant 0 : i32
    return %c0_i32, %c0_i32_0 : i32, i32
  }
  func.func @transform_32(%arg0: i32) -> (i32, i32) {
    %c0_i32 = arith.constant 0 : i32
    %c0_i32_0 = arith.constant 0 : i32
    %c0_i32_1 = arith.constant 0 : i32
    return %c0_i32, %c0_i32_0 : i32, i32
  }
  func.func @transform_33(%arg0: i32) -> (i32, i32) {
    %c0_i32 = arith.constant 0 : i32
    %c0_i32_0 = arith.constant 0 : i32
    %c0_i32_1 = arith.constant 0 : i32
    return %c0_i32, %c0_i32_0 : i32, i32
  }
}

</mosaic_0001>

<llo_original>
// kernel: teacher_forward.1
$region0: #{teacher_forward.1}
  #allocation0 [shape = 'u32[]', space=smem, size = 0x4, offset = 0x4, fixed_abs, tag = 'smem constant byte address 0x4 - core index']
  #allocation1 [shape = 'u32[144,128]{1,0:T(1,128)}', space=vmem, size = 0x12000, scoped, tag = 'internal scratch']
  #allocation2 [shape = 'f32[1,1]{1,0:T(1,128)S(1)}', space=vmem, size = 0x200, scoped, tag = 'scoped memory for teacher_forward.1']
  %s0 = inlined_call_operand.smem [shape: u32[34], index: -1, kind: input, shape index: {}]
  %s1 = sld [smem:[%s0]]
  %s2 = scalar_lea.smem %s0, 1
  %s3 = sld [smem:[%s2]]
  %s4 = scalar_lea.smem %s0, 2
  %s5 = sld [smem:[%s4]]
  %s6 = scalar_lea.smem %s0, 3
  %s7 = sld [smem:[%s6]]
  %s8 = scalar_lea.smem %s0, 4
  %s9 = sld [smem:[%s8]]
  %s10 = scalar_lea.smem %s0, 5
  %s11 = sld [smem:[%s10]]
  %s12 = scalar_lea.smem %s0, 6
  %s13 = sld [smem:[%s12]]
  %s14 = scalar_lea.smem %s0, 7
  %s15 = sld [smem:[%s14]]
  %s16 = scalar_lea.smem %s0, 8
  %s17 = sld [smem:[%s16]]
  %s18 = scalar_lea.smem %s0, 9
  %s19 = sld [smem:[%s18]]
  %s20 = scalar_lea.smem %s0, 10
  %s21 = sld [smem:[%s20]]
  %s22 = scalar_lea.smem %s0, 11
  %s23 = sld [smem:[%s22]]
  %s24 = scalar_lea.smem %s0, 12
  %s25 = sld [smem:[%s24]]
  %s26 = scalar_lea.smem %s0, 13
  %s27 = sld [smem:[%s26]]
  %s28 = scalar_lea.smem %s0, 14
  %s29 = sld [smem:[%s28]]
  %s30 = scalar_lea.smem %s0, 15
  %s31 = sld [smem:[%s30]]
  %s32 = scalar_lea.smem %s0, 16
  %s33 = sld [smem:[%s32]]
  %s34 = scalar_lea.smem %s0, 17
  %s35 = sld [smem:[%s34]]
  %s36 = scalar_lea.smem %s0, 18
  %s37 = sld [smem:[%s36]]
  %s38 = scalar_lea.smem %s0, 19
  %s39 = sld [smem:[%s38]]
  %s40 = scalar_lea.smem %s0, 20
  %s41 = sld [smem:[%s40]]
  %s42 = scalar_lea.smem %s0, 21
  %s43 = sld [smem:[%s42]]
  %s44 = scalar_lea.smem %s0, 22
  %s45 = sld [smem:[%s44]]
  %s46 = scalar_lea.smem %s0, 23
  %s47 = sld [smem:[%s46]]
  %s48 = scalar_lea.smem %s0, 24
  %s49 = sld [smem:[%s48]]
  %s50 = scalar_lea.smem %s0, 25
  %s51 = sld [smem:[%s50]]
  %s52 = scalar_lea.smem %s0, 26
  %s53 = sld [smem:[%s52]]
  %s54 = scalar_lea.smem %s0, 27
  %s55 = sld [smem:[%s54]]
  %s56 = scalar_lea.smem %s0, 28
  %s57 = sld [smem:[%s56]]
  %s58 = scalar_lea.smem %s0, 29
  %s59 = sld [smem:[%s58]]
  %s60 = scalar_lea.smem %s0, 30
  %s61 = sld [smem:[%s60]]
  %s62 = scalar_lea.smem %s0, 31
  %s63 = sld [smem:[%s62]]
  %s64 = scalar_lea.smem %s0, 32
  %s65 = sld [smem:[%s64]]
  %s66 = scalar_lea.smem %s0, 33
  %s67 = sld [smem:[%s66]]
  %s68 = sld [smem:[#allocation0]]
  $region142: #{teacher_forward.1} parent=0
    _
  %s70 = ssub.s32 1, %s68
  %s71 = scalar_select 0, %s70, %s68
  %v72 = vstv %s65
  %73 = vst [vmem:[#allocation2] sm:$0x1] %v72
  // Predicated region
  $region2: #{teacher_forward.1} parent=0 // pred_check
    _
  $region3: #{teacher_forward.1} parent=0 // pred_check_branch
    %75 = sbr.rel (0) target = $region5
  $region4: #{teacher_forward.1} parent=0 // pred_region
    _
  $region5: #{teacher_forward.1} parent=0 // pred_fallthru
    _
  // Predicated region
  $region6: #{teacher_forward.1} parent=0 // pred_check
    _
  $region7: #{teacher_forward.1} parent=0 // pred_check_branch
    %77 = sbr.rel (0) target = $region9
  $region8: #{teacher_forward.1} parent=0 // pred_region
    _
  $region9: #{teacher_forward.1} parent=0 // pred_fallthru
    _
  // Predicated region
  $region10: #{teacher_forward.1} parent=0 // pred_check
    _
  $region11: #{teacher_forward.1} parent=0 // pred_check_branch
    %79 = sbr.rel (0) target = $region13
  $region12: #{teacher_forward.1} parent=0 // pred_region
    _
  $region13: #{teacher_forward.1} parent=0 // pred_fallthru
    _
  // Predicated region
  $region14: #{teacher_forward.1} parent=0 // pred_check
    _
  $region15: #{teacher_forward.1} parent=0 // pred_check_branch
    %81 = sbr.rel (0) target = $region17
  $region16: #{teacher_forward.1} parent=0 // pred_region
    _
  $region17: #{teacher_forward.1} parent=0 // pred_fallthru
    _
  // Predicated region
  $region18: #{teacher_forward.1} parent=0 // pred_check
    _
  $region19: #{teacher_forward.1} parent=0 // pred_check_branch
    %83 = sbr.rel (0) target = $region21
  $region20: #{teacher_forward.1} parent=0 // pred_region
    _
  $region21: #{teacher_forward.1} parent=0 // pred_fallthru
    _
  // Predicated region
  $region22: #{teacher_forward.1} parent=0 // pred_check
    _
  $region23: #{teacher_forward.1} parent=0 // pred_check_branch
    %85 = sbr.rel (0) target = $region25
  $region24: #{teacher_forward.1} parent=0 // pred_region
    _
  $region25: #{teacher_forward.1} parent=0 // pred_fallthru
    _
  // Predicated region
  $region26: #{teacher_forward.1} parent=0 // pred_check
    _
  $region27: #{teacher_forward.1} parent=0 // pred_check_branch
    %87 = sbr.rel (0) target = $region29
  $region28: #{teacher_forward.1} parent=0 // pred_region
    _
  $region29: #{teacher_forward.1} parent=0 // pred_fallthru
    _
  // Predicated region
  $region30: #{teacher_forward.1} parent=0 // pred_check
    _
  $region31: #{teacher_forward.1} parent=0 // pred_check_branch
    %89 = sbr.rel (0) target = $region33
  $region32: #{teacher_forward.1} parent=0 // pred_region
    _
  $region33: #{teacher_forward.1} parent=0 // pred_fallthru
    _
  // Predicated region
  $region34: #{teacher_forward.1} parent=0 // pred_check
    _
  $region35: #{teacher_forward.1} parent=0 // pred_check_branch
    %91 = sbr.rel (0) target = $region37
  $region36: #{teacher_forward.1} parent=0 // pred_region
    _
  $region37: #{teacher_forward.1} parent=0 // pred_fallthru
    _
  // Predicated region
  $region38: #{teacher_forward.1} parent=0 // pred_check
    _
  $region39: #{teacher_forward.1} parent=0 // pred_check_branch
    %93 = sbr.rel (0) target = $region41
  $region40: #{teacher_forward.1} parent=0 // pred_region
    _
  $region41: #{teacher_forward.1} parent=0 // pred_fallthru
    _
  // Predicated region
  $region42: #{teacher_forward.1} parent=0 // pred_check
    _
  $region43: #{teacher_forward.1} parent=0 // pred_check_branch
    %95 = sbr.rel (0) target = $region45
  $region44: #{teacher_forward.1} parent=0 // pred_region
    _
  $region45: #{teacher_forward.1} parent=0 // pred_fallthru
    _
  // Predicated region
  $region46: #{teacher_forward.1} parent=0 // pred_check
    _
  $region47: #{teacher_forward.1} parent=0 // pred_check_branch
    %97 = sbr.rel (0) target = $region49
  $region48: #{teacher_forward.1} parent=0 // pred_region
    _
  $region49: #{teacher_forward.1} parent=0 // pred_fallthru
    _
  // Predicated region
  $region50: #{teacher_forward.1} parent=0 // pred_check
    _
  $region51: #{teacher_forward.1} parent=0 // pred_check_branch
    %99 = sbr.rel (0) target = $region53
  $region52: #{teacher_forward.1} parent=0 // pred_region
    _
  $region53: #{teacher_forward.1} parent=0 // pred_fallthru
    _
  // Predicated region
  $region54: #{teacher_forward.1} parent=0 // pred_check
    _
  $region55: #{teacher_forward.1} parent=0 // pred_check_branch
    %101 = sbr.rel (0) target = $region57
  $region56: #{teacher_forward.1} parent=0 // pred_region
    _
  $region57: #{teacher_forward.1} parent=0 // pred_fallthru
    _
  // Predicated region
  $region58: #{teacher_forward.1} parent=0 // pred_check
    _
  $region59: #{teacher_forward.1} parent=0 // pred_check_branch
    %103 = sbr.rel (0) target = $region61
  $region60: #{teacher_forward.1} parent=0 // pred_region
    _
  $region61: #{teacher_forward.1} parent=0 // pred_fallthru
    _
  // Predicated region
  $region62: #{teacher_forward.1} parent=0 // pred_check
    _
  $region63: #{teacher_forward.1} parent=0 // pred_check_branch
    %105 = sbr.rel (0) target = $region65
  $region64: #{teacher_forward.1} parent=0 // pred_region
    _
  $region65: #{teacher_forward.1} parent=0 // pred_fallthru
    _
  // Predicated region
  $region66: #{teacher_forward.1} parent=0 // pred_check
    _
  $region67: #{teacher_forward.1} parent=0 // pred_check_branch
    %107 = sbr.rel (0) target = $region69
  $region68: #{teacher_forward.1} parent=0 // pred_region
    _
  $region69: #{teacher_forward.1} parent=0 // pred_fallthru
    _
  // Predicated region
  $region70: #{teacher_forward.1} parent=0 // pred_check
    _
  $region71: #{teacher_forward.1} parent=0 // pred_check_branch
    %109 = sbr.rel (0) target = $region73
  $region72: #{teacher_forward.1} parent=0 // pred_region
    _
  $region73: #{teacher_forward.1} parent=0 // pred_fallthru
    _
  // Predicated region
  $region74: #{teacher_forward.1} parent=0 // pred_check
    _
  $region75: #{teacher_forward.1} parent=0 // pred_check_branch
    %111 = sbr.rel (0) target = $region77
  $region76: #{teacher_forward.1} parent=0 // pred_region
    _
  $region77: #{teacher_forward.1} parent=0 // pred_fallthru
    _
  // Predicated region
  $region78: #{teacher_forward.1} parent=0 // pred_check
    _
  $region79: #{teacher_forward.1} parent=0 // pred_check_branch
    %113 = sbr.rel (0) target = $region81
  $region80: #{teacher_forward.1} parent=0 // pred_region
    _
  $region81: #{teacher_forward.1} parent=0 // pred_fallthru
    _
  // Predicated region
  $region82: #{teacher_forward.1} parent=0 // pred_check
    _
  $region83: #{teacher_forward.1} parent=0 // pred_check_branch
    %115 = sbr.rel (0) target = $region85
  $region84: #{teacher_forward.1} parent=0 // pred_region
    _
  $region85: #{teacher_forward.1} parent=0 // pred_fallthru
    _
  // Predicated region
  $region86: #{teacher_forward.1} parent=0 // pred_check
    _
  $region87: #{teacher_forward.1} parent=0 // pred_check_branch
    %117 = sbr.rel (0) target = $region89
  $region88: #{teacher_forward.1} parent=0 // pred_region
    _
  $region89: #{teacher_forward.1} parent=0 // pred_fallthru
    _
  // Predicated region
  $region90: #{teacher_forward.1} parent=0 // pred_check
    _
  $region91: #{teacher_forward.1} parent=0 // pred_check_branch
    %119 = sbr.rel (0) target = $region93
  $region92: #{teacher_forward.1} parent=0 // pred_region
    _
  $region93: #{teacher_forward.1} parent=0 // pred_fallthru
    _
  // Predicated region
  $region94: #{teacher_forward.1} parent=0 // pred_check
    _
  $region95: #{teacher_forward.1} parent=0 // pred_check_branch
    %121 = sbr.rel (0) target = $region97
  $region96: #{teacher_forward.1} parent=0 // pred_region
    _
  $region97: #{teacher_forward.1} parent=0 // pred_fallthru
    _
  // Predicated region
  $region98: #{teacher_forward.1} parent=0 // pred_check
    _
  $region99: #{teacher_forward.1} parent=0 // pred_check_branch
    %123 = sbr.rel (0) target = $region101
  $region100: #{teacher_forward.1} parent=0 // pred_region
    _
  $region101: #{teacher_forward.1} parent=0 // pred_fallthru
    _
  // Predicated region
  $region102: #{teacher_forward.1} parent=0 // pred_check
    _
  $region103: #{teacher_forward.1} parent=0 // pred_check_branch
    %125 = sbr.rel (0) target = $region105
  $region104: #{teacher_forward.1} parent=0 // pred_region
    _
  $region105: #{teacher_forward.1} parent=0 // pred_fallthru
    _
  // Predicated region
  $region106: #{teacher_forward.1} parent=0 // pred_check
    _
  $region107: #{teacher_forward.1} parent=0 // pred_check_branch
    %127 = sbr.rel (0) target = $region109
  $region108: #{teacher_forward.1} parent=0 // pred_region
    _
  $region109: #{teacher_forward.1} parent=0 // pred_fallthru
    _
  // Predicated region
  $region110: #{teacher_forward.1} parent=0 // pred_check
    _
  $region111: #{teacher_forward.1} parent=0 // pred_check_branch
    %129 = sbr.rel (0) target = $region113
  $region112: #{teacher_forward.1} parent=0 // pred_region
    _
  $region113: #{teacher_forward.1} parent=0 // pred_fallthru
    _
  // Predicated region
  $region114: #{teacher_forward.1} parent=0 // pred_check
    _
  $region115: #{teacher_forward.1} parent=0 // pred_check_branch
    %131 = sbr.rel (0) target = $region117
  $region116: #{teacher_forward.1} parent=0 // pred_region
    _
  $region117: #{teacher_forward.1} parent=0 // pred_fallthru
    _
  // Predicated region
  $region118: #{teacher_forward.1} parent=0 // pred_check
    _
  $region119: #{teacher_forward.1} parent=0 // pred_check_branch
    %133 = sbr.rel (0) target = $region121
  $region120: #{teacher_forward.1} parent=0 // pred_region
    _
  $region121: #{teacher_forward.1} parent=0 // pred_fallthru
    _
  // Predicated region
  $region122: #{teacher_forward.1} parent=0 // pred_check
    _
  $region123: #{teacher_forward.1} parent=0 // pred_check_branch
    %135 = sbr.rel (0) target = $region125
  $region124: #{teacher_forward.1} parent=0 // pred_region
    _
  $region125: #{teacher_forward.1} parent=0 // pred_fallthru
    _
  // Predicated region
  $region126: #{teacher_forward.1} parent=0 // pred_check
    _
  $region127: #{teacher_forward.1} parent=0 // pred_check_branch
    %137 = sbr.rel (0) target = $region129
  $region128: #{teacher_forward.1} parent=0 // pred_region
    _
  $region129: #{teacher_forward.1} parent=0 // pred_fallthru
    _
  // Predicated region
  $region130: #{teacher_forward.1} parent=0 // pred_check
    _
  $region131: #{teacher_forward.1} parent=0 // pred_check_branch
    %139 = sbr.rel (0) target = $region133
  $region132: #{teacher_forward.1} parent=0 // pred_region
    _
  $region133: #{teacher_forward.1} parent=0 // pred_fallthru
    _
  %v141 = vld [vmem:[%s1] sm:$0xff]
  %v142 = vld [vmem:[%s1 + $0x8] sm:$0xff]
  %v143 = vld [vmem:[%s9] sm:$0x1]
  %145 = vset.pattern.permute.xlu0 0
  %146 = vperm.xlu0 %145, %v141
  %v147 = vpop.permute.xlu0 %146
  %150 = vset.pattern.permute.xlu0 0
  %151 = vperm.xlu0 %150, %v142
  %v152 = vpop.permute.xlu0 %151
  %v155 = vlaneseq
  %v156 = vshrl.u32 %v155, 7
  %v157 = vsub.s32 0, %v156
  %v158 = vrot.slane %v143, %v157
  %v160 = vmul.f32 %v147, %v158
  %v161 = vmul.f32 %v152, %v158
  %v162 = vld [vmem:[%s11] sm:$0x1]
  %v164 = vlaneseq
  %v165 = vshrl.u32 %v164, 7
  %v166 = vsub.s32 0, %v165
  %v167 = vrot.slane %v162, %v166
  %v169 = vadd.f32 %v160, %v167
  %v170 = vadd.f32 %v161, %v167
  %v171 = vld [vmem:[%s5] sm:$0xff]
  %v172 = vld [vmem:[%s5 + $0x8] sm:$0xff]
  %v173 = vadd.f32 %v169, %v171
  %v174 = vadd.f32 %v170, %v172
  %v175 = vld [vmem:[%s7] sm:$0xff]
  %v176 = vld [vmem:[%s7 + $0x8] sm:$0xff]
  %v177 = vpack.c.bf16 %v174, %v173
  %v178 = vld [vmem:[%s13] sm:$0xff]
  %v179 = vld [vmem:[%s13 + $0x8] sm:$0xff]
  %v180 = vld [vmem:[%s13 + $0x10] sm:$0xff]
  %v181 = vld [vmem:[%s13 + $0x18] sm:$0xff]
  %v182 = vld [vmem:[%s13 + $0x20] sm:$0xff]
  %v183 = vld [vmem:[%s13 + $0x28] sm:$0xff]
  %v184 = vld [vmem:[%s13 + $0x30] sm:$0xff]
  %v185 = vld [vmem:[%s13 + $0x38] sm:$0xff]
  %v186 = vld [vmem:[%s15] sm:$0x3]
  %v188 = vlaneseq
  %v189 = vshrl.u32 %v188, 7
  %v190 = vsub.s32 0, %v189
  %v191 = vrot.slane %v186, %v190
  %v192 = vlaneseq
  %v193 = vshrl.u32 %v192, 7
  %v194 = vsub.s32 1, %v193
  %v195 = vrot.slane %v186, %v194
  %v206 = vunpack.c.l.b16 %v178
  %v207 = vunpack.c.h.b16 %v178
  %v208 = vunpack.c.l.b16 %v179
  %v209 = vunpack.c.h.b16 %v179
  %v210 = vunpack.c.l.b16 %v180
  %v211 = vunpack.c.h.b16 %v180
  %v212 = vunpack.c.l.b16 %v181
  %v213 = vunpack.c.h.b16 %v181
  %v214 = vunpack.c.l.b16 %v182
  %v215 = vunpack.c.h.b16 %v182
  %v216 = vunpack.c.l.b16 %v183
  %v217 = vunpack.c.h.b16 %v183
  %v218 = vunpack.c.l.b16 %v184
  %v219 = vunpack.c.h.b16 %v184
  %v220 = vunpack.c.l.b16 %v185
  %v221 = vunpack.c.h.b16 %v185
  %v222 = vpack.c.b16 %v208, %v206
  %v223 = vpack.c.b16 %v209, %v207
  %v224 = vpack.c.b16 %v212, %v210
  %v225 = vpack.c.b16 %v213, %v211
  %v226 = vpack.c.b16 %v216, %v214
  %v227 = vpack.c.b16 %v217, %v215
  %v228 = vpack.c.b16 %v220, %v218
  %v229 = vpack.c.b16 %v221, %v219
  %vm238 = vcmask 523264
  %v240 = vsel %vm238, %v177, 0
  %242 = vmatprep.subr.bf16.mxu0 %v223
  %243 = vmatpush1.bf16.msra.mxu0 %v222
  %244 = vmatprep.subr.bf16.mxu0 %v225
  %245 = vmatpush1.bf16.msra.mxu0 %v224
  %246 = vmatprep.subr.bf16.mxu0 %v227
  %247 = vmatpush1.bf16.msra.mxu0 %v226
  %248 = vmatprep.subr.bf16.mxu0 %v229
  %249 = vmatpush1.bf16.msra.mxu0 %v228
  %250 = vmatprep.subr.bf16.mxu0 0
  %251 = vmatpush1.bf16.msra.mxu0 0
  %252 = vmatprep.subr.bf16.mxu0 0
  %253 = vmatpush1.bf16.msra.mxu0 0
  %254 = vmatprep.subr.bf16.mxu0 0
  %255 = vmatpush1.bf16.msra.mxu0 0
  %256 = vmatprep.subr.bf16.mxu0 0
  %257 = vmatpush1.bf16.msra.mxu0 0
  %258 = vmatprep.subr.bf16.mxu0 0
  %259 = vmatpush1.bf16.msra.mxu0 0
  %260 = vmatprep.subr.bf16.mxu0 0
  %261 = vmatpush1.bf16.msra.mxu0 0
  %262 = vmatprep.subr.bf16.mxu0 0
  %263 = vmatpush1.bf16.msra.mxu0 0
  %264 = vmatprep.subr.bf16.mxu0 0
  %265 = vmatpush1.bf16.msra.mxu0 0
  %266 = vmatprep.subr.bf16.mxu0 0
  %267 = vmatpush1.bf16.msra.mxu0 0
  %268 = vmatprep.subr.bf16.mxu0 0
  %269 = vmatpush1.bf16.msra.mxu0 0
  %270 = vmatprep.subr.bf16.mxu0 0
  %271 = vmatpush1.bf16.msra.mxu0 0
  %272 = vmatprep.subr.bf16.mxu0 0
  %273 = vmatpush1.bf16.msra.mxu0 0
  %274 = vmatprep.mubr.bf16.mxu0 0
  %275 = vmatmul.mubr.bf16.gmra.mrb[0].mxu0 %v240
  %v276 = vpop.f32.mrb[0].mxu0
  %v277 = vadd.f32 %v191, %v276
  %v278 = vpop.f32.mrb[0].mxu0
  %v279 = vadd.f32 %v195, %v278
  %v280 = vpop.f32.mrb[0].mxu0
  %v281 = vadd.f32 %v191, %v280
  %v282 = vpop.f32.mrb[0].mxu0
  %v283 = vadd.f32 %v195, %v282
  %284 = vdwg.mxu0
  %285 = vxpose.xlu0.b32.start [1/16] %v277, 128
  %286 = vxpose.xlu0.b32.cont [2/16] %v281, 128
  %287 = vxpose.xlu0.b32.cont [3/16] 0.0, 128
  %288 = vxpose.xlu0.b32.cont [4/16] 0.0, 128
  %289 = vxpose.xlu0.b32.cont [5/16] 0.0, 128
  %290 = vxpose.xlu0.b32.cont [6/16] 0.0, 128
  %291 = vxpose.xlu0.b32.cont [7/16] 0.0, 128
  %292 = vxpose.xlu0.b32.cont [8/16] 0.0, 128
  %293 = vxpose.xlu0.b32.cont [9/16] 0.0, 128
  %294 = vxpose.xlu0.b32.cont [10/16] 0.0, 128
  %295 = vxpose.xlu0.b32.cont [11/16] 0.0, 128
  %296 = vxpose.xlu0.b32.cont [12/16] 0.0, 128
  %297 = vxpose.xlu0.b32.cont [13/16] 0.0, 128
  %298 = vxpose.xlu0.b32.cont [14/16] 0.0, 128
  %299 = vxpose.xlu0.b32.cont [15/16] 0.0, 128
  %300 = vxpose.xlu0.b32.end [16/16] 0.0, 128
  %v301 = vpop.trf.xlu0
  %v302 = vpop.trf.xlu0
  %v303 = vpop.trf.xlu0
  %v304 = vpop.trf.xlu0
  %v305 = vpop.trf.xlu0
  %v306 = vpop.trf.xlu0
  %v307 = vpop.trf.xlu0
  %v308 = vpop.trf.xlu0
  %v309 = vpop.trf.xlu0
  %v310 = vpop.trf.xlu0
  %v311 = vpop.trf.xlu0
  %v312 = vpop.trf.xlu0
  %v313 = vpop.trf.xlu0
  %v314 = vpop.trf.xlu0
  %v315 = vpop.trf.xlu0
  %v316 = vpop.trf.xlu0
  %317 = vxpose.xlu0.b32.start [1/16] %v279, 128
  %318 = vxpose.xlu0.b32.cont [2/16] %v283, 128
  %319 = vxpose.xlu0.b32.cont [3/16] 0.0, 128
  %320 = vxpose.xlu0.b32.cont [4/16] 0.0, 128
  %321 = vxpose.xlu0.b32.cont [5/16] 0.0, 128
  %322 = vxpose.xlu0.b32.cont [6/16] 0.0, 128
  %323 = vxpose.xlu0.b32.cont [7/16] 0.0, 128
  %324 = vxpose.xlu0.b32.cont [8/16] 0.0, 128
  %325 = vxpose.xlu0.b32.cont [9/16] 0.0, 128
  %326 = vxpose.xlu0.b32.cont [10/16] 0.0, 128
  %327 = vxpose.xlu0.b32.cont [11/16] 0.0, 128
  %328 = vxpose.xlu0.b32.cont [12/16] 0.0, 128
  %329 = vxpose.xlu0.b32.cont [13/16] 0.0, 128
  %330 = vxpose.xlu0.b32.cont [14/16] 0.0, 128
  %331 = vxpose.xlu0.b32.cont [15/16] 0.0, 128
  %332 = vxpose.xlu0.b32.end [16/16] 0.0, 128
  %v333 = vpop.trf.xlu0
  %v334 = vpop.trf.xlu0
  %v335 = vpop.trf.xlu0
  %v336 = vpop.trf.xlu0
  %v337 = vpop.trf.xlu0
  %v338 = vpop.trf.xlu0
  %v339 = vpop.trf.xlu0
  %v340 = vpop.trf.xlu0
  %v341 = vpop.trf.xlu0
  %v342 = vpop.trf.xlu0
  %v343 = vpop.trf.xlu0
  %v344 = vpop.trf.xlu0
  %v345 = vpop.trf.xlu0
  %v346 = vpop.trf.xlu0
  %v347 = vpop.trf.xlu0
  %v348 = vpop.trf.xlu0
  %v349 = vpack.c.bf16 %v301, %v301
  %v350 = vpack.c.bf16 %v302, %v302
  %v351 = vpack.c.bf16 %v303, %v303
  %v352 = vpack.c.bf16 %v304, %v304
  %v353 = vpack.c.bf16 %v305, %v305
  %v354 = vpack.c.bf16 %v306, %v306
  %v355 = vpack.c.bf16 %v307, %v307
  %v356 = vpack.c.bf16 %v308, %v308
  %v357 = vpack.c.bf16 %v309, %v309
  %v358 = vpack.c.bf16 %v310, %v310
  %v359 = vpack.c.bf16 %v311, %v311
  %v360 = vpack.c.bf16 %v312, %v312
  %v361 = vpack.c.bf16 %v313, %v313
  %v362 = vpack.c.bf16 %v314, %v314
  %v363 = vpack.c.bf16 %v315, %v315
  %v364 = vpack.c.bf16 %v316, %v316
  %365 = vxpose.xlu0.c.b16.start [1/8] %v349, 128
  %366 = vxpose.xlu0.c.b16.cont [2/8] 0, 128
  %367 = vxpose.xlu0.c.b16.cont [3/8] 0, 128
  %368 = vxpose.xlu0.c.b16.cont [4/8] 0, 128
  %369 = vxpose.xlu0.c.b16.cont [5/8] 0, 128
  %370 = vxpose.xlu0.c.b16.cont [6/8] 0, 128
  %371 = vxpose.xlu0.c.b16.cont [7/8] 0, 128
  %372 = vxpose.xlu0.c.b16.end [8/8] 0, 128
  %v373 = vpop.trf.xlu0
  %v374 = vpop.trf.xlu0
  %v375 = vpop.trf.xlu0
  %v376 = vpop.trf.xlu0
  %v377 = vpop.trf.xlu0
  %v378 = vpop.trf.xlu0
  %v379 = vpop.trf.xlu0
  %v380 = vpop.trf.xlu0
  %vm381 = vcmask 64512
  %v383 = vsel %vm381, %v373, 0
  %vm385 = vcmask 1043456
  %v387 = vsel %vm385, %v357, 0
  %389 = vmatprep.subr.bf16.mxu0 0
  %390 = vmatpush1.bf16.msra.mxu0 %v387
  %391 = vmatprep.subr.bf16.mxu0 0
  %392 = vmatpush1.bf16.msra.mxu0 0
  %393 = vmatprep.subr.bf16.mxu0 0
  %394 = vmatpush1.bf16.msra.mxu0 0
  %395 = vmatprep.subr.bf16.mxu0 0
  %396 = vmatpush1.bf16.msra.mxu0 0
  %397 = vmatprep.subr.bf16.mxu0 0
  %398 = vmatpush1.bf16.msra.mxu0 0
  %399 = vmatprep.subr.bf16.mxu0 0
  %400 = vmatpush1.bf16.msra.mxu0 0
  %401 = vmatprep.subr.bf16.mxu0 0
  %402 = vmatpush1.bf16.msra.mxu0 0
  %403 = vmatprep.subr.bf16.mxu0 0
  %404 = vmatpush1.bf16.msra.mxu0 0
  %405 = vmatprep.subr.bf16.mxu0 0
  %406 = vmatpush1.bf16.msra.mxu0 0
  %407 = vmatprep.subr.bf16.mxu0 0
  %408 = vmatpush1.bf16.msra.mxu0 0
  %409 = vmatprep.subr.bf16.mxu0 0
  %410 = vmatpush1.bf16.msra.mxu0 0
  %411 = vmatprep.subr.bf16.mxu0 0
  %412 = vmatpush1.bf16.msra.mxu0 0
  %413 = vmatprep.subr.bf16.mxu0 0
  %414 = vmatpush1.bf16.msra.mxu0 0
  %415 = vmatprep.subr.bf16.mxu0 0
  %416 = vmatpush1.bf16.msra.mxu0 0
  %417 = vmatprep.subr.bf16.mxu0 0
  %418 = vmatpush1.bf16.msra.mxu0 0
  %419 = vmatprep.subr.bf16.mxu0 0
  %420 = vmatpush1.bf16.msra.mxu0 0
  %421 = vmatprep.mubr.bf16.mxu0 0
  %422 = vmatmul.mubr.bf16.gmra.mrb[0].mxu0 %v383
  %v423 = vpop.f32.mrb[0].mxu0
  %v424 = vadd.f32 %v175, %v423
  %v425 = vpop.f32.mrb[0].mxu0
  %v426 = vpop.f32.mrb[0].mxu0
  %v427 = vadd.f32 %v176, %v426
  %v428 = vpop.f32.mrb[0].mxu0
  %429 = vdwg.mxu0
  %430 = vxpose.xlu0.c.b16.start [1/8] %v350, 128
  %431 = vxpose.xlu0.c.b16.cont [2/8] 0, 128
  %432 = vxpose.xlu0.c.b16.cont [3/8] 0, 128
  %433 = vxpose.xlu0.c.b16.cont [4/8] 0, 128
  %434 = vxpose.xlu0.c.b16.cont [5/8] 0, 128
  %435 = vxpose.xlu0.c.b16.cont [6/8] 0, 128
  %436 = vxpose.xlu0.c.b16.cont [7/8] 0, 128
  %437 = vxpose.xlu0.c.b16.end [8/8] 0, 128
  %v438 = vpop.trf.xlu0
  %v439 = vpop.trf.xlu0
  %v440 = vpop.trf.xlu0
  %v441 = vpop.trf.xlu0
  %v442 = vpop.trf.xlu0
  %v443 = vpop.trf.xlu0
  %v444 = vpop.trf.xlu0
  %v445 = vpop.trf.xlu0
  %v447 = vsel %vm381, %v438, 0
  %v450 = vsel %vm385, %v358, 0
  %452 = vmatprep.subr.bf16.mxu0 0
  %453 = vmatpush1.bf16.msra.mxu0 %v450
  %454 = vmatprep.subr.bf16.mxu0 0
  %455 = vmatpush1.bf16.msra.mxu0 0
  %456 = vmatprep.subr.bf16.mxu0 0
  %457 = vmatpush1.bf16.msra.mxu0 0
  %458 = vmatprep.subr.bf16.mxu0 0
  %459 = vmatpush1.bf16.msra.mxu0 0
  %460 = vmatprep.subr.bf16.mxu0 0
  %461 = vmatpush1.bf16.msra.mxu0 0
  %462 = vmatprep.subr.bf16.mxu0 0
  %463 = vmatpush1.bf16.msra.mxu0 0
  %464 = vmatprep.subr.bf16.mxu0 0
  %465 = vmatpush1.bf16.msra.mxu0 0
  %466 = vmatprep.subr.bf16.mxu0 0
  %467 = vmatpush1.bf16.msra.mxu0 0
  %468 = vmatprep.subr.bf16.mxu0 0
  %469 = vmatpush1.bf16.msra.mxu0 0
  %470 = vmatprep.subr.bf16.mxu0 0
  %471 = vmatpush1.bf16.msra.mxu0 0
  %472 = vmatprep.subr.bf16.mxu0 0
  %473 = vmatpush1.bf16.msra.mxu0 0
  %474 = vmatprep.subr.bf16.mxu0 0
  %475 = vmatpush1.bf16.msra.mxu0 0
  %476 = vmatprep.subr.bf16.mxu0 0
  %477 = vmatpush1.bf16.msra.mxu0 0
  %478 = vmatprep.subr.bf16.mxu0 0
  %479 = vmatpush1.bf16.msra.mxu0 0
  %480 = vmatprep.subr.bf16.mxu0 0
  %481 = vmatpush1.bf16.msra.mxu0 0
  %482 = vmatprep.subr.bf16.mxu0 0
  %483 = vmatpush1.bf16.msra.mxu0 0
  %484 = vmatprep.mubr.bf16.mxu0 0
  %485 = vmatmul.mubr.bf16.gmra.mrb[0].mxu0 %v447
  %v486 = vpop.f32.mrb[0].mxu0
  %v487 = vadd.f32 %v175, %v486
  %v488 = vpop.f32.mrb[0].mxu0
  %v489 = vpop.f32.mrb[0].mxu0
  %v490 = vadd.f32 %v176, %v489
  %v491 = vpop.f32.mrb[0].mxu0
  %492 = vdwg.mxu0
  %493 = vxpose.xlu0.c.b16.start [1/8] %v351, 128
  %494 = vxpose.xlu0.c.b16.cont [2/8] 0, 128
  %495 = vxpose.xlu0.c.b16.cont [3/8] 0, 128
  %496 = vxpose.xlu0.c.b16.cont [4/8] 0, 128
  %497 = vxpose.xlu0.c.b16.cont [5/8] 0, 128
  %498 = vxpose.xlu0.c.b16.cont [6/8] 0, 128
  %499 = vxpose.xlu0.c.b16.cont [7/8] 0, 128
  %500 = vxpose.xlu0.c.b16.end [8/8] 0, 128
  %v501 = vpop.trf.xlu0
  %v502 = vpop.trf.xlu0
  %v503 = vpop.trf.xlu0
  %v504 = vpop.trf.xlu0
  %v505 = vpop.trf.xlu0
  %v506 = vpop.trf.xlu0
  %v507 = vpop.trf.xlu0
  %v508 = vpop.trf.xlu0
  %v510 = vsel %vm381, %v501, 0
  %v513 = vsel %vm385, %v359, 0
  %515 = vmatprep.subr.bf16.mxu0 0
  %516 = vmatpush1.bf16.msra.mxu0 %v513
  %517 = vmatprep.subr.bf16.mxu0 0
  %518 = vmatpush1.bf16.msra.mxu0 0
  %519 = vmatprep.subr.bf16.mxu0 0
  %520 = vmatpush1.bf16.msra.mxu0 0
  %521 = vmatprep.subr.bf16.mxu0 0
  %522 = vmatpush1.bf16.msra.mxu0 0
  %523 = vmatprep.subr.bf16.mxu0 0
  %524 = vmatpush1.bf16.msra.mxu0 0
  %525 = vmatprep.subr.bf16.mxu0 0
  %526 = vmatpush1.bf16.msra.mxu0 0
  %527 = vmatprep.subr.bf16.mxu0 0
  %528 = vmatpush1.bf16.msra.mxu0 0
  %529 = vmatprep.subr.bf16.mxu0 0
  %530 = vmatpush1.bf16.msra.mxu0 0
  %531 = vmatprep.subr.bf16.mxu0 0
  %532 = vmatpush1.bf16.msra.mxu0 0
  %533 = vmatprep.subr.bf16.mxu0 0
  %534 = vmatpush1.bf16.msra.mxu0 0
  %535 = vmatprep.subr.bf16.mxu0 0
  %536 = vmatpush1.bf16.msra.mxu0 0
  %537 = vmatprep.subr.bf16.mxu0 0
  %538 = vmatpush1.bf16.msra.mxu0 0
  %539 = vmatprep.subr.bf16.mxu0 0
  %540 = vmatpush1.bf16.msra.mxu0 0
  %541 = vmatprep.subr.bf16.mxu0 0
  %542 = vmatpush1.bf16.msra.mxu0 0
  %543 = vmatprep.subr.bf16.mxu0 0
  %544 = vmatpush1.bf16.msra.mxu0 0
  %545 = vmatprep.subr.bf16.mxu0 0
  %546 = vmatpush1.bf16.msra.mxu0 0
  %547 = vmatprep.mubr.bf16.mxu0 0
  %548 = vmatmul.mubr.bf16.gmra.mrb[0].mxu0 %v510
  %v549 = vpop.f32.mrb[0].mxu0
  %v550 = vadd.f32 %v175, %v549
  %v551 = vpop.f32.mrb[0].mxu0
  %v552 = vpop.f32.mrb[0].mxu0
  %v553 = vadd.f32 %v176, %v552
  %v554 = vpop.f32.mrb[0].mxu0
  %555 = vdwg.mxu0
  %556 = vxpose.xlu0.c.b16.start [1/8] %v352, 128
  %557 = vxpose.xlu0.c.b16.cont [2/8] 0, 128
  %558 = vxpose.xlu0.c.b16.cont [3/8] 0, 128
  %559 = vxpose.xlu0.c.b16.cont [4/8] 0, 128
  %560 = vxpose.xlu0.c.b16.cont [5/8] 0, 128
  %561 = vxpose.xlu0.c.b16.cont [6/8] 0, 128
  %562 = vxpose.xlu0.c.b16.cont [7/8] 0, 128
  %563 = vxpose.xlu0.c.b16.end [8/8] 0, 128
  %v564 = vpop.trf.xlu0
  %v565 = vpop.trf.xlu0
  %v566 = vpop.trf.xlu0
  %v567 = vpop.trf.xlu0
  %v568 = vpop.trf.xlu0
  %v569 = vpop.trf.xlu0
  %v570 = vpop.trf.xlu0
  %v571 = vpop.trf.xlu0
  %v573 = vsel %vm381, %v564, 0
  %v576 = vsel %vm385, %v360, 0
  %578 = vmatprep.subr.bf16.mxu0 0
  %579 = vmatpush1.bf16.msra.mxu0 %v576
  %580 = vmatprep.subr.bf16.mxu0 0
  %581 = vmatpush1.bf16.msra.mxu0 0
  %582 = vmatprep.subr.bf16.mxu0 0
  %583 = vmatpush1.bf16.msra.mxu0 0
  %584 = vmatprep.subr.bf16.mxu0 0
  %585 = vmatpush1.bf16.msra.mxu0 0
  %586 = vmatprep.subr.bf16.mxu0 0
  %587 = vmatpush1.bf16.msra.mxu0 0
  %588 = vmatprep.subr.bf16.mxu0 0
  %589 = vmatpush1.bf16.msra.mxu0 0
  %590 = vmatprep.subr.bf16.mxu0 0
  %591 = vmatpush1.bf16.msra.mxu0 0
  %592 = vmatprep.subr.bf16.mxu0 0
  %593 = vmatpush1.bf16.msra.mxu0 0
  %594 = vmatprep.subr.bf16.mxu0 0
  %595 = vmatpush1.bf16.msra.mxu0 0
  %596 = vmatprep.subr.bf16.mxu0 0
  %597 = vmatpush1.bf16.msra.mxu0 0
  %598 = vmatprep.subr.bf16.mxu0 0
  %599 = vmatpush1.bf16.msra.mxu0 0
  %600 = vmatprep.subr.bf16.mxu0 0
  %601 = vmatpush1.bf16.msra.mxu0 0
  %602 = vmatprep.subr.bf16.mxu0 0
  %603 = vmatpush1.bf16.msra.mxu0 0
  %604 = vmatprep.subr.bf16.mxu0 0
  %605 = vmatpush1.bf16.msra.mxu0 0
  %606 = vmatprep.subr.bf16.mxu0 0
  %607 = vmatpush1.bf16.msra.mxu0 0
  %608 = vmatprep.subr.bf16.mxu0 0
  %609 = vmatpush1.bf16.msra.mxu0 0
  %610 = vmatprep.mubr.bf16.mxu0 0
  %611 = vmatmul.mubr.bf16.gmra.mrb[0].mxu0 %v573
  %v612 = vpop.f32.mrb[0].mxu0
  %v613 = vadd.f32 %v175, %v612
  %v614 = vpop.f32.mrb[0].mxu0
  %v615 = vpop.f32.mrb[0].mxu0
  %v616 = vadd.f32 %v176, %v615
  %v617 = vpop.f32.mrb[0].mxu0
  %618 = vdwg.mxu0
  %619 = vxpose.xlu0.c.b16.start [1/8] %v353, 128
  %620 = vxpose.xlu0.c.b16.cont [2/8] 0, 128
  %621 = vxpose.xlu0.c.b16.cont [3/8] 0, 128
  %622 = vxpose.xlu0.c.b16.cont [4/8] 0, 128
  %623 = vxpose.xlu0.c.b16.cont [5/8] 0, 128
  %624 = vxpose.xlu0.c.b16.cont [6/8] 0, 128
  %625 = vxpose.xlu0.c.b16.cont [7/8] 0, 128
  %626 = vxpose.xlu0.c.b16.end [8/8] 0, 128
  %v627 = vpop.trf.xlu0
  %v628 = vpop.trf.xlu0
  %v629 = vpop.trf.xlu0
  %v630 = vpop.trf.xlu0
  %v631 = vpop.trf.xlu0
  %v632 = vpop.trf.xlu0
  %v633 = vpop.trf.xlu0
  %v634 = vpop.trf.xlu0
  %v636 = vsel %vm381, %v627, 0
  %v639 = vsel %vm385, %v361, 0
  %641 = vmatprep.subr.bf16.mxu0 0
  %642 = vmatpush1.bf16.msra.mxu0 %v639
  %643 = vmatprep.subr.bf16.mxu0 0
  %644 = vmatpush1.bf16.msra.mxu0 0
  %645 = vmatprep.subr.bf16.mxu0 0
  %646 = vmatpush1.bf16.msra.mxu0 0
  %647 = vmatprep.subr.bf16.mxu0 0
  %648 = vmatpush1.bf16.msra.mxu0 0
  %649 = vmatprep.subr.bf16.mxu0 0
  %650 = vmatpush1.bf16.msra.mxu0 0
  %651 = vmatprep.subr.bf16.mxu0 0
  %652 = vmatpush1.bf16.msra.mxu0 0
  %653 = vmatprep.subr.bf16.mxu0 0
  %654 = vmatpush1.bf16.msra.mxu0 0
  %655 = vmatprep.subr.bf16.mxu0 0
  %656 = vmatpush1.bf16.msra.mxu0 0
  %657 = vmatprep.subr.bf16.mxu0 0
  %658 = vmatpush1.bf16.msra.mxu0 0
  %659 = vmatprep.subr.bf16.mxu0 0
  %660 = vmatpush1.bf16.msra.mxu0 0
  %661 = vmatprep.subr.bf16.mxu0 0
  %662 = vmatpush1.bf16.msra.mxu0 0
  %663 = vmatprep.subr.bf16.mxu0 0
  %664 = vmatpush1.bf16.msra.mxu0 0
  %665 = vmatprep.subr.bf16.mxu0 0
  %666 = vmatpush1.bf16.msra.mxu0 0
  %667 = vmatprep.subr.bf16.mxu0 0
  %668 = vmatpush1.bf16.msra.mxu0 0
  %669 = vmatprep.subr.bf16.mxu0 0
  %670 = vmatpush1.bf16.msra.mxu0 0
  %671 = vmatprep.subr.bf16.mxu0 0
  %672 = vmatpush1.bf16.msra.mxu0 0
  %673 = vmatprep.mubr.bf16.mxu0 0
  %674 = vmatmul.mubr.bf16.gmra.mrb[0].mxu0 %v636
  %v675 = vpop.f32.mrb[0].mxu0
  %v676 = vadd.f32 %v175, %v675
  %v677 = vpop.f32.mrb[0].mxu0
  %v678 = vpop.f32.mrb[0].mxu0
  %v679 = vadd.f32 %v176, %v678
  %v680 = vpop.f32.mrb[0].mxu0
  %681 = vdwg.mxu0
  %682 = vxpose.xlu0.c.b16.start [1/8] %v354, 128
  %683 = vxpose.xlu0.c.b16.cont [2/8] 0, 128
  %684 = vxpose.xlu0.c.b16.cont [3/8] 0, 128
  %685 = vxpose.xlu0.c.b16.cont [4/8] 0, 128
  %686 = vxpose.xlu0.c.b16.cont [5/8] 0, 128
  %687 = vxpose.xlu0.c.b16.cont [6/8] 0, 128
  %688 = vxpose.xlu0.c.b16.cont [7/8] 0, 128
  %689 = vxpose.xlu0.c.b16.end [8/8] 0, 128
  %v690 = vpop.trf.xlu0
  %v691 = vpop.trf.xlu0
  %v692 = vpop.trf.xlu0
  %v693 = vpop.trf.xlu0
  %v694 = vpop.trf.xlu0
  %v695 = vpop.trf.xlu0
  %v696 = vpop.trf.xlu0
  %v697 = vpop.trf.xlu0
  %v699 = vsel %vm381, %v690, 0
  %v702 = vsel %vm385, %v362, 0
  %704 = vmatprep.subr.bf16.mxu0 0
  %705 = vmatpush1.bf16.msra.mxu0 %v702
  %706 = vmatprep.subr.bf16.mxu0 0
  %707 = vmatpush1.bf16.msra.mxu0 0
  %708 = vmatprep.subr.bf16.mxu0 0
  %709 = vmatpush1.bf16.msra.mxu0 0
  %710 = vmatprep.subr.bf16.mxu0 0
  %711 = vmatpush1.bf16.msra.mxu0 0
  %712 = vmatprep.subr.bf16.mxu0 0
  %713 = vmatpush1.bf16.msra.mxu0 0
  %714 = vmatprep.subr.bf16.mxu0 0
  %715 = vmatpush1.bf16.msra.mxu0 0
  %716 = vmatprep.subr.bf16.mxu0 0
  %717 = vmatpush1.bf16.msra.mxu0 0
  %718 = vmatprep.subr.bf16.mxu0 0
  %719 = vmatpush1.bf16.msra.mxu0 0
  %720 = vmatprep.subr.bf16.mxu0 0
  %721 = vmatpush1.bf16.msra.mxu0 0
  %722 = vmatprep.subr.bf16.mxu0 0
  %723 = vmatpush1.bf16.msra.mxu0 0
  %724 = vmatprep.subr.bf16.mxu0 0
  %725 = vmatpush1.bf16.msra.mxu0 0
  %726 = vmatprep.subr.bf16.mxu0 0
  %727 = vmatpush1.bf16.msra.mxu0 0
  %728 = vmatprep.subr.bf16.mxu0 0
  %729 = vmatpush1.bf16.msra.mxu0 0
  %730 = vmatprep.subr.bf16.mxu0 0
  %731 = vmatpush1.bf16.msra.mxu0 0
  %732 = vmatprep.subr.bf16.mxu0 0
  %733 = vmatpush1.bf16.msra.mxu0 0
  %734 = vmatprep.subr.bf16.mxu0 0
  %735 = vmatpush1.bf16.msra.mxu0 0
  %736 = vmatprep.mubr.bf16.mxu0 0
  %737 = vmatmul.mubr.bf16.gmra.mrb[0].mxu0 %v699
  %v738 = vpop.f32.mrb[0].mxu0
  %v739 = vadd.f32 %v175, %v738
  %v740 = vpop.f32.mrb[0].mxu0
  %v741 = vpop.f32.mrb[0].mxu0
  %v742 = vadd.f32 %v176, %v741
  %v743 = vpop.f32.mrb[0].mxu0
  %744 = vdwg.mxu0
  %745 = vxpose.xlu0.c.b16.start [1/8] %v355, 128
  %746 = vxpose.xlu0.c.b16.cont [2/8] 0, 128
  %747 = vxpose.xlu0.c.b16.cont [3/8] 0, 128
  %748 = vxpose.xlu0.c.b16.cont [4/8] 0, 128
  %749 = vxpose.xlu0.c.b16.cont [5/8] 0, 128
  %750 = vxpose.xlu0.c.b16.cont [6/8] 0, 128
  %751 = vxpose.xlu0.c.b16.cont [7/8] 0, 128
  %752 = vxpose.xlu0.c.b16.end [8/8] 0, 128
  %v753 = vpop.trf.xlu0
  %v754 = vpop.trf.xlu0
  %v755 = vpop.trf.xlu0
  %v756 = vpop.trf.xlu0
  %v757 = vpop.trf.xlu0
  %v758 = vpop.trf.xlu0
  %v759 = vpop.trf.xlu0
  %v760 = vpop.trf.xlu0
  %v762 = vsel %vm381, %v753, 0
  %v765 = vsel %vm385, %v363, 0
  %767 = vmatprep.subr.bf16.mxu0 0
  %768 = vmatpush1.bf16.msra.mxu0 %v765
  %769 = vmatprep.subr.bf16.mxu0 0
  %770 = vmatpush1.bf16.msra.mxu0 0
  %771 = vmatprep.subr.bf16.mxu0 0
  %772 = vmatpush1.bf16.msra.mxu0 0
  %773 = vmatprep.subr.bf16.mxu0 0
  %774 = vmatpush1.bf16.msra.mxu0 0
  %775 = vmatprep.subr.bf16.mxu0 0
  %776 = vmatpush1.bf16.msra.mxu0 0
  %777 = vmatprep.subr.bf16.mxu0 0
  %778 = vmatpush1.bf16.msra.mxu0 0
  %779 = vmatprep.subr.bf16.mxu0 0
  %780 = vmatpush1.bf16.msra.mxu0 0
  %781 = vmatprep.subr.bf16.mxu0 0
  %782 = vmatpush1.bf16.msra.mxu0 0
  %783 = vmatprep.subr.bf16.mxu0 0
  %784 = vmatpush1.bf16.msra.mxu0 0
  %785 = vmatprep.subr.bf16.mxu0 0
  %786 = vmatpush1.bf16.msra.mxu0 0
  %787 = vmatprep.subr.bf16.mxu0 0
  %788 = vmatpush1.bf16.msra.mxu0 0
  %789 = vmatprep.subr.bf16.mxu0 0
  %790 = vmatpush1.bf16.msra.mxu0 0
  %791 = vmatprep.subr.bf16.mxu0 0
  %792 = vmatpush1.bf16.msra.mxu0 0
  %793 = vmatprep.subr.bf16.mxu0 0
  %794 = vmatpush1.bf16.msra.mxu0 0
  %795 = vmatprep.subr.bf16.mxu0 0
  %796 = vmatpush1.bf16.msra.mxu0 0
  %797 = vmatprep.subr.bf16.mxu0 0
  %798 = vmatpush1.bf16.msra.mxu0 0
  %799 = vmatprep.mubr.bf16.mxu0 0
  %800 = vmatmul.mubr.bf16.gmra.mrb[0].mxu0 %v762
  %v801 = vpop.f32.mrb[0].mxu0
  %v802 = vadd.f32 %v175, %v801
  %v803 = vpop.f32.mrb[0].mxu0
  %v804 = vpop.f32.mrb[0].mxu0
  %v805 = vadd.f32 %v176, %v804
  %v806 = vpop.f32.mrb[0].mxu0
  %807 = vdwg.mxu0
  %808 = vxpose.xlu0.c.b16.start [1/8] %v356, 128
  %809 = vxpose.xlu0.c.b16.cont [2/8] 0, 128
  %810 = vxpose.xlu0.c.b16.cont [3/8] 0, 128
  %811 = vxpose.xlu0.c.b16.cont [4/8] 0, 128
  %812 = vxpose.xlu0.c.b16.cont [5/8] 0, 128
  %813 = vxpose.xlu0.c.b16.cont [6/8] 0, 128
  %814 = vxpose.xlu0.c.b16.cont [7/8] 0, 128
  %815 = vxpose.xlu0.c.b16.end [8/8] 0, 128
  %v816 = vpop.trf.xlu0
  %v817 = vpop.trf.xlu0
  %v818 = vpop.trf.xlu0
  %v819 = vpop.trf.xlu0
  %v820 = vpop.trf.xlu0
  %v821 = vpop.trf.xlu0
  %v822 = vpop.trf.xlu0
  %v823 = vpop.trf.xlu0
  %v825 = vsel %vm381, %v816, 0
  %v828 = vsel %vm385, %v364, 0
  %830 = vmatprep.subr.bf16.mxu0 0
  %831 = vmatpush1.bf16.msra.mxu0 %v828
  %832 = vmatprep.subr.bf16.mxu0 0
  %833 = vmatpush1.bf16.msra.mxu0 0
  %834 = vmatprep.subr.bf16.mxu0 0
  %835 = vmatpush1.bf16.msra.mxu0 0
  %836 = vmatprep.subr.bf16.mxu0 0
  %837 = vmatpush1.bf16.msra.mxu0 0
  %838 = vmatprep.subr.bf16.mxu0 0
  %839 = vmatpush1.bf16.msra.mxu0 0
  %840 = vmatprep.subr.bf16.mxu0 0
  %841 = vmatpush1.bf16.msra.mxu0 0
  %842 = vmatprep.subr.bf16.mxu0 0
  %843 = vmatpush1.bf16.msra.mxu0 0
  %844 = vmatprep.subr.bf16.mxu0 0
  %845 = vmatpush1.bf16.msra.mxu0 0
  %846 = vmatprep.subr.bf16.mxu0 0
  %847 = vmatpush1.bf16.msra.mxu0 0
  %848 = vmatprep.subr.bf16.mxu0 0
  %849 = vmatpush1.bf16.msra.mxu0 0
  %850 = vmatprep.subr.bf16.mxu0 0
  %851 = vmatpush1.bf16.msra.mxu0 0
  %852 = vmatprep.subr.bf16.mxu0 0
  %853 = vmatpush1.bf16.msra.mxu0 0
  %854 = vmatprep.subr.bf16.mxu0 0
  %855 = vmatpush1.bf16.msra.mxu0 0
  %856 = vmatprep.subr.bf16.mxu0 0
  %857 = vmatpush1.bf16.msra.mxu0 0
  %858 = vmatprep.subr.bf16.mxu0 0
  %859 = vmatpush1.bf16.msra.mxu0 0
  %860 = vmatprep.subr.bf16.mxu0 0
  %861 = vmatpush1.bf16.msra.mxu0 0
  %862 = vmatprep.mubr.bf16.mxu0 0
  %863 = vmatmul.mubr.bf16.gmra.mrb[0].mxu0 %v825
  %v864 = vpop.f32.mrb[0].mxu0
  %v865 = vadd.f32 %v175, %v864
  %v866 = vpop.f32.mrb[0].mxu0
  %v867 = vpop.f32.mrb[0].mxu0
  %v868 = vadd.f32 %v176, %v867
  %v869 = vpop.f32.mrb[0].mxu0
  %870 = vdwg.mxu0
  %vm871 = vcmask 130048
  %v872 = vsel %vm871, %v424, -inf
  %873 = vmax.xlane.f32.xlu0 %v872
  %v874 = vpop.xlane.xlu0 %873
  %v875 = vsel %vm871, %v427, -inf
  %876 = vmax.xlane.f32.xlu0 %v875
  %v877 = vpop.xlane.xlu0 %876
  %v878 = vsel %vm871, %v487, -inf
  %879 = vmax.xlane.f32.xlu0 %v878
  %v880 = vpop.xlane.xlu0 %879
  %v881 = vsel %vm871, %v490, -inf
  %882 = vmax.xlane.f32.xlu0 %v881
  %v883 = vpop.xlane.xlu0 %882
  %v884 = vsel %vm871, %v550, -inf
  %885 = vmax.xlane.f32.xlu0 %v884
  %v886 = vpop.xlane.xlu0 %885
  %v887 = vsel %vm871, %v553, -inf
  %888 = vmax.xlane.f32.xlu0 %v887
  %v889 = vpop.xlane.xlu0 %888
  %v890 = vsel %vm871, %v613, -inf
  %891 = vmax.xlane.f32.xlu0 %v890
  %v892 = vpop.xlane.xlu0 %891
  %v893 = vsel %vm871, %v616, -inf
  %894 = vmax.xlane.f32.xlu0 %v893
  %v895 = vpop.xlane.xlu0 %894
  %v896 = vsel %vm871, %v676, -inf
  %897 = vmax.xlane.f32.xlu0 %v896
  %v898 = vpop.xlane.xlu0 %897
  %v899 = vsel %vm871, %v679, -inf
  %900 = vmax.xlane.f32.xlu0 %v899
  %v901 = vpop.xlane.xlu0 %900
  %v902 = vsel %vm871, %v739, -inf
  %903 = vmax.xlane.f32.xlu0 %v902
  %v904 = vpop.xlane.xlu0 %903
  %v905 = vsel %vm871, %v742, -inf
  %906 = vmax.xlane.f32.xlu0 %v905
  %v907 = vpop.xlane.xlu0 %906
  %v908 = vsel %vm871, %v802, -inf
  %909 = vmax.xlane.f32.xlu0 %v908
  %v910 = vpop.xlane.xlu0 %909
  %v911 = vsel %vm871, %v805, -inf
  %912 = vmax.xlane.f32.xlu0 %v911
  %v913 = vpop.xlane.xlu0 %912
  %v914 = vsel %vm871, %v865, -inf
  %915 = vmax.xlane.f32.xlu0 %v914
  %v916 = vpop.xlane.xlu0 %915
  %v917 = vsel %vm871, %v868, -inf
  %918 = vmax.xlane.f32.xlu0 %v917
  %v919 = vpop.xlane.xlu0 %918
  %v920 = vsub.f32 %v424, %v874
  %v921 = vsub.f32 %v427, %v877
  %v922 = vsub.f32 %v487, %v880
  %v923 = vsub.f32 %v490, %v883
  %v924 = vsub.f32 %v550, %v886
  %v925 = vsub.f32 %v553, %v889
  %v926 = vsub.f32 %v613, %v892
  %v927 = vsub.f32 %v616, %v895
  %v928 = vsub.f32 %v676, %v898
  %v929 = vsub.f32 %v679, %v901
  %v930 = vsub.f32 %v739, %v904
  %v931 = vsub.f32 %v742, %v907
  %v932 = vsub.f32 %v802, %v910
  %v933 = vsub.f32 %v805, %v913
  %v934 = vsub.f32 %v865, %v916
  %v935 = vsub.f32 %v868, %v919
  %v936 = vmul.f32 %v920, 1.442695
  %v937 = vpow.pop %v936
  %v938 = vmul.f32 %v921, 1.442695
  %v939 = vpow.pop %v938
  %v940 = vmul.f32 %v922, 1.442695
  %v941 = vpow.pop %v940
  %v942 = vmul.f32 %v923, 1.442695
  %v943 = vpow.pop %v942
  %v944 = vmul.f32 %v924, 1.442695
  %v945 = vpow.pop %v944
  %v946 = vmul.f32 %v925, 1.442695
  %v947 = vpow.pop %v946
  %v948 = vmul.f32 %v926, 1.442695
  %v949 = vpow.pop %v948
  %v950 = vmul.f32 %v927, 1.442695
  %v951 = vpow.pop %v950
  %v952 = vmul.f32 %v928, 1.442695
  %v953 = vpow.pop %v952
  %v954 = vmul.f32 %v929, 1.442695
  %v955 = vpow.pop %v954
  %v956 = vmul.f32 %v930, 1.442695
  %v957 = vpow.pop %v956
  %v958 = vmul.f32 %v931, 1.442695
  %v959 = vpow.pop %v958
  %v960 = vmul.f32 %v932, 1.442695
  %v961 = vpow.pop %v960
  %v962 = vmul.f32 %v933, 1.442695
  %v963 = vpow.pop %v962
  %v964 = vmul.f32 %v934, 1.442695
  %v965 = vpow.pop %v964
  %v966 = vmul.f32 %v935, 1.442695
  %v967 = vpow.pop %v966
  %v968 = vsel %vm871, %v937, 0.0
  %969 = vadd.xlane.f32.xlu0 %v968
  %v970 = vpop.xlane.xlu0 %969
  %v971 = vsel %vm871, %v939, 0.0
  %972 = vadd.xlane.f32.xlu0 %v971
  %v973 = vpop.xlane.xlu0 %972
  %v974 = vsel %vm871, %v941, 0.0
  %975 = vadd.xlane.f32.xlu0 %v974
  %v976 = vpop.xlane.xlu0 %975
  %v977 = vsel %vm871, %v943, 0.0
  %978 = vadd.xlane.f32.xlu0 %v977
  %v979 = vpop.xlane.xlu0 %978
  %v980 = vsel %vm871, %v945, 0.0
  %981 = vadd.xlane.f32.xlu0 %v980
  %v982 = vpop.xlane.xlu0 %981
  %v983 = vsel %vm871, %v947, 0.0
  %984 = vadd.xlane.f32.xlu0 %v983
  %v985 = vpop.xlane.xlu0 %984
  %v986 = vsel %vm871, %v949, 0.0
  %987 = vadd.xlane.f32.xlu0 %v986
  %v988 = vpop.xlane.xlu0 %987
  %v989 = vsel %vm871, %v951, 0.0
  %990 = vadd.xlane.f32.xlu0 %v989
  %v991 = vpop.xlane.xlu0 %990
  %v992 = vsel %vm871, %v953, 0.0
  %993 = vadd.xlane.f32.xlu0 %v992
  %v994 = vpop.xlane.xlu0 %993
  %v995 = vsel %vm871, %v955, 0.0
  %996 = vadd.xlane.f32.xlu0 %v995
  %v997 = vpop.xlane.xlu0 %996
  %v998 = vsel %vm871, %v957, 0.0
  %999 = vadd.xlane.f32.xlu0 %v998
  %v1000 = vpop.xlane.xlu0 %999
  %v1001 = vsel %vm871, %v959, 0.0
  %1002 = vadd.xlane.f32.xlu0 %v1001
  %v1003 = vpop.xlane.xlu0 %1002
  %v1004 = vsel %vm871, %v961, 0.0
  %1005 = vadd.xlane.f32.xlu0 %v1004
  %v1006 = vpop.xlane.xlu0 %1005
  %v1007 = vsel %vm871, %v963, 0.0
  %1008 = vadd.xlane.f32.xlu0 %v1007
  %v1009 = vpop.xlane.xlu0 %1008
  %v1010 = vsel %vm871, %v965, 0.0
  %1011 = vadd.xlane.f32.xlu0 %v1010
  %v1012 = vpop.xlane.xlu0 %1011
  %v1013 = vsel %vm871, %v967, 0.0
  %1014 = vadd.xlane.f32.xlu0 %v1013
  %v1015 = vpop.xlane.xlu0 %1014
  %v1016 = vrcp.pop %v970
  %v1017 = vmul.f32 %v937, %v1016
  %v1018 = vrcp.pop %v973
  %v1019 = vmul.f32 %v939, %v1018
  %v1020 = vrcp.pop %v976
  %v1021 = vmul.f32 %v941, %v1020
  %v1022 = vrcp.pop %v979
  %v1023 = vmul.f32 %v943, %v1022
  %v1024 = vrcp.pop %v982
  %v1025 = vmul.f32 %v945, %v1024
  %v1026 = vrcp.pop %v985
  %v1027 = vmul.f32 %v947, %v1026
  %v1028 = vrcp.pop %v988
  %v1029 = vmul.f32 %v949, %v1028
  %v1030 = vrcp.pop %v991
  %v1031 = vmul.f32 %v951, %v1030
  %v1032 = vrcp.pop %v994
  %v1033 = vmul.f32 %v953, %v1032
  %v1034 = vrcp.pop %v997
  %v1035 = vmul.f32 %v955, %v1034
  %v1036 = vrcp.pop %v1000
  %v1037 = vmul.f32 %v957, %v1036
  %v1038 = vrcp.pop %v1003
  %v1039 = vmul.f32 %v959, %v1038
  %v1040 = vrcp.pop %v1006
  %v1041 = vmul.f32 %v961, %v1040
  %v1042 = vrcp.pop %v1009
  %v1043 = vmul.f32 %v963, %v1042
  %v1044 = vrcp.pop %v1012
  %v1045 = vmul.f32 %v965, %v1044
  %v1046 = vrcp.pop %v1015
  %v1047 = vmul.f32 %v967, %v1046
  %v1048 = vpack.c.bf16 %v1019, %v1017
  %v1049 = vpack.c.bf16 %v1023, %v1021
  %v1050 = vpack.c.bf16 %v1027, %v1025
  %v1051 = vpack.c.bf16 %v1031, %v1029
  %v1052 = vpack.c.bf16 %v1035, %v1033
  %v1053 = vpack.c.bf16 %v1039, %v1037
  %v1054 = vpack.c.bf16 %v1043, %v1041
  %v1055 = vpack.c.bf16 %v1047, %v1045
  %v1056 = vpack.c.bf16 %v333, %v333
  %v1057 = vpack.c.bf16 %v334, %v334
  %v1058 = vpack.c.bf16 %v335, %v335
  %v1059 = vpack.c.bf16 %v336, %v336
  %v1060 = vpack.c.bf16 %v337, %v337
  %v1061 = vpack.c.bf16 %v338, %v338
  %v1062 = vpack.c.bf16 %v339, %v339
  %v1063 = vpack.c.bf16 %v340, %v340
  %v1065 = vsel %vm871, %v1048, 0
  %v1068 = vsel %vm871, %v1056, 0
  %1070 = vmatprep.subr.bf16.mxu0 0
  %1071 = vmatpush1.bf16.xpose.msra.mxu0 %v1068
  %1072 = vmatprep.subr.bf16.mxu0 0
  %1073 = vmatpush1.bf16.xpose.msra.mxu0 0
  %1074 = vmatprep.subr.bf16.mxu0 0
  %1075 = vmatpush1.bf16.xpose.msra.mxu0 0
  %1076 = vmatprep.subr.bf16.mxu0 0
  %1077 = vmatpush1.bf16.xpose.msra.mxu0 0
  %1078 = vmatprep.subr.bf16.mxu0 0
  %1079 = vmatpush1.bf16.xpose.msra.mxu0 0
  %1080 = vmatprep.subr.bf16.mxu0 0
  %1081 = vmatpush1.bf16.xpose.msra.mxu0 0
  %1082 = vmatprep.subr.bf16.mxu0 0
  %1083 = vmatpush1.bf16.xpose.msra.mxu0 0
  %1084 = vmatprep.subr.bf16.mxu0 0
  %1085 = vmatpush1.bf16.xpose.msra.mxu0 0
  %1086 = vmatprep.subr.bf16.mxu0 0
  %1087 = vmatpush1.bf16.xpose.msra.mxu0 0
  %1088 = vmatprep.subr.bf16.mxu0 0
  %1089 = vmatpush1.bf16.xpose.msra.mxu0 0
  %1090 = vmatprep.subr.bf16.mxu0 0
  %1091 = vmatpush1.bf16.xpose.msra.mxu0 0
  %1092 = vmatprep.subr.bf16.mxu0 0
  %1093 = vmatpush1.bf16.xpose.msra.mxu0 0
  %1094 = vmatprep.subr.bf16.mxu0 0
  %1095 = vmatpush1.bf16.xpose.msra.mxu0 0
  %1096 = vmatprep.subr.bf16.mxu0 0
  %1097 = vmatpush1.bf16.xpose.msra.mxu0 0
  %1098 = vmatprep.subr.bf16.mxu0 0
  %1099 = vmatpush1.bf16.xpose.msra.mxu0 0
  %1100 = vmatprep.subr.bf16.mxu0 0
  %1101 = vmatpush1.bf16.xpose.msra.mxu0 0
  %1102 = vmatprep.mubr.bf16.mxu0 0
  %1103 = vmatmul.mubr.bf16.gmra.mrb[0].mxu0 %v1065
  %v1104 = vpop.f32.mrb[0].mxu0
  %v1105 = vadd.f32 0.0, %v1104
  %v1106 = vpop.f32.mrb[0].mxu0
  %v1107 = vpop.f32.mrb[0].mxu0
  %v1108 = vadd.f32 0.0, %v1107
  %v1109 = vpop.f32.mrb[0].mxu0
  %1110 = vdwg.mxu0
  %v1112 = vsel %vm871, %v1049, 0
  %v1115 = vsel %vm871, %v1057, 0
  %1117 = vmatprep.subr.bf16.mxu0 0
  %1118 = vmatpush1.bf16.xpose.msra.mxu0 %v1115
  %1119 = vmatprep.subr.bf16.mxu0 0
  %1120 = vmatpush1.bf16.xpose.msra.mxu0 0
  %1121 = vmatprep.subr.bf16.mxu0 0
  %1122 = vmatpush1.bf16.xpose.msra.mxu0 0
  %1123 = vmatprep.subr.bf16.mxu0 0
  %1124 = vmatpush1.bf16.xpose.msra.mxu0 0
  %1125 = vmatprep.subr.bf16.mxu0 0
  %1126 = vmatpush1.bf16.xpose.msra.mxu0 0
  %1127 = vmatprep.subr.bf16.mxu0 0
  %1128 = vmatpush1.bf16.xpose.msra.mxu0 0
  %1129 = vmatprep.subr.bf16.mxu0 0
  %1130 = vmatpush1.bf16.xpose.msra.mxu0 0
  %1131 = vmatprep.subr.bf16.mxu0 0
  %1132 = vmatpush1.bf16.xpose.msra.mxu0 0
  %1133 = vmatprep.subr.bf16.mxu0 0
  %1134 = vmatpush1.bf16.xpose.msra.mxu0 0
  %1135 = vmatprep.subr.bf16.mxu0 0
  %1136 = vmatpush1.bf16.xpose.msra.mxu0 0
  %1137 = vmatprep.subr.bf16.mxu0 0
  %1138 = vmatpush1.bf16.xpose.msra.mxu0 0
  %1139 = vmatprep.subr.bf16.mxu0 0
  %1140 = vmatpush1.bf16.xpose.msra.mxu0 0
  %1141 = vmatprep.subr.bf16.mxu0 0
  %1142 = vmatpush1.bf16.xpose.msra.mxu0 0
  %1143 = vmatprep.subr.bf16.mxu0 0
  %1144 = vmatpush1.bf16.xpose.msra.mxu0 0
  %1145 = vmatprep.subr.bf16.mxu0 0
  %1146 = vmatpush1.bf16.xpose.msra.mxu0 0
  %1147 = vmatprep.subr.bf16.mxu0 0
  %1148 = vmatpush1.bf16.xpose.msra.mxu0 0
  %1149 = vmatprep.mubr.bf16.mxu0 0
  %1150 = vmatmul.mubr.bf16.gmra.mrb[0].mxu0 %v1112
  %v1151 = vpop.f32.mrb[0].mxu0
  %v1152 = vadd.f32 0.0, %v1151
  %v1153 = vpop.f32.mrb[0].mxu0
  %v1154 = vpop.f32.mrb[0].mxu0
  %v1155 = vadd.f32 0.0, %v1154
  %v1156 = vpop.f32.mrb[0].mxu0
  %1157 = vdwg.mxu0
  %v1159 = vsel %vm871, %v1050, 0
  %v1162 = vsel %vm871, %v1058, 0
  %1164 = vmatprep.subr.bf16.mxu0 0
  %1165 = vmatpush1.bf16.xpose.msra.mxu0 %v1162
  %1166 = vmatprep.subr.bf16.mxu0 0
  %1167 = vmatpush1.bf16.xpose.msra.mxu0 0
  %1168 = vmatprep.subr.bf16.mxu0 0
  %1169 = vmatpush1.bf16.xpose.msra.mxu0 0
  %1170 = vmatprep.subr.bf16.mxu0 0
  %1171 = vmatpush1.bf16.xpose.msra.mxu0 0
  %1172 = vmatprep.subr.bf16.mxu0 0
  %1173 = vmatpush1.bf16.xpose.msra.mxu0 0
  %1174 = vmatprep.subr.bf16.mxu0 0
  %1175 = vmatpush1.bf16.xpose.msra.mxu0 0
  %1176 = vmatprep.subr.bf16.mxu0 0
  %1177 = vmatpush1.bf16.xpose.msra.mxu0 0
  %1178 = vmatprep.subr.bf16.mxu0 0
  %1179 = vmatpush1.bf16.xpose.msra.mxu0 0
  %1180 = vmatprep.subr.bf16.mxu0 0
  %1181 = vmatpush1.bf16.xpose.msra.mxu0 0
  %1182 = vmatprep.subr.bf16.mxu0 0
  %1183 = vmatpush1.bf16.xpose.msra.mxu0 0
  %1184 = vmatprep.subr.bf16.mxu0 0
  %1185 = vmatpush1.bf16.xpose.msra.mxu0 0
  %1186 = vmatprep.subr.bf16.mxu0 0
  %1187 = vmatpush1.bf16.xpose.msra.mxu0 0
  %1188 = vmatprep.subr.bf16.mxu0 0
  %1189 = vmatpush1.bf16.xpose.msra.mxu0 0
  %1190 = vmatprep.subr.bf16.mxu0 0
  %1191 = vmatpush1.bf16.xpose.msra.mxu0 0
  %1192 = vmatprep.subr.bf16.mxu0 0
  %1193 = vmatpush1.bf16.xpose.msra.mxu0 0
  %1194 = vmatprep.subr.bf16.mxu0 0
  %1195 = vmatpush1.bf16.xpose.msra.mxu0 0
  %1196 = vmatprep.mubr.bf16.mxu0 0
  %1197 = vmatmul.mubr.bf16.gmra.mrb[0].mxu0 %v1159
  %v1198 = vpop.f32.mrb[0].mxu0
  %v1199 = vadd.f32 0.0, %v1198
  %v1200 = vpop.f32.mrb[0].mxu0
  %v1201 = vpop.f32.mrb[0].mxu0
  %v1202 = vadd.f32 0.0, %v1201
  %v1203 = vpop.f32.mrb[0].mxu0
  %1204 = vdwg.mxu0
  %v1206 = vsel %vm871, %v1051, 0
  %v1209 = vsel %vm871, %v1059, 0
  %1211 = vmatprep.subr.bf16.mxu0 0
  %1212 = vmatpush1.bf16.xpose.msra.mxu0 %v1209
  %1213 = vmatprep.subr.bf16.mxu0 0
  %1214 = vmatpush1.bf16.xpose.msra.mxu0 0
  %1215 = vmatprep.subr.bf16.mxu0 0
  %1216 = vmatpush1.bf16.xpose.msra.mxu0 0
  %1217 = vmatprep.subr.bf16.mxu0 0
  %1218 = vmatpush1.bf16.xpose.msra.mxu0 0
  %1219 = vmatprep.subr.bf16.mxu0 0
  %1220 = vmatpush1.bf16.xpose.msra.mxu0 0
  %1221 = vmatprep.subr.bf16.mxu0 0
  %1222 = vmatpush1.bf16.xpose.msra.mxu0 0
  %1223 = vmatprep.subr.bf16.mxu0 0
  %1224 = vmatpush1.bf16.xpose.msra.mxu0 0
  %1225 = vmatprep.subr.bf16.mxu0 0
  %1226 = vmatpush1.bf16.xpose.msra.mxu0 0
  %1227 = vmatprep.subr.bf16.mxu0 0
  %1228 = vmatpush1.bf16.xpose.msra.mxu0 0
  %1229 = vmatprep.subr.bf16.mxu0 0
  %1230 = vmatpush1.bf16.xpose.msra.mxu0 0
  %1231 = vmatprep.subr.bf16.mxu0 0
  %1232 = vmatpush1.bf16.xpose.msra.mxu0 0
  %1233 = vmatprep.subr.bf16.mxu0 0
  %1234 = vmatpush1.bf16.xpose.msra.mxu0 0
  %1235 = vmatprep.subr.bf16.mxu0 0
  %1236 = vmatpush1.bf16.xpose.msra.mxu0 0
  %1237 = vmatprep.subr.bf16.mxu0 0
  %1238 = vmatpush1.bf16.xpose.msra.mxu0 0
  %1239 = vmatprep.subr.bf16.mxu0 0
  %1240 = vmatpush1.bf16.xpose.msra.mxu0 0
  %1241 = vmatprep.subr.bf16.mxu0 0
  %1242 = vmatpush1.bf16.xpose.msra.mxu0 0
  %1243 = vmatprep.mubr.bf16.mxu0 0
  %1244 = vmatmul.mubr.bf16.gmra.mrb[0].mxu0 %v1206
  %v1245 = vpop.f32.mrb[0].mxu0
  %v1246 = vadd.f32 0.0, %v1245
  %v1247 = vpop.f32.mrb[0].mxu0
  %v1248 = vpop.f32.mrb[0].mxu0
  %v1249 = vadd.f32 0.0, %v1248
  %v1250 = vpop.f32.mrb[0].mxu0
  %1251 = vdwg.mxu0
  %v1253 = vsel %vm871, %v1052, 0
  %v1256 = vsel %vm871, %v1060, 0
  %1258 = vmatprep.subr.bf16.mxu0 0
  %1259 = vmatpush1.bf16.xpose.msra.mxu0 %v1256
  %1260 = vmatprep.subr.bf16.mxu0 0
  %1261 = vmatpush1.bf16.xpose.msra.mxu0 0
  %1262 = vmatprep.subr.bf16.mxu0 0
  %1263 = vmatpush1.bf16.xpose.msra.mxu0 0
  %1264 = vmatprep.subr.bf16.mxu0 0
  %1265 = vmatpush1.bf16.xpose.msra.mxu0 0
  %1266 = vmatprep.subr.bf16.mxu0 0
  %1267 = vmatpush1.bf16.xpose.msra.mxu0 0
  %1268 = vmatprep.subr.bf16.mxu0 0
  %1269 = vmatpush1.bf16.xpose.msra.mxu0 0
  %1270 = vmatprep.subr.bf16.mxu0 0
  %1271 = vmatpush1.bf16.xpose.msra.mxu0 0
  %1272 = vmatprep.subr.bf16.mxu0 0
  %1273 = vmatpush1.bf16.xpose.msra.mxu0 0
  %1274 = vmatprep.subr.bf16.mxu0 0
  %1275 = vmatpush1.bf16.xpose.msra.mxu0 0
  %1276 = vmatprep.subr.bf16.mxu0 0
  %1277 = vmatpush1.bf16.xpose.msra.mxu0 0
  %1278 = vmatprep.subr.bf16.mxu0 0
  %1279 = vmatpush1.bf16.xpose.msra.mxu0 0
  %1280 = vmatprep.subr.bf16.mxu0 0
  %1281 = vmatpush1.bf16.xpose.msra.mxu0 0
  %1282 = vmatprep.subr.bf16.mxu0 0
  %1283 = vmatpush1.bf16.xpose.msra.mxu0 0
  %1284 = vmatprep.subr.bf16.mxu0 0
  %1285 = vmatpush1.bf16.xpose.msra.mxu0 0
  %1286 = vmatprep.subr.bf16.mxu0 0
  %1287 = vmatpush1.bf16.xpose.msra.mxu0 0
  %1288 = vmatprep.subr.bf16.mxu0 0
  %1289 = vmatpush1.bf16.xpose.msra.mxu0 0
  %1290 = vmatprep.mubr.bf16.mxu0 0
  %1291 = vmatmul.mubr.bf16.gmra.mrb[0].mxu0 %v1253
  %v1292 = vpop.f32.mrb[0].mxu0
  %v1293 = vadd.f32 0.0, %v1292
  %v1294 = vpop.f32.mrb[0].mxu0
  %v1295 = vpop.f32.mrb[0].mxu0
  %v1296 = vadd.f32 0.0, %v1295
  %v1297 = vpop.f32.mrb[0].mxu0
  %1298 = vdwg.mxu0
  %v1300 = vsel %vm871, %v1053, 0
  %v1303 = vsel %vm871, %v1061, 0
  %1305 = vmatprep.subr.bf16.mxu0 0
  %1306 = vmatpush1.bf16.xpose.msra.mxu0 %v1303
  %1307 = vmatprep.subr.bf16.mxu0 0
  %1308 = vmatpush1.bf16.xpose.msra.mxu0 0
  %1309 = vmatprep.subr.bf16.mxu0 0
  %1310 = vmatpush1.bf16.xpose.msra.mxu0 0
  %1311 = vmatprep.subr.bf16.mxu0 0
  %1312 = vmatpush1.bf16.xpose.msra.mxu0 0
  %1313 = vmatprep.subr.bf16.mxu0 0
  %1314 = vmatpush1.bf16.xpose.msra.mxu0 0
  %1315 = vmatprep.subr.bf16.mxu0 0
  %1316 = vmatpush1.bf16.xpose.msra.mxu0 0
  %1317 = vmatprep.subr.bf16.mxu0 0
  %1318 = vmatpush1.bf16.xpose.msra.mxu0 0
  %1319 = vmatprep.subr.bf16.mxu0 0
  %1320 = vmatpush1.bf16.xpose.msra.mxu0 0
  %1321 = vmatprep.subr.bf16.mxu0 0
  %1322 = vmatpush1.bf16.xpose.msra.mxu0 0
  %1323 = vmatprep.subr.bf16.mxu0 0
  %1324 = vmatpush1.bf16.xpose.msra.mxu0 0
  %1325 = vmatprep.subr.bf16.mxu0 0
  %1326 = vmatpush1.bf16.xpose.msra.mxu0 0
  %1327 = vmatprep.subr.bf16.mxu0 0
  %1328 = vmatpush1.bf16.xpose.msra.mxu0 0
  %1329 = vmatprep.subr.bf16.mxu0 0
  %1330 = vmatpush1.bf16.xpose.msra.mxu0 0
  %1331 = vmatprep.subr.bf16.mxu0 0
  %1332 = vmatpush1.bf16.xpose.msra.mxu0 0
  %1333 = vmatprep.subr.bf16.mxu0 0
  %1334 = vmatpush1.bf16.xpose.msra.mxu0 0
  %1335 = vmatprep.subr.bf16.mxu0 0
  %1336 = vmatpush1.bf16.xpose.msra.mxu0 0
  %1337 = vmatprep.mubr.bf16.mxu0 0
  %1338 = vmatmul.mubr.bf16.gmra.mrb[0].mxu0 %v1300
  %v1339 = vpop.f32.mrb[0].mxu0
  %v1340 = vadd.f32 0.0, %v1339
  %v1341 = vpop.f32.mrb[0].mxu0
  %v1342 = vpop.f32.mrb[0].mxu0
  %v1343 = vadd.f32 0.0, %v1342
  %v1344 = vpop.f32.mrb[0].mxu0
  %1345 = vdwg.mxu0
  %v1347 = vsel %vm871, %v1054, 0
  %v1350 = vsel %vm871, %v1062, 0
  %1352 = vmatprep.subr.bf16.mxu0 0
  %1353 = vmatpush1.bf16.xpose.msra.mxu0 %v1350
  %1354 = vmatprep.subr.bf16.mxu0 0
  %1355 = vmatpush1.bf16.xpose.msra.mxu0 0
  %1356 = vmatprep.subr.bf16.mxu0 0
  %1357 = vmatpush1.bf16.xpose.msra.mxu0 0
  %1358 = vmatprep.subr.bf16.mxu0 0
  %1359 = vmatpush1.bf16.xpose.msra.mxu0 0
  %1360 = vmatprep.subr.bf16.mxu0 0
  %1361 = vmatpush1.bf16.xpose.msra.mxu0 0
  %1362 = vmatprep.subr.bf16.mxu0 0
  %1363 = vmatpush1.bf16.xpose.msra.mxu0 0
  %1364 = vmatprep.subr.bf16.mxu0 0
  %1365 = vmatpush1.bf16.xpose.msra.mxu0 0
  %1366 = vmatprep.subr.bf16.mxu0 0
  %1367 = vmatpush1.bf16.xpose.msra.mxu0 0
  %1368 = vmatprep.subr.bf16.mxu0 0
  %1369 = vmatpush1.bf16.xpose.msra.mxu0 0
  %1370 = vmatprep.subr.bf16.mxu0 0
  %1371 = vmatpush1.bf16.xpose.msra.mxu0 0
  %1372 = vmatprep.subr.bf16.mxu0 0
  %1373 = vmatpush1.bf16.xpose.msra.mxu0 0
  %1374 = vmatprep.subr.bf16.mxu0 0
  %1375 = vmatpush1.bf16.xpose.msra.mxu0 0
  %1376 = vmatprep.subr.bf16.mxu0 0
  %1377 = vmatpush1.bf16.xpose.msra.mxu0 0
  %1378 = vmatprep.subr.bf16.mxu0 0
  %1379 = vmatpush1.bf16.xpose.msra.mxu0 0
  %1380 = vmatprep.subr.bf16.mxu0 0
  %1381 = vmatpush1.bf16.xpose.msra.mxu0 0
  %1382 = vmatprep.subr.bf16.mxu0 0
  %1383 = vmatpush1.bf16.xpose.msra.mxu0 0
  %1384 = vmatprep.mubr.bf16.mxu0 0
  %1385 = vmatmul.mubr.bf16.gmra.mrb[0].mxu0 %v1347
  %v1386 = vpop.f32.mrb[0].mxu0
  %v1387 = vadd.f32 0.0, %v1386
  %v1388 = vpop.f32.mrb[0].mxu0
  %v1389 = vpop.f32.mrb[0].mxu0
  %v1390 = vadd.f32 0.0, %v1389
  %v1391 = vpop.f32.mrb[0].mxu0
  %1392 = vdwg.mxu0
  %v1394 = vsel %vm871, %v1055, 0
  %v1397 = vsel %vm871, %v1063, 0
  %1399 = vmatprep.subr.bf16.mxu0 0
  %1400 = vmatpush1.bf16.xpose.msra.mxu0 %v1397
  %1401 = vmatprep.subr.bf16.mxu0 0
  %1402 = vmatpush1.bf16.xpose.msra.mxu0 0
  %1403 = vmatprep.subr.bf16.mxu0 0
  %1404 = vmatpush1.bf16.xpose.msra.mxu0 0
  %1405 = vmatprep.subr.bf16.mxu0 0
  %1406 = vmatpush1.bf16.xpose.msra.mxu0 0
  %1407 = vmatprep.subr.bf16.mxu0 0
  %1408 = vmatpush1.bf16.xpose.msra.mxu0 0
  %1409 = vmatprep.subr.bf16.mxu0 0
  %1410 = vmatpush1.bf16.xpose.msra.mxu0 0
  %1411 = vmatprep.subr.bf16.mxu0 0
  %1412 = vmatpush1.bf16.xpose.msra.mxu0 0
  %1413 = vmatprep.subr.bf16.mxu0 0
  %1414 = vmatpush1.bf16.xpose.msra.mxu0 0
  %1415 = vmatprep.subr.bf16.mxu0 0
  %1416 = vmatpush1.bf16.xpose.msra.mxu0 0
  %1417 = vmatprep.subr.bf16.mxu0 0
  %1418 = vmatpush1.bf16.xpose.msra.mxu0 0
  %1419 = vmatprep.subr.bf16.mxu0 0
  %1420 = vmatpush1.bf16.xpose.msra.mxu0 0
  %1421 = vmatprep.subr.bf16.mxu0 0
  %1422 = vmatpush1.bf16.xpose.msra.mxu0 0
  %1423 = vmatprep.subr.bf16.mxu0 0
  %1424 = vmatpush1.bf16.xpose.msra.mxu0 0
  %1425 = vmatprep.subr.bf16.mxu0 0
  %1426 = vmatpush1.bf16.xpose.msra.mxu0 0
  %1427 = vmatprep.subr.bf16.mxu0 0
  %1428 = vmatpush1.bf16.xpose.msra.mxu0 0
  %1429 = vmatprep.subr.bf16.mxu0 0
  %1430 = vmatpush1.bf16.xpose.msra.mxu0 0
  %1431 = vmatprep.mubr.bf16.mxu0 0
  %1432 = vmatmul.mubr.bf16.gmra.mrb[0].mxu0 %v1394
  %v1433 = vpop.f32.mrb[0].mxu0
  %v1434 = vadd.f32 0.0, %v1433
  %v1435 = vpop.f32.mrb[0].mxu0
  %v1436 = vpop.f32.mrb[0].mxu0
  %v1437 = vadd.f32 0.0, %v1436
  %v1438 = vpop.f32.mrb[0].mxu0
  %1439 = vdwg.mxu0
  %1440 = vxpose.xlu0.b32.start [1/16] %v1105, 128
  %1441 = vxpose.xlu0.b32.cont [2/16] %v1108, 128
  %1442 = vxpose.xlu0.b32.cont [3/16] 0.0, 128
  %1443 = vxpose.xlu0.b32.cont [4/16] 0.0, 128
  %1444 = vxpose.xlu0.b32.cont [5/16] 0.0, 128
  %1445 = vxpose.xlu0.b32.cont [6/16] 0.0, 128
  %1446 = vxpose.xlu0.b32.cont [7/16] 0.0, 128
  %1447 = vxpose.xlu0.b32.cont [8/16] 0.0, 128
  %1448 = vxpose.xlu0.b32.cont [9/16] 0.0, 128
  %1449 = vxpose.xlu0.b32.cont [10/16] 0.0, 128
  %1450 = vxpose.xlu0.b32.cont [11/16] 0.0, 128
  %1451 = vxpose.xlu0.b32.cont [12/16] 0.0, 128
  %1452 = vxpose.xlu0.b32.cont [13/16] 0.0, 128
  %1453 = vxpose.xlu0.b32.cont [14/16] 0.0, 128
  %1454 = vxpose.xlu0.b32.cont [15/16] 0.0, 128
  %1455 = vxpose.xlu0.b32.end [16/16] 0.0, 128
  %v1456 = vpop.trf.xlu0
  %v1457 = vpop.trf.xlu0
  %v1458 = vpop.trf.xlu0
  %v1459 = vpop.trf.xlu0
  %v1460 = vpop.trf.xlu0
  %v1461 = vpop.trf.xlu0
  %v1462 = vpop.trf.xlu0
  %v1463 = vpop.trf.xlu0
  %v1464 = vpop.trf.xlu0
  %v1465 = vpop.trf.xlu0
  %v1466 = vpop.trf.xlu0
  %v1467 = vpop.trf.xlu0
  %v1468 = vpop.trf.xlu0
  %v1469 = vpop.trf.xlu0
  %v1470 = vpop.trf.xlu0
  %v1471 = vpop.trf.xlu0
  %1472 = vxpose.xlu0.b32.start [1/16] %v1152, 128
  %1473 = vxpose.xlu0.b32.cont [2/16] %v1155, 128
  %1474 = vxpose.xlu0.b32.cont [3/16] 0.0, 128
  %1475 = vxpose.xlu0.b32.cont [4/16] 0.0, 128
  %1476 = vxpose.xlu0.b32.cont [5/16] 0.0, 128
  %1477 = vxpose.xlu0.b32.cont [6/16] 0.0, 128
  %1478 = vxpose.xlu0.b32.cont [7/16] 0.0, 128
  %1479 = vxpose.xlu0.b32.cont [8/16] 0.0, 128
  %1480 = vxpose.xlu0.b32.cont [9/16] 0.0, 128
  %1481 = vxpose.xlu0.b32.cont [10/16] 0.0, 128
  %1482 = vxpose.xlu0.b32.cont [11/16] 0.0, 128
  %1483 = vxpose.xlu0.b32.cont [12/16] 0.0, 128
  %1484 = vxpose.xlu0.b32.cont [13/16] 0.0, 128
  %1485 = vxpose.xlu0.b32.cont [14/16] 0.0, 128
  %1486 = vxpose.xlu0.b32.cont [15/16] 0.0, 128
  %1487 = vxpose.xlu0.b32.end [16/16] 0.0, 128
  %v1488 = vpop.trf.xlu0
  %v1489 = vpop.trf.xlu0
  %v1490 = vpop.trf.xlu0
  %v1491 = vpop.trf.xlu0
  %v1492 = vpop.trf.xlu0
  %v1493 = vpop.trf.xlu0
  %v1494 = vpop.trf.xlu0
  %v1495 = vpop.trf.xlu0
  %v1496 = vpop.trf.xlu0
  %v1497 = vpop.trf.xlu0
  %v1498 = vpop.trf.xlu0
  %v1499 = vpop.trf.xlu0
  %v1500 = vpop.trf.xlu0
  %v1501 = vpop.trf.xlu0
  %v1502 = vpop.trf.xlu0
  %v1503 = vpop.trf.xlu0
  %1504 = vxpose.xlu0.b32.start [1/16] %v1199, 128
  %1505 = vxpose.xlu0.b32.cont [2/16] %v1202, 128
  %1506 = vxpose.xlu0.b32.cont [3/16] 0.0, 128
  %1507 = vxpose.xlu0.b32.cont [4/16] 0.0, 128
  %1508 = vxpose.xlu0.b32.cont [5/16] 0.0, 128
  %1509 = vxpose.xlu0.b32.cont [6/16] 0.0, 128
  %1510 = vxpose.xlu0.b32.cont [7/16] 0.0, 128
  %1511 = vxpose.xlu0.b32.cont [8/16] 0.0, 128
  %1512 = vxpose.xlu0.b32.cont [9/16] 0.0, 128
  %1513 = vxpose.xlu0.b32.cont [10/16] 0.0, 128
  %1514 = vxpose.xlu0.b32.cont [11/16] 0.0, 128
  %1515 = vxpose.xlu0.b32.cont [12/16] 0.0, 128
  %1516 = vxpose.xlu0.b32.cont [13/16] 0.0, 128
  %1517 = vxpose.xlu0.b32.cont [14/16] 0.0, 128
  %1518 = vxpose.xlu0.b32.cont [15/16] 0.0, 128
  %1519 = vxpose.xlu0.b32.end [16/16] 0.0, 128
  %v1520 = vpop.trf.xlu0
  %v1521 = vpop.trf.xlu0
  %v1522 = vpop.trf.xlu0
  %v1523 = vpop.trf.xlu0
  %v1524 = vpop.trf.xlu0
  %v1525 = vpop.trf.xlu0
  %v1526 = vpop.trf.xlu0
  %v1527 = vpop.trf.xlu0
  %v1528 = vpop.trf.xlu0
  %v1529 = vpop.trf.xlu0
  %v1530 = vpop.trf.xlu0
  %v1531 = vpop.trf.xlu0
  %v1532 = vpop.trf.xlu0
  %v1533 = vpop.trf.xlu0
  %v1534 = vpop.trf.xlu0
  %v1535 = vpop.trf.xlu0
  %1536 = vxpose.xlu0.b32.start [1/16] %v1246, 128
  %1537 = vxpose.xlu0.b32.cont [2/16] %v1249, 128
  %1538 = vxpose.xlu0.b32.cont [3/16] 0.0, 128
  %1539 = vxpose.xlu0.b32.cont [4/16] 0.0, 128
  %1540 = vxpose.xlu0.b32.cont [5/16] 0.0, 128
  %1541 = vxpose.xlu0.b32.cont [6/16] 0.0, 128
  %1542 = vxpose.xlu0.b32.cont [7/16] 0.0, 128
  %1543 = vxpose.xlu0.b32.cont [8/16] 0.0, 128
  %1544 = vxpose.xlu0.b32.cont [9/16] 0.0, 128
  %1545 = vxpose.xlu0.b32.cont [10/16] 0.0, 128
  %1546 = vxpose.xlu0.b32.cont [11/16] 0.0, 128
  %1547 = vxpose.xlu0.b32.cont [12/16] 0.0, 128
  %1548 = vxpose.xlu0.b32.cont [13/16] 0.0, 128
  %1549 = vxpose.xlu0.b32.cont [14/16] 0.0, 128
  %1550 = vxpose.xlu0.b32.cont [15/16] 0.0, 128
  %1551 = vxpose.xlu0.b32.end [16/16] 0.0, 128
  %v1552 = vpop.trf.xlu0
  %v1553 = vpop.trf.xlu0
  %v1554 = vpop.trf.xlu0
  %v1555 = vpop.trf.xlu0
  %v1556 = vpop.trf.xlu0
  %v1557 = vpop.trf.xlu0
  %v1558 = vpop.trf.xlu0
  %v1559 = vpop.trf.xlu0
  %v1560 = vpop.trf.xlu0
  %v1561 = vpop.trf.xlu0
  %v1562 = vpop.trf.xlu0
  %v1563 = vpop.trf.xlu0
  %v1564 = vpop.trf.xlu0
  %v1565 = vpop.trf.xlu0
  %v1566 = vpop.trf.xlu0
  %v1567 = vpop.trf.xlu0
  %1568 = vxpose.xlu0.b32.start [1/16] %v1293, 128
  %1569 = vxpose.xlu0.b32.cont [2/16] %v1296, 128
  %1570 = vxpose.xlu0.b32.cont [3/16] 0.0, 128
  %1571 = vxpose.xlu0.b32.cont [4/16] 0.0, 128
  %1572 = vxpose.xlu0.b32.cont [5/16] 0.0, 128
  %1573 = vxpose.xlu0.b32.cont [6/16] 0.0, 128
  %1574 = vxpose.xlu0.b32.cont [7/16] 0.0, 128
  %1575 = vxpose.xlu0.b32.cont [8/16] 0.0, 128
  %1576 = vxpose.xlu0.b32.cont [9/16] 0.0, 128
  %1577 = vxpose.xlu0.b32.cont [10/16] 0.0, 128
  %1578 = vxpose.xlu0.b32.cont [11/16] 0.0, 128
  %1579 = vxpose.xlu0.b32.cont [12/16] 0.0, 128
  %1580 = vxpose.xlu0.b32.cont [13/16] 0.0, 128
  %1581 = vxpose.xlu0.b32.cont [14/16] 0.0, 128
  %1582 = vxpose.xlu0.b32.cont [15/16] 0.0, 128
  %1583 = vxpose.xlu0.b32.end [16/16] 0.0, 128
  %v1584 = vpop.trf.xlu0
  %v1585 = vpop.trf.xlu0
  %v1586 = vpop.trf.xlu0
  %v1587 = vpop.trf.xlu0
  %v1588 = vpop.trf.xlu0
  %v1589 = vpop.trf.xlu0
  %v1590 = vpop.trf.xlu0
  %v1591 = vpop.trf.xlu0
  %v1592 = vpop.trf.xlu0
  %v1593 = vpop.trf.xlu0
  %v1594 = vpop.trf.xlu0
  %v1595 = vpop.trf.xlu0
  %v1596 = vpop.trf.xlu0
  %v1597 = vpop.trf.xlu0
  %v1598 = vpop.trf.xlu0
  %v1599 = vpop.trf.xlu0
  %1600 = vxpose.xlu0.b32.start [1/16] %v1340, 128
  %1601 = vxpose.xlu0.b32.cont [2/16] %v1343, 128
  %1602 = vxpose.xlu0.b32.cont [3/16] 0.0, 128
  %1603 = vxpose.xlu0.b32.cont [4/16] 0.0, 128
  %1604 = vxpose.xlu0.b32.cont [5/16] 0.0, 128
  %1605 = vxpose.xlu0.b32.cont [6/16] 0.0, 128
  %1606 = vxpose.xlu0.b32.cont [7/16] 0.0, 128
  %1607 = vxpose.xlu0.b32.cont [8/16] 0.0, 128
  %1608 = vxpose.xlu0.b32.cont [9/16] 0.0, 128
  %1609 = vxpose.xlu0.b32.cont [10/16] 0.0, 128
  %1610 = vxpose.xlu0.b32.cont [11/16] 0.0, 128
  %1611 = vxpose.xlu0.b32.cont [12/16] 0.0, 128
  %1612 = vxpose.xlu0.b32.cont [13/16] 0.0, 128
  %1613 = vxpose.xlu0.b32.cont [14/16] 0.0, 128
  %1614 = vxpose.xlu0.b32.cont [15/16] 0.0, 128
  %1615 = vxpose.xlu0.b32.end [16/16] 0.0, 128
  %v1616 = vpop.trf.xlu0
  %v1617 = vpop.trf.xlu0
  %v1618 = vpop.trf.xlu0
  %v1619 = vpop.trf.xlu0
  %v1620 = vpop.trf.xlu0
  %v1621 = vpop.trf.xlu0
  %v1622 = vpop.trf.xlu0
  %v1623 = vpop.trf.xlu0
  %v1624 = vpop.trf.xlu0
  %v1625 = vpop.trf.xlu0
  %v1626 = vpop.trf.xlu0
  %v1627 = vpop.trf.xlu0
  %v1628 = vpop.trf.xlu0
  %v1629 = vpop.trf.xlu0
  %v1630 = vpop.trf.xlu0
  %v1631 = vpop.trf.xlu0
  %1632 = vxpose.xlu0.b32.start [1/16] %v1387, 128
  %1633 = vxpose.xlu0.b32.cont [2/16] %v1390, 128
  %1634 = vxpose.xlu0.b32.cont [3/16] 0.0, 128
  %1635 = vxpose.xlu0.b32.cont [4/16] 0.0, 128
  %1636 = vxpose.xlu0.b32.cont [5/16] 0.0, 128
  %1637 = vxpose.xlu0.b32.cont [6/16] 0.0, 128
  %1638 = vxpose.xlu0.b32.cont [7/16] 0.0, 128
  %1639 = vxpose.xlu0.b32.cont [8/16] 0.0, 128
  %1640 = vxpose.xlu0.b32.cont [9/16] 0.0, 128
  %1641 = vxpose.xlu0.b32.cont [10/16] 0.0, 128
  %1642 = vxpose.xlu0.b32.cont [11/16] 0.0, 128
  %1643 = vxpose.xlu0.b32.cont [12/16] 0.0, 128
  %1644 = vxpose.xlu0.b32.cont [13/16] 0.0, 128
  %1645 = vxpose.xlu0.b32.cont [14/16] 0.0, 128
  %1646 = vxpose.xlu0.b32.cont [15/16] 0.0, 128
  %1647 = vxpose.xlu0.b32.end [16/16] 0.0, 128
  %v1648 = vpop.trf.xlu0
  %v1649 = vpop.trf.xlu0
  %v1650 = vpop.trf.xlu0
  %v1651 = vpop.trf.xlu0
  %v1652 = vpop.trf.xlu0
  %v1653 = vpop.trf.xlu0
  %v1654 = vpop.trf.xlu0
  %v1655 = vpop.trf.xlu0
  %v1656 = vpop.trf.xlu0
  %v1657 = vpop.trf.xlu0
  %v1658 = vpop.trf.xlu0
  %v1659 = vpop.trf.xlu0
  %v1660 = vpop.trf.xlu0
  %v1661 = vpop.trf.xlu0
  %v1662 = vpop.trf.xlu0
  %v1663 = vpop.trf.xlu0
  %1664 = vxpose.xlu0.b32.start [1/16] %v1434, 128
  %1665 = vxpose.xlu0.b32.cont [2/16] %v1437, 128
  %1666 = vxpose.xlu0.b32.cont [3/16] 0.0, 128
  %1667 = vxpose.xlu0.b32.cont [4/16] 0.0, 128
  %1668 = vxpose.xlu0.b32.cont [5/16] 0.0, 128
  %1669 = vxpose.xlu0.b32.cont [6/16] 0.0, 128
  %1670 = vxpose.xlu0.b32.cont [7/16] 0.0, 128
  %1671 = vxpose.xlu0.b32.cont [8/16] 0.0, 128
  %1672 = vxpose.xlu0.b32.cont [9/16] 0.0, 128
  %1673 = vxpose.xlu0.b32.cont [10/16] 0.0, 128
  %1674 = vxpose.xlu0.b32.cont [11/16] 0.0, 128
  %1675 = vxpose.xlu0.b32.cont [12/16] 0.0, 128
  %1676 = vxpose.xlu0.b32.cont [13/16] 0.0, 128
  %1677 = vxpose.xlu0.b32.cont [14/16] 0.0, 128
  %1678 = vxpose.xlu0.b32.cont [15/16] 0.0, 128
  %1679 = vxpose.xlu0.b32.end [16/16] 0.0, 128
  %v1680 = vpop.trf.xlu0
  %v1681 = vpop.trf.xlu0
  %v1682 = vpop.trf.xlu0
  %v1683 = vpop.trf.xlu0
  %v1684 = vpop.trf.xlu0
  %v1685 = vpop.trf.xlu0
  %v1686 = vpop.trf.xlu0
  %v1687 = vpop.trf.xlu0
  %v1688 = vpop.trf.xlu0
  %v1689 = vpop.trf.xlu0
  %v1690 = vpop.trf.xlu0
  %v1691 = vpop.trf.xlu0
  %v1692 = vpop.trf.xlu0
  %v1693 = vpop.trf.xlu0
  %v1694 = vpop.trf.xlu0
  %v1695 = vpop.trf.xlu0
  %1696 = vxpose.xlu0.b32.start [1/16] %v1456, 128
  %1697 = vxpose.xlu0.b32.cont [2/16] %v1488, 128
  %1698 = vxpose.xlu0.b32.cont [3/16] %v1520, 128
  %1699 = vxpose.xlu0.b32.cont [4/16] %v1552, 128
  %1700 = vxpose.xlu0.b32.cont [5/16] %v1584, 128
  %1701 = vxpose.xlu0.b32.cont [6/16] %v1616, 128
  %1702 = vxpose.xlu0.b32.cont [7/16] %v1648, 128
  %1703 = vxpose.xlu0.b32.cont [8/16] %v1680, 128
  %1704 = vxpose.xlu0.b32.cont [9/16] 0.0, 128
  %1705 = vxpose.xlu0.b32.cont [10/16] 0.0, 128
  %1706 = vxpose.xlu0.b32.cont [11/16] 0.0, 128
  %1707 = vxpose.xlu0.b32.cont [12/16] 0.0, 128
  %1708 = vxpose.xlu0.b32.cont [13/16] 0.0, 128
  %1709 = vxpose.xlu0.b32.cont [14/16] 0.0, 128
  %1710 = vxpose.xlu0.b32.cont [15/16] 0.0, 128
  %1711 = vxpose.xlu0.b32.end [16/16] 0.0, 128
  %v1712 = vpop.trf.xlu0
  %v1713 = vpop.trf.xlu0
  %v1714 = vpop.trf.xlu0
  %v1715 = vpop.trf.xlu0
  %v1716 = vpop.trf.xlu0
  %v1717 = vpop.trf.xlu0
  %v1718 = vpop.trf.xlu0
  %v1719 = vpop.trf.xlu0
  %v1720 = vpop.trf.xlu0
  %v1721 = vpop.trf.xlu0
  %v1722 = vpop.trf.xlu0
  %v1723 = vpop.trf.xlu0
  %v1724 = vpop.trf.xlu0
  %v1725 = vpop.trf.xlu0
  %v1726 = vpop.trf.xlu0
  %v1727 = vpop.trf.xlu0
  %v1728 = vpack.c.bf16 %v1713, %v1712
  %v1729 = vld [vmem:[%s17] sm:$0xf]
  %v1730 = vld [vmem:[%s17 + $0x4] sm:$0xf]
  %v1731 = vld [vmem:[%s17 + $0x8] sm:$0xf]
  %v1732 = vld [vmem:[%s17 + $0xc] sm:$0xf]
  %v1733 = vld [vmem:[%s17 + $0x10] sm:$0xf]
  %v1734 = vld [vmem:[%s17 + $0x14] sm:$0xf]
  %v1735 = vld [vmem:[%s17 + $0x18] sm:$0xf]
  %v1736 = vld [vmem:[%s17 + $0x1c] sm:$0xf]
  %v1737 = vld [vmem:[%s19] sm:$0x1]
  %v1739 = vlaneseq
  %v1740 = vshrl.u32 %v1739, 7
  %v1741 = vsub.s32 0, %v1740
  %v1742 = vrot.slane %v1737, %v1741
  %v1752 = vunpack.c.l.b16 %v1729
  %v1753 = vunpack.c.l.b16 %v1730
  %v1754 = vunpack.c.l.b16 %v1731
  %v1755 = vunpack.c.l.b16 %v1732
  %v1756 = vunpack.c.l.b16 %v1733
  %v1757 = vunpack.c.l.b16 %v1734
  %v1758 = vunpack.c.l.b16 %v1735
  %v1759 = vunpack.c.l.b16 %v1736
  %v1760 = vpack.c.b16 %v1753, %v1752
  %v1761 = vpack.c.b16 %v1755, %v1754
  %v1762 = vpack.c.b16 %v1757, %v1756
  %v1763 = vpack.c.b16 %v1759, %v1758
  %v1769 = vsel %vm238, %v1728, 0
  %1771 = vmatprep.subr.bf16.mxu0 0
  %1772 = vmatpush1.bf16.msra.mxu0 %v1760
  %1773 = vmatprep.subr.bf16.mxu0 0
  %1774 = vmatpush1.bf16.msra.mxu0 %v1761
  %1775 = vmatprep.subr.bf16.mxu0 0
  %1776 = vmatpush1.bf16.msra.mxu0 %v1762
  %1777 = vmatprep.subr.bf16.mxu0 0
  %1778 = vmatpush1.bf16.msra.mxu0 %v1763
  %1779 = vmatprep.subr.bf16.mxu0 0
  %1780 = vmatpush1.bf16.msra.mxu0 0
  %1781 = vmatprep.subr.bf16.mxu0 0
  %1782 = vmatpush1.bf16.msra.mxu0 0
  %1783 = vmatprep.subr.bf16.mxu0 0
  %1784 = vmatpush1.bf16.msra.mxu0 0
  %1785 = vmatprep.subr.bf16.mxu0 0
  %1786 = vmatpush1.bf16.msra.mxu0 0
  %1787 = vmatprep.subr.bf16.mxu0 0
  %1788 = vmatpush1.bf16.msra.mxu0 0
  %1789 = vmatprep.subr.bf16.mxu0 0
  %1790 = vmatpush1.bf16.msra.mxu0 0
  %1791 = vmatprep.subr.bf16.mxu0 0
  %1792 = vmatpush1.bf16.msra.mxu0 0
  %1793 = vmatprep.subr.bf16.mxu0 0
  %1794 = vmatpush1.bf16.msra.mxu0 0
  %1795 = vmatprep.subr.bf16.mxu0 0
  %1796 = vmatpush1.bf16.msra.mxu0 0
  %1797 = vmatprep.subr.bf16.mxu0 0
  %1798 = vmatpush1.bf16.msra.mxu0 0
  %1799 = vmatprep.subr.bf16.mxu0 0
  %1800 = vmatpush1.bf16.msra.mxu0 0
  %1801 = vmatprep.subr.bf16.mxu0 0
  %1802 = vmatpush1.bf16.msra.mxu0 0
  %1803 = vmatprep.mubr.bf16.mxu0 0
  %1804 = vmatmul.mubr.bf16.gmra.mrb[0].mxu0 %v1769
  %v1805 = vpop.f32.mrb[0].mxu0
  %v1806 = vadd.f32 %v1742, %v1805
  %v1807 = vpop.f32.mrb[0].mxu0
  %v1808 = vpop.f32.mrb[0].mxu0
  %v1809 = vadd.f32 %v1742, %v1808
  %v1810 = vpop.f32.mrb[0].mxu0
  %1811 = vdwg.mxu0
  %v1812 = vadd.f32 %v173, %v1806
  %v1813 = vadd.f32 %v174, %v1809
  %v1814 = vld [vmem:[%s21] sm:$0x1]
  %v1815 = vld [vmem:[%s23] sm:$0x1]
  %v1816 = vsel %vm238, %v1812, 0.0
  %1817 = vadd.xlane.f32.xlu0 %v1816
  %v1818 = vpop.xlane.xlu0 %1817
  %v1819 = vsel %vm238, %v1813, 0.0
  %1820 = vadd.xlane.f32.xlu0 %v1819
  %v1821 = vpop.xlane.xlu0 %1820
  %v1822 = vrcp.pop 64.0
  %v1823 = vmul.f32 %v1818, %v1822
  %v1824 = vmul.f32 %v1821, %v1822
  %v1825 = vsub.f32 %v1812, %v1823
  %v1826 = vsub.f32 %v1813, %v1824
  %v1827 = vmul.f32 %v1825, %v1825
  %v1828 = vmul.f32 %v1826, %v1826
  %v1829 = vsel %vm238, %v1827, 0.0
  %1830 = vadd.xlane.f32.xlu0 %v1829
  %v1831 = vpop.xlane.xlu0 %1830
  %v1832 = vsel %vm238, %v1828, 0.0
  %1833 = vadd.xlane.f32.xlu0 %v1832
  %v1834 = vpop.xlane.xlu0 %1833
  %v1835 = vmul.f32 %v1831, %v1822
  %v1836 = vmul.f32 %v1834, %v1822
  %v1837 = vadd.f32 %v1835, 1e-05
  %v1838 = vadd.f32 %v1836, 1e-05
  %v1839 = vrsqrt.pop %v1837
  %v1840 = vrsqrt.pop %v1838
  %v1841 = vmul.f32 %v1825, %v1839
  %v1842 = vmul.f32 %v1826, %v1840
  %v1844 = vlaneseq
  %v1845 = vshrl.u32 %v1844, 7
  %v1846 = vsub.s32 0, %v1845
  %v1847 = vrot.slane %v1814, %v1846
  %v1849 = vmul.f32 %v1841, %v1847
  %v1850 = vmul.f32 %v1842, %v1847
  %v1852 = vlaneseq
  %v1853 = vshrl.u32 %v1852, 7
  %v1854 = vsub.s32 0, %v1853
  %v1855 = vrot.slane %v1815, %v1854
  %v1857 = vadd.f32 %v1849, %v1855
  %v1858 = vadd.f32 %v1850, %v1855
  %v1859 = vpack.c.bf16 %v1858, %v1857
  %v1860 = vld [vmem:[%s25] sm:$0xff]
  %v1861 = vld [vmem:[%s25 + $0x8] sm:$0xff]
  %v1862 = vld [vmem:[%s25 + $0x10] sm:$0xff]
  %v1863 = vld [vmem:[%s25 + $0x18] sm:$0xff]
  %v1864 = vld [vmem:[%s25 + $0x20] sm:$0xff]
  %v1865 = vld [vmem:[%s25 + $0x28] sm:$0xff]
  %v1866 = vld [vmem:[%s25 + $0x30] sm:$0xff]
  %v1867 = vld [vmem:[%s25 + $0x38] sm:$0xff]
  %v1868 = vld [vmem:[%s27] sm:$0x3]
  %v1870 = vlaneseq
  %v1871 = vshrl.u32 %v1870, 7
  %v1872 = vsub.s32 0, %v1871
  %v1873 = vrot.slane %v1868, %v1872
  %v1874 = vlaneseq
  %v1875 = vshrl.u32 %v1874, 7
  %v1876 = vsub.s32 1, %v1875
  %v1877 = vrot.slane %v1868, %v1876
  %v1888 = vunpack.c.l.b16 %v1860
  %v1889 = vunpack.c.h.b16 %v1860
  %v1890 = vunpack.c.l.b16 %v1861
  %v1891 = vunpack.c.h.b16 %v1861
  %v1892 = vunpack.c.l.b16 %v1862
  %v1893 = vunpack.c.h.b16 %v1862
  %v1894 = vunpack.c.l.b16 %v1863
  %v1895 = vunpack.c.h.b16 %v1863
  %v1896 = vunpack.c.l.b16 %v1864
  %v1897 = vunpack.c.h.b16 %v1864
  %v1898 = vunpack.c.l.b16 %v1865
  %v1899 = vunpack.c.h.b16 %v1865
  %v1900 = vunpack.c.l.b16 %v1866
  %v1901 = vunpack.c.h.b16 %v1866
  %v1902 = vunpack.c.l.b16 %v1867
  %v1903 = vunpack.c.h.b16 %v1867
  %v1904 = vpack.c.b16 %v1890, %v1888
  %v1905 = vpack.c.b16 %v1891, %v1889
  %v1906 = vpack.c.b16 %v1894, %v1892
  %v1907 = vpack.c.b16 %v1895, %v1893
  %v1908 = vpack.c.b16 %v1898, %v1896
  %v1909 = vpack.c.b16 %v1899, %v1897
  %v1910 = vpack.c.b16 %v1902, %v1900
  %v1911 = vpack.c.b16 %v1903, %v1901
  %v1921 = vsel %vm238, %v1859, 0
  %1923 = vmatprep.subr.bf16.mxu0 %v1905
  %1924 = vmatpush1.bf16.msra.mxu0 %v1904
  %1925 = vmatprep.subr.bf16.mxu0 %v1907
  %1926 = vmatpush1.bf16.msra.mxu0 %v1906
  %1927 = vmatprep.subr.bf16.mxu0 %v1909
  %1928 = vmatpush1.bf16.msra.mxu0 %v1908
  %1929 = vmatprep.subr.bf16.mxu0 %v1911
  %1930 = vmatpush1.bf16.msra.mxu0 %v1910
  %1931 = vmatprep.subr.bf16.mxu0 0
  %1932 = vmatpush1.bf16.msra.mxu0 0
  %1933 = vmatprep.subr.bf16.mxu0 0
  %1934 = vmatpush1.bf16.msra.mxu0 0
  %1935 = vmatprep.subr.bf16.mxu0 0
  %1936 = vmatpush1.bf16.msra.mxu0 0
  %1937 = vmatprep.subr.bf16.mxu0 0
  %1938 = vmatpush1.bf16.msra.mxu0 0
  %1939 = vmatprep.subr.bf16.mxu0 0
  %1940 = vmatpush1.bf16.msra.mxu0 0
  %1941 = vmatprep.subr.bf16.mxu0 0
  %1942 = vmatpush1.bf16.msra.mxu0 0
  %1943 = vmatprep.subr.bf16.mxu0 0
  %1944 = vmatpush1.bf16.msra.mxu0 0
  %1945 = vmatprep.subr.bf16.mxu0 0
  %1946 = vmatpush1.bf16.msra.mxu0 0
  %1947 = vmatprep.subr.bf16.mxu0 0
  %1948 = vmatpush1.bf16.msra.mxu0 0
  %1949 = vmatprep.subr.bf16.mxu0 0
  %1950 = vmatpush1.bf16.msra.mxu0 0
  %1951 = vmatprep.subr.bf16.mxu0 0
  %1952 = vmatpush1.bf16.msra.mxu0 0
  %1953 = vmatprep.subr.bf16.mxu0 0
  %1954 = vmatpush1.bf16.msra.mxu0 0
  %1955 = vmatprep.mubr.bf16.mxu0 0
  %1956 = vmatmul.mubr.bf16.gmra.mrb[0].mxu0 %v1921
  %v1957 = vpop.f32.mrb[0].mxu0
  %v1958 = vadd.f32 %v1873, %v1957
  %v1959 = vpop.f32.mrb[0].mxu0
  %v1960 = vadd.f32 %v1877, %v1959
  %v1961 = vpop.f32.mrb[0].mxu0
  %v1962 = vadd.f32 %v1873, %v1961
  %v1963 = vpop.f32.mrb[0].mxu0
  %v1964 = vadd.f32 %v1877, %v1963
  %1965 = vdwg.mxu0
  %v1966 = vmax.f32 %v1958, 0.0
  %v1967 = vmax.f32 %v1960, 0.0
  %v1968 = vmax.f32 %v1962, 0.0
  %v1969 = vmax.f32 %v1964, 0.0
  %v1970 = vpack.c.bf16 %v1968, %v1966
  %v1971 = vpack.c.bf16 %v1969, %v1967
  %v1972 = vld [vmem:[%s29] sm:$0xf]
  %v1973 = vld [vmem:[%s29 + $0x4] sm:$0xf]
  %v1974 = vld [vmem:[%s29 + $0x8] sm:$0xf]
  %v1975 = vld [vmem:[%s29 + $0xc] sm:$0xf]
  %v1976 = vld [vmem:[%s29 + $0x10] sm:$0xf]
  %v1977 = vld [vmem:[%s29 + $0x14] sm:$0xf]
  %v1978 = vld [vmem:[%s29 + $0x18] sm:$0xf]
  %v1979 = vld [vmem:[%s29 + $0x1c] sm:$0xf]
  %v1980 = vld [vmem:[%s29 + $0x20] sm:$0xf]
  %v1981 = vld [vmem:[%s29 + $0x24] sm:$0xf]
  %v1982 = vld [vmem:[%s29 + $0x28] sm:$0xf]
  %v1983 = vld [vmem:[%s29 + $0x2c] sm:$0xf]
  %v1984 = vld [vmem:[%s29 + $0x30] sm:$0xf]
  %v1985 = vld [vmem:[%s29 + $0x34] sm:$0xf]
  %v1986 = vld [vmem:[%s29 + $0x38] sm:$0xf]
  %v1987 = vld [vmem:[%s29 + $0x3c] sm:$0xf]
  %v1988 = vld [vmem:[%s29 + $0x40] sm:$0xf]
  %v1989 = vld [vmem:[%s29 + $0x44] sm:$0xf]
  %v1990 = vld [vmem:[%s29 + $0x48] sm:$0xf]
  %v1991 = vld [vmem:[%s29 + $0x4c] sm:$0xf]
  %v1992 = vld [vmem:[%s29 + $0x50] sm:$0xf]
  %v1993 = vld [vmem:[%s29 + $0x54] sm:$0xf]
  %v1994 = vld [vmem:[%s29 + $0x58] sm:$0xf]
  %v1995 = vld [vmem:[%s29 + $0x5c] sm:$0xf]
  %v1996 = vld [vmem:[%s29 + $0x60] sm:$0xf]
  %v1997 = vld [vmem:[%s29 + $0x64] sm:$0xf]
  %v1998 = vld [vmem:[%s29 + $0x68] sm:$0xf]
  %v1999 = vld [vmem:[%s29 + $0x6c] sm:$0xf]
  %v2000 = vld [vmem:[%s29 + $0x70] sm:$0xf]
  %v2001 = vld [vmem:[%s29 + $0x74] sm:$0xf]
  %v2002 = vld [vmem:[%s29 + $0x78] sm:$0xf]
  %v2003 = vld [vmem:[%s29 + $0x7c] sm:$0xf]
  %v2004 = vld [vmem:[%s31] sm:$0x1]
  %v2006 = vlaneseq
  %v2007 = vshrl.u32 %v2006, 7
  %v2008 = vsub.s32 0, %v2007
  %v2009 = vrot.slane %v2004, %v2008
  %v2043 = vunpack.c.l.b16 %v1972
  %v2044 = vunpack.c.l.b16 %v1973
  %v2045 = vunpack.c.l.b16 %v1974
  %v2046 = vunpack.c.l.b16 %v1975
  %v2047 = vunpack.c.l.b16 %v1976
  %v2048 = vunpack.c.l.b16 %v1977
  %v2049 = vunpack.c.l.b16 %v1978
  %v2050 = vunpack.c.l.b16 %v1979
  %v2051 = vunpack.c.l.b16 %v1980
  %v2052 = vunpack.c.l.b16 %v1981
  %v2053 = vunpack.c.l.b16 %v1982
  %v2054 = vunpack.c.l.b16 %v1983
  %v2055 = vunpack.c.l.b16 %v1984
  %v2056 = vunpack.c.l.b16 %v1985
  %v2057 = vunpack.c.l.b16 %v1986
  %v2058 = vunpack.c.l.b16 %v1987
  %v2059 = vunpack.c.l.b16 %v1988
  %v2060 = vunpack.c.l.b16 %v1989
  %v2061 = vunpack.c.l.b16 %v1990
  %v2062 = vunpack.c.l.b16 %v1991
  %v2063 = vunpack.c.l.b16 %v1992
  %v2064 = vunpack.c.l.b16 %v1993
  %v2065 = vunpack.c.l.b16 %v1994
  %v2066 = vunpack.c.l.b16 %v1995
  %v2067 = vunpack.c.l.b16 %v1996
  %v2068 = vunpack.c.l.b16 %v1997
  %v2069 = vunpack.c.l.b16 %v1998
  %v2070 = vunpack.c.l.b16 %v1999
  %v2071 = vunpack.c.l.b16 %v2000
  %v2072 = vunpack.c.l.b16 %v2001
  %v2073 = vunpack.c.l.b16 %v2002
  %v2074 = vunpack.c.l.b16 %v2003
  %v2075 = vpack.c.b16 %v2044, %v2043
  %v2076 = vpack.c.b16 %v2046, %v2045
  %v2077 = vpack.c.b16 %v2048, %v2047
  %v2078 = vpack.c.b16 %v2050, %v2049
  %v2079 = vpack.c.b16 %v2052, %v2051
  %v2080 = vpack.c.b16 %v2054, %v2053
  %v2081 = vpack.c.b16 %v2056, %v2055
  %v2082 = vpack.c.b16 %v2058, %v2057
  %v2083 = vpack.c.b16 %v2060, %v2059
  %v2084 = vpack.c.b16 %v2062, %v2061
  %v2085 = vpack.c.b16 %v2064, %v2063
  %v2086 = vpack.c.b16 %v2066, %v2065
  %v2087 = vpack.c.b16 %v2068, %v2067
  %v2088 = vpack.c.b16 %v2070, %v2069
  %v2089 = vpack.c.b16 %v2072, %v2071
  %v2090 = vpack.c.b16 %v2074, %v2073
  %2107 = vmatprep.subr.bf16.mxu0 0
  %2108 = vmatpush1.bf16.msra.mxu0 %v2075
  %2109 = vmatprep.subr.bf16.mxu0 0
  %2110 = vmatpush1.bf16.msra.mxu0 %v2076
  %2111 = vmatprep.subr.bf16.mxu0 0
  %2112 = vmatpush1.bf16.msra.mxu0 %v2077
  %2113 = vmatprep.subr.bf16.mxu0 0
  %2114 = vmatpush1.bf16.msra.mxu0 %v2078
  %2115 = vmatprep.subr.bf16.mxu0 0
  %2116 = vmatpush1.bf16.msra.mxu0 %v2079
  %2117 = vmatprep.subr.bf16.mxu0 0
  %2118 = vmatpush1.bf16.msra.mxu0 %v2080
  %2119 = vmatprep.subr.bf16.mxu0 0
  %2120 = vmatpush1.bf16.msra.mxu0 %v2081
  %2121 = vmatprep.subr.bf16.mxu0 0
  %2122 = vmatpush1.bf16.msra.mxu0 %v2082
  %2123 = vmatprep.subr.bf16.mxu0 0
  %2124 = vmatpush1.bf16.msra.mxu0 %v2083
  %2125 = vmatprep.subr.bf16.mxu0 0
  %2126 = vmatpush1.bf16.msra.mxu0 %v2084
  %2127 = vmatprep.subr.bf16.mxu0 0
  %2128 = vmatpush1.bf16.msra.mxu0 %v2085
  %2129 = vmatprep.subr.bf16.mxu0 0
  %2130 = vmatpush1.bf16.msra.mxu0 %v2086
  %2131 = vmatprep.subr.bf16.mxu0 0
  %2132 = vmatpush1.bf16.msra.mxu0 %v2087
  %2133 = vmatprep.subr.bf16.mxu0 0
  %2134 = vmatpush1.bf16.msra.mxu0 %v2088
  %2135 = vmatprep.subr.bf16.mxu0 0
  %2136 = vmatpush1.bf16.msra.mxu0 %v2089
  %2137 = vmatprep.subr.bf16.mxu0 0
  %2138 = vmatpush1.bf16.msra.mxu0 %v2090
  %2139 = vmatprep.mubr.bf16.mxu0 %v1971
  %2140 = vmatmul.mubr.bf16.gmra.mrb[0].mxu0 %v1970
  %v2141 = vpop.f32.mrb[0].mxu0
  %v2142 = vadd.f32 %v2009, %v2141
  %v2143 = vpop.f32.mrb[0].mxu0
  %v2144 = vpop.f32.mrb[0].mxu0
  %v2145 = vadd.f32 %v2009, %v2144
  %v2146 = vpop.f32.mrb[0].mxu0
  %2147 = vdwg.mxu0
  %v2148 = vadd.f32 %v1857, %v2142
  %v2149 = vadd.f32 %v1858, %v2145
  %v2150 = vld [vmem:[%s33] sm:$0x1]
  %v2151 = vld [vmem:[%s35] sm:$0x1]
  %v2152 = vsel %vm238, %v2148, 0.0
  %2153 = vadd.xlane.f32.xlu0 %v2152
  %v2154 = vpop.xlane.xlu0 %2153
  %v2155 = vsel %vm238, %v2149, 0.0
  %2156 = vadd.xlane.f32.xlu0 %v2155
  %v2157 = vpop.xlane.xlu0 %2156
  %v2158 = vmul.f32 %v2154, %v1822
  %v2159 = vmul.f32 %v2157, %v1822
  %v2160 = vsub.f32 %v2148, %v2158
  %v2161 = vsub.f32 %v2149, %v2159
  %v2162 = vmul.f32 %v2160, %v2160
  %v2163 = vmul.f32 %v2161, %v2161
  %v2164 = vsel %vm238, %v2162, 0.0
  %2165 = vadd.xlane.f32.xlu0 %v2164
  %v2166 = vpop.xlane.xlu0 %2165
  %v2167 = vsel %vm238, %v2163, 0.0
  %2168 = vadd.xlane.f32.xlu0 %v2167
  %v2169 = vpop.xlane.xlu0 %2168
  %v2170 = vmul.f32 %v2166, %v1822
  %v2171 = vmul.f32 %v2169, %v1822
  %v2172 = vadd.f32 %v2170, 1e-05
  %v2173 = vadd.f32 %v2171, 1e-05
  %v2174 = vrsqrt.pop %v2172
  %v2175 = vrsqrt.pop %v2173
  %v2176 = vmul.f32 %v2160, %v2174
  %v2177 = vmul.f32 %v2161, %v2175
  %v2179 = vlaneseq
  %v2180 = vshrl.u32 %v2179, 7
  %v2181 = vsub.s32 0, %v2180
  %v2182 = vrot.slane %v2150, %v2181
  %v2184 = vmul.f32 %v2176, %v2182
  %v2185 = vmul.f32 %v2177, %v2182
  %v2187 = vlaneseq
  %v2188 = vshrl.u32 %v2187, 7
  %v2189 = vsub.s32 0, %v2188
  %v2190 = vrot.slane %v2151, %v2189
  %v2192 = vadd.f32 %v2184, %v2190
  %v2193 = vadd.f32 %v2185, %v2190
  %v2194 = vpack.c.bf16 %v2193, %v2192
  %s2195 = scalar_lea.vmem %s13, 64
  %v2196 = vld [vmem:[%s2195] sm:$0xff]
  %v2197 = vld [vmem:[%s2195 + $0x8] sm:$0xff]
  %v2198 = vld [vmem:[%s2195 + $0x10] sm:$0xff]
  %v2199 = vld [vmem:[%s2195 + $0x18] sm:$0xff]
  %v2200 = vld [vmem:[%s2195 + $0x20] sm:$0xff]
  %v2201 = vld [vmem:[%s2195 + $0x28] sm:$0xff]
  %v2202 = vld [vmem:[%s2195 + $0x30] sm:$0xff]
  %v2203 = vld [vmem:[%s2195 + $0x38] sm:$0xff]
  %s2204 = scalar_lea.vmem %s15, 2
  %v2205 = vld [vmem:[%s2204] sm:$0x3]
  %v2207 = vlaneseq
  %v2208 = vshrl.u32 %v2207, 7
  %v2209 = vsub.s32 0, %v2208
  %v2210 = vrot.slane %v2205, %v2209
  %v2211 = vlaneseq
  %v2212 = vshrl.u32 %v2211, 7
  %v2213 = vsub.s32 1, %v2212
  %v2214 = vrot.slane %v2205, %v2213
  %v2225 = vunpack.c.l.b16 %v2196
  %v2226 = vunpack.c.h.b16 %v2196
  %v2227 = vunpack.c.l.b16 %v2197
  %v2228 = vunpack.c.h.b16 %v2197
  %v2229 = vunpack.c.l.b16 %v2198
  %v2230 = vunpack.c.h.b16 %v2198
  %v2231 = vunpack.c.l.b16 %v2199
  %v2232 = vunpack.c.h.b16 %v2199
  %v2233 = vunpack.c.l.b16 %v2200
  %v2234 = vunpack.c.h.b16 %v2200
  %v2235 = vunpack.c.l.b16 %v2201
  %v2236 = vunpack.c.h.b16 %v2201
  %v2237 = vunpack.c.l.b16 %v2202
  %v2238 = vunpack.c.h.b16 %v2202
  %v2239 = vunpack.c.l.b16 %v2203
  %v2240 = vunpack.c.h.b16 %v2203
  %v2241 = vpack.c.b16 %v2227, %v2225
  %v2242 = vpack.c.b16 %v2228, %v2226
  %v2243 = vpack.c.b16 %v2231, %v2229
  %v2244 = vpack.c.b16 %v2232, %v2230
  %v2245 = vpack.c.b16 %v2235, %v2233
  %v2246 = vpack.c.b16 %v2236, %v2234
  %v2247 = vpack.c.b16 %v2239, %v2237
  %v2248 = vpack.c.b16 %v2240, %v2238
  %v2258 = vsel %vm238, %v2194, 0
  %2260 = vmatprep.subr.bf16.mxu0 %v2242
  %2261 = vmatpush1.bf16.msra.mxu0 %v2241
  %2262 = vmatprep.subr.bf16.mxu0 %v2244
  %2263 = vmatpush1.bf16.msra.mxu0 %v2243
  %2264 = vmatprep.subr.bf16.mxu0 %v2246
  %2265 = vmatpush1.bf16.msra.mxu0 %v2245
  %2266 = vmatprep.subr.bf16.mxu0 %v2248
  %2267 = vmatpush1.bf16.msra.mxu0 %v2247
  %2268 = vmatprep.subr.bf16.mxu0 0
  %2269 = vmatpush1.bf16.msra.mxu0 0
  %2270 = vmatprep.subr.bf16.mxu0 0
  %2271 = vmatpush1.bf16.msra.mxu0 0
  %2272 = vmatprep.subr.bf16.mxu0 0
  %2273 = vmatpush1.bf16.msra.mxu0 0
  %2274 = vmatprep.subr.bf16.mxu0 0
  %2275 = vmatpush1.bf16.msra.mxu0 0
  %2276 = vmatprep.subr.bf16.mxu0 0
  %2277 = vmatpush1.bf16.msra.mxu0 0
  %2278 = vmatprep.subr.bf16.mxu0 0
  %2279 = vmatpush1.bf16.msra.mxu0 0
  %2280 = vmatprep.subr.bf16.mxu0 0
  %2281 = vmatpush1.bf16.msra.mxu0 0
  %2282 = vmatprep.subr.bf16.mxu0 0
  %2283 = vmatpush1.bf16.msra.mxu0 0
  %2284 = vmatprep.subr.bf16.mxu0 0
  %2285 = vmatpush1.bf16.msra.mxu0 0
  %2286 = vmatprep.subr.bf16.mxu0 0
  %2287 = vmatpush1.bf16.msra.mxu0 0
  %2288 = vmatprep.subr.bf16.mxu0 0
  %2289 = vmatpush1.bf16.msra.mxu0 0
  %2290 = vmatprep.subr.bf16.mxu0 0
  %2291 = vmatpush1.bf16.msra.mxu0 0
  %2292 = vmatprep.mubr.bf16.mxu0 0
  %2293 = vmatmul.mubr.bf16.gmra.mrb[0].mxu0 %v2258
  %v2294 = vpop.f32.mrb[0].mxu0
  %v2295 = vadd.f32 %v2210, %v2294
  %v2296 = vpop.f32.mrb[0].mxu0
  %v2297 = vadd.f32 %v2214, %v2296
  %v2298 = vpop.f32.mrb[0].mxu0
  %v2299 = vadd.f32 %v2210, %v2298
  %v2300 = vpop.f32.mrb[0].mxu0
  %v2301 = vadd.f32 %v2214, %v2300
  %2302 = vdwg.mxu0
  %2303 = vxpose.xlu0.b32.start [1/16] %v2295, 128
  %2304 = vxpose.xlu0.b32.cont [2/16] %v2299, 128
  %2305 = vxpose.xlu0.b32.cont [3/16] 0.0, 128
  %2306 = vxpose.xlu0.b32.cont [4/16] 0.0, 128
  %2307 = vxpose.xlu0.b32.cont [5/16] 0.0, 128
  %2308 = vxpose.xlu0.b32.cont [6/16] 0.0, 128
  %2309 = vxpose.xlu0.b32.cont [7/16] 0.0, 128
  %2310 = vxpose.xlu0.b32.cont [8/16] 0.0, 128
  %2311 = vxpose.xlu0.b32.cont [9/16] 0.0, 128
  %2312 = vxpose.xlu0.b32.cont [10/16] 0.0, 128
  %2313 = vxpose.xlu0.b32.cont [11/16] 0.0, 128
  %2314 = vxpose.xlu0.b32.cont [12/16] 0.0, 128
  %2315 = vxpose.xlu0.b32.cont [13/16] 0.0, 128
  %2316 = vxpose.xlu0.b32.cont [14/16] 0.0, 128
  %2317 = vxpose.xlu0.b32.cont [15/16] 0.0, 128
  %2318 = vxpose.xlu0.b32.end [16/16] 0.0, 128
  %v2319 = vpop.trf.xlu0
  %v2320 = vpop.trf.xlu0
  %v2321 = vpop.trf.xlu0
  %v2322 = vpop.trf.xlu0
  %v2323 = vpop.trf.xlu0
  %v2324 = vpop.trf.xlu0
  %v2325 = vpop.trf.xlu0
  %v2326 = vpop.trf.xlu0
  %v2327 = vpop.trf.xlu0
  %v2328 = vpop.trf.xlu0
  %v2329 = vpop.trf.xlu0
  %v2330 = vpop.trf.xlu0
  %v2331 = vpop.trf.xlu0
  %v2332 = vpop.trf.xlu0
  %v2333 = vpop.trf.xlu0
  %v2334 = vpop.trf.xlu0
  %2335 = vxpose.xlu0.b32.start [1/16] %v2297, 128
  %2336 = vxpose.xlu0.b32.cont [2/16] %v2301, 128
  %2337 = vxpose.xlu0.b32.cont [3/16] 0.0, 128
  %2338 = vxpose.xlu0.b32.cont [4/16] 0.0, 128
  %2339 = vxpose.xlu0.b32.cont [5/16] 0.0, 128
  %2340 = vxpose.xlu0.b32.cont [6/16] 0.0, 128
  %2341 = vxpose.xlu0.b32.cont [7/16] 0.0, 128
  %2342 = vxpose.xlu0.b32.cont [8/16] 0.0, 128
  %2343 = vxpose.xlu0.b32.cont [9/16] 0.0, 128
  %2344 = vxpose.xlu0.b32.cont [10/16] 0.0, 128
  %2345 = vxpose.xlu0.b32.cont [11/16] 0.0, 128
  %2346 = vxpose.xlu0.b32.cont [12/16] 0.0, 128
  %2347 = vxpose.xlu0.b32.cont [13/16] 0.0, 128
  %2348 = vxpose.xlu0.b32.cont [14/16] 0.0, 128
  %2349 = vxpose.xlu0.b32.cont [15/16] 0.0, 128
  %2350 = vxpose.xlu0.b32.end [16/16] 0.0, 128
  %v2351 = vpop.trf.xlu0
  %v2352 = vpop.trf.xlu0
  %v2353 = vpop.trf.xlu0
  %v2354 = vpop.trf.xlu0
  %v2355 = vpop.trf.xlu0
  %v2356 = vpop.trf.xlu0
  %v2357 = vpop.trf.xlu0
  %v2358 = vpop.trf.xlu0
  %v2359 = vpop.trf.xlu0
  %v2360 = vpop.trf.xlu0
  %v2361 = vpop.trf.xlu0
  %v2362 = vpop.trf.xlu0
  %v2363 = vpop.trf.xlu0
  %v2364 = vpop.trf.xlu0
  %v2365 = vpop.trf.xlu0
  %v2366 = vpop.trf.xlu0
  %v2367 = vpack.c.bf16 %v2319, %v2319
  %v2368 = vpack.c.bf16 %v2320, %v2320
  %v2369 = vpack.c.bf16 %v2321, %v2321
  %v2370 = vpack.c.bf16 %v2322, %v2322
  %v2371 = vpack.c.bf16 %v2323, %v2323
  %v2372 = vpack.c.bf16 %v2324, %v2324
  %v2373 = vpack.c.bf16 %v2325, %v2325
  %v2374 = vpack.c.bf16 %v2326, %v2326
  %v2375 = vpack.c.bf16 %v2327, %v2327
  %v2376 = vpack.c.bf16 %v2328, %v2328
  %v2377 = vpack.c.bf16 %v2329, %v2329
  %v2378 = vpack.c.bf16 %v2330, %v2330
  %v2379 = vpack.c.bf16 %v2331, %v2331
  %v2380 = vpack.c.bf16 %v2332, %v2332
  %v2381 = vpack.c.bf16 %v2333, %v2333
  %v2382 = vpack.c.bf16 %v2334, %v2334
  %2383 = vxpose.xlu0.c.b16.start [1/8] %v2367, 128
  %2384 = vxpose.xlu0.c.b16.cont [2/8] 0, 128
  %2385 = vxpose.xlu0.c.b16.cont [3/8] 0, 128
  %2386 = vxpose.xlu0.c.b16.cont [4/8] 0, 128
  %2387 = vxpose.xlu0.c.b16.cont [5/8] 0, 128
  %2388 = vxpose.xlu0.c.b16.cont [6/8] 0, 128
  %2389 = vxpose.xlu0.c.b16.cont [7/8] 0, 128
  %2390 = vxpose.xlu0.c.b16.end [8/8] 0, 128
  %v2391 = vpop.trf.xlu0
  %v2392 = vpop.trf.xlu0
  %v2393 = vpop.trf.xlu0
  %v2394 = vpop.trf.xlu0
  %v2395 = vpop.trf.xlu0
  %v2396 = vpop.trf.xlu0
  %v2397 = vpop.trf.xlu0
  %v2398 = vpop.trf.xlu0
  %v2400 = vsel %vm381, %v2391, 0
  %v2403 = vsel %vm385, %v2375, 0
  %2405 = vmatprep.subr.bf16.mxu0 0
  %2406 = vmatpush1.bf16.msra.mxu0 %v2403
  %2407 = vmatprep.subr.bf16.mxu0 0
  %2408 = vmatpush1.bf16.msra.mxu0 0
  %2409 = vmatprep.subr.bf16.mxu0 0
  %2410 = vmatpush1.bf16.msra.mxu0 0
  %2411 = vmatprep.subr.bf16.mxu0 0
  %2412 = vmatpush1.bf16.msra.mxu0 0
  %2413 = vmatprep.subr.bf16.mxu0 0
  %2414 = vmatpush1.bf16.msra.mxu0 0
  %2415 = vmatprep.subr.bf16.mxu0 0
  %2416 = vmatpush1.bf16.msra.mxu0 0
  %2417 = vmatprep.subr.bf16.mxu0 0
  %2418 = vmatpush1.bf16.msra.mxu0 0
  %2419 = vmatprep.subr.bf16.mxu0 0
  %2420 = vmatpush1.bf16.msra.mxu0 0
  %2421 = vmatprep.subr.bf16.mxu0 0
  %2422 = vmatpush1.bf16.msra.mxu0 0
  %2423 = vmatprep.subr.bf16.mxu0 0
  %2424 = vmatpush1.bf16.msra.mxu0 0
  %2425 = vmatprep.subr.bf16.mxu0 0
  %2426 = vmatpush1.bf16.msra.mxu0 0
  %2427 = vmatprep.subr.bf16.mxu0 0
  %2428 = vmatpush1.bf16.msra.mxu0 0
  %2429 = vmatprep.subr.bf16.mxu0 0
  %2430 = vmatpush1.bf16.msra.mxu0 0
  %2431 = vmatprep.subr.bf16.mxu0 0
  %2432 = vmatpush1.bf16.msra.mxu0 0
  %2433 = vmatprep.subr.bf16.mxu0 0
  %2434 = vmatpush1.bf16.msra.mxu0 0
  %2435 = vmatprep.subr.bf16.mxu0 0
  %2436 = vmatpush1.bf16.msra.mxu0 0
  %2437 = vmatprep.mubr.bf16.mxu0 0
  %2438 = vmatmul.mubr.bf16.gmra.mrb[0].mxu0 %v2400
  %v2439 = vpop.f32.mrb[0].mxu0
  %v2440 = vadd.f32 %v175, %v2439
  %v2441 = vpop.f32.mrb[0].mxu0
  %v2442 = vpop.f32.mrb[0].mxu0
  %v2443 = vadd.f32 %v176, %v2442
  %v2444 = vpop.f32.mrb[0].mxu0
  %2445 = vdwg.mxu0
  %2446 = vxpose.xlu0.c.b16.start [1/8] %v2368, 128
  %2447 = vxpose.xlu0.c.b16.cont [2/8] 0, 128
  %2448 = vxpose.xlu0.c.b16.cont [3/8] 0, 128
  %2449 = vxpose.xlu0.c.b16.cont [4/8] 0, 128
  %2450 = vxpose.xlu0.c.b16.cont [5/8] 0, 128
  %2451 = vxpose.xlu0.c.b16.cont [6/8] 0, 128
  %2452 = vxpose.xlu0.c.b16.cont [7/8] 0, 128
  %2453 = vxpose.xlu0.c.b16.end [8/8] 0, 128
  %v2454 = vpop.trf.xlu0
  %v2455 = vpop.trf.xlu0
  %v2456 = vpop.trf.xlu0
  %v2457 = vpop.trf.xlu0
  %v2458 = vpop.trf.xlu0
  %v2459 = vpop.trf.xlu0
  %v2460 = vpop.trf.xlu0
  %v2461 = vpop.trf.xlu0
  %v2463 = vsel %vm381, %v2454, 0
  %v2466 = vsel %vm385, %v2376, 0
  %2468 = vmatprep.subr.bf16.mxu0 0
  %2469 = vmatpush1.bf16.msra.mxu0 %v2466
  %2470 = vmatprep.subr.bf16.mxu0 0
  %2471 = vmatpush1.bf16.msra.mxu0 0
  %2472 = vmatprep.subr.bf16.mxu0 0
  %2473 = vmatpush1.bf16.msra.mxu0 0
  %2474 = vmatprep.subr.bf16.mxu0 0
  %2475 = vmatpush1.bf16.msra.mxu0 0
  %2476 = vmatprep.subr.bf16.mxu0 0
  %2477 = vmatpush1.bf16.msra.mxu0 0
  %2478 = vmatprep.subr.bf16.mxu0 0
  %2479 = vmatpush1.bf16.msra.mxu0 0
  %2480 = vmatprep.subr.bf16.mxu0 0
  %2481 = vmatpush1.bf16.msra.mxu0 0
  %2482 = vmatprep.subr.bf16.mxu0 0
  %2483 = vmatpush1.bf16.msra.mxu0 0
  %2484 = vmatprep.subr.bf16.mxu0 0
  %2485 = vmatpush1.bf16.msra.mxu0 0
  %2486 = vmatprep.subr.bf16.mxu0 0
  %2487 = vmatpush1.bf16.msra.mxu0 0
  %2488 = vmatprep.subr.bf16.mxu0 0
  %2489 = vmatpush1.bf16.msra.mxu0 0
  %2490 = vmatprep.subr.bf16.mxu0 0
  %2491 = vmatpush1.bf16.msra.mxu0 0
  %2492 = vmatprep.subr.bf16.mxu0 0
  %2493 = vmatpush1.bf16.msra.mxu0 0
  %2494 = vmatprep.subr.bf16.mxu0 0
  %2495 = vmatpush1.bf16.msra.mxu0 0
  %2496 = vmatprep.subr.bf16.mxu0 0
  %2497 = vmatpush1.bf16.msra.mxu0 0
  %2498 = vmatprep.subr.bf16.mxu0 0
  %2499 = vmatpush1.bf16.msra.mxu0 0
  %2500 = vmatprep.mubr.bf16.mxu0 0
  %2501 = vmatmul.mubr.bf16.gmra.mrb[0].mxu0 %v2463
  %v2502 = vpop.f32.mrb[0].mxu0
  %v2503 = vadd.f32 %v175, %v2502
  %v2504 = vpop.f32.mrb[0].mxu0
  %v2505 = vpop.f32.mrb[0].mxu0
  %v2506 = vadd.f32 %v176, %v2505
  %v2507 = vpop.f32.mrb[0].mxu0
  %2508 = vdwg.mxu0
  %2509 = vxpose.xlu0.c.b16.start [1/8] %v2369, 128
  %2510 = vxpose.xlu0.c.b16.cont [2/8] 0, 128
  %2511 = vxpose.xlu0.c.b16.cont [3/8] 0, 128
  %2512 = vxpose.xlu0.c.b16.cont [4/8] 0, 128
  %2513 = vxpose.xlu0.c.b16.cont [5/8] 0, 128
  %2514 = vxpose.xlu0.c.b16.cont [6/8] 0, 128
  %2515 = vxpose.xlu0.c.b16.cont [7/8] 0, 128
  %2516 = vxpose.xlu0.c.b16.end [8/8] 0, 128
  %v2517 = vpop.trf.xlu0
  %v2518 = vpop.trf.xlu0
  %v2519 = vpop.trf.xlu0
  %v2520 = vpop.trf.xlu0
  %v2521 = vpop.trf.xlu0
  %v2522 = vpop.trf.xlu0
  %v2523 = vpop.trf.xlu0
  %v2524 = vpop.trf.xlu0
  %v2526 = vsel %vm381, %v2517, 0
  %v2529 = vsel %vm385, %v2377, 0
  %2531 = vmatprep.subr.bf16.mxu0 0
  %2532 = vmatpush1.bf16.msra.mxu0 %v2529
  %2533 = vmatprep.subr.bf16.mxu0 0
  %2534 = vmatpush1.bf16.msra.mxu0 0
  %2535 = vmatprep.subr.bf16.mxu0 0
  %2536 = vmatpush1.bf16.msra.mxu0 0
  %2537 = vmatprep.subr.bf16.mxu0 0
  %2538 = vmatpush1.bf16.msra.mxu0 0
  %2539 = vmatprep.subr.bf16.mxu0 0
  %2540 = vmatpush1.bf16.msra.mxu0 0
  %2541 = vmatprep.subr.bf16.mxu0 0
  %2542 = vmatpush1.bf16.msra.mxu0 0
  %2543 = vmatprep.subr.bf16.mxu0 0
  %2544 = vmatpush1.bf16.msra.mxu0 0
  %2545 = vmatprep.subr.bf16.mxu0 0
  %2546 = vmatpush1.bf16.msra.mxu0 0
  %2547 = vmatprep.subr.bf16.mxu0 0
  %2548 = vmatpush1.bf16.msra.mxu0 0
  %2549 = vmatprep.subr.bf16.mxu0 0
  %2550 = vmatpush1.bf16.msra.mxu0 0
  %2551 = vmatprep.subr.bf16.mxu0 0
  %2552 = vmatpush1.bf16.msra.mxu0 0
  %2553 = vmatprep.subr.bf16.mxu0 0
  %2554 = vmatpush1.bf16.msra.mxu0 0
  %2555 = vmatprep.subr.bf16.mxu0 0
  %2556 = vmatpush1.bf16.msra.mxu0 0
  %2557 = vmatprep.subr.bf16.mxu0 0
  %2558 = vmatpush1.bf16.msra.mxu0 0
  %2559 = vmatprep.subr.bf16.mxu0 0
  %2560 = vmatpush1.bf16.msra.mxu0 0
  %2561 = vmatprep.subr.bf16.mxu0 0
  %2562 = vmatpush1.bf16.msra.mxu0 0
  %2563 = vmatprep.mubr.bf16.mxu0 0
  %2564 = vmatmul.mubr.bf16.gmra.mrb[0].mxu0 %v2526
  %v2565 = vpop.f32.mrb[0].mxu0
  %v2566 = vadd.f32 %v175, %v2565
  %v2567 = vpop.f32.mrb[0].mxu0
  %v2568 = vpop.f32.mrb[0].mxu0
  %v2569 = vadd.f32 %v176, %v2568
  %v2570 = vpop.f32.mrb[0].mxu0
  %2571 = vdwg.mxu0
  %2572 = vxpose.xlu0.c.b16.start [1/8] %v2370, 128
  %2573 = vxpose.xlu0.c.b16.cont [2/8] 0, 128
  %2574 = vxpose.xlu0.c.b16.cont [3/8] 0, 128
  %2575 = vxpose.xlu0.c.b16.cont [4/8] 0, 128
  %2576 = vxpose.xlu0.c.b16.cont [5/8] 0, 128
  %2577 = vxpose.xlu0.c.b16.cont [6/8] 0, 128
  %2578 = vxpose.xlu0.c.b16.cont [7/8] 0, 128
  %2579 = vxpose.xlu0.c.b16.end [8/8] 0, 128
  %v2580 = vpop.trf.xlu0
  %v2581 = vpop.trf.xlu0
  %v2582 = vpop.trf.xlu0
  %v2583 = vpop.trf.xlu0
  %v2584 = vpop.trf.xlu0
  %v2585 = vpop.trf.xlu0
  %v2586 = vpop.trf.xlu0
  %v2587 = vpop.trf.xlu0
  %v2589 = vsel %vm381, %v2580, 0
  %v2592 = vsel %vm385, %v2378, 0
  %2594 = vmatprep.subr.bf16.mxu0 0
  %2595 = vmatpush1.bf16.msra.mxu0 %v2592
  %2596 = vmatprep.subr.bf16.mxu0 0
  %2597 = vmatpush1.bf16.msra.mxu0 0
  %2598 = vmatprep.subr.bf16.mxu0 0
  %2599 = vmatpush1.bf16.msra.mxu0 0
  %2600 = vmatprep.subr.bf16.mxu0 0
  %2601 = vmatpush1.bf16.msra.mxu0 0
  %2602 = vmatprep.subr.bf16.mxu0 0
  %2603 = vmatpush1.bf16.msra.mxu0 0
  %2604 = vmatprep.subr.bf16.mxu0 0
  %2605 = vmatpush1.bf16.msra.mxu0 0
  %2606 = vmatprep.subr.bf16.mxu0 0
  %2607 = vmatpush1.bf16.msra.mxu0 0
  %2608 = vmatprep.subr.bf16.mxu0 0
  %2609 = vmatpush1.bf16.msra.mxu0 0
  %2610 = vmatprep.subr.bf16.mxu0 0
  %2611 = vmatpush1.bf16.msra.mxu0 0
  %2612 = vmatprep.subr.bf16.mxu0 0
  %2613 = vmatpush1.bf16.msra.mxu0 0
  %2614 = vmatprep.subr.bf16.mxu0 0
  %2615 = vmatpush1.bf16.msra.mxu0 0
  %2616 = vmatprep.subr.bf16.mxu0 0
  %2617 = vmatpush1.bf16.msra.mxu0 0
  %2618 = vmatprep.subr.bf16.mxu0 0
  %2619 = vmatpush1.bf16.msra.mxu0 0
  %2620 = vmatprep.subr.bf16.mxu0 0
  %2621 = vmatpush1.bf16.msra.mxu0 0
  %2622 = vmatprep.subr.bf16.mxu0 0
  %2623 = vmatpush1.bf16.msra.mxu0 0
  %2624 = vmatprep.subr.bf16.mxu0 0
  %2625 = vmatpush1.bf16.msra.mxu0 0
  %2626 = vmatprep.mubr.bf16.mxu0 0
  %2627 = vmatmul.mubr.bf16.gmra.mrb[0].mxu0 %v2589
  %v2628 = vpop.f32.mrb[0].mxu0
  %v2629 = vadd.f32 %v175, %v2628
  %v2630 = vpop.f32.mrb[0].mxu0
  %v2631 = vpop.f32.mrb[0].mxu0
  %v2632 = vadd.f32 %v176, %v2631
  %v2633 = vpop.f32.mrb[0].mxu0
  %2634 = vdwg.mxu0
  %2635 = vxpose.xlu0.c.b16.start [1/8] %v2371, 128
  %2636 = vxpose.xlu0.c.b16.cont [2/8] 0, 128
  %2637 = vxpose.xlu0.c.b16.cont [3/8] 0, 128
  %2638 = vxpose.xlu0.c.b16.cont [4/8] 0, 128
  %2639 = vxpose.xlu0.c.b16.cont [5/8] 0, 128
  %2640 = vxpose.xlu0.c.b16.cont [6/8] 0, 128
  %2641 = vxpose.xlu0.c.b16.cont [7/8] 0, 128
  %2642 = vxpose.xlu0.c.b16.end [8/8] 0, 128
  %v2643 = vpop.trf.xlu0
  %v2644 = vpop.trf.xlu0
  %v2645 = vpop.trf.xlu0
  %v2646 = vpop.trf.xlu0
  %v2647 = vpop.trf.xlu0
  %v2648 = vpop.trf.xlu0
  %v2649 = vpop.trf.xlu0
  %v2650 = vpop.trf.xlu0
  %v2652 = vsel %vm381, %v2643, 0
  %v2655 = vsel %vm385, %v2379, 0
  %2657 = vmatprep.subr.bf16.mxu0 0
  %2658 = vmatpush1.bf16.msra.mxu0 %v2655
  %2659 = vmatprep.subr.bf16.mxu0 0
  %2660 = vmatpush1.bf16.msra.mxu0 0
  %2661 = vmatprep.subr.bf16.mxu0 0
  %2662 = vmatpush1.bf16.msra.mxu0 0
  %2663 = vmatprep.subr.bf16.mxu0 0
  %2664 = vmatpush1.bf16.msra.mxu0 0
  %2665 = vmatprep.subr.bf16.mxu0 0
  %2666 = vmatpush1.bf16.msra.mxu0 0
  %2667 = vmatprep.subr.bf16.mxu0 0
  %2668 = vmatpush1.bf16.msra.mxu0 0
  %2669 = vmatprep.subr.bf16.mxu0 0
  %2670 = vmatpush1.bf16.msra.mxu0 0
  %2671 = vmatprep.subr.bf16.mxu0 0
  %2672 = vmatpush1.bf16.msra.mxu0 0
  %2673 = vmatprep.subr.bf16.mxu0 0
  %2674 = vmatpush1.bf16.msra.mxu0 0
  %2675 = vmatprep.subr.bf16.mxu0 0
  %2676 = vmatpush1.bf16.msra.mxu0 0
  %2677 = vmatprep.subr.bf16.mxu0 0
  %2678 = vmatpush1.bf16.msra.mxu0 0
  %2679 = vmatprep.subr.bf16.mxu0 0
  %2680 = vmatpush1.bf16.msra.mxu0 0
  %2681 = vmatprep.subr.bf16.mxu0 0
  %2682 = vmatpush1.bf16.msra.mxu0 0
  %2683 = vmatprep.subr.bf16.mxu0 0
  %2684 = vmatpush1.bf16.msra.mxu0 0
  %2685 = vmatprep.subr.bf16.mxu0 0
  %2686 = vmatpush1.bf16.msra.mxu0 0
  %2687 = vmatprep.subr.bf16.mxu0 0
  %2688 = vmatpush1.bf16.msra.mxu0 0
  %2689 = vmatprep.mubr.bf16.mxu0 0
  %2690 = vmatmul.mubr.bf16.gmra.mrb[0].mxu0 %v2652
  %v2691 = vpop.f32.mrb[0].mxu0
  %v2692 = vadd.f32 %v175, %v2691
  %v2693 = vpop.f32.mrb[0].mxu0
  %v2694 = vpop.f32.mrb[0].mxu0
  %v2695 = vadd.f32 %v176, %v2694
  %v2696 = vpop.f32.mrb[0].mxu0
  %2697 = vdwg.mxu0
  %2698 = vxpose.xlu0.c.b16.start [1/8] %v2372, 128
  %2699 = vxpose.xlu0.c.b16.cont [2/8] 0, 128
  %2700 = vxpose.xlu0.c.b16.cont [3/8] 0, 128
  %2701 = vxpose.xlu0.c.b16.cont [4/8] 0, 128
  %2702 = vxpose.xlu0.c.b16.cont [5/8] 0, 128
  %2703 = vxpose.xlu0.c.b16.cont [6/8] 0, 128
  %2704 = vxpose.xlu0.c.b16.cont [7/8] 0, 128
  %2705 = vxpose.xlu0.c.b16.end [8/8] 0, 128
  %v2706 = vpop.trf.xlu0
  %v2707 = vpop.trf.xlu0
  %v2708 = vpop.trf.xlu0
  %v2709 = vpop.trf.xlu0
  %v2710 = vpop.trf.xlu0
  %v2711 = vpop.trf.xlu0
  %v2712 = vpop.trf.xlu0
  %v2713 = vpop.trf.xlu0
  %v2715 = vsel %vm381, %v2706, 0
  %v2718 = vsel %vm385, %v2380, 0
  %2720 = vmatprep.subr.bf16.mxu0 0
  %2721 = vmatpush1.bf16.msra.mxu0 %v2718
  %2722 = vmatprep.subr.bf16.mxu0 0
  %2723 = vmatpush1.bf16.msra.mxu0 0
  %2724 = vmatprep.subr.bf16.mxu0 0
  %2725 = vmatpush1.bf16.msra.mxu0 0
  %2726 = vmatprep.subr.bf16.mxu0 0
  %2727 = vmatpush1.bf16.msra.mxu0 0
  %2728 = vmatprep.subr.bf16.mxu0 0
  %2729 = vmatpush1.bf16.msra.mxu0 0
  %2730 = vmatprep.subr.bf16.mxu0 0
  %2731 = vmatpush1.bf16.msra.mxu0 0
  %2732 = vmatprep.subr.bf16.mxu0 0
  %2733 = vmatpush1.bf16.msra.mxu0 0
  %2734 = vmatprep.subr.bf16.mxu0 0
  %2735 = vmatpush1.bf16.msra.mxu0 0
  %2736 = vmatprep.subr.bf16.mxu0 0
  %2737 = vmatpush1.bf16.msra.mxu0 0
  %2738 = vmatprep.subr.bf16.mxu0 0
  %2739 = vmatpush1.bf16.msra.mxu0 0
  %2740 = vmatprep.subr.bf16.mxu0 0
  %2741 = vmatpush1.bf16.msra.mxu0 0
  %2742 = vmatprep.subr.bf16.mxu0 0
  %2743 = vmatpush1.bf16.msra.mxu0 0
  %2744 = vmatprep.subr.bf16.mxu0 0
  %2745 = vmatpush1.bf16.msra.mxu0 0
  %2746 = vmatprep.subr.bf16.mxu0 0
  %2747 = vmatpush1.bf16.msra.mxu0 0
  %2748 = vmatprep.subr.bf16.mxu0 0
  %2749 = vmatpush1.bf16.msra.mxu0 0
  %2750 = vmatprep.subr.bf16.mxu0 0
  %2751 = vmatpush1.bf16.msra.mxu0 0
  %2752 = vmatprep.mubr.bf16.mxu0 0
  %2753 = vmatmul.mubr.bf16.gmra.mrb[0].mxu0 %v2715
  %v2754 = vpop.f32.mrb[0].mxu0
  %v2755 = vadd.f32 %v175, %v2754
  %v2756 = vpop.f32.mrb[0].mxu0
  %v2757 = vpop.f32.mrb[0].mxu0
  %v2758 = vadd.f32 %v176, %v2757
  %v2759 = vpop.f32.mrb[0].mxu0
  %2760 = vdwg.mxu0
  %2761 = vxpose.xlu0.c.b16.start [1/8] %v2373, 128
  %2762 = vxpose.xlu0.c.b16.cont [2/8] 0, 128
  %2763 = vxpose.xlu0.c.b16.cont [3/8] 0, 128
  %2764 = vxpose.xlu0.c.b16.cont [4/8] 0, 128
  %2765 = vxpose.xlu0.c.b16.cont [5/8] 0, 128
  %2766 = vxpose.xlu0.c.b16.cont [6/8] 0, 128
  %2767 = vxpose.xlu0.c.b16.cont [7/8] 0, 128
  %2768 = vxpose.xlu0.c.b16.end [8/8] 0, 128
  %v2769 = vpop.trf.xlu0
  %v2770 = vpop.trf.xlu0
  %v2771 = vpop.trf.xlu0
  %v2772 = vpop.trf.xlu0
  %v2773 = vpop.trf.xlu0
  %v2774 = vpop.trf.xlu0
  %v2775 = vpop.trf.xlu0
  %v2776 = vpop.trf.xlu0
  %v2778 = vsel %vm381, %v2769, 0
  %v2781 = vsel %vm385, %v2381, 0
  %2783 = vmatprep.subr.bf16.mxu0 0
  %2784 = vmatpush1.bf16.msra.mxu0 %v2781
  %2785 = vmatprep.subr.bf16.mxu0 0
  %2786 = vmatpush1.bf16.msra.mxu0 0
  %2787 = vmatprep.subr.bf16.mxu0 0
  %2788 = vmatpush1.bf16.msra.mxu0 0
  %2789 = vmatprep.subr.bf16.mxu0 0
  %2790 = vmatpush1.bf16.msra.mxu0 0
  %2791 = vmatprep.subr.bf16.mxu0 0
  %2792 = vmatpush1.bf16.msra.mxu0 0
  %2793 = vmatprep.subr.bf16.mxu0 0
  %2794 = vmatpush1.bf16.msra.mxu0 0
  %2795 = vmatprep.subr.bf16.mxu0 0
  %2796 = vmatpush1.bf16.msra.mxu0 0
  %2797 = vmatprep.subr.bf16.mxu0 0
  %2798 = vmatpush1.bf16.msra.mxu0 0
  %2799 = vmatprep.subr.bf16.mxu0 0
  %2800 = vmatpush1.bf16.msra.mxu0 0
  %2801 = vmatprep.subr.bf16.mxu0 0
  %2802 = vmatpush1.bf16.msra.mxu0 0
  %2803 = vmatprep.subr.bf16.mxu0 0
  %2804 = vmatpush1.bf16.msra.mxu0 0
  %2805 = vmatprep.subr.bf16.mxu0 0
  %2806 = vmatpush1.bf16.msra.mxu0 0
  %2807 = vmatprep.subr.bf16.mxu0 0
  %2808 = vmatpush1.bf16.msra.mxu0 0
  %2809 = vmatprep.subr.bf16.mxu0 0
  %2810 = vmatpush1.bf16.msra.mxu0 0
  %2811 = vmatprep.subr.bf16.mxu0 0
  %2812 = vmatpush1.bf16.msra.mxu0 0
  %2813 = vmatprep.subr.bf16.mxu0 0
  %2814 = vmatpush1.bf16.msra.mxu0 0
  %2815 = vmatprep.mubr.bf16.mxu0 0
  %2816 = vmatmul.mubr.bf16.gmra.mrb[0].mxu0 %v2778
  %v2817 = vpop.f32.mrb[0].mxu0
  %v2818 = vadd.f32 %v175, %v2817
  %v2819 = vpop.f32.mrb[0].mxu0
  %v2820 = vpop.f32.mrb[0].mxu0
  %v2821 = vadd.f32 %v176, %v2820
  %v2822 = vpop.f32.mrb[0].mxu0
  %2823 = vdwg.mxu0
  %2824 = vxpose.xlu0.c.b16.start [1/8] %v2374, 128
  %2825 = vxpose.xlu0.c.b16.cont [2/8] 0, 128
  %2826 = vxpose.xlu0.c.b16.cont [3/8] 0, 128
  %2827 = vxpose.xlu0.c.b16.cont [4/8] 0, 128
  %2828 = vxpose.xlu0.c.b16.cont [5/8] 0, 128
  %2829 = vxpose.xlu0.c.b16.cont [6/8] 0, 128
  %2830 = vxpose.xlu0.c.b16.cont [7/8] 0, 128
  %2831 = vxpose.xlu0.c.b16.end [8/8] 0, 128
  %v2832 = vpop.trf.xlu0
  %v2833 = vpop.trf.xlu0
  %v2834 = vpop.trf.xlu0
  %v2835 = vpop.trf.xlu0
  %v2836 = vpop.trf.xlu0
  %v2837 = vpop.trf.xlu0
  %v2838 = vpop.trf.xlu0
  %v2839 = vpop.trf.xlu0
  %v2841 = vsel %vm381, %v2832, 0
  %v2844 = vsel %vm385, %v2382, 0
  %2846 = vmatprep.subr.bf16.mxu0 0
  %2847 = vmatpush1.bf16.msra.mxu0 %v2844
  %2848 = vmatprep.subr.bf16.mxu0 0
  %2849 = vmatpush1.bf16.msra.mxu0 0
  %2850 = vmatprep.subr.bf16.mxu0 0
  %2851 = vmatpush1.bf16.msra.mxu0 0
  %2852 = vmatprep.subr.bf16.mxu0 0
  %2853 = vmatpush1.bf16.msra.mxu0 0
  %2854 = vmatprep.subr.bf16.mxu0 0
  %2855 = vmatpush1.bf16.msra.mxu0 0
  %2856 = vmatprep.subr.bf16.mxu0 0
  %2857 = vmatpush1.bf16.msra.mxu0 0
  %2858 = vmatprep.subr.bf16.mxu0 0
  %2859 = vmatpush1.bf16.msra.mxu0 0
  %2860 = vmatprep.subr.bf16.mxu0 0
  %2861 = vmatpush1.bf16.msra.mxu0 0
  %2862 = vmatprep.subr.bf16.mxu0 0
  %2863 = vmatpush1.bf16.msra.mxu0 0
  %2864 = vmatprep.subr.bf16.mxu0 0
  %2865 = vmatpush1.bf16.msra.mxu0 0
  %2866 = vmatprep.subr.bf16.mxu0 0
  %2867 = vmatpush1.bf16.msra.mxu0 0
  %2868 = vmatprep.subr.bf16.mxu0 0
  %2869 = vmatpush1.bf16.msra.mxu0 0
  %2870 = vmatprep.subr.bf16.mxu0 0
  %2871 = vmatpush1.bf16.msra.mxu0 0
  %2872 = vmatprep.subr.bf16.mxu0 0
  %2873 = vmatpush1.bf16.msra.mxu0 0
  %2874 = vmatprep.subr.bf16.mxu0 0
  %2875 = vmatpush1.bf16.msra.mxu0 0
  %2876 = vmatprep.subr.bf16.mxu0 0
  %2877 = vmatpush1.bf16.msra.mxu0 0
  %2878 = vmatprep.mubr.bf16.mxu0 0
  %2879 = vmatmul.mubr.bf16.gmra.mrb[0].mxu0 %v2841
  %v2880 = vpop.f32.mrb[0].mxu0
  %v2881 = vadd.f32 %v175, %v2880
  %v2882 = vpop.f32.mrb[0].mxu0
  %v2883 = vpop.f32.mrb[0].mxu0
  %v2884 = vadd.f32 %v176, %v2883
  %v2885 = vpop.f32.mrb[0].mxu0
  %2886 = vdwg.mxu0
  %v2887 = vsel %vm871, %v2440, -inf
  %2888 = vmax.xlane.f32.xlu0 %v2887
  %v2889 = vpop.xlane.xlu0 %2888
  %v2890 = vsel %vm871, %v2443, -inf
  %2891 = vmax.xlane.f32.xlu0 %v2890
  %v2892 = vpop.xlane.xlu0 %2891
  %v2893 = vsel %vm871, %v2503, -inf
  %2894 = vmax.xlane.f32.xlu0 %v2893
  %v2895 = vpop.xlane.xlu0 %2894
  %v2896 = vsel %vm871, %v2506, -inf
  %2897 = vmax.xlane.f32.xlu0 %v2896
  %v2898 = vpop.xlane.xlu0 %2897
  %v2899 = vsel %vm871, %v2566, -inf
  %2900 = vmax.xlane.f32.xlu0 %v2899
  %v2901 = vpop.xlane.xlu0 %2900
  %v2902 = vsel %vm871, %v2569, -inf
  %2903 = vmax.xlane.f32.xlu0 %v2902
  %v2904 = vpop.xlane.xlu0 %2903
  %v2905 = vsel %vm871, %v2629, -inf
  %2906 = vmax.xlane.f32.xlu0 %v2905
  %v2907 = vpop.xlane.xlu0 %2906
  %v2908 = vsel %vm871, %v2632, -inf
  %2909 = vmax.xlane.f32.xlu0 %v2908
  %v2910 = vpop.xlane.xlu0 %2909
  %v2911 = vsel %vm871, %v2692, -inf
  %2912 = vmax.xlane.f32.xlu0 %v2911
  %v2913 = vpop.xlane.xlu0 %2912
  %v2914 = vsel %vm871, %v2695, -inf
  %2915 = vmax.xlane.f32.xlu0 %v2914
  %v2916 = vpop.xlane.xlu0 %2915
  %v2917 = vsel %vm871, %v2755, -inf
  %2918 = vmax.xlane.f32.xlu0 %v2917
  %v2919 = vpop.xlane.xlu0 %2918
  %v2920 = vsel %vm871, %v2758, -inf
  %2921 = vmax.xlane.f32.xlu0 %v2920
  %v2922 = vpop.xlane.xlu0 %2921
  %v2923 = vsel %vm871, %v2818, -inf
  %2924 = vmax.xlane.f32.xlu0 %v2923
  %v2925 = vpop.xlane.xlu0 %2924
  %v2926 = vsel %vm871, %v2821, -inf
  %2927 = vmax.xlane.f32.xlu0 %v2926
  %v2928 = vpop.xlane.xlu0 %2927
  %v2929 = vsel %vm871, %v2881, -inf
  %2930 = vmax.xlane.f32.xlu0 %v2929
  %v2931 = vpop.xlane.xlu0 %2930
  %v2932 = vsel %vm871, %v2884, -inf
  %2933 = vmax.xlane.f32.xlu0 %v2932
  %v2934 = vpop.xlane.xlu0 %2933
  %v2935 = vsub.f32 %v2440, %v2889
  %v2936 = vsub.f32 %v2443, %v2892
  %v2937 = vsub.f32 %v2503, %v2895
  %v2938 = vsub.f32 %v2506, %v2898
  %v2939 = vsub.f32 %v2566, %v2901
  %v2940 = vsub.f32 %v2569, %v2904
  %v2941 = vsub.f32 %v2629, %v2907
  %v2942 = vsub.f32 %v2632, %v2910
  %v2943 = vsub.f32 %v2692, %v2913
  %v2944 = vsub.f32 %v2695, %v2916
  %v2945 = vsub.f32 %v2755, %v2919
  %v2946 = vsub.f32 %v2758, %v2922
  %v2947 = vsub.f32 %v2818, %v2925
  %v2948 = vsub.f32 %v2821, %v2928
  %v2949 = vsub.f32 %v2881, %v2931
  %v2950 = vsub.f32 %v2884, %v2934
  %v2951 = vmul.f32 %v2935, 1.442695
  %v2952 = vpow.pop %v2951
  %v2953 = vmul.f32 %v2936, 1.442695
  %v2954 = vpow.pop %v2953
  %v2955 = vmul.f32 %v2937, 1.442695
  %v2956 = vpow.pop %v2955
  %v2957 = vmul.f32 %v2938, 1.442695
  %v2958 = vpow.pop %v2957
  %v2959 = vmul.f32 %v2939, 1.442695
  %v2960 = vpow.pop %v2959
  %v2961 = vmul.f32 %v2940, 1.442695
  %v2962 = vpow.pop %v2961
  %v2963 = vmul.f32 %v2941, 1.442695
  %v2964 = vpow.pop %v2963
  %v2965 = vmul.f32 %v2942, 1.442695
  %v2966 = vpow.pop %v2965
  %v2967 = vmul.f32 %v2943, 1.442695
  %v2968 = vpow.pop %v2967
  %v2969 = vmul.f32 %v2944, 1.442695
  %v2970 = vpow.pop %v2969
  %v2971 = vmul.f32 %v2945, 1.442695
  %v2972 = vpow.pop %v2971
  %v2973 = vmul.f32 %v2946, 1.442695
  %v2974 = vpow.pop %v2973
  %v2975 = vmul.f32 %v2947, 1.442695
  %v2976 = vpow.pop %v2975
  %v2977 = vmul.f32 %v2948, 1.442695
  %v2978 = vpow.pop %v2977
  %v2979 = vmul.f32 %v2949, 1.442695
  %v2980 = vpow.pop %v2979
  %v2981 = vmul.f32 %v2950, 1.442695
  %v2982 = vpow.pop %v2981
  %v2983 = vsel %vm871, %v2952, 0.0
  %2984 = vadd.xlane.f32.xlu0 %v2983
  %v2985 = vpop.xlane.xlu0 %2984
  %v2986 = vsel %vm871, %v2954, 0.0
  %2987 = vadd.xlane.f32.xlu0 %v2986
  %v2988 = vpop.xlane.xlu0 %2987
  %v2989 = vsel %vm871, %v2956, 0.0
  %2990 = vadd.xlane.f32.xlu0 %v2989
  %v2991 = vpop.xlane.xlu0 %2990
  %v2992 = vsel %vm871, %v2958, 0.0
  %2993 = vadd.xlane.f32.xlu0 %v2992
  %v2994 = vpop.xlane.xlu0 %2993
  %v2995 = vsel %vm871, %v2960, 0.0
  %2996 = vadd.xlane.f32.xlu0 %v2995
  %v2997 = vpop.xlane.xlu0 %2996
  %v2998 = vsel %vm871, %v2962, 0.0
  %2999 = vadd.xlane.f32.xlu0 %v2998
  %v3000 = vpop.xlane.xlu0 %2999
  %v3001 = vsel %vm871, %v2964, 0.0
  %3002 = vadd.xlane.f32.xlu0 %v3001
  %v3003 = vpop.xlane.xlu0 %3002
  %v3004 = vsel %vm871, %v2966, 0.0
  %3005 = vadd.xlane.f32.xlu0 %v3004
  %v3006 = vpop.xlane.xlu0 %3005
  %v3007 = vsel %vm871, %v2968, 0.0
  %3008 = vadd.xlane.f32.xlu0 %v3007
  %v3009 = vpop.xlane.xlu0 %3008
  %v3010 = vsel %vm871, %v2970, 0.0
  %3011 = vadd.xlane.f32.xlu0 %v3010
  %v3012 = vpop.xlane.xlu0 %3011
  %v3013 = vsel %vm871, %v2972, 0.0
  %3014 = vadd.xlane.f32.xlu0 %v3013
  %v3015 = vpop.xlane.xlu0 %3014
  %v3016 = vsel %vm871, %v2974, 0.0
  %3017 = vadd.xlane.f32.xlu0 %v3016
  %v3018 = vpop.xlane.xlu0 %3017
  %v3019 = vsel %vm871, %v2976, 0.0
  %3020 = vadd.xlane.f32.xlu0 %v3019
  %v3021 = vpop.xlane.xlu0 %3020
  %v3022 = vsel %vm871, %v2978, 0.0
  %3023 = vadd.xlane.f32.xlu0 %v3022
  %v3024 = vpop.xlane.xlu0 %3023
  %v3025 = vsel %vm871, %v2980, 0.0
  %3026 = vadd.xlane.f32.xlu0 %v3025
  %v3027 = vpop.xlane.xlu0 %3026
  %v3028 = vsel %vm871, %v2982, 0.0
  %3029 = vadd.xlane.f32.xlu0 %v3028
  %v3030 = vpop.xlane.xlu0 %3029
  %v3031 = vrcp.pop %v2985
  %v3032 = vmul.f32 %v2952, %v3031
  %v3033 = vrcp.pop %v2988
  %v3034 = vmul.f32 %v2954, %v3033
  %v3035 = vrcp.pop %v2991
  %v3036 = vmul.f32 %v2956, %v3035
  %v3037 = vrcp.pop %v2994
  %v3038 = vmul.f32 %v2958, %v3037
  %v3039 = vrcp.pop %v2997
  %v3040 = vmul.f32 %v2960, %v3039
  %v3041 = vrcp.pop %v3000
  %v3042 = vmul.f32 %v2962, %v3041
  %v3043 = vrcp.pop %v3003
  %v3044 = vmul.f32 %v2964, %v3043
  %v3045 = vrcp.pop %v3006
  %v3046 = vmul.f32 %v2966, %v3045
  %v3047 = vrcp.pop %v3009
  %v3048 = vmul.f32 %v2968, %v3047
  %v3049 = vrcp.pop %v3012
  %v3050 = vmul.f32 %v2970, %v3049
  %v3051 = vrcp.pop %v3015
  %v3052 = vmul.f32 %v2972, %v3051
  %v3053 = vrcp.pop %v3018
  %v3054 = vmul.f32 %v2974, %v3053
  %v3055 = vrcp.pop %v3021
  %v3056 = vmul.f32 %v2976, %v3055
  %v3057 = vrcp.pop %v3024
  %v3058 = vmul.f32 %v2978, %v3057
  %v3059 = vrcp.pop %v3027
  %v3060 = vmul.f32 %v2980, %v3059
  %v3061 = vrcp.pop %v3030
  %v3062 = vmul.f32 %v2982, %v3061
  %v3063 = vpack.c.bf16 %v3034, %v3032
  %v3064 = vpack.c.bf16 %v3038, %v3036
  %v3065 = vpack.c.bf16 %v3042, %v3040
  %v3066 = vpack.c.bf16 %v3046, %v3044
  %v3067 = vpack.c.bf16 %v3050, %v3048
  %v3068 = vpack.c.bf16 %v3054, %v3052
  %v3069 = vpack.c.bf16 %v3058, %v3056
  %v3070 = vpack.c.bf16 %v3062, %v3060
  %v3071 = vpack.c.bf16 %v2351, %v2351
  %v3072 = vpack.c.bf16 %v2352, %v2352
  %v3073 = vpack.c.bf16 %v2353, %v2353
  %v3074 = vpack.c.bf16 %v2354, %v2354
  %v3075 = vpack.c.bf16 %v2355, %v2355
  %v3076 = vpack.c.bf16 %v2356, %v2356
  %v3077 = vpack.c.bf16 %v2357, %v2357
  %v3078 = vpack.c.bf16 %v2358, %v2358
  %v3080 = vsel %vm871, %v3063, 0
  %v3083 = vsel %vm871, %v3071, 0
  %3085 = vmatprep.subr.bf16.mxu0 0
  %3086 = vmatpush1.bf16.xpose.msra.mxu0 %v3083
  %3087 = vmatprep.subr.bf16.mxu0 0
  %3088 = vmatpush1.bf16.xpose.msra.mxu0 0
  %3089 = vmatprep.subr.bf16.mxu0 0
  %3090 = vmatpush1.bf16.xpose.msra.mxu0 0
  %3091 = vmatprep.subr.bf16.mxu0 0
  %3092 = vmatpush1.bf16.xpose.msra.mxu0 0
  %3093 = vmatprep.subr.bf16.mxu0 0
  %3094 = vmatpush1.bf16.xpose.msra.mxu0 0
  %3095 = vmatprep.subr.bf16.mxu0 0
  %3096 = vmatpush1.bf16.xpose.msra.mxu0 0
  %3097 = vmatprep.subr.bf16.mxu0 0
  %3098 = vmatpush1.bf16.xpose.msra.mxu0 0
  %3099 = vmatprep.subr.bf16.mxu0 0
  %3100 = vmatpush1.bf16.xpose.msra.mxu0 0
  %3101 = vmatprep.subr.bf16.mxu0 0
  %3102 = vmatpush1.bf16.xpose.msra.mxu0 0
  %3103 = vmatprep.subr.bf16.mxu0 0
  %3104 = vmatpush1.bf16.xpose.msra.mxu0 0
  %3105 = vmatprep.subr.bf16.mxu0 0
  %3106 = vmatpush1.bf16.xpose.msra.mxu0 0
  %3107 = vmatprep.subr.bf16.mxu0 0
  %3108 = vmatpush1.bf16.xpose.msra.mxu0 0
  %3109 = vmatprep.subr.bf16.mxu0 0
  %3110 = vmatpush1.bf16.xpose.msra.mxu0 0
  %3111 = vmatprep.subr.bf16.mxu0 0
  %3112 = vmatpush1.bf16.xpose.msra.mxu0 0
  %3113 = vmatprep.subr.bf16.mxu0 0
  %3114 = vmatpush1.bf16.xpose.msra.mxu0 0
  %3115 = vmatprep.subr.bf16.mxu0 0
  %3116 = vmatpush1.bf16.xpose.msra.mxu0 0
  %3117 = vmatprep.mubr.bf16.mxu0 0
  %3118 = vmatmul.mubr.bf16.gmra.mrb[0].mxu0 %v3080
  %v3119 = vpop.f32.mrb[0].mxu0
  %v3120 = vadd.f32 0.0, %v3119
  %v3121 = vpop.f32.mrb[0].mxu0
  %v3122 = vpop.f32.mrb[0].mxu0
  %v3123 = vadd.f32 0.0, %v3122
  %v3124 = vpop.f32.mrb[0].mxu0
  %3125 = vdwg.mxu0
  %v3127 = vsel %vm871, %v3064, 0
  %v3130 = vsel %vm871, %v3072, 0
  %3132 = vmatprep.subr.bf16.mxu0 0
  %3133 = vmatpush1.bf16.xpose.msra.mxu0 %v3130
  %3134 = vmatprep.subr.bf16.mxu0 0
  %3135 = vmatpush1.bf16.xpose.msra.mxu0 0
  %3136 = vmatprep.subr.bf16.mxu0 0
  %3137 = vmatpush1.bf16.xpose.msra.mxu0 0
  %3138 = vmatprep.subr.bf16.mxu0 0
  %3139 = vmatpush1.bf16.xpose.msra.mxu0 0
  %3140 = vmatprep.subr.bf16.mxu0 0
  %3141 = vmatpush1.bf16.xpose.msra.mxu0 0
  %3142 = vmatprep.subr.bf16.mxu0 0
  %3143 = vmatpush1.bf16.xpose.msra.mxu0 0
  %3144 = vmatprep.subr.bf16.mxu0 0
  %3145 = vmatpush1.bf16.xpose.msra.mxu0 0
  %3146 = vmatprep.subr.bf16.mxu0 0
  %3147 = vmatpush1.bf16.xpose.msra.mxu0 0
  %3148 = vmatprep.subr.bf16.mxu0 0
  %3149 = vmatpush1.bf16.xpose.msra.mxu0 0
  %3150 = vmatprep.subr.bf16.mxu0 0
  %3151 = vmatpush1.bf16.xpose.msra.mxu0 0
  %3152 = vmatprep.subr.bf16.mxu0 0
  %3153 = vmatpush1.bf16.xpose.msra.mxu0 0
  %3154 = vmatprep.subr.bf16.mxu0 0
  %3155 = vmatpush1.bf16.xpose.msra.mxu0 0
  %3156 = vmatprep.subr.bf16.mxu0 0
  %3157 = vmatpush1.bf16.xpose.msra.mxu0 0
  %3158 = vmatprep.subr.bf16.mxu0 0
  %3159 = vmatpush1.bf16.xpose.msra.mxu0 0
  %3160 = vmatprep.subr.bf16.mxu0 0
  %3161 = vmatpush1.bf16.xpose.msra.mxu0 0
  %3162 = vmatprep.subr.bf16.mxu0 0
  %3163 = vmatpush1.bf16.xpose.msra.mxu0 0
  %3164 = vmatprep.mubr.bf16.mxu0 0
  %3165 = vmatmul.mubr.bf16.gmra.mrb[0].mxu0 %v3127
  %v3166 = vpop.f32.mrb[0].mxu0
  %v3167 = vadd.f32 0.0, %v3166
  %v3168 = vpop.f32.mrb[0].mxu0
  %v3169 = vpop.f32.mrb[0].mxu0
  %v3170 = vadd.f32 0.0, %v3169
  %v3171 = vpop.f32.mrb[0].mxu0
  %3172 = vdwg.mxu0
  %v3174 = vsel %vm871, %v3065, 0
  %v3177 = vsel %vm871, %v3073, 0
  %3179 = vmatprep.subr.bf16.mxu0 0
  %3180 = vmatpush1.bf16.xpose.msra.mxu0 %v3177
  %3181 = vmatprep.subr.bf16.mxu0 0
  %3182 = vmatpush1.bf16.xpose.msra.mxu0 0
  %3183 = vmatprep.subr.bf16.mxu0 0
  %3184 = vmatpush1.bf16.xpose.msra.mxu0 0
  %3185 = vmatprep.subr.bf16.mxu0 0
  %3186 = vmatpush1.bf16.xpose.msra.mxu0 0
  %3187 = vmatprep.subr.bf16.mxu0 0
  %3188 = vmatpush1.bf16.xpose.msra.mxu0 0
  %3189 = vmatprep.subr.bf16.mxu0 0
  %3190 = vmatpush1.bf16.xpose.msra.mxu0 0
  %3191 = vmatprep.subr.bf16.mxu0 0
  %3192 = vmatpush1.bf16.xpose.msra.mxu0 0
  %3193 = vmatprep.subr.bf16.mxu0 0
  %3194 = vmatpush1.bf16.xpose.msra.mxu0 0
  %3195 = vmatprep.subr.bf16.mxu0 0
  %3196 = vmatpush1.bf16.xpose.msra.mxu0 0
  %3197 = vmatprep.subr.bf16.mxu0 0
  %3198 = vmatpush1.bf16.xpose.msra.mxu0 0
  %3199 = vmatprep.subr.bf16.mxu0 0
  %3200 = vmatpush1.bf16.xpose.msra.mxu0 0
  %3201 = vmatprep.subr.bf16.mxu0 0
  %3202 = vmatpush1.bf16.xpose.msra.mxu0 0
  %3203 = vmatprep.subr.bf16.mxu0 0
  %3204 = vmatpush1.bf16.xpose.msra.mxu0 0
  %3205 = vmatprep.subr.bf16.mxu0 0
  %3206 = vmatpush1.bf16.xpose.msra.mxu0 0
  %3207 = vmatprep.subr.bf16.mxu0 0
  %3208 = vmatpush1.bf16.xpose.msra.mxu0 0
  %3209 = vmatprep.subr.bf16.mxu0 0
  %3210 = vmatpush1.bf16.xpose.msra.mxu0 0
  %3211 = vmatprep.mubr.bf16.mxu0 0
  %3212 = vmatmul.mubr.bf16.gmra.mrb[0].mxu0 %v3174
  %v3213 = vpop.f32.mrb[0].mxu0
  %v3214 = vadd.f32 0.0, %v3213
  %v3215 = vpop.f32.mrb[0].mxu0
  %v3216 = vpop.f32.mrb[0].mxu0
  %v3217 = vadd.f32 0.0, %v3216
  %v3218 = vpop.f32.mrb[0].mxu0
  %3219 = vdwg.mxu0
  %v3221 = vsel %vm871, %v3066, 0
  %v3224 = vsel %vm871, %v3074, 0
  %3226 = vmatprep.subr.bf16.mxu0 0
  %3227 = vmatpush1.bf16.xpose.msra.mxu0 %v3224
  %3228 = vmatprep.subr.bf16.mxu0 0
  %3229 = vmatpush1.bf16.xpose.msra.mxu0 0
  %3230 = vmatprep.subr.bf16.mxu0 0
  %3231 = vmatpush1.bf16.xpose.msra.mxu0 0
  %3232 = vmatprep.subr.bf16.mxu0 0
  %3233 = vmatpush1.bf16.xpose.msra.mxu0 0
  %3234 = vmatprep.subr.bf16.mxu0 0
  %3235 = vmatpush1.bf16.xpose.msra.mxu0 0
  %3236 = vmatprep.subr.bf16.mxu0 0
  %3237 = vmatpush1.bf16.xpose.msra.mxu0 0
  %3238 = vmatprep.subr.bf16.mxu0 0
  %3239 = vmatpush1.bf16.xpose.msra.mxu0 0
  %3240 = vmatprep.subr.bf16.mxu0 0
  %3241 = vmatpush1.bf16.xpose.msra.mxu0 0
  %3242 = vmatprep.subr.bf16.mxu0 0
  %3243 = vmatpush1.bf16.xpose.msra.mxu0 0
  %3244 = vmatprep.subr.bf16.mxu0 0
  %3245 = vmatpush1.bf16.xpose.msra.mxu0 0
  %3246 = vmatprep.subr.bf16.mxu0 0
  %3247 = vmatpush1.bf16.xpose.msra.mxu0 0
  %3248 = vmatprep.subr.bf16.mxu0 0
  %3249 = vmatpush1.bf16.xpose.msra.mxu0 0
  %3250 = vmatprep.subr.bf16.mxu0 0
  %3251 = vmatpush1.bf16.xpose.msra.mxu0 0
  %3252 = vmatprep.subr.bf16.mxu0 0
  %3253 = vmatpush1.bf16.xpose.msra.mxu0 0
  %3254 = vmatprep.subr.bf16.mxu0 0
  %3255 = vmatpush1.bf16.xpose.msra.mxu0 0
  %3256 = vmatprep.subr.bf16.mxu0 0
  %3257 = vmatpush1.bf16.xpose.msra.mxu0 0
  %3258 = vmatprep.mubr.bf16.mxu0 0
  %3259 = vmatmul.mubr.bf16.gmra.mrb[0].mxu0 %v3221
  %v3260 = vpop.f32.mrb[0].mxu0
  %v3261 = vadd.f32 0.0, %v3260
  %v3262 = vpop.f32.mrb[0].mxu0
  %v3263 = vpop.f32.mrb[0].mxu0
  %v3264 = vadd.f32 0.0, %v3263
  %v3265 = vpop.f32.mrb[0].mxu0
  %3266 = vdwg.mxu0
  %v3268 = vsel %vm871, %v3067, 0
  %v3271 = vsel %vm871, %v3075, 0
  %3273 = vmatprep.subr.bf16.mxu0 0
  %3274 = vmatpush1.bf16.xpose.msra.mxu0 %v3271
  %3275 = vmatprep.subr.bf16.mxu0 0
  %3276 = vmatpush1.bf16.xpose.msra.mxu0 0
  %3277 = vmatprep.subr.bf16.mxu0 0
  %3278 = vmatpush1.bf16.xpose.msra.mxu0 0
  %3279 = vmatprep.subr.bf16.mxu0 0
  %3280 = vmatpush1.bf16.xpose.msra.mxu0 0
  %3281 = vmatprep.subr.bf16.mxu0 0
  %3282 = vmatpush1.bf16.xpose.msra.mxu0 0
  %3283 = vmatprep.subr.bf16.mxu0 0
  %3284 = vmatpush1.bf16.xpose.msra.mxu0 0
  %3285 = vmatprep.subr.bf16.mxu0 0
  %3286 = vmatpush1.bf16.xpose.msra.mxu0 0
  %3287 = vmatprep.subr.bf16.mxu0 0
  %3288 = vmatpush1.bf16.xpose.msra.mxu0 0
  %3289 = vmatprep.subr.bf16.mxu0 0
  %3290 = vmatpush1.bf16.xpose.msra.mxu0 0
  %3291 = vmatprep.subr.bf16.mxu0 0
  %3292 = vmatpush1.bf16.xpose.msra.mxu0 0
  %3293 = vmatprep.subr.bf16.mxu0 0
  %3294 = vmatpush1.bf16.xpose.msra.mxu0 0
  %3295 = vmatprep.subr.bf16.mxu0 0
  %3296 = vmatpush1.bf16.xpose.msra.mxu0 0
  %3297 = vmatprep.subr.bf16.mxu0 0
  %3298 = vmatpush1.bf16.xpose.msra.mxu0 0
  %3299 = vmatprep.subr.bf16.mxu0 0
  %3300 = vmatpush1.bf16.xpose.msra.mxu0 0
  %3301 = vmatprep.subr.bf16.mxu0 0
  %3302 = vmatpush1.bf16.xpose.msra.mxu0 0
  %3303 = vmatprep.subr.bf16.mxu0 0
  %3304 = vmatpush1.bf16.xpose.msra.mxu0 0
  %3305 = vmatprep.mubr.bf16.mxu0 0
  %3306 = vmatmul.mubr.bf16.gmra.mrb[0].mxu0 %v3268
  %v3307 = vpop.f32.mrb[0].mxu0
  %v3308 = vadd.f32 0.0, %v3307
  %v3309 = vpop.f32.mrb[0].mxu0
  %v3310 = vpop.f32.mrb[0].mxu0
  %v3311 = vadd.f32 0.0, %v3310
  %v3312 = vpop.f32.mrb[0].mxu0
  %3313 = vdwg.mxu0
  %v3315 = vsel %vm871, %v3068, 0
  %v3318 = vsel %vm871, %v3076, 0
  %3320 = vmatprep.subr.bf16.mxu0 0
  %3321 = vmatpush1.bf16.xpose.msra.mxu0 %v3318
  %3322 = vmatprep.subr.bf16.mxu0 0
  %3323 = vmatpush1.bf16.xpose.msra.mxu0 0
  %3324 = vmatprep.subr.bf16.mxu0 0
  %3325 = vmatpush1.bf16.xpose.msra.mxu0 0
  %3326 = vmatprep.subr.bf16.mxu0 0
  %3327 = vmatpush1.bf16.xpose.msra.mxu0 0
  %3328 = vmatprep.subr.bf16.mxu0 0
  %3329 = vmatpush1.bf16.xpose.msra.mxu0 0
  %3330 = vmatprep.subr.bf16.mxu0 0
  %3331 = vmatpush1.bf16.xpose.msra.mxu0 0
  %3332 = vmatprep.subr.bf16.mxu0 0
  %3333 = vmatpush1.bf16.xpose.msra.mxu0 0
  %3334 = vmatprep.subr.bf16.mxu0 0
  %3335 = vmatpush1.bf16.xpose.msra.mxu0 0
  %3336 = vmatprep.subr.bf16.mxu0 0
  %3337 = vmatpush1.bf16.xpose.msra.mxu0 0
  %3338 = vmatprep.subr.bf16.mxu0 0
  %3339 = vmatpush1.bf16.xpose.msra.mxu0 0
  %3340 = vmatprep.subr.bf16.mxu0 0
  %3341 = vmatpush1.bf16.xpose.msra.mxu0 0
  %3342 = vmatprep.subr.bf16.mxu0 0
  %3343 = vmatpush1.bf16.xpose.msra.mxu0 0
  %3344 = vmatprep.subr.bf16.mxu0 0
  %3345 = vmatpush1.bf16.xpose.msra.mxu0 0
  %3346 = vmatprep.subr.bf16.mxu0 0
  %3347 = vmatpush1.bf16.xpose.msra.mxu0 0
  %3348 = vmatprep.subr.bf16.mxu0 0
  %3349 = vmatpush1.bf16.xpose.msra.mxu0 0
  %3350 = vmatprep.subr.bf16.mxu0 0
  %3351 = vmatpush1.bf16.xpose.msra.mxu0 0
  %3352 = vmatprep.mubr.bf16.mxu0 0
  %3353 = vmatmul.mubr.bf16.gmra.mrb[0].mxu0 %v3315
  %v3354 = vpop.f32.mrb[0].mxu0
  %v3355 = vadd.f32 0.0, %v3354
  %v3356 = vpop.f32.mrb[0].mxu0
  %v3357 = vpop.f32.mrb[0].mxu0
  %v3358 = vadd.f32 0.0, %v3357
  %v3359 = vpop.f32.mrb[0].mxu0
  %3360 = vdwg.mxu0
  %v3362 = vsel %vm871, %v3069, 0
  %v3365 = vsel %vm871, %v3077, 0
  %3367 = vmatprep.subr.bf16.mxu0 0
  %3368 = vmatpush1.bf16.xpose.msra.mxu0 %v3365
  %3369 = vmatprep.subr.bf16.mxu0 0
  %3370 = vmatpush1.bf16.xpose.msra.mxu0 0
  %3371 = vmatprep.subr.bf16.mxu0 0
  %3372 = vmatpush1.bf16.xpose.msra.mxu0 0
  %3373 = vmatprep.subr.bf16.mxu0 0
  %3374 = vmatpush1.bf16.xpose.msra.mxu0 0
  %3375 = vmatprep.subr.bf16.mxu0 0
  %3376 = vmatpush1.bf16.xpose.msra.mxu0 0
  %3377 = vmatprep.subr.bf16.mxu0 0
  %3378 = vmatpush1.bf16.xpose.msra.mxu0 0
  %3379 = vmatprep.subr.bf16.mxu0 0
  %3380 = vmatpush1.bf16.xpose.msra.mxu0 0
  %3381 = vmatprep.subr.bf16.mxu0 0
  %3382 = vmatpush1.bf16.xpose.msra.mxu0 0
  %3383 = vmatprep.subr.bf16.mxu0 0
  %3384 = vmatpush1.bf16.xpose.msra.mxu0 0
  %3385 = vmatprep.subr.bf16.mxu0 0
  %3386 = vmatpush1.bf16.xpose.msra.mxu0 0
  %3387 = vmatprep.subr.bf16.mxu0 0
  %3388 = vmatpush1.bf16.xpose.msra.mxu0 0
  %3389 = vmatprep.subr.bf16.mxu0 0
  %3390 = vmatpush1.bf16.xpose.msra.mxu0 0
  %3391 = vmatprep.subr.bf16.mxu0 0
  %3392 = vmatpush1.bf16.xpose.msra.mxu0 0
  %3393 = vmatprep.subr.bf16.mxu0 0
  %3394 = vmatpush1.bf16.xpose.msra.mxu0 0
  %3395 = vmatprep.subr.bf16.mxu0 0
  %3396 = vmatpush1.bf16.xpose.msra.mxu0 0
  %3397 = vmatprep.subr.bf16.mxu0 0
  %3398 = vmatpush1.bf16.xpose.msra.mxu0 0
  %3399 = vmatprep.mubr.bf16.mxu0 0
  %3400 = vmatmul.mubr.bf16.gmra.mrb[0].mxu0 %v3362
  %v3401 = vpop.f32.mrb[0].mxu0
  %v3402 = vadd.f32 0.0, %v3401
  %v3403 = vpop.f32.mrb[0].mxu0
  %v3404 = vpop.f32.mrb[0].mxu0
  %v3405 = vadd.f32 0.0, %v3404
  %v3406 = vpop.f32.mrb[0].mxu0
  %3407 = vdwg.mxu0
  %v3409 = vsel %vm871, %v3070, 0
  %v3412 = vsel %vm871, %v3078, 0
  %3414 = vmatprep.subr.bf16.mxu0 0
  %3415 = vmatpush1.bf16.xpose.msra.mxu0 %v3412
  %3416 = vmatprep.subr.bf16.mxu0 0
  %3417 = vmatpush1.bf16.xpose.msra.mxu0 0
  %3418 = vmatprep.subr.bf16.mxu0 0
  %3419 = vmatpush1.bf16.xpose.msra.mxu0 0
  %3420 = vmatprep.subr.bf16.mxu0 0
  %3421 = vmatpush1.bf16.xpose.msra.mxu0 0
  %3422 = vmatprep.subr.bf16.mxu0 0
  %3423 = vmatpush1.bf16.xpose.msra.mxu0 0
  %3424 = vmatprep.subr.bf16.mxu0 0
  %3425 = vmatpush1.bf16.xpose.msra.mxu0 0
  %3426 = vmatprep.subr.bf16.mxu0 0
  %3427 = vmatpush1.bf16.xpose.msra.mxu0 0
  %3428 = vmatprep.subr.bf16.mxu0 0
  %3429 = vmatpush1.bf16.xpose.msra.mxu0 0
  %3430 = vmatprep.subr.bf16.mxu0 0
  %3431 = vmatpush1.bf16.xpose.msra.mxu0 0
  %3432 = vmatprep.subr.bf16.mxu0 0
  %3433 = vmatpush1.bf16.xpose.msra.mxu0 0
  %3434 = vmatprep.subr.bf16.mxu0 0
  %3435 = vmatpush1.bf16.xpose.msra.mxu0 0
  %3436 = vmatprep.subr.bf16.mxu0 0
  %3437 = vmatpush1.bf16.xpose.msra.mxu0 0
  %3438 = vmatprep.subr.bf16.mxu0 0
  %3439 = vmatpush1.bf16.xpose.msra.mxu0 0
  %3440 = vmatprep.subr.bf16.mxu0 0
  %3441 = vmatpush1.bf16.xpose.msra.mxu0 0
  %3442 = vmatprep.subr.bf16.mxu0 0
  %3443 = vmatpush1.bf16.xpose.msra.mxu0 0
  %3444 = vmatprep.subr.bf16.mxu0 0
  %3445 = vmatpush1.bf16.xpose.msra.mxu0 0
  %3446 = vmatprep.mubr.bf16.mxu0 0
  %3447 = vmatmul.mubr.bf16.gmra.mrb[0].mxu0 %v3409
  %v3448 = vpop.f32.mrb[0].mxu0
  %v3449 = vadd.f32 0.0, %v3448
  %v3450 = vpop.f32.mrb[0].mxu0
  %v3451 = vpop.f32.mrb[0].mxu0
  %v3452 = vadd.f32 0.0, %v3451
  %v3453 = vpop.f32.mrb[0].mxu0
  %3454 = vdwg.mxu0
  %3455 = vxpose.xlu0.b32.start [1/16] %v3120, 128
  %3456 = vxpose.xlu0.b32.cont [2/16] %v3123, 128
  %3457 = vxpose.xlu0.b32.cont [3/16] 0.0, 128
  %3458 = vxpose.xlu0.b32.cont [4/16] 0.0, 128
  %3459 = vxpose.xlu0.b32.cont [5/16] 0.0, 128
  %3460 = vxpose.xlu0.b32.cont [6/16] 0.0, 128
  %3461 = vxpose.xlu0.b32.cont [7/16] 0.0, 128
  %3462 = vxpose.xlu0.b32.cont [8/16] 0.0, 128
  %3463 = vxpose.xlu0.b32.cont [9/16] 0.0, 128
  %3464 = vxpose.xlu0.b32.cont [10/16] 0.0, 128
  %3465 = vxpose.xlu0.b32.cont [11/16] 0.0, 128
  %3466 = vxpose.xlu0.b32.cont [12/16] 0.0, 128
  %3467 = vxpose.xlu0.b32.cont [13/16] 0.0, 128
  %3468 = vxpose.xlu0.b32.cont [14/16] 0.0, 128
  %3469 = vxpose.xlu0.b32.cont [15/16] 0.0, 128
  %3470 = vxpose.xlu0.b32.end [16/16] 0.0, 128
  %v3471 = vpop.trf.xlu0
  %v3472 = vpop.trf.xlu0
  %v3473 = vpop.trf.xlu0
  %v3474 = vpop.trf.xlu0
  %v3475 = vpop.trf.xlu0
  %v3476 = vpop.trf.xlu0
  %v3477 = vpop.trf.xlu0
  %v3478 = vpop.trf.xlu0
  %v3479 = vpop.trf.xlu0
  %v3480 = vpop.trf.xlu0
  %v3481 = vpop.trf.xlu0
  %v3482 = vpop.trf.xlu0
  %v3483 = vpop.trf.xlu0
  %v3484 = vpop.trf.xlu0
  %v3485 = vpop.trf.xlu0
  %v3486 = vpop.trf.xlu0
  %3487 = vxpose.xlu0.b32.start [1/16] %v3167, 128
  %3488 = vxpose.xlu0.b32.cont [2/16] %v3170, 128
  %3489 = vxpose.xlu0.b32.cont [3/16] 0.0, 128
  %3490 = vxpose.xlu0.b32.cont [4/16] 0.0, 128
  %3491 = vxpose.xlu0.b32.cont [5/16] 0.0, 128
  %3492 = vxpose.xlu0.b32.cont [6/16] 0.0, 128
  %3493 = vxpose.xlu0.b32.cont [7/16] 0.0, 128
  %3494 = vxpose.xlu0.b32.cont [8/16] 0.0, 128
  %3495 = vxpose.xlu0.b32.cont [9/16] 0.0, 128
  %3496 = vxpose.xlu0.b32.cont [10/16] 0.0, 128
  %3497 = vxpose.xlu0.b32.cont [11/16] 0.0, 128
  %3498 = vxpose.xlu0.b32.cont [12/16] 0.0, 128
  %3499 = vxpose.xlu0.b32.cont [13/16] 0.0, 128
  %3500 = vxpose.xlu0.b32.cont [14/16] 0.0, 128
  %3501 = vxpose.xlu0.b32.cont [15/16] 0.0, 128
  %3502 = vxpose.xlu0.b32.end [16/16] 0.0, 128
  %v3503 = vpop.trf.xlu0
  %v3504 = vpop.trf.xlu0
  %v3505 = vpop.trf.xlu0
  %v3506 = vpop.trf.xlu0
  %v3507 = vpop.trf.xlu0
  %v3508 = vpop.trf.xlu0
  %v3509 = vpop.trf.xlu0
  %v3510 = vpop.trf.xlu0
  %v3511 = vpop.trf.xlu0
  %v3512 = vpop.trf.xlu0
  %v3513 = vpop.trf.xlu0
  %v3514 = vpop.trf.xlu0
  %v3515 = vpop.trf.xlu0
  %v3516 = vpop.trf.xlu0
  %v3517 = vpop.trf.xlu0
  %v3518 = vpop.trf.xlu0
  %3519 = vxpose.xlu0.b32.start [1/16] %v3214, 128
  %3520 = vxpose.xlu0.b32.cont [2/16] %v3217, 128
  %3521 = vxpose.xlu0.b32.cont [3/16] 0.0, 128
  %3522 = vxpose.xlu0.b32.cont [4/16] 0.0, 128
  %3523 = vxpose.xlu0.b32.cont [5/16] 0.0, 128
  %3524 = vxpose.xlu0.b32.cont [6/16] 0.0, 128
  %3525 = vxpose.xlu0.b32.cont [7/16] 0.0, 128
  %3526 = vxpose.xlu0.b32.cont [8/16] 0.0, 128
  %3527 = vxpose.xlu0.b32.cont [9/16] 0.0, 128
  %3528 = vxpose.xlu0.b32.cont [10/16] 0.0, 128
  %3529 = vxpose.xlu0.b32.cont [11/16] 0.0, 128
  %3530 = vxpose.xlu0.b32.cont [12/16] 0.0, 128
  %3531 = vxpose.xlu0.b32.cont [13/16] 0.0, 128
  %3532 = vxpose.xlu0.b32.cont [14/16] 0.0, 128
  %3533 = vxpose.xlu0.b32.cont [15/16] 0.0, 128
  %3534 = vxpose.xlu0.b32.end [16/16] 0.0, 128
  %v3535 = vpop.trf.xlu0
  %v3536 = vpop.trf.xlu0
  %v3537 = vpop.trf.xlu0
  %v3538 = vpop.trf.xlu0
  %v3539 = vpop.trf.xlu0
  %v3540 = vpop.trf.xlu0
  %v3541 = vpop.trf.xlu0
  %v3542 = vpop.trf.xlu0
  %v3543 = vpop.trf.xlu0
  %v3544 = vpop.trf.xlu0
  %v3545 = vpop.trf.xlu0
  %v3546 = vpop.trf.xlu0
  %v3547 = vpop.trf.xlu0
  %v3548 = vpop.trf.xlu0
  %v3549 = vpop.trf.xlu0
  %v3550 = vpop.trf.xlu0
  %3551 = vxpose.xlu0.b32.start [1/16] %v3261, 128
  %3552 = vxpose.xlu0.b32.cont [2/16] %v3264, 128
  %3553 = vxpose.xlu0.b32.cont [3/16] 0.0, 128
  %3554 = vxpose.xlu0.b32.cont [4/16] 0.0, 128
  %3555 = vxpose.xlu0.b32.cont [5/16] 0.0, 128
  %3556 = vxpose.xlu0.b32.cont [6/16] 0.0, 128
  %3557 = vxpose.xlu0.b32.cont [7/16] 0.0, 128
  %3558 = vxpose.xlu0.b32.cont [8/16] 0.0, 128
  %3559 = vxpose.xlu0.b32.cont [9/16] 0.0, 128
  %3560 = vxpose.xlu0.b32.cont [10/16] 0.0, 128
  %3561 = vxpose.xlu0.b32.cont [11/16] 0.0, 128
  %3562 = vxpose.xlu0.b32.cont [12/16] 0.0, 128
  %3563 = vxpose.xlu0.b32.cont [13/16] 0.0, 128
  %3564 = vxpose.xlu0.b32.cont [14/16] 0.0, 128
  %3565 = vxpose.xlu0.b32.cont [15/16] 0.0, 128
  %3566 = vxpose.xlu0.b32.end [16/16] 0.0, 128
  %v3567 = vpop.trf.xlu0
  %v3568 = vpop.trf.xlu0
  %v3569 = vpop.trf.xlu0
  %v3570 = vpop.trf.xlu0
  %v3571 = vpop.trf.xlu0
  %v3572 = vpop.trf.xlu0
  %v3573 = vpop.trf.xlu0
  %v3574 = vpop.trf.xlu0
  %v3575 = vpop.trf.xlu0
  %v3576 = vpop.trf.xlu0
  %v3577 = vpop.trf.xlu0
  %v3578 = vpop.trf.xlu0
  %v3579 = vpop.trf.xlu0
  %v3580 = vpop.trf.xlu0
  %v3581 = vpop.trf.xlu0
  %v3582 = vpop.trf.xlu0
  %3583 = vxpose.xlu0.b32.start [1/16] %v3308, 128
  %3584 = vxpose.xlu0.b32.cont [2/16] %v3311, 128
  %3585 = vxpose.xlu0.b32.cont [3/16] 0.0, 128
  %3586 = vxpose.xlu0.b32.cont [4/16] 0.0, 128
  %3587 = vxpose.xlu0.b32.cont [5/16] 0.0, 128
  %3588 = vxpose.xlu0.b32.cont [6/16] 0.0, 128
  %3589 = vxpose.xlu0.b32.cont [7/16] 0.0, 128
  %3590 = vxpose.xlu0.b32.cont [8/16] 0.0, 128
  %3591 = vxpose.xlu0.b32.cont [9/16] 0.0, 128
  %3592 = vxpose.xlu0.b32.cont [10/16] 0.0, 128
  %3593 = vxpose.xlu0.b32.cont [11/16] 0.0, 128
  %3594 = vxpose.xlu0.b32.cont [12/16] 0.0, 128
  %3595 = vxpose.xlu0.b32.cont [13/16] 0.0, 128
  %3596 = vxpose.xlu0.b32.cont [14/16] 0.0, 128
  %3597 = vxpose.xlu0.b32.cont [15/16] 0.0, 128
  %3598 = vxpose.xlu0.b32.end [16/16] 0.0, 128
  %v3599 = vpop.trf.xlu0
  %v3600 = vpop.trf.xlu0
  %v3601 = vpop.trf.xlu0
  %v3602 = vpop.trf.xlu0
  %v3603 = vpop.trf.xlu0
  %v3604 = vpop.trf.xlu0
  %v3605 = vpop.trf.xlu0
  %v3606 = vpop.trf.xlu0
  %v3607 = vpop.trf.xlu0
  %v3608 = vpop.trf.xlu0
  %v3609 = vpop.trf.xlu0
  %v3610 = vpop.trf.xlu0
  %v3611 = vpop.trf.xlu0
  %v3612 = vpop.trf.xlu0
  %v3613 = vpop.trf.xlu0
  %v3614 = vpop.trf.xlu0
  %3615 = vxpose.xlu0.b32.start [1/16] %v3355, 128
  %3616 = vxpose.xlu0.b32.cont [2/16] %v3358, 128
  %3617 = vxpose.xlu0.b32.cont [3/16] 0.0, 128
  %3618 = vxpose.xlu0.b32.cont [4/16] 0.0, 128
  %3619 = vxpose.xlu0.b32.cont [5/16] 0.0, 128
  %3620 = vxpose.xlu0.b32.cont [6/16] 0.0, 128
  %3621 = vxpose.xlu0.b32.cont [7/16] 0.0, 128
  %3622 = vxpose.xlu0.b32.cont [8/16] 0.0, 128
  %3623 = vxpose.xlu0.b32.cont [9/16] 0.0, 128
  %3624 = vxpose.xlu0.b32.cont [10/16] 0.0, 128
  %3625 = vxpose.xlu0.b32.cont [11/16] 0.0, 128
  %3626 = vxpose.xlu0.b32.cont [12/16] 0.0, 128
  %3627 = vxpose.xlu0.b32.cont [13/16] 0.0, 128
  %3628 = vxpose.xlu0.b32.cont [14/16] 0.0, 128
  %3629 = vxpose.xlu0.b32.cont [15/16] 0.0, 128
  %3630 = vxpose.xlu0.b32.end [16/16] 0.0, 128
  %v3631 = vpop.trf.xlu0
  %v3632 = vpop.trf.xlu0
  %v3633 = vpop.trf.xlu0
  %v3634 = vpop.trf.xlu0
  %v3635 = vpop.trf.xlu0
  %v3636 = vpop.trf.xlu0
  %v3637 = vpop.trf.xlu0
  %v3638 = vpop.trf.xlu0
  %v3639 = vpop.trf.xlu0
  %v3640 = vpop.trf.xlu0
  %v3641 = vpop.trf.xlu0
  %v3642 = vpop.trf.xlu0
  %v3643 = vpop.trf.xlu0
  %v3644 = vpop.trf.xlu0
  %v3645 = vpop.trf.xlu0
  %v3646 = vpop.trf.xlu0
  %3647 = vxpose.xlu0.b32.start [1/16] %v3402, 128
  %3648 = vxpose.xlu0.b32.cont [2/16] %v3405, 128
  %3649 = vxpose.xlu0.b32.cont [3/16] 0.0, 128
  %3650 = vxpose.xlu0.b32.cont [4/16] 0.0, 128
  %3651 = vxpose.xlu0.b32.cont [5/16] 0.0, 128
  %3652 = vxpose.xlu0.b32.cont [6/16] 0.0, 128
  %3653 = vxpose.xlu0.b32.cont [7/16] 0.0, 128
  %3654 = vxpose.xlu0.b32.cont [8/16] 0.0, 128
  %3655 = vxpose.xlu0.b32.cont [9/16] 0.0, 128
  %3656 = vxpose.xlu0.b32.cont [10/16] 0.0, 128
  %3657 = vxpose.xlu0.b32.cont [11/16] 0.0, 128
  %3658 = vxpose.xlu0.b32.cont [12/16] 0.0, 128
  %3659 = vxpose.xlu0.b32.cont [13/16] 0.0, 128
  %3660 = vxpose.xlu0.b32.cont [14/16] 0.0, 128
  %3661 = vxpose.xlu0.b32.cont [15/16] 0.0, 128
  %3662 = vxpose.xlu0.b32.end [16/16] 0.0, 128
  %v3663 = vpop.trf.xlu0
  %v3664 = vpop.trf.xlu0
  %v3665 = vpop.trf.xlu0
  %v3666 = vpop.trf.xlu0
  %v3667 = vpop.trf.xlu0
  %v3668 = vpop.trf.xlu0
  %v3669 = vpop.trf.xlu0
  %v3670 = vpop.trf.xlu0
  %v3671 = vpop.trf.xlu0
  %v3672 = vpop.trf.xlu0
  %v3673 = vpop.trf.xlu0
  %v3674 = vpop.trf.xlu0
  %v3675 = vpop.trf.xlu0
  %v3676 = vpop.trf.xlu0
  %v3677 = vpop.trf.xlu0
  %v3678 = vpop.trf.xlu0
  %3679 = vxpose.xlu0.b32.start [1/16] %v3449, 128
  %3680 = vxpose.xlu0.b32.cont [2/16] %v3452, 128
  %3681 = vxpose.xlu0.b32.cont [3/16] 0.0, 128
  %3682 = vxpose.xlu0.b32.cont [4/16] 0.0, 128
  %3683 = vxpose.xlu0.b32.cont [5/16] 0.0, 128
  %3684 = vxpose.xlu0.b32.cont [6/16] 0.0, 128
  %3685 = vxpose.xlu0.b32.cont [7/16] 0.0, 128
  %3686 = vxpose.xlu0.b32.cont [8/16] 0.0, 128
  %3687 = vxpose.xlu0.b32.cont [9/16] 0.0, 128
  %3688 = vxpose.xlu0.b32.cont [10/16] 0.0, 128
  %3689 = vxpose.xlu0.b32.cont [11/16] 0.0, 128
  %3690 = vxpose.xlu0.b32.cont [12/16] 0.0, 128
  %3691 = vxpose.xlu0.b32.cont [13/16] 0.0, 128
  %3692 = vxpose.xlu0.b32.cont [14/16] 0.0, 128
  %3693 = vxpose.xlu0.b32.cont [15/16] 0.0, 128
  %3694 = vxpose.xlu0.b32.end [16/16] 0.0, 128
  %v3695 = vpop.trf.xlu0
  %v3696 = vpop.trf.xlu0
  %v3697 = vpop.trf.xlu0
  %v3698 = vpop.trf.xlu0
  %v3699 = vpop.trf.xlu0
  %v3700 = vpop.trf.xlu0
  %v3701 = vpop.trf.xlu0
  %v3702 = vpop.trf.xlu0
  %v3703 = vpop.trf.xlu0
  %v3704 = vpop.trf.xlu0
  %v3705 = vpop.trf.xlu0
  %v3706 = vpop.trf.xlu0
  %v3707 = vpop.trf.xlu0
  %v3708 = vpop.trf.xlu0
  %v3709 = vpop.trf.xlu0
  %v3710 = vpop.trf.xlu0
  %3711 = vxpose.xlu0.b32.start [1/16] %v3471, 128
  %3712 = vxpose.xlu0.b32.cont [2/16] %v3503, 128
  %3713 = vxpose.xlu0.b32.cont [3/16] %v3535, 128
  %3714 = vxpose.xlu0.b32.cont [4/16] %v3567, 128
  %3715 = vxpose.xlu0.b32.cont [5/16] %v3599, 128
  %3716 = vxpose.xlu0.b32.cont [6/16] %v3631, 128
  %3717 = vxpose.xlu0.b32.cont [7/16] %v3663, 128
  %3718 = vxpose.xlu0.b32.cont [8/16] %v3695, 128
  %3719 = vxpose.xlu0.b32.cont [9/16] 0.0, 128
  %3720 = vxpose.xlu0.b32.cont [10/16] 0.0, 128
  %3721 = vxpose.xlu0.b32.cont [11/16] 0.0, 128
  %3722 = vxpose.xlu0.b32.cont [12/16] 0.0, 128
  %3723 = vxpose.xlu0.b32.cont [13/16] 0.0, 128
  %3724 = vxpose.xlu0.b32.cont [14/16] 0.0, 128
  %3725 = vxpose.xlu0.b32.cont [15/16] 0.0, 128
  %3726 = vxpose.xlu0.b32.end [16/16] 0.0, 128
  %v3727 = vpop.trf.xlu0
  %v3728 = vpop.trf.xlu0
  %v3729 = vpop.trf.xlu0
  %v3730 = vpop.trf.xlu0
  %v3731 = vpop.trf.xlu0
  %v3732 = vpop.trf.xlu0
  %v3733 = vpop.trf.xlu0
  %v3734 = vpop.trf.xlu0
  %v3735 = vpop.trf.xlu0
  %v3736 = vpop.trf.xlu0
  %v3737 = vpop.trf.xlu0
  %v3738 = vpop.trf.xlu0
  %v3739 = vpop.trf.xlu0
  %v3740 = vpop.trf.xlu0
  %v3741 = vpop.trf.xlu0
  %v3742 = vpop.trf.xlu0
  %v3743 = vpack.c.bf16 %v3728, %v3727
  %s3744 = scalar_lea.vmem %s17, 32
  %v3745 = vld [vmem:[%s3744] sm:$0xf]
  %v3746 = vld [vmem:[%s3744 + $0x4] sm:$0xf]
  %v3747 = vld [vmem:[%s3744 + $0x8] sm:$0xf]
  %v3748 = vld [vmem:[%s3744 + $0xc] sm:$0xf]
  %v3749 = vld [vmem:[%s3744 + $0x10] sm:$0xf]
  %v3750 = vld [vmem:[%s3744 + $0x14] sm:$0xf]
  %v3751 = vld [vmem:[%s3744 + $0x18] sm:$0xf]
  %v3752 = vld [vmem:[%s3744 + $0x1c] sm:$0xf]
  %s3753 = scalar_lea.vmem %s19, 1
  %v3754 = vld [vmem:[%s3753] sm:$0x1]
  %v3756 = vlaneseq
  %v3757 = vshrl.u32 %v3756, 7
  %v3758 = vsub.s32 0, %v3757
  %v3759 = vrot.slane %v3754, %v3758
  %v3769 = vunpack.c.l.b16 %v3745
  %v3770 = vunpack.c.l.b16 %v3746
  %v3771 = vunpack.c.l.b16 %v3747
  %v3772 = vunpack.c.l.b16 %v3748
  %v3773 = vunpack.c.l.b16 %v3749
  %v3774 = vunpack.c.l.b16 %v3750
  %v3775 = vunpack.c.l.b16 %v3751
  %v3776 = vunpack.c.l.b16 %v3752
  %v3777 = vpack.c.b16 %v3770, %v3769
  %v3778 = vpack.c.b16 %v3772, %v3771
  %v3779 = vpack.c.b16 %v3774, %v3773
  %v3780 = vpack.c.b16 %v3776, %v3775
  %v3786 = vsel %vm238, %v3743, 0
  %3788 = vmatprep.subr.bf16.mxu0 0
  %3789 = vmatpush1.bf16.msra.mxu0 %v3777
  %3790 = vmatprep.subr.bf16.mxu0 0
  %3791 = vmatpush1.bf16.msra.mxu0 %v3778
  %3792 = vmatprep.subr.bf16.mxu0 0
  %3793 = vmatpush1.bf16.msra.mxu0 %v3779
  %3794 = vmatprep.subr.bf16.mxu0 0
  %3795 = vmatpush1.bf16.msra.mxu0 %v3780
  %3796 = vmatprep.subr.bf16.mxu0 0
  %3797 = vmatpush1.bf16.msra.mxu0 0
  %3798 = vmatprep.subr.bf16.mxu0 0
  %3799 = vmatpush1.bf16.msra.mxu0 0
  %3800 = vmatprep.subr.bf16.mxu0 0
  %3801 = vmatpush1.bf16.msra.mxu0 0
  %3802 = vmatprep.subr.bf16.mxu0 0
  %3803 = vmatpush1.bf16.msra.mxu0 0
  %3804 = vmatprep.subr.bf16.mxu0 0
  %3805 = vmatpush1.bf16.msra.mxu0 0
  %3806 = vmatprep.subr.bf16.mxu0 0
  %3807 = vmatpush1.bf16.msra.mxu0 0
  %3808 = vmatprep.subr.bf16.mxu0 0
  %3809 = vmatpush1.bf16.msra.mxu0 0
  %3810 = vmatprep.subr.bf16.mxu0 0
  %3811 = vmatpush1.bf16.msra.mxu0 0
  %3812 = vmatprep.subr.bf16.mxu0 0
  %3813 = vmatpush1.bf16.msra.mxu0 0
  %3814 = vmatprep.subr.bf16.mxu0 0
  %3815 = vmatpush1.bf16.msra.mxu0 0
  %3816 = vmatprep.subr.bf16.mxu0 0
  %3817 = vmatpush1.bf16.msra.mxu0 0
  %3818 = vmatprep.subr.bf16.mxu0 0
  %3819 = vmatpush1.bf16.msra.mxu0 0
  %3820 = vmatprep.mubr.bf16.mxu0 0
  %3821 = vmatmul.mubr.bf16.gmra.mrb[0].mxu0 %v3786
  %v3822 = vpop.f32.mrb[0].mxu0
  %v3823 = vadd.f32 %v3759, %v3822
  %v3824 = vpop.f32.mrb[0].mxu0
  %v3825 = vpop.f32.mrb[0].mxu0
  %v3826 = vadd.f32 %v3759, %v3825
  %v3827 = vpop.f32.mrb[0].mxu0
  %3828 = vdwg.mxu0
  %v3829 = vadd.f32 %v2192, %v3823
  %v3830 = vadd.f32 %v2193, %v3826
  %s3831 = scalar_lea.vmem %s21, 1
  %v3832 = vld [vmem:[%s3831] sm:$0x1]
  %s3833 = scalar_lea.vmem %s23, 1
  %v3834 = vld [vmem:[%s3833] sm:$0x1]
  %v3835 = vsel %vm238, %v3829, 0.0
  %3836 = vadd.xlane.f32.xlu0 %v3835
  %v3837 = vpop.xlane.xlu0 %3836
  %v3838 = vsel %vm238, %v3830, 0.0
  %3839 = vadd.xlane.f32.xlu0 %v3838
  %v3840 = vpop.xlane.xlu0 %3839
  %v3841 = vmul.f32 %v3837, %v1822
  %v3842 = vmul.f32 %v3840, %v1822
  %v3843 = vsub.f32 %v3829, %v3841
  %v3844 = vsub.f32 %v3830, %v3842
  %v3845 = vmul.f32 %v3843, %v3843
  %v3846 = vmul.f32 %v3844, %v3844
  %v3847 = vsel %vm238, %v3845, 0.0
  %3848 = vadd.xlane.f32.xlu0 %v3847
  %v3849 = vpop.xlane.xlu0 %3848
  %v3850 = vsel %vm238, %v3846, 0.0
  %3851 = vadd.xlane.f32.xlu0 %v3850
  %v3852 = vpop.xlane.xlu0 %3851
  %v3853 = vmul.f32 %v3849, %v1822
  %v3854 = vmul.f32 %v3852, %v1822
  %v3855 = vadd.f32 %v3853, 1e-05
  %v3856 = vadd.f32 %v3854, 1e-05
  %v3857 = vrsqrt.pop %v3855
  %v3858 = vrsqrt.pop %v3856
  %v3859 = vmul.f32 %v3843, %v3857
  %v3860 = vmul.f32 %v3844, %v3858
  %v3862 = vlaneseq
  %v3863 = vshrl.u32 %v3862, 7
  %v3864 = vsub.s32 0, %v3863
  %v3865 = vrot.slane %v3832, %v3864
  %v3867 = vmul.f32 %v3859, %v3865
  %v3868 = vmul.f32 %v3860, %v3865
  %v3870 = vlaneseq
  %v3871 = vshrl.u32 %v3870, 7
  %v3872 = vsub.s32 0, %v3871
  %v3873 = vrot.slane %v3834, %v3872
  %v3875 = vadd.f32 %v3867, %v3873
  %v3876 = vadd.f32 %v3868, %v3873
  %v3877 = vpack.c.bf16 %v3876, %v3875
  %s3878 = scalar_lea.vmem %s25, 64
  %v3879 = vld [vmem:[%s3878] sm:$0xff]
  %v3880 = vld [vmem:[%s3878 + $0x8] sm:$0xff]
  %v3881 = vld [vmem:[%s3878 + $0x10] sm:$0xff]
  %v3882 = vld [vmem:[%s3878 + $0x18] sm:$0xff]
  %v3883 = vld [vmem:[%s3878 + $0x20] sm:$0xff]
  %v3884 = vld [vmem:[%s3878 + $0x28] sm:$0xff]
  %v3885 = vld [vmem:[%s3878 + $0x30] sm:$0xff]
  %v3886 = vld [vmem:[%s3878 + $0x38] sm:$0xff]
  %s3887 = scalar_lea.vmem %s27, 2
  %v3888 = vld [vmem:[%s3887] sm:$0x3]
  %v3890 = vlaneseq
  %v3891 = vshrl.u32 %v3890, 7
  %v3892 = vsub.s32 0, %v3891
  %v3893 = vrot.slane %v3888, %v3892
  %v3894 = vlaneseq
  %v3895 = vshrl.u32 %v3894, 7
  %v3896 = vsub.s32 1, %v3895
  %v3897 = vrot.slane %v3888, %v3896
  %v3908 = vunpack.c.l.b16 %v3879
  %v3909 = vunpack.c.h.b16 %v3879
  %v3910 = vunpack.c.l.b16 %v3880
  %v3911 = vunpack.c.h.b16 %v3880
  %v3912 = vunpack.c.l.b16 %v3881
  %v3913 = vunpack.c.h.b16 %v3881
  %v3914 = vunpack.c.l.b16 %v3882
  %v3915 = vunpack.c.h.b16 %v3882
  %v3916 = vunpack.c.l.b16 %v3883
  %v3917 = vunpack.c.h.b16 %v3883
  %v3918 = vunpack.c.l.b16 %v3884
  %v3919 = vunpack.c.h.b16 %v3884
  %v3920 = vunpack.c.l.b16 %v3885
  %v3921 = vunpack.c.h.b16 %v3885
  %v3922 = vunpack.c.l.b16 %v3886
  %v3923 = vunpack.c.h.b16 %v3886
  %v3924 = vpack.c.b16 %v3910, %v3908
  %v3925 = vpack.c.b16 %v3911, %v3909
  %v3926 = vpack.c.b16 %v3914, %v3912
  %v3927 = vpack.c.b16 %v3915, %v3913
  %v3928 = vpack.c.b16 %v3918, %v3916
  %v3929 = vpack.c.b16 %v3919, %v3917
  %v3930 = vpack.c.b16 %v3922, %v3920
  %v3931 = vpack.c.b16 %v3923, %v3921
  %v3941 = vsel %vm238, %v3877, 0
  %3943 = vmatprep.subr.bf16.mxu0 %v3925
  %3944 = vmatpush1.bf16.msra.mxu0 %v3924
  %3945 = vmatprep.subr.bf16.mxu0 %v3927
  %3946 = vmatpush1.bf16.msra.mxu0 %v3926
  %3947 = vmatprep.subr.bf16.mxu0 %v3929
  %3948 = vmatpush1.bf16.msra.mxu0 %v3928
  %3949 = vmatprep.subr.bf16.mxu0 %v3931
  %3950 = vmatpush1.bf16.msra.mxu0 %v3930
  %3951 = vmatprep.subr.bf16.mxu0 0
  %3952 = vmatpush1.bf16.msra.mxu0 0
  %3953 = vmatprep.subr.bf16.mxu0 0
  %3954 = vmatpush1.bf16.msra.mxu0 0
  %3955 = vmatprep.subr.bf16.mxu0 0
  %3956 = vmatpush1.bf16.msra.mxu0 0
  %3957 = vmatprep.subr.bf16.mxu0 0
  %3958 = vmatpush1.bf16.msra.mxu0 0
  %3959 = vmatprep.subr.bf16.mxu0 0
  %3960 = vmatpush1.bf16.msra.mxu0 0
  %3961 = vmatprep.subr.bf16.mxu0 0
  %3962 = vmatpush1.bf16.msra.mxu0 0
  %3963 = vmatprep.subr.bf16.mxu0 0
  %3964 = vmatpush1.bf16.msra.mxu0 0
  %3965 = vmatprep.subr.bf16.mxu0 0
  %3966 = vmatpush1.bf16.msra.mxu0 0
  %3967 = vmatprep.subr.bf16.mxu0 0
  %3968 = vmatpush1.bf16.msra.mxu0 0
  %3969 = vmatprep.subr.bf16.mxu0 0
  %3970 = vmatpush1.bf16.msra.mxu0 0
  %3971 = vmatprep.subr.bf16.mxu0 0
  %3972 = vmatpush1.bf16.msra.mxu0 0
  %3973 = vmatprep.subr.bf16.mxu0 0
  %3974 = vmatpush1.bf16.msra.mxu0 0
  %3975 = vmatprep.mubr.bf16.mxu0 0
  %3976 = vmatmul.mubr.bf16.gmra.mrb[0].mxu0 %v3941
  %v3977 = vpop.f32.mrb[0].mxu0
  %v3978 = vadd.f32 %v3893, %v3977
  %v3979 = vpop.f32.mrb[0].mxu0
  %v3980 = vadd.f32 %v3897, %v3979
  %v3981 = vpop.f32.mrb[0].mxu0
  %v3982 = vadd.f32 %v3893, %v3981
  %v3983 = vpop.f32.mrb[0].mxu0
  %v3984 = vadd.f32 %v3897, %v3983
  %3985 = vdwg.mxu0
  %v3986 = vmax.f32 %v3978, 0.0
  %v3987 = vmax.f32 %v3980, 0.0
  %v3988 = vmax.f32 %v3982, 0.0
  %v3989 = vmax.f32 %v3984, 0.0
  %v3990 = vpack.c.bf16 %v3988, %v3986
  %v3991 = vpack.c.bf16 %v3989, %v3987
  %s3992 = scalar_lea.vmem %s29, 128
  %v3993 = vld [vmem:[%s3992] sm:$0xf]
  %v3994 = vld [vmem:[%s3992 + $0x4] sm:$0xf]
  %v3995 = vld [vmem:[%s3992 + $0x8] sm:$0xf]
  %v3996 = vld [vmem:[%s3992 + $0xc] sm:$0xf]
  %v3997 = vld [vmem:[%s3992 + $0x10] sm:$0xf]
  %v3998 = vld [vmem:[%s3992 + $0x14] sm:$0xf]
  %v3999 = vld [vmem:[%s3992 + $0x18] sm:$0xf]
  %v4000 = vld [vmem:[%s3992 + $0x1c] sm:$0xf]
  %v4001 = vld [vmem:[%s3992 + $0x20] sm:$0xf]
  %v4002 = vld [vmem:[%s3992 + $0x24] sm:$0xf]
  %v4003 = vld [vmem:[%s3992 + $0x28] sm:$0xf]
  %v4004 = vld [vmem:[%s3992 + $0x2c] sm:$0xf]
  %v4005 = vld [vmem:[%s3992 + $0x30] sm:$0xf]
  %v4006 = vld [vmem:[%s3992 + $0x34] sm:$0xf]
  %v4007 = vld [vmem:[%s3992 + $0x38] sm:$0xf]
  %v4008 = vld [vmem:[%s3992 + $0x3c] sm:$0xf]
  %v4009 = vld [vmem:[%s3992 + $0x40] sm:$0xf]
  %v4010 = vld [vmem:[%s3992 + $0x44] sm:$0xf]
  %v4011 = vld [vmem:[%s3992 + $0x48] sm:$0xf]
  %v4012 = vld [vmem:[%s3992 + $0x4c] sm:$0xf]
  %v4013 = vld [vmem:[%s3992 + $0x50] sm:$0xf]
  %v4014 = vld [vmem:[%s3992 + $0x54] sm:$0xf]
  %v4015 = vld [vmem:[%s3992 + $0x58] sm:$0xf]
  %v4016 = vld [vmem:[%s3992 + $0x5c] sm:$0xf]
  %v4017 = vld [vmem:[%s3992 + $0x60] sm:$0xf]
  %v4018 = vld [vmem:[%s3992 + $0x64] sm:$0xf]
  %v4019 = vld [vmem:[%s3992 + $0x68] sm:$0xf]
  %v4020 = vld [vmem:[%s3992 + $0x6c] sm:$0xf]
  %v4021 = vld [vmem:[%s3992 + $0x70] sm:$0xf]
  %v4022 = vld [vmem:[%s3992 + $0x74] sm:$0xf]
  %v4023 = vld [vmem:[%s3992 + $0x78] sm:$0xf]
  %v4024 = vld [vmem:[%s3992 + $0x7c] sm:$0xf]
  %s4025 = scalar_lea.vmem %s31, 1
  %v4026 = vld [vmem:[%s4025] sm:$0x1]
  %v4028 = vlaneseq
  %v4029 = vshrl.u32 %v4028, 7
  %v4030 = vsub.s32 0, %v4029
  %v4031 = vrot.slane %v4026, %v4030
  %v4065 = vunpack.c.l.b16 %v3993
  %v4066 = vunpack.c.l.b16 %v3994
  %v4067 = vunpack.c.l.b16 %v3995
  %v4068 = vunpack.c.l.b16 %v3996
  %v4069 = vunpack.c.l.b16 %v3997
  %v4070 = vunpack.c.l.b16 %v3998
  %v4071 = vunpack.c.l.b16 %v3999
  %v4072 = vunpack.c.l.b16 %v4000
  %v4073 = vunpack.c.l.b16 %v4001
  %v4074 = vunpack.c.l.b16 %v4002
  %v4075 = vunpack.c.l.b16 %v4003
  %v4076 = vunpack.c.l.b16 %v4004
  %v4077 = vunpack.c.l.b16 %v4005
  %v4078 = vunpack.c.l.b16 %v4006
  %v4079 = vunpack.c.l.b16 %v4007
  %v4080 = vunpack.c.l.b16 %v4008
  %v4081 = vunpack.c.l.b16 %v4009
  %v4082 = vunpack.c.l.b16 %v4010
  %v4083 = vunpack.c.l.b16 %v4011
  %v4084 = vunpack.c.l.b16 %v4012
  %v4085 = vunpack.c.l.b16 %v4013
  %v4086 = vunpack.c.l.b16 %v4014
  %v4087 = vunpack.c.l.b16 %v4015
  %v4088 = vunpack.c.l.b16 %v4016
  %v4089 = vunpack.c.l.b16 %v4017
  %v4090 = vunpack.c.l.b16 %v4018
  %v4091 = vunpack.c.l.b16 %v4019
  %v4092 = vunpack.c.l.b16 %v4020
  %v4093 = vunpack.c.l.b16 %v4021
  %v4094 = vunpack.c.l.b16 %v4022
  %v4095 = vunpack.c.l.b16 %v4023
  %v4096 = vunpack.c.l.b16 %v4024
  %v4097 = vpack.c.b16 %v4066, %v4065
  %v4098 = vpack.c.b16 %v4068, %v4067
  %v4099 = vpack.c.b16 %v4070, %v4069
  %v4100 = vpack.c.b16 %v4072, %v4071
  %v4101 = vpack.c.b16 %v4074, %v4073
  %v4102 = vpack.c.b16 %v4076, %v4075
  %v4103 = vpack.c.b16 %v4078, %v4077
  %v4104 = vpack.c.b16 %v4080, %v4079
  %v4105 = vpack.c.b16 %v4082, %v4081
  %v4106 = vpack.c.b16 %v4084, %v4083
  %v4107 = vpack.c.b16 %v4086, %v4085
  %v4108 = vpack.c.b16 %v4088, %v4087
  %v4109 = vpack.c.b16 %v4090, %v4089
  %v4110 = vpack.c.b16 %v4092, %v4091
  %v4111 = vpack.c.b16 %v4094, %v4093
  %v4112 = vpack.c.b16 %v4096, %v4095
  %4129 = vmatprep.subr.bf16.mxu0 0
  %4130 = vmatpush1.bf16.msra.mxu0 %v4097
  %4131 = vmatprep.subr.bf16.mxu0 0
  %4132 = vmatpush1.bf16.msra.mxu0 %v4098
  %4133 = vmatprep.subr.bf16.mxu0 0
  %4134 = vmatpush1.bf16.msra.mxu0 %v4099
  %4135 = vmatprep.subr.bf16.mxu0 0
  %4136 = vmatpush1.bf16.msra.mxu0 %v4100
  %4137 = vmatprep.subr.bf16.mxu0 0
  %4138 = vmatpush1.bf16.msra.mxu0 %v4101
  %4139 = vmatprep.subr.bf16.mxu0 0
  %4140 = vmatpush1.bf16.msra.mxu0 %v4102
  %4141 = vmatprep.subr.bf16.mxu0 0
  %4142 = vmatpush1.bf16.msra.mxu0 %v4103
  %4143 = vmatprep.subr.bf16.mxu0 0
  %4144 = vmatpush1.bf16.msra.mxu0 %v4104
  %4145 = vmatprep.subr.bf16.mxu0 0
  %4146 = vmatpush1.bf16.msra.mxu0 %v4105
  %4147 = vmatprep.subr.bf16.mxu0 0
  %4148 = vmatpush1.bf16.msra.mxu0 %v4106
  %4149 = vmatprep.subr.bf16.mxu0 0
  %4150 = vmatpush1.bf16.msra.mxu0 %v4107
  %4151 = vmatprep.subr.bf16.mxu0 0
  %4152 = vmatpush1.bf16.msra.mxu0 %v4108
  %4153 = vmatprep.subr.bf16.mxu0 0
  %4154 = vmatpush1.bf16.msra.mxu0 %v4109
  %4155 = vmatprep.subr.bf16.mxu0 0
  %4156 = vmatpush1.bf16.msra.mxu0 %v4110
  %4157 = vmatprep.subr.bf16.mxu0 0
  %4158 = vmatpush1.bf16.msra.mxu0 %v4111
  %4159 = vmatprep.subr.bf16.mxu0 0
  %4160 = vmatpush1.bf16.msra.mxu0 %v4112
  %4161 = vmatprep.mubr.bf16.mxu0 %v3991
  %4162 = vmatmul.mubr.bf16.gmra.mrb[0].mxu0 %v3990
  %v4163 = vpop.f32.mrb[0].mxu0
  %v4164 = vadd.f32 %v4031, %v4163
  %v4165 = vpop.f32.mrb[0].mxu0
  %v4166 = vpop.f32.mrb[0].mxu0
  %v4167 = vadd.f32 %v4031, %v4166
  %v4168 = vpop.f32.mrb[0].mxu0
  %4169 = vdwg.mxu0
  %v4170 = vadd.f32 %v3875, %v4164
  %v4171 = vadd.f32 %v3876, %v4167
  %s4172 = scalar_lea.vmem %s33, 1
  %v4173 = vld [vmem:[%s4172] sm:$0x1]
  %s4174 = scalar_lea.vmem %s35, 1
  %v4175 = vld [vmem:[%s4174] sm:$0x1]
  %v4176 = vsel %vm238, %v4170, 0.0
  %4177 = vadd.xlane.f32.xlu0 %v4176
  %v4178 = vpop.xlane.xlu0 %4177
  %v4179 = vsel %vm238, %v4171, 0.0
  %4180 = vadd.xlane.f32.xlu0 %v4179
  %v4181 = vpop.xlane.xlu0 %4180
  %v4182 = vmul.f32 %v4178, %v1822
  %v4183 = vmul.f32 %v4181, %v1822
  %v4184 = vsub.f32 %v4170, %v4182
  %v4185 = vsub.f32 %v4171, %v4183
  %v4186 = vmul.f32 %v4184, %v4184
  %v4187 = vmul.f32 %v4185, %v4185
  %v4188 = vsel %vm238, %v4186, 0.0
  %4189 = vadd.xlane.f32.xlu0 %v4188
  %v4190 = vpop.xlane.xlu0 %4189
  %v4191 = vsel %vm238, %v4187, 0.0
  %4192 = vadd.xlane.f32.xlu0 %v4191
  %v4193 = vpop.xlane.xlu0 %4192
  %v4194 = vmul.f32 %v4190, %v1822
  %v4195 = vmul.f32 %v4193, %v1822
  %v4196 = vadd.f32 %v4194, 1e-05
  %v4197 = vadd.f32 %v4195, 1e-05
  %v4198 = vrsqrt.pop %v4196
  %v4199 = vrsqrt.pop %v4197
  %v4200 = vmul.f32 %v4184, %v4198
  %v4201 = vmul.f32 %v4185, %v4199
  %v4203 = vlaneseq
  %v4204 = vshrl.u32 %v4203, 7
  %v4205 = vsub.s32 0, %v4204
  %v4206 = vrot.slane %v4173, %v4205
  %v4208 = vmul.f32 %v4200, %v4206
  %v4209 = vmul.f32 %v4201, %v4206
  %v4211 = vlaneseq
  %v4212 = vshrl.u32 %v4211, 7
  %v4213 = vsub.s32 0, %v4212
  %v4214 = vrot.slane %v4175, %v4213
  %v4216 = vadd.f32 %v4208, %v4214
  %v4217 = vadd.f32 %v4209, %v4214
  %v4218 = vpack.c.bf16 %v4217, %v4216
  %s4219 = scalar_lea.vmem %s13, 128
  %v4220 = vld [vmem:[%s4219] sm:$0xff]
  %v4221 = vld [vmem:[%s4219 + $0x8] sm:$0xff]
  %v4222 = vld [vmem:[%s4219 + $0x10] sm:$0xff]
  %v4223 = vld [vmem:[%s4219 + $0x18] sm:$0xff]
  %v4224 = vld [vmem:[%s4219 + $0x20] sm:$0xff]
  %v4225 = vld [vmem:[%s4219 + $0x28] sm:$0xff]
  %v4226 = vld [vmem:[%s4219 + $0x30] sm:$0xff]
  %v4227 = vld [vmem:[%s4219 + $0x38] sm:$0xff]
  %s4228 = scalar_lea.vmem %s15, 4
  %v4229 = vld [vmem:[%s4228] sm:$0x3]
  %v4231 = vlaneseq
  %v4232 = vshrl.u32 %v4231, 7
  %v4233 = vsub.s32 0, %v4232
  %v4234 = vrot.slane %v4229, %v4233
  %v4235 = vlaneseq
  %v4236 = vshrl.u32 %v4235, 7
  %v4237 = vsub.s32 1, %v4236
  %v4238 = vrot.slane %v4229, %v4237
  %v4249 = vunpack.c.l.b16 %v4220
  %v4250 = vunpack.c.h.b16 %v4220
  %v4251 = vunpack.c.l.b16 %v4221
  %v4252 = vunpack.c.h.b16 %v4221
  %v4253 = vunpack.c.l.b16 %v4222
  %v4254 = vunpack.c.h.b16 %v4222
  %v4255 = vunpack.c.l.b16 %v4223
  %v4256 = vunpack.c.h.b16 %v4223
  %v4257 = vunpack.c.l.b16 %v4224
  %v4258 = vunpack.c.h.b16 %v4224
  %v4259 = vunpack.c.l.b16 %v4225
  %v4260 = vunpack.c.h.b16 %v4225
  %v4261 = vunpack.c.l.b16 %v4226
  %v4262 = vunpack.c.h.b16 %v4226
  %v4263 = vunpack.c.l.b16 %v4227
  %v4264 = vunpack.c.h.b16 %v4227
  %v4265 = vpack.c.b16 %v4251, %v4249
  %v4266 = vpack.c.b16 %v4252, %v4250
  %v4267 = vpack.c.b16 %v4255, %v4253
  %v4268 = vpack.c.b16 %v4256, %v4254
  %v4269 = vpack.c.b16 %v4259, %v4257
  %v4270 = vpack.c.b16 %v4260, %v4258
  %v4271 = vpack.c.b16 %v4263, %v4261
  %v4272 = vpack.c.b16 %v4264, %v4262
  %v4282 = vsel %vm238, %v4218, 0
  %4284 = vmatprep.subr.bf16.mxu0 %v4266
  %4285 = vmatpush1.bf16.msra.mxu0 %v4265
  %4286 = vmatprep.subr.bf16.mxu0 %v4268
  %4287 = vmatpush1.bf16.msra.mxu0 %v4267
  %4288 = vmatprep.subr.bf16.mxu0 %v4270
  %4289 = vmatpush1.bf16.msra.mxu0 %v4269
  %4290 = vmatprep.subr.bf16.mxu0 %v4272
  %4291 = vmatpush1.bf16.msra.mxu0 %v4271
  %4292 = vmatprep.subr.bf16.mxu0 0
  %4293 = vmatpush1.bf16.msra.mxu0 0
  %4294 = vmatprep.subr.bf16.mxu0 0
  %4295 = vmatpush1.bf16.msra.mxu0 0
  %4296 = vmatprep.subr.bf16.mxu0 0
  %4297 = vmatpush1.bf16.msra.mxu0 0
  %4298 = vmatprep.subr.bf16.mxu0 0
  %4299 = vmatpush1.bf16.msra.mxu0 0
  %4300 = vmatprep.subr.bf16.mxu0 0
  %4301 = vmatpush1.bf16.msra.mxu0 0
  %4302 = vmatprep.subr.bf16.mxu0 0
  %4303 = vmatpush1.bf16.msra.mxu0 0
  %4304 = vmatprep.subr.bf16.mxu0 0
  %4305 = vmatpush1.bf16.msra.mxu0 0
  %4306 = vmatprep.subr.bf16.mxu0 0
  %4307 = vmatpush1.bf16.msra.mxu0 0
  %4308 = vmatprep.subr.bf16.mxu0 0
  %4309 = vmatpush1.bf16.msra.mxu0 0
  %4310 = vmatprep.subr.bf16.mxu0 0
  %4311 = vmatpush1.bf16.msra.mxu0 0
  %4312 = vmatprep.subr.bf16.mxu0 0
  %4313 = vmatpush1.bf16.msra.mxu0 0
  %4314 = vmatprep.subr.bf16.mxu0 0
  %4315 = vmatpush1.bf16.msra.mxu0 0
  %4316 = vmatprep.mubr.bf16.mxu0 0
  %4317 = vmatmul.mubr.bf16.gmra.mrb[0].mxu0 %v4282
  %v4318 = vpop.f32.mrb[0].mxu0
  %v4319 = vadd.f32 %v4234, %v4318
  %v4320 = vpop.f32.mrb[0].mxu0
  %v4321 = vadd.f32 %v4238, %v4320
  %v4322 = vpop.f32.mrb[0].mxu0
  %v4323 = vadd.f32 %v4234, %v4322
  %v4324 = vpop.f32.mrb[0].mxu0
  %v4325 = vadd.f32 %v4238, %v4324
  %4326 = vdwg.mxu0
  %4327 = vxpose.xlu0.b32.start [1/16] %v4319, 128
  %4328 = vxpose.xlu0.b32.cont [2/16] %v4323, 128
  %4329 = vxpose.xlu0.b32.cont [3/16] 0.0, 128
  %4330 = vxpose.xlu0.b32.cont [4/16] 0.0, 128
  %4331 = vxpose.xlu0.b32.cont [5/16] 0.0, 128
  %4332 = vxpose.xlu0.b32.cont [6/16] 0.0, 128
  %4333 = vxpose.xlu0.b32.cont [7/16] 0.0, 128
  %4334 = vxpose.xlu0.b32.cont [8/16] 0.0, 128
  %4335 = vxpose.xlu0.b32.cont [9/16] 0.0, 128
  %4336 = vxpose.xlu0.b32.cont [10/16] 0.0, 128
  %4337 = vxpose.xlu0.b32.cont [11/16] 0.0, 128
  %4338 = vxpose.xlu0.b32.cont [12/16] 0.0, 128
  %4339 = vxpose.xlu0.b32.cont [13/16] 0.0, 128
  %4340 = vxpose.xlu0.b32.cont [14/16] 0.0, 128
  %4341 = vxpose.xlu0.b32.cont [15/16] 0.0, 128
  %4342 = vxpose.xlu0.b32.end [16/16] 0.0, 128
  %v4343 = vpop.trf.xlu0
  %v4344 = vpop.trf.xlu0
  %v4345 = vpop.trf.xlu0
  %v4346 = vpop.trf.xlu0
  %v4347 = vpop.trf.xlu0
  %v4348 = vpop.trf.xlu0
  %v4349 = vpop.trf.xlu0
  %v4350 = vpop.trf.xlu0
  %v4351 = vpop.trf.xlu0
  %v4352 = vpop.trf.xlu0
  %v4353 = vpop.trf.xlu0
  %v4354 = vpop.trf.xlu0
  %v4355 = vpop.trf.xlu0
  %v4356 = vpop.trf.xlu0
  %v4357 = vpop.trf.xlu0
  %v4358 = vpop.trf.xlu0
  %4359 = vxpose.xlu0.b32.start [1/16] %v4321, 128
  %4360 = vxpose.xlu0.b32.cont [2/16] %v4325, 128
  %4361 = vxpose.xlu0.b32.cont [3/16] 0.0, 128
  %4362 = vxpose.xlu0.b32.cont [4/16] 0.0, 128
  %4363 = vxpose.xlu0.b32.cont [5/16] 0.0, 128
  %4364 = vxpose.xlu0.b32.cont [6/16] 0.0, 128
  %4365 = vxpose.xlu0.b32.cont [7/16] 0.0, 128
  %4366 = vxpose.xlu0.b32.cont [8/16] 0.0, 128
  %4367 = vxpose.xlu0.b32.cont [9/16] 0.0, 128
  %4368 = vxpose.xlu0.b32.cont [10/16] 0.0, 128
  %4369 = vxpose.xlu0.b32.cont [11/16] 0.0, 128
  %4370 = vxpose.xlu0.b32.cont [12/16] 0.0, 128
  %4371 = vxpose.xlu0.b32.cont [13/16] 0.0, 128
  %4372 = vxpose.xlu0.b32.cont [14/16] 0.0, 128
  %4373 = vxpose.xlu0.b32.cont [15/16] 0.0, 128
  %4374 = vxpose.xlu0.b32.end [16/16] 0.0, 128
  %v4375 = vpop.trf.xlu0
  %v4376 = vpop.trf.xlu0
  %v4377 = vpop.trf.xlu0
  %v4378 = vpop.trf.xlu0
  %v4379 = vpop.trf.xlu0
  %v4380 = vpop.trf.xlu0
  %v4381 = vpop.trf.xlu0
  %v4382 = vpop.trf.xlu0
  %v4383 = vpop.trf.xlu0
  %v4384 = vpop.trf.xlu0
  %v4385 = vpop.trf.xlu0
  %v4386 = vpop.trf.xlu0
  %v4387 = vpop.trf.xlu0
  %v4388 = vpop.trf.xlu0
  %v4389 = vpop.trf.xlu0
  %v4390 = vpop.trf.xlu0
  %v4391 = vpack.c.bf16 %v4343, %v4343
  %v4392 = vpack.c.bf16 %v4344, %v4344
  %v4393 = vpack.c.bf16 %v4345, %v4345
  %v4394 = vpack.c.bf16 %v4346, %v4346
  %v4395 = vpack.c.bf16 %v4347, %v4347
  %v4396 = vpack.c.bf16 %v4348, %v4348
  %v4397 = vpack.c.bf16 %v4349, %v4349
  %v4398 = vpack.c.bf16 %v4350, %v4350
  %v4399 = vpack.c.bf16 %v4351, %v4351
  %v4400 = vpack.c.bf16 %v4352, %v4352
  %v4401 = vpack.c.bf16 %v4353, %v4353
  %v4402 = vpack.c.bf16 %v4354, %v4354
  %v4403 = vpack.c.bf16 %v4355, %v4355
  %v4404 = vpack.c.bf16 %v4356, %v4356
  %v4405 = vpack.c.bf16 %v4357, %v4357
  %v4406 = vpack.c.bf16 %v4358, %v4358
  %4407 = vxpose.xlu0.c.b16.start [1/8] %v4391, 128
  %4408 = vxpose.xlu0.c.b16.cont [2/8] 0, 128
  %4409 = vxpose.xlu0.c.b16.cont [3/8] 0, 128
  %4410 = vxpose.xlu0.c.b16.cont [4/8] 0, 128
  %4411 = vxpose.xlu0.c.b16.cont [5/8] 0, 128
  %4412 = vxpose.xlu0.c.b16.cont [6/8] 0, 128
  %4413 = vxpose.xlu0.c.b16.cont [7/8] 0, 128
  %4414 = vxpose.xlu0.c.b16.end [8/8] 0, 128
  %v4415 = vpop.trf.xlu0
  %v4416 = vpop.trf.xlu0
  %v4417 = vpop.trf.xlu0
  %v4418 = vpop.trf.xlu0
  %v4419 = vpop.trf.xlu0
  %v4420 = vpop.trf.xlu0
  %v4421 = vpop.trf.xlu0
  %v4422 = vpop.trf.xlu0
  %v4424 = vsel %vm381, %v4415, 0
  %v4427 = vsel %vm385, %v4399, 0
  %4429 = vmatprep.subr.bf16.mxu0 0
  %4430 = vmatpush1.bf16.msra.mxu0 %v4427
  %4431 = vmatprep.subr.bf16.mxu0 0
  %4432 = vmatpush1.bf16.msra.mxu0 0
  %4433 = vmatprep.subr.bf16.mxu0 0
  %4434 = vmatpush1.bf16.msra.mxu0 0
  %4435 = vmatprep.subr.bf16.mxu0 0
  %4436 = vmatpush1.bf16.msra.mxu0 0
  %4437 = vmatprep.subr.bf16.mxu0 0
  %4438 = vmatpush1.bf16.msra.mxu0 0
  %4439 = vmatprep.subr.bf16.mxu0 0
  %4440 = vmatpush1.bf16.msra.mxu0 0
  %4441 = vmatprep.subr.bf16.mxu0 0
  %4442 = vmatpush1.bf16.msra.mxu0 0
  %4443 = vmatprep.subr.bf16.mxu0 0
  %4444 = vmatpush1.bf16.msra.mxu0 0
  %4445 = vmatprep.subr.bf16.mxu0 0
  %4446 = vmatpush1.bf16.msra.mxu0 0
  %4447 = vmatprep.subr.bf16.mxu0 0
  %4448 = vmatpush1.bf16.msra.mxu0 0
  %4449 = vmatprep.subr.bf16.mxu0 0
  %4450 = vmatpush1.bf16.msra.mxu0 0
  %4451 = vmatprep.subr.bf16.mxu0 0
  %4452 = vmatpush1.bf16.msra.mxu0 0
  %4453 = vmatprep.subr.bf16.mxu0 0
  %4454 = vmatpush1.bf16.msra.mxu0 0
  %4455 = vmatprep.subr.bf16.mxu0 0
  %4456 = vmatpush1.bf16.msra.mxu0 0
  %4457 = vmatprep.subr.bf16.mxu0 0
  %4458 = vmatpush1.bf16.msra.mxu0 0
  %4459 = vmatprep.subr.bf16.mxu0 0
  %4460 = vmatpush1.bf16.msra.mxu0 0
  %4461 = vmatprep.mubr.bf16.mxu0 0
  %4462 = vmatmul.mubr.bf16.gmra.mrb[0].mxu0 %v4424
  %v4463 = vpop.f32.mrb[0].mxu0
  %v4464 = vadd.f32 %v175, %v4463
  %v4465 = vpop.f32.mrb[0].mxu0
  %v4466 = vpop.f32.mrb[0].mxu0
  %v4467 = vadd.f32 %v176, %v4466
  %v4468 = vpop.f32.mrb[0].mxu0
  %4469 = vdwg.mxu0
  %4470 = vxpose.xlu0.c.b16.start [1/8] %v4392, 128
  %4471 = vxpose.xlu0.c.b16.cont [2/8] 0, 128
  %4472 = vxpose.xlu0.c.b16.cont [3/8] 0, 128
  %4473 = vxpose.xlu0.c.b16.cont [4/8] 0, 128
  %4474 = vxpose.xlu0.c.b16.cont [5/8] 0, 128
  %4475 = vxpose.xlu0.c.b16.cont [6/8] 0, 128
  %4476 = vxpose.xlu0.c.b16.cont [7/8] 0, 128
  %4477 = vxpose.xlu0.c.b16.end [8/8] 0, 128
  %v4478 = vpop.trf.xlu0
  %v4479 = vpop.trf.xlu0
  %v4480 = vpop.trf.xlu0
  %v4481 = vpop.trf.xlu0
  %v4482 = vpop.trf.xlu0
  %v4483 = vpop.trf.xlu0
  %v4484 = vpop.trf.xlu0
  %v4485 = vpop.trf.xlu0
  %v4487 = vsel %vm381, %v4478, 0
  %v4490 = vsel %vm385, %v4400, 0
  %4492 = vmatprep.subr.bf16.mxu0 0
  %4493 = vmatpush1.bf16.msra.mxu0 %v4490
  %4494 = vmatprep.subr.bf16.mxu0 0
  %4495 = vmatpush1.bf16.msra.mxu0 0
  %4496 = vmatprep.subr.bf16.mxu0 0
  %4497 = vmatpush1.bf16.msra.mxu0 0
  %4498 = vmatprep.subr.bf16.mxu0 0
  %4499 = vmatpush1.bf16.msra.mxu0 0
  %4500 = vmatprep.subr.bf16.mxu0 0
  %4501 = vmatpush1.bf16.msra.mxu0 0
  %4502 = vmatprep.subr.bf16.mxu0 0
  %4503 = vmatpush1.bf16.msra.mxu0 0
  %4504 = vmatprep.subr.bf16.mxu0 0
  %4505 = vmatpush1.bf16.msra.mxu0 0
  %4506 = vmatprep.subr.bf16.mxu0 0
  %4507 = vmatpush1.bf16.msra.mxu0 0
  %4508 = vmatprep.subr.bf16.mxu0 0
  %4509 = vmatpush1.bf16.msra.mxu0 0
  %4510 = vmatprep.subr.bf16.mxu0 0
  %4511 = vmatpush1.bf16.msra.mxu0 0
  %4512 = vmatprep.subr.bf16.mxu0 0
  %4513 = vmatpush1.bf16.msra.mxu0 0
  %4514 = vmatprep.subr.bf16.mxu0 0
  %4515 = vmatpush1.bf16.msra.mxu0 0
  %4516 = vmatprep.subr.bf16.mxu0 0
  %4517 = vmatpush1.bf16.msra.mxu0 0
  %4518 = vmatprep.subr.bf16.mxu0 0
  %4519 = vmatpush1.bf16.msra.mxu0 0
  %4520 = vmatprep.subr.bf16.mxu0 0
  %4521 = vmatpush1.bf16.msra.mxu0 0
  %4522 = vmatprep.subr.bf16.mxu0 0
  %4523 = vmatpush1.bf16.msra.mxu0 0
  %4524 = vmatprep.mubr.bf16.mxu0 0
  %4525 = vmatmul.mubr.bf16.gmra.mrb[0].mxu0 %v4487
  %v4526 = vpop.f32.mrb[0].mxu0
  %v4527 = vadd.f32 %v175, %v4526
  %v4528 = vpop.f32.mrb[0].mxu0
  %v4529 = vpop.f32.mrb[0].mxu0
  %v4530 = vadd.f32 %v176, %v4529
  %v4531 = vpop.f32.mrb[0].mxu0
  %4532 = vdwg.mxu0
  %4533 = vxpose.xlu0.c.b16.start [1/8] %v4393, 128
  %4534 = vxpose.xlu0.c.b16.cont [2/8] 0, 128
  %4535 = vxpose.xlu0.c.b16.cont [3/8] 0, 128
  %4536 = vxpose.xlu0.c.b16.cont [4/8] 0, 128
  %4537 = vxpose.xlu0.c.b16.cont [5/8] 0, 128
  %4538 = vxpose.xlu0.c.b16.cont [6/8] 0, 128
  %4539 = vxpose.xlu0.c.b16.cont [7/8] 0, 128
  %4540 = vxpose.xlu0.c.b16.end [8/8] 0, 128
  %v4541 = vpop.trf.xlu0
  %v4542 = vpop.trf.xlu0
  %v4543 = vpop.trf.xlu0
  %v4544 = vpop.trf.xlu0
  %v4545 = vpop.trf.xlu0
  %v4546 = vpop.trf.xlu0
  %v4547 = vpop.trf.xlu0
  %v4548 = vpop.trf.xlu0
  %v4550 = vsel %vm381, %v4541, 0
  %v4553 = vsel %vm385, %v4401, 0
  %4555 = vmatprep.subr.bf16.mxu0 0
  %4556 = vmatpush1.bf16.msra.mxu0 %v4553
  %4557 = vmatprep.subr.bf16.mxu0 0
  %4558 = vmatpush1.bf16.msra.mxu0 0
  %4559 = vmatprep.subr.bf16.mxu0 0
  %4560 = vmatpush1.bf16.msra.mxu0 0
  %4561 = vmatprep.subr.bf16.mxu0 0
  %4562 = vmatpush1.bf16.msra.mxu0 0
  %4563 = vmatprep.subr.bf16.mxu0 0
  %4564 = vmatpush1.bf16.msra.mxu0 0
  %4565 = vmatprep.subr.bf16.mxu0 0
  %4566 = vmatpush1.bf16.msra.mxu0 0
  %4567 = vmatprep.subr.bf16.mxu0 0
  %4568 = vmatpush1.bf16.msra.mxu0 0
  %4569 = vmatprep.subr.bf16.mxu0 0
  %4570 = vmatpush1.bf16.msra.mxu0 0
  %4571 = vmatprep.subr.bf16.mxu0 0
  %4572 = vmatpush1.bf16.msra.mxu0 0
  %4573 = vmatprep.subr.bf16.mxu0 0
  %4574 = vmatpush1.bf16.msra.mxu0 0
  %4575 = vmatprep.subr.bf16.mxu0 0
  %4576 = vmatpush1.bf16.msra.mxu0 0
  %4577 = vmatprep.subr.bf16.mxu0 0
  %4578 = vmatpush1.bf16.msra.mxu0 0
  %4579 = vmatprep.subr.bf16.mxu0 0
  %4580 = vmatpush1.bf16.msra.mxu0 0
  %4581 = vmatprep.subr.bf16.mxu0 0
  %4582 = vmatpush1.bf16.msra.mxu0 0
  %4583 = vmatprep.subr.bf16.mxu0 0
  %4584 = vmatpush1.bf16.msra.mxu0 0
  %4585 = vmatprep.subr.bf16.mxu0 0
  %4586 = vmatpush1.bf16.msra.mxu0 0
  %4587 = vmatprep.mubr.bf16.mxu0 0
  %4588 = vmatmul.mubr.bf16.gmra.mrb[0].mxu0 %v4550
  %v4589 = vpop.f32.mrb[0].mxu0
  %v4590 = vadd.f32 %v175, %v4589
  %v4591 = vpop.f32.mrb[0].mxu0
  %v4592 = vpop.f32.mrb[0].mxu0
  %v4593 = vadd.f32 %v176, %v4592
  %v4594 = vpop.f32.mrb[0].mxu0
  %4595 = vdwg.mxu0
  %4596 = vxpose.xlu0.c.b16.start [1/8] %v4394, 128
  %4597 = vxpose.xlu0.c.b16.cont [2/8] 0, 128
  %4598 = vxpose.xlu0.c.b16.cont [3/8] 0, 128
  %4599 = vxpose.xlu0.c.b16.cont [4/8] 0, 128
  %4600 = vxpose.xlu0.c.b16.cont [5/8] 0, 128
  %4601 = vxpose.xlu0.c.b16.cont [6/8] 0, 128
  %4602 = vxpose.xlu0.c.b16.cont [7/8] 0, 128
  %4603 = vxpose.xlu0.c.b16.end [8/8] 0, 128
  %v4604 = vpop.trf.xlu0
  %v4605 = vpop.trf.xlu0
  %v4606 = vpop.trf.xlu0
  %v4607 = vpop.trf.xlu0
  %v4608 = vpop.trf.xlu0
  %v4609 = vpop.trf.xlu0
  %v4610 = vpop.trf.xlu0
  %v4611 = vpop.trf.xlu0
  %v4613 = vsel %vm381, %v4604, 0
  %v4616 = vsel %vm385, %v4402, 0
  %4618 = vmatprep.subr.bf16.mxu0 0
  %4619 = vmatpush1.bf16.msra.mxu0 %v4616
  %4620 = vmatprep.subr.bf16.mxu0 0
  %4621 = vmatpush1.bf16.msra.mxu0 0
  %4622 = vmatprep.subr.bf16.mxu0 0
  %4623 = vmatpush1.bf16.msra.mxu0 0
  %4624 = vmatprep.subr.bf16.mxu0 0
  %4625 = vmatpush1.bf16.msra.mxu0 0
  %4626 = vmatprep.subr.bf16.mxu0 0
  %4627 = vmatpush1.bf16.msra.mxu0 0
  %4628 = vmatprep.subr.bf16.mxu0 0
  %4629 = vmatpush1.bf16.msra.mxu0 0
  %4630 = vmatprep.subr.bf16.mxu0 0
  %4631 = vmatpush1.bf16.msra.mxu0 0
  %4632 = vmatprep.subr.bf16.mxu0 0
  %4633 = vmatpush1.bf16.msra.mxu0 0
  %4634 = vmatprep.subr.bf16.mxu0 0
  %4635 = vmatpush1.bf16.msra.mxu0 0
  %4636 = vmatprep.subr.bf16.mxu0 0
  %4637 = vmatpush1.bf16.msra.mxu0 0
  %4638 = vmatprep.subr.bf16.mxu0 0
  %4639 = vmatpush1.bf16.msra.mxu0 0
  %4640 = vmatprep.subr.bf16.mxu0 0
  %4641 = vmatpush1.bf16.msra.mxu0 0
  %4642 = vmatprep.subr.bf16.mxu0 0
  %4643 = vmatpush1.bf16.msra.mxu0 0
  %4644 = vmatprep.subr.bf16.mxu0 0
  %4645 = vmatpush1.bf16.msra.mxu0 0
  %4646 = vmatprep.subr.bf16.mxu0 0
  %4647 = vmatpush1.bf16.msra.mxu0 0
  %4648 = vmatprep.subr.bf16.mxu0 0
  %4649 = vmatpush1.bf16.msra.mxu0 0
  %4650 = vmatprep.mubr.bf16.mxu0 0
  %4651 = vmatmul.mubr.bf16.gmra.mrb[0].mxu0 %v4613
  %v4652 = vpop.f32.mrb[0].mxu0
  %v4653 = vadd.f32 %v175, %v4652
  %v4654 = vpop.f32.mrb[0].mxu0
  %v4655 = vpop.f32.mrb[0].mxu0
  %v4656 = vadd.f32 %v176, %v4655
  %v4657 = vpop.f32.mrb[0].mxu0
  %4658 = vdwg.mxu0
  %4659 = vxpose.xlu0.c.b16.start [1/8] %v4395, 128
  %4660 = vxpose.xlu0.c.b16.cont [2/8] 0, 128
  %4661 = vxpose.xlu0.c.b16.cont [3/8] 0, 128
  %4662 = vxpose.xlu0.c.b16.cont [4/8] 0, 128
  %4663 = vxpose.xlu0.c.b16.cont [5/8] 0, 128
  %4664 = vxpose.xlu0.c.b16.cont [6/8] 0, 128
  %4665 = vxpose.xlu0.c.b16.cont [7/8] 0, 128
  %4666 = vxpose.xlu0.c.b16.end [8/8] 0, 128
  %v4667 = vpop.trf.xlu0
  %v4668 = vpop.trf.xlu0
  %v4669 = vpop.trf.xlu0
  %v4670 = vpop.trf.xlu0
  %v4671 = vpop.trf.xlu0
  %v4672 = vpop.trf.xlu0
  %v4673 = vpop.trf.xlu0
  %v4674 = vpop.trf.xlu0
  %v4676 = vsel %vm381, %v4667, 0
  %v4679 = vsel %vm385, %v4403, 0
  %4681 = vmatprep.subr.bf16.mxu0 0
  %4682 = vmatpush1.bf16.msra.mxu0 %v4679
  %4683 = vmatprep.subr.bf16.mxu0 0
  %4684 = vmatpush1.bf16.msra.mxu0 0
  %4685 = vmatprep.subr.bf16.mxu0 0
  %4686 = vmatpush1.bf16.msra.mxu0 0
  %4687 = vmatprep.subr.bf16.mxu0 0
  %4688 = vmatpush1.bf16.msra.mxu0 0
  %4689 = vmatprep.subr.bf16.mxu0 0
  %4690 = vmatpush1.bf16.msra.mxu0 0
  %4691 = vmatprep.subr.bf16.mxu0 0
  %4692 = vmatpush1.bf16.msra.mxu0 0
  %4693 = vmatprep.subr.bf16.mxu0 0
  %4694 = vmatpush1.bf16.msra.mxu0 0
  %4695 = vmatprep.subr.bf16.mxu0 0
  %4696 = vmatpush1.bf16.msra.mxu0 0
  %4697 = vmatprep.subr.bf16.mxu0 0
  %4698 = vmatpush1.bf16.msra.mxu0 0
  %4699 = vmatprep.subr.bf16.mxu0 0
  %4700 = vmatpush1.bf16.msra.mxu0 0
  %4701 = vmatprep.subr.bf16.mxu0 0
  %4702 = vmatpush1.bf16.msra.mxu0 0
  %4703 = vmatprep.subr.bf16.mxu0 0
  %4704 = vmatpush1.bf16.msra.mxu0 0
  %4705 = vmatprep.subr.bf16.mxu0 0
  %4706 = vmatpush1.bf16.msra.mxu0 0
  %4707 = vmatprep.subr.bf16.mxu0 0
  %4708 = vmatpush1.bf16.msra.mxu0 0
  %4709 = vmatprep.subr.bf16.mxu0 0
  %4710 = vmatpush1.bf16.msra.mxu0 0
  %4711 = vmatprep.subr.bf16.mxu0 0
  %4712 = vmatpush1.bf16.msra.mxu0 0
  %4713 = vmatprep.mubr.bf16.mxu0 0
  %4714 = vmatmul.mubr.bf16.gmra.mrb[0].mxu0 %v4676
  %v4715 = vpop.f32.mrb[0].mxu0
  %v4716 = vadd.f32 %v175, %v4715
  %v4717 = vpop.f32.mrb[0].mxu0
  %v4718 = vpop.f32.mrb[0].mxu0
  %v4719 = vadd.f32 %v176, %v4718
  %v4720 = vpop.f32.mrb[0].mxu0
  %4721 = vdwg.mxu0
  %4722 = vxpose.xlu0.c.b16.start [1/8] %v4396, 128
  %4723 = vxpose.xlu0.c.b16.cont [2/8] 0, 128
  %4724 = vxpose.xlu0.c.b16.cont [3/8] 0, 128
  %4725 = vxpose.xlu0.c.b16.cont [4/8] 0, 128
  %4726 = vxpose.xlu0.c.b16.cont [5/8] 0, 128
  %4727 = vxpose.xlu0.c.b16.cont [6/8] 0, 128
  %4728 = vxpose.xlu0.c.b16.cont [7/8] 0, 128
  %4729 = vxpose.xlu0.c.b16.end [8/8] 0, 128
  %v4730 = vpop.trf.xlu0
  %v4731 = vpop.trf.xlu0
  %v4732 = vpop.trf.xlu0
  %v4733 = vpop.trf.xlu0
  %v4734 = vpop.trf.xlu0
  %v4735 = vpop.trf.xlu0
  %v4736 = vpop.trf.xlu0
  %v4737 = vpop.trf.xlu0
  %v4739 = vsel %vm381, %v4730, 0
  %v4742 = vsel %vm385, %v4404, 0
  %4744 = vmatprep.subr.bf16.mxu0 0
  %4745 = vmatpush1.bf16.msra.mxu0 %v4742
  %4746 = vmatprep.subr.bf16.mxu0 0
  %4747 = vmatpush1.bf16.msra.mxu0 0
  %4748 = vmatprep.subr.bf16.mxu0 0
  %4749 = vmatpush1.bf16.msra.mxu0 0
  %4750 = vmatprep.subr.bf16.mxu0 0
  %4751 = vmatpush1.bf16.msra.mxu0 0
  %4752 = vmatprep.subr.bf16.mxu0 0
  %4753 = vmatpush1.bf16.msra.mxu0 0
  %4754 = vmatprep.subr.bf16.mxu0 0
  %4755 = vmatpush1.bf16.msra.mxu0 0
  %4756 = vmatprep.subr.bf16.mxu0 0
  %4757 = vmatpush1.bf16.msra.mxu0 0
  %4758 = vmatprep.subr.bf16.mxu0 0
  %4759 = vmatpush1.bf16.msra.mxu0 0
  %4760 = vmatprep.subr.bf16.mxu0 0
  %4761 = vmatpush1.bf16.msra.mxu0 0
  %4762 = vmatprep.subr.bf16.mxu0 0
  %4763 = vmatpush1.bf16.msra.mxu0 0
  %4764 = vmatprep.subr.bf16.mxu0 0
  %4765 = vmatpush1.bf16.msra.mxu0 0
  %4766 = vmatprep.subr.bf16.mxu0 0
  %4767 = vmatpush1.bf16.msra.mxu0 0
  %4768 = vmatprep.subr.bf16.mxu0 0
  %4769 = vmatpush1.bf16.msra.mxu0 0
  %4770 = vmatprep.subr.bf16.mxu0 0
  %4771 = vmatpush1.bf16.msra.mxu0 0
  %4772 = vmatprep.subr.bf16.mxu0 0
  %4773 = vmatpush1.bf16.msra.mxu0 0
  %4774 = vmatprep.subr.bf16.mxu0 0
  %4775 = vmatpush1.bf16.msra.mxu0 0
  %4776 = vmatprep.mubr.bf16.mxu0 0
  %4777 = vmatmul.mubr.bf16.gmra.mrb[0].mxu0 %v4739
  %v4778 = vpop.f32.mrb[0].mxu0
  %v4779 = vadd.f32 %v175, %v4778
  %v4780 = vpop.f32.mrb[0].mxu0
  %v4781 = vpop.f32.mrb[0].mxu0
  %v4782 = vadd.f32 %v176, %v4781
  %v4783 = vpop.f32.mrb[0].mxu0
  %4784 = vdwg.mxu0
  %4785 = vxpose.xlu0.c.b16.start [1/8] %v4397, 128
  %4786 = vxpose.xlu0.c.b16.cont [2/8] 0, 128
  %4787 = vxpose.xlu0.c.b16.cont [3/8] 0, 128
  %4788 = vxpose.xlu0.c.b16.cont [4/8] 0, 128
  %4789 = vxpose.xlu0.c.b16.cont [5/8] 0, 128
  %4790 = vxpose.xlu0.c.b16.cont [6/8] 0, 128
  %4791 = vxpose.xlu0.c.b16.cont [7/8] 0, 128
  %4792 = vxpose.xlu0.c.b16.end [8/8] 0, 128
  %v4793 = vpop.trf.xlu0
  %v4794 = vpop.trf.xlu0
  %v4795 = vpop.trf.xlu0
  %v4796 = vpop.trf.xlu0
  %v4797 = vpop.trf.xlu0
  %v4798 = vpop.trf.xlu0
  %v4799 = vpop.trf.xlu0
  %v4800 = vpop.trf.xlu0
  %v4802 = vsel %vm381, %v4793, 0
  %v4805 = vsel %vm385, %v4405, 0
  %4807 = vmatprep.subr.bf16.mxu0 0
  %4808 = vmatpush1.bf16.msra.mxu0 %v4805
  %4809 = vmatprep.subr.bf16.mxu0 0
  %4810 = vmatpush1.bf16.msra.mxu0 0
  %4811 = vmatprep.subr.bf16.mxu0 0
  %4812 = vmatpush1.bf16.msra.mxu0 0
  %4813 = vmatprep.subr.bf16.mxu0 0
  %4814 = vmatpush1.bf16.msra.mxu0 0
  %4815 = vmatprep.subr.bf16.mxu0 0
  %4816 = vmatpush1.bf16.msra.mxu0 0
  %4817 = vmatprep.subr.bf16.mxu0 0
  %4818 = vmatpush1.bf16.msra.mxu0 0
  %4819 = vmatprep.subr.bf16.mxu0 0
  %4820 = vmatpush1.bf16.msra.mxu0 0
  %4821 = vmatprep.subr.bf16.mxu0 0
  %4822 = vmatpush1.bf16.msra.mxu0 0
  %4823 = vmatprep.subr.bf16.mxu0 0
  %4824 = vmatpush1.bf16.msra.mxu0 0
  %4825 = vmatprep.subr.bf16.mxu0 0
  %4826 = vmatpush1.bf16.msra.mxu0 0
  %4827 = vmatprep.subr.bf16.mxu0 0
  %4828 = vmatpush1.bf16.msra.mxu0 0
  %4829 = vmatprep.subr.bf16.mxu0 0
  %4830 = vmatpush1.bf16.msra.mxu0 0
  %4831 = vmatprep.subr.bf16.mxu0 0
  %4832 = vmatpush1.bf16.msra.mxu0 0
  %4833 = vmatprep.subr.bf16.mxu0 0
  %4834 = vmatpush1.bf16.msra.mxu0 0
  %4835 = vmatprep.subr.bf16.mxu0 0
  %4836 = vmatpush1.bf16.msra.mxu0 0
  %4837 = vmatprep.subr.bf16.mxu0 0
  %4838 = vmatpush1.bf16.msra.mxu0 0
  %4839 = vmatprep.mubr.bf16.mxu0 0
  %4840 = vmatmul.mubr.bf16.gmra.mrb[0].mxu0 %v4802
  %v4841 = vpop.f32.mrb[0].mxu0
  %v4842 = vadd.f32 %v175, %v4841
  %v4843 = vpop.f32.mrb[0].mxu0
  %v4844 = vpop.f32.mrb[0].mxu0
  %v4845 = vadd.f32 %v176, %v4844
  %v4846 = vpop.f32.mrb[0].mxu0
  %4847 = vdwg.mxu0
  %4848 = vxpose.xlu0.c.b16.start [1/8] %v4398, 128
  %4849 = vxpose.xlu0.c.b16.cont [2/8] 0, 128
  %4850 = vxpose.xlu0.c.b16.cont [3/8] 0, 128
  %4851 = vxpose.xlu0.c.b16.cont [4/8] 0, 128
  %4852 = vxpose.xlu0.c.b16.cont [5/8] 0, 128
  %4853 = vxpose.xlu0.c.b16.cont [6/8] 0, 128
  %4854 = vxpose.xlu0.c.b16.cont [7/8] 0, 128
  %4855 = vxpose.xlu0.c.b16.end [8/8] 0, 128
  %v4856 = vpop.trf.xlu0
  %v4857 = vpop.trf.xlu0
  %v4858 = vpop.trf.xlu0
  %v4859 = vpop.trf.xlu0
  %v4860 = vpop.trf.xlu0
  %v4861 = vpop.trf.xlu0
  %v4862 = vpop.trf.xlu0
  %v4863 = vpop.trf.xlu0
  %v4865 = vsel %vm381, %v4856, 0
  %v4868 = vsel %vm385, %v4406, 0
  %4870 = vmatprep.subr.bf16.mxu0 0
  %4871 = vmatpush1.bf16.msra.mxu0 %v4868
  %4872 = vmatprep.subr.bf16.mxu0 0
  %4873 = vmatpush1.bf16.msra.mxu0 0
  %4874 = vmatprep.subr.bf16.mxu0 0
  %4875 = vmatpush1.bf16.msra.mxu0 0
  %4876 = vmatprep.subr.bf16.mxu0 0
  %4877 = vmatpush1.bf16.msra.mxu0 0
  %4878 = vmatprep.subr.bf16.mxu0 0
  %4879 = vmatpush1.bf16.msra.mxu0 0
  %4880 = vmatprep.subr.bf16.mxu0 0
  %4881 = vmatpush1.bf16.msra.mxu0 0
  %4882 = vmatprep.subr.bf16.mxu0 0
  %4883 = vmatpush1.bf16.msra.mxu0 0
  %4884 = vmatprep.subr.bf16.mxu0 0
  %4885 = vmatpush1.bf16.msra.mxu0 0
  %4886 = vmatprep.subr.bf16.mxu0 0
  %4887 = vmatpush1.bf16.msra.mxu0 0
  %4888 = vmatprep.subr.bf16.mxu0 0
  %4889 = vmatpush1.bf16.msra.mxu0 0
  %4890 = vmatprep.subr.bf16.mxu0 0
  %4891 = vmatpush1.bf16.msra.mxu0 0
  %4892 = vmatprep.subr.bf16.mxu0 0
  %4893 = vmatpush1.bf16.msra.mxu0 0
  %4894 = vmatprep.subr.bf16.mxu0 0
  %4895 = vmatpush1.bf16.msra.mxu0 0
  %4896 = vmatprep.subr.bf16.mxu0 0
  %4897 = vmatpush1.bf16.msra.mxu0 0
  %4898 = vmatprep.subr.bf16.mxu0 0
  %4899 = vmatpush1.bf16.msra.mxu0 0
  %4900 = vmatprep.subr.bf16.mxu0 0
  %4901 = vmatpush1.bf16.msra.mxu0 0
  %4902 = vmatprep.mubr.bf16.mxu0 0
  %4903 = vmatmul.mubr.bf16.gmra.mrb[0].mxu0 %v4865
  %v4904 = vpop.f32.mrb[0].mxu0
  %v4905 = vadd.f32 %v175, %v4904
  %v4906 = vpop.f32.mrb[0].mxu0
  %v4907 = vpop.f32.mrb[0].mxu0
  %v4908 = vadd.f32 %v176, %v4907
  %v4909 = vpop.f32.mrb[0].mxu0
  %4910 = vdwg.mxu0
  %v4911 = vsel %vm871, %v4464, -inf
  %4912 = vmax.xlane.f32.xlu0 %v4911
  %v4913 = vpop.xlane.xlu0 %4912
  %v4914 = vsel %vm871, %v4467, -inf
  %4915 = vmax.xlane.f32.xlu0 %v4914
  %v4916 = vpop.xlane.xlu0 %4915
  %v4917 = vsel %vm871, %v4527, -inf
  %4918 = vmax.xlane.f32.xlu0 %v4917
  %v4919 = vpop.xlane.xlu0 %4918
  %v4920 = vsel %vm871, %v4530, -inf
  %4921 = vmax.xlane.f32.xlu0 %v4920
  %v4922 = vpop.xlane.xlu0 %4921
  %v4923 = vsel %vm871, %v4590, -inf
  %4924 = vmax.xlane.f32.xlu0 %v4923
  %v4925 = vpop.xlane.xlu0 %4924
  %v4926 = vsel %vm871, %v4593, -inf
  %4927 = vmax.xlane.f32.xlu0 %v4926
  %v4928 = vpop.xlane.xlu0 %4927
  %v4929 = vsel %vm871, %v4653, -inf
  %4930 = vmax.xlane.f32.xlu0 %v4929
  %v4931 = vpop.xlane.xlu0 %4930
  %v4932 = vsel %vm871, %v4656, -inf
  %4933 = vmax.xlane.f32.xlu0 %v4932
  %v4934 = vpop.xlane.xlu0 %4933
  %v4935 = vsel %vm871, %v4716, -inf
  %4936 = vmax.xlane.f32.xlu0 %v4935
  %v4937 = vpop.xlane.xlu0 %4936
  %v4938 = vsel %vm871, %v4719, -inf
  %4939 = vmax.xlane.f32.xlu0 %v4938
  %v4940 = vpop.xlane.xlu0 %4939
  %v4941 = vsel %vm871, %v4779, -inf
  %4942 = vmax.xlane.f32.xlu0 %v4941
  %v4943 = vpop.xlane.xlu0 %4942
  %v4944 = vsel %vm871, %v4782, -inf
  %4945 = vmax.xlane.f32.xlu0 %v4944
  %v4946 = vpop.xlane.xlu0 %4945
  %v4947 = vsel %vm871, %v4842, -inf
  %4948 = vmax.xlane.f32.xlu0 %v4947
  %v4949 = vpop.xlane.xlu0 %4948
  %v4950 = vsel %vm871, %v4845, -inf
  %4951 = vmax.xlane.f32.xlu0 %v4950
  %v4952 = vpop.xlane.xlu0 %4951
  %v4953 = vsel %vm871, %v4905, -inf
  %4954 = vmax.xlane.f32.xlu0 %v4953
  %v4955 = vpop.xlane.xlu0 %4954
  %v4956 = vsel %vm871, %v4908, -inf
  %4957 = vmax.xlane.f32.xlu0 %v4956
  %v4958 = vpop.xlane.xlu0 %4957
  %v4959 = vsub.f32 %v4464, %v4913
  %v4960 = vsub.f32 %v4467, %v4916
  %v4961 = vsub.f32 %v4527, %v4919
  %v4962 = vsub.f32 %v4530, %v4922
  %v4963 = vsub.f32 %v4590, %v4925
  %v4964 = vsub.f32 %v4593, %v4928
  %v4965 = vsub.f32 %v4653, %v4931
  %v4966 = vsub.f32 %v4656, %v4934
  %v4967 = vsub.f32 %v4716, %v4937
  %v4968 = vsub.f32 %v4719, %v4940
  %v4969 = vsub.f32 %v4779, %v4943
  %v4970 = vsub.f32 %v4782, %v4946
  %v4971 = vsub.f32 %v4842, %v4949
  %v4972 = vsub.f32 %v4845, %v4952
  %v4973 = vsub.f32 %v4905, %v4955
  %v4974 = vsub.f32 %v4908, %v4958
  %v4975 = vmul.f32 %v4959, 1.442695
  %v4976 = vpow.pop %v4975
  %v4977 = vmul.f32 %v4960, 1.442695
  %v4978 = vpow.pop %v4977
  %v4979 = vmul.f32 %v4961, 1.442695
  %v4980 = vpow.pop %v4979
  %v4981 = vmul.f32 %v4962, 1.442695
  %v4982 = vpow.pop %v4981
  %v4983 = vmul.f32 %v4963, 1.442695
  %v4984 = vpow.pop %v4983
  %v4985 = vmul.f32 %v4964, 1.442695
  %v4986 = vpow.pop %v4985
  %v4987 = vmul.f32 %v4965, 1.442695
  %v4988 = vpow.pop %v4987
  %v4989 = vmul.f32 %v4966, 1.442695
  %v4990 = vpow.pop %v4989
  %v4991 = vmul.f32 %v4967, 1.442695
  %v4992 = vpow.pop %v4991
  %v4993 = vmul.f32 %v4968, 1.442695
  %v4994 = vpow.pop %v4993
  %v4995 = vmul.f32 %v4969, 1.442695
  %v4996 = vpow.pop %v4995
  %v4997 = vmul.f32 %v4970, 1.442695
  %v4998 = vpow.pop %v4997
  %v4999 = vmul.f32 %v4971, 1.442695
  %v5000 = vpow.pop %v4999
  %v5001 = vmul.f32 %v4972, 1.442695
  %v5002 = vpow.pop %v5001
  %v5003 = vmul.f32 %v4973, 1.442695
  %v5004 = vpow.pop %v5003
  %v5005 = vmul.f32 %v4974, 1.442695
  %v5006 = vpow.pop %v5005
  %v5007 = vsel %vm871, %v4976, 0.0
  %5008 = vadd.xlane.f32.xlu0 %v5007
  %v5009 = vpop.xlane.xlu0 %5008
  %v5010 = vsel %vm871, %v4978, 0.0
  %5011 = vadd.xlane.f32.xlu0 %v5010
  %v5012 = vpop.xlane.xlu0 %5011
  %v5013 = vsel %vm871, %v4980, 0.0
  %5014 = vadd.xlane.f32.xlu0 %v5013
  %v5015 = vpop.xlane.xlu0 %5014
  %v5016 = vsel %vm871, %v4982, 0.0
  %5017 = vadd.xlane.f32.xlu0 %v5016
  %v5018 = vpop.xlane.xlu0 %5017
  %v5019 = vsel %vm871, %v4984, 0.0
  %5020 = vadd.xlane.f32.xlu0 %v5019
  %v5021 = vpop.xlane.xlu0 %5020
  %v5022 = vsel %vm871, %v4986, 0.0
  %5023 = vadd.xlane.f32.xlu0 %v5022
  %v5024 = vpop.xlane.xlu0 %5023
  %v5025 = vsel %vm871, %v4988, 0.0
  %5026 = vadd.xlane.f32.xlu0 %v5025
  %v5027 = vpop.xlane.xlu0 %5026
  %v5028 = vsel %vm871, %v4990, 0.0
  %5029 = vadd.xlane.f32.xlu0 %v5028
  %v5030 = vpop.xlane.xlu0 %5029
  %v5031 = vsel %vm871, %v4992, 0.0
  %5032 = vadd.xlane.f32.xlu0 %v5031
  %v5033 = vpop.xlane.xlu0 %5032
  %v5034 = vsel %vm871, %v4994, 0.0
  %5035 = vadd.xlane.f32.xlu0 %v5034
  %v5036 = vpop.xlane.xlu0 %5035
  %v5037 = vsel %vm871, %v4996, 0.0
  %5038 = vadd.xlane.f32.xlu0 %v5037
  %v5039 = vpop.xlane.xlu0 %5038
  %v5040 = vsel %vm871, %v4998, 0.0
  %5041 = vadd.xlane.f32.xlu0 %v5040
  %v5042 = vpop.xlane.xlu0 %5041
  %v5043 = vsel %vm871, %v5000, 0.0
  %5044 = vadd.xlane.f32.xlu0 %v5043
  %v5045 = vpop.xlane.xlu0 %5044
  %v5046 = vsel %vm871, %v5002, 0.0
  %5047 = vadd.xlane.f32.xlu0 %v5046
  %v5048 = vpop.xlane.xlu0 %5047
  %v5049 = vsel %vm871, %v5004, 0.0
  %5050 = vadd.xlane.f32.xlu0 %v5049
  %v5051 = vpop.xlane.xlu0 %5050
  %v5052 = vsel %vm871, %v5006, 0.0
  %5053 = vadd.xlane.f32.xlu0 %v5052
  %v5054 = vpop.xlane.xlu0 %5053
  %v5055 = vrcp.pop %v5009
  %v5056 = vmul.f32 %v4976, %v5055
  %v5057 = vrcp.pop %v5012
  %v5058 = vmul.f32 %v4978, %v5057
  %v5059 = vrcp.pop %v5015
  %v5060 = vmul.f32 %v4980, %v5059
  %v5061 = vrcp.pop %v5018
  %v5062 = vmul.f32 %v4982, %v5061
  %v5063 = vrcp.pop %v5021
  %v5064 = vmul.f32 %v4984, %v5063
  %v5065 = vrcp.pop %v5024
  %v5066 = vmul.f32 %v4986, %v5065
  %v5067 = vrcp.pop %v5027
  %v5068 = vmul.f32 %v4988, %v5067
  %v5069 = vrcp.pop %v5030
  %v5070 = vmul.f32 %v4990, %v5069
  %v5071 = vrcp.pop %v5033
  %v5072 = vmul.f32 %v4992, %v5071
  %v5073 = vrcp.pop %v5036
  %v5074 = vmul.f32 %v4994, %v5073
  %v5075 = vrcp.pop %v5039
  %v5076 = vmul.f32 %v4996, %v5075
  %v5077 = vrcp.pop %v5042
  %v5078 = vmul.f32 %v4998, %v5077
  %v5079 = vrcp.pop %v5045
  %v5080 = vmul.f32 %v5000, %v5079
  %v5081 = vrcp.pop %v5048
  %v5082 = vmul.f32 %v5002, %v5081
  %v5083 = vrcp.pop %v5051
  %v5084 = vmul.f32 %v5004, %v5083
  %v5085 = vrcp.pop %v5054
  %v5086 = vmul.f32 %v5006, %v5085
  %v5087 = vpack.c.bf16 %v5058, %v5056
  %v5088 = vpack.c.bf16 %v5062, %v5060
  %v5089 = vpack.c.bf16 %v5066, %v5064
  %v5090 = vpack.c.bf16 %v5070, %v5068
  %v5091 = vpack.c.bf16 %v5074, %v5072
  %v5092 = vpack.c.bf16 %v5078, %v5076
  %v5093 = vpack.c.bf16 %v5082, %v5080
  %v5094 = vpack.c.bf16 %v5086, %v5084
  %v5095 = vpack.c.bf16 %v4375, %v4375
  %v5096 = vpack.c.bf16 %v4376, %v4376
  %v5097 = vpack.c.bf16 %v4377, %v4377
  %v5098 = vpack.c.bf16 %v4378, %v4378
  %v5099 = vpack.c.bf16 %v4379, %v4379
  %v5100 = vpack.c.bf16 %v4380, %v4380
  %v5101 = vpack.c.bf16 %v4381, %v4381
  %v5102 = vpack.c.bf16 %v4382, %v4382
  %v5104 = vsel %vm871, %v5087, 0
  %v5107 = vsel %vm871, %v5095, 0
  %5109 = vmatprep.subr.bf16.mxu0 0
  %5110 = vmatpush1.bf16.xpose.msra.mxu0 %v5107
  %5111 = vmatprep.subr.bf16.mxu0 0
  %5112 = vmatpush1.bf16.xpose.msra.mxu0 0
  %5113 = vmatprep.subr.bf16.mxu0 0
  %5114 = vmatpush1.bf16.xpose.msra.mxu0 0
  %5115 = vmatprep.subr.bf16.mxu0 0
  %5116 = vmatpush1.bf16.xpose.msra.mxu0 0
  %5117 = vmatprep.subr.bf16.mxu0 0
  %5118 = vmatpush1.bf16.xpose.msra.mxu0 0
  %5119 = vmatprep.subr.bf16.mxu0 0
  %5120 = vmatpush1.bf16.xpose.msra.mxu0 0
  %5121 = vmatprep.subr.bf16.mxu0 0
  %5122 = vmatpush1.bf16.xpose.msra.mxu0 0
  %5123 = vmatprep.subr.bf16.mxu0 0
  %5124 = vmatpush1.bf16.xpose.msra.mxu0 0
  %5125 = vmatprep.subr.bf16.mxu0 0
  %5126 = vmatpush1.bf16.xpose.msra.mxu0 0
  %5127 = vmatprep.subr.bf16.mxu0 0
  %5128 = vmatpush1.bf16.xpose.msra.mxu0 0
  %5129 = vmatprep.subr.bf16.mxu0 0
  %5130 = vmatpush1.bf16.xpose.msra.mxu0 0
  %5131 = vmatprep.subr.bf16.mxu0 0
  %5132 = vmatpush1.bf16.xpose.msra.mxu0 0
  %5133 = vmatprep.subr.bf16.mxu0 0
  %5134 = vmatpush1.bf16.xpose.msra.mxu0 0
  %5135 = vmatprep.subr.bf16.mxu0 0
  %5136 = vmatpush1.bf16.xpose.msra.mxu0 0
  %5137 = vmatprep.subr.bf16.mxu0 0
  %5138 = vmatpush1.bf16.xpose.msra.mxu0 0
  %5139 = vmatprep.subr.bf16.mxu0 0
  %5140 = vmatpush1.bf16.xpose.msra.mxu0 0
  %5141 = vmatprep.mubr.bf16.mxu0 0
  %5142 = vmatmul.mubr.bf16.gmra.mrb[0].mxu0 %v5104
  %v5143 = vpop.f32.mrb[0].mxu0
  %v5144 = vadd.f32 0.0, %v5143
  %v5145 = vpop.f32.mrb[0].mxu0
  %v5146 = vpop.f32.mrb[0].mxu0
  %v5147 = vadd.f32 0.0, %v5146
  %v5148 = vpop.f32.mrb[0].mxu0
  %5149 = vdwg.mxu0
  %v5151 = vsel %vm871, %v5088, 0
  %v5154 = vsel %vm871, %v5096, 0
  %5156 = vmatprep.subr.bf16.mxu0 0
  %5157 = vmatpush1.bf16.xpose.msra.mxu0 %v5154
  %5158 = vmatprep.subr.bf16.mxu0 0
  %5159 = vmatpush1.bf16.xpose.msra.mxu0 0
  %5160 = vmatprep.subr.bf16.mxu0 0
  %5161 = vmatpush1.bf16.xpose.msra.mxu0 0
  %5162 = vmatprep.subr.bf16.mxu0 0
  %5163 = vmatpush1.bf16.xpose.msra.mxu0 0
  %5164 = vmatprep.subr.bf16.mxu0 0
  %5165 = vmatpush1.bf16.xpose.msra.mxu0 0
  %5166 = vmatprep.subr.bf16.mxu0 0
  %5167 = vmatpush1.bf16.xpose.msra.mxu0 0
  %5168 = vmatprep.subr.bf16.mxu0 0
  %5169 = vmatpush1.bf16.xpose.msra.mxu0 0
  %5170 = vmatprep.subr.bf16.mxu0 0
  %5171 = vmatpush1.bf16.xpose.msra.mxu0 0
  %5172 = vmatprep.subr.bf16.mxu0 0
  %5173 = vmatpush1.bf16.xpose.msra.mxu0 0
  %5174 = vmatprep.subr.bf16.mxu0 0
  %5175 = vmatpush1.bf16.xpose.msra.mxu0 0
  %5176 = vmatprep.subr.bf16.mxu0 0
  %5177 = vmatpush1.bf16.xpose.msra.mxu0 0
  %5178 = vmatprep.subr.bf16.mxu0 0
  %5179 = vmatpush1.bf16.xpose.msra.mxu0 0
  %5180 = vmatprep.subr.bf16.mxu0 0
  %5181 = vmatpush1.bf16.xpose.msra.mxu0 0
  %5182 = vmatprep.subr.bf16.mxu0 0
  %5183 = vmatpush1.bf16.xpose.msra.mxu0 0
  %5184 = vmatprep.subr.bf16.mxu0 0
  %5185 = vmatpush1.bf16.xpose.msra.mxu0 0
  %5186 = vmatprep.subr.bf16.mxu0 0
  %5187 = vmatpush1.bf16.xpose.msra.mxu0 0
  %5188 = vmatprep.mubr.bf16.mxu0 0
  %5189 = vmatmul.mubr.bf16.gmra.mrb[0].mxu0 %v5151
  %v5190 = vpop.f32.mrb[0].mxu0
  %v5191 = vadd.f32 0.0, %v5190
  %v5192 = vpop.f32.mrb[0].mxu0
  %v5193 = vpop.f32.mrb[0].mxu0
  %v5194 = vadd.f32 0.0, %v5193
  %v5195 = vpop.f32.mrb[0].mxu0
  %5196 = vdwg.mxu0
  %v5198 = vsel %vm871, %v5089, 0
  %v5201 = vsel %vm871, %v5097, 0
  %5203 = vmatprep.subr.bf16.mxu0 0
  %5204 = vmatpush1.bf16.xpose.msra.mxu0 %v5201
  %5205 = vmatprep.subr.bf16.mxu0 0
  %5206 = vmatpush1.bf16.xpose.msra.mxu0 0
  %5207 = vmatprep.subr.bf16.mxu0 0
  %5208 = vmatpush1.bf16.xpose.msra.mxu0 0
  %5209 = vmatprep.subr.bf16.mxu0 0
  %5210 = vmatpush1.bf16.xpose.msra.mxu0 0
  %5211 = vmatprep.subr.bf16.mxu0 0
  %5212 = vmatpush1.bf16.xpose.msra.mxu0 0
  %5213 = vmatprep.subr.bf16.mxu0 0
  %5214 = vmatpush1.bf16.xpose.msra.mxu0 0
  %5215 = vmatprep.subr.bf16.mxu0 0
  %5216 = vmatpush1.bf16.xpose.msra.mxu0 0
  %5217 = vmatprep.subr.bf16.mxu0 0
  %5218 = vmatpush1.bf16.xpose.msra.mxu0 0
  %5219 = vmatprep.subr.bf16.mxu0 0
  %5220 = vmatpush1.bf16.xpose.msra.mxu0 0
  %5221 = vmatprep.subr.bf16.mxu0 0
  %5222 = vmatpush1.bf16.xpose.msra.mxu0 0
  %5223 = vmatprep.subr.bf16.mxu0 0
  %5224 = vmatpush1.bf16.xpose.msra.mxu0 0
  %5225 = vmatprep.subr.bf16.mxu0 0
  %5226 = vmatpush1.bf16.xpose.msra.mxu0 0
  %5227 = vmatprep.subr.bf16.mxu0 0
  %5228 = vmatpush1.bf16.xpose.msra.mxu0 0
  %5229 = vmatprep.subr.bf16.mxu0 0
  %5230 = vmatpush1.bf16.xpose.msra.mxu0 0
  %5231 = vmatprep.subr.bf16.mxu0 0
  %5232 = vmatpush1.bf16.xpose.msra.mxu0 0
  %5233 = vmatprep.subr.bf16.mxu0 0
  %5234 = vmatpush1.bf16.xpose.msra.mxu0 0
  %5235 = vmatprep.mubr.bf16.mxu0 0
  %5236 = vmatmul.mubr.bf16.gmra.mrb[0].mxu0 %v5198
  %v5237 = vpop.f32.mrb[0].mxu0
  %v5238 = vadd.f32 0.0, %v5237
  %v5239 = vpop.f32.mrb[0].mxu0
  %v5240 = vpop.f32.mrb[0].mxu0
  %v5241 = vadd.f32 0.0, %v5240
  %v5242 = vpop.f32.mrb[0].mxu0
  %5243 = vdwg.mxu0
  %v5245 = vsel %vm871, %v5090, 0
  %v5248 = vsel %vm871, %v5098, 0
  %5250 = vmatprep.subr.bf16.mxu0 0
  %5251 = vmatpush1.bf16.xpose.msra.mxu0 %v5248
  %5252 = vmatprep.subr.bf16.mxu0 0
  %5253 = vmatpush1.bf16.xpose.msra.mxu0 0
  %5254 = vmatprep.subr.bf16.mxu0 0
  %5255 = vmatpush1.bf16.xpose.msra.mxu0 0
  %5256 = vmatprep.subr.bf16.mxu0 0
  %5257 = vmatpush1.bf16.xpose.msra.mxu0 0
  %5258 = vmatprep.subr.bf16.mxu0 0
  %5259 = vmatpush1.bf16.xpose.msra.mxu0 0
  %5260 = vmatprep.subr.bf16.mxu0 0
  %5261 = vmatpush1.bf16.xpose.msra.mxu0 0
  %5262 = vmatprep.subr.bf16.mxu0 0
  %5263 = vmatpush1.bf16.xpose.msra.mxu0 0
  %5264 = vmatprep.subr.bf16.mxu0 0
  %5265 = vmatpush1.bf16.xpose.msra.mxu0 0
  %5266 = vmatprep.subr.bf16.mxu0 0
  %5267 = vmatpush1.bf16.xpose.msra.mxu0 0
  %5268 = vmatprep.subr.bf16.mxu0 0
  %5269 = vmatpush1.bf16.xpose.msra.mxu0 0
  %5270 = vmatprep.subr.bf16.mxu0 0
  %5271 = vmatpush1.bf16.xpose.msra.mxu0 0
  %5272 = vmatprep.subr.bf16.mxu0 0
  %5273 = vmatpush1.bf16.xpose.msra.mxu0 0
  %5274 = vmatprep.subr.bf16.mxu0 0
  %5275 = vmatpush1.bf16.xpose.msra.mxu0 0
  %5276 = vmatprep.subr.bf16.mxu0 0
  %5277 = vmatpush1.bf16.xpose.msra.mxu0 0
  %5278 = vmatprep.subr.bf16.mxu0 0
  %5279 = vmatpush1.bf16.xpose.msra.mxu0 0
  %5280 = vmatprep.subr.bf16.mxu0 0
  %5281 = vmatpush1.bf16.xpose.msra.mxu0 0
  %5282 = vmatprep.mubr.bf16.mxu0 0
  %5283 = vmatmul.mubr.bf16.gmra.mrb[0].mxu0 %v5245
  %v5284 = vpop.f32.mrb[0].mxu0
  %v5285 = vadd.f32 0.0, %v5284
  %v5286 = vpop.f32.mrb[0].mxu0
  %v5287 = vpop.f32.mrb[0].mxu0
  %v5288 = vadd.f32 0.0, %v5287
  %v5289 = vpop.f32.mrb[0].mxu0
  %5290 = vdwg.mxu0
  %v5292 = vsel %vm871, %v5091, 0
  %v5295 = vsel %vm871, %v5099, 0
  %5297 = vmatprep.subr.bf16.mxu0 0
  %5298 = vmatpush1.bf16.xpose.msra.mxu0 %v5295
  %5299 = vmatprep.subr.bf16.mxu0 0
  %5300 = vmatpush1.bf16.xpose.msra.mxu0 0
  %5301 = vmatprep.subr.bf16.mxu0 0
  %5302 = vmatpush1.bf16.xpose.msra.mxu0 0
  %5303 = vmatprep.subr.bf16.mxu0 0
  %5304 = vmatpush1.bf16.xpose.msra.mxu0 0
  %5305 = vmatprep.subr.bf16.mxu0 0
  %5306 = vmatpush1.bf16.xpose.msra.mxu0 0
  %5307 = vmatprep.subr.bf16.mxu0 0
  %5308 = vmatpush1.bf16.xpose.msra.mxu0 0
  %5309 = vmatprep.subr.bf16.mxu0 0
  %5310 = vmatpush1.bf16.xpose.msra.mxu0 0
  %5311 = vmatprep.subr.bf16.mxu0 0
  %5312 = vmatpush1.bf16.xpose.msra.mxu0 0
  %5313 = vmatprep.subr.bf16.mxu0 0
  %5314 = vmatpush1.bf16.xpose.msra.mxu0 0
  %5315 = vmatprep.subr.bf16.mxu0 0
  %5316 = vmatpush1.bf16.xpose.msra.mxu0 0
  %5317 = vmatprep.subr.bf16.mxu0 0
  %5318 = vmatpush1.bf16.xpose.msra.mxu0 0
  %5319 = vmatprep.subr.bf16.mxu0 0
  %5320 = vmatpush1.bf16.xpose.msra.mxu0 0
  %5321 = vmatprep.subr.bf16.mxu0 0
  %5322 = vmatpush1.bf16.xpose.msra.mxu0 0
  %5323 = vmatprep.subr.bf16.mxu0 0
  %5324 = vmatpush1.bf16.xpose.msra.mxu0 0
  %5325 = vmatprep.subr.bf16.mxu0 0
  %5326 = vmatpush1.bf16.xpose.msra.mxu0 0
  %5327 = vmatprep.subr.bf16.mxu0 0
  %5328 = vmatpush1.bf16.xpose.msra.mxu0 0
  %5329 = vmatprep.mubr.bf16.mxu0 0
  %5330 = vmatmul.mubr.bf16.gmra.mrb[0].mxu0 %v5292
  %v5331 = vpop.f32.mrb[0].mxu0
  %v5332 = vadd.f32 0.0, %v5331
  %v5333 = vpop.f32.mrb[0].mxu0
  %v5334 = vpop.f32.mrb[0].mxu0
  %v5335 = vadd.f32 0.0, %v5334
  %v5336 = vpop.f32.mrb[0].mxu0
  %5337 = vdwg.mxu0
  %v5339 = vsel %vm871, %v5092, 0
  %v5342 = vsel %vm871, %v5100, 0
  %5344 = vmatprep.subr.bf16.mxu0 0
  %5345 = vmatpush1.bf16.xpose.msra.mxu0 %v5342
  %5346 = vmatprep.subr.bf16.mxu0 0
  %5347 = vmatpush1.bf16.xpose.msra.mxu0 0
  %5348 = vmatprep.subr.bf16.mxu0 0
  %5349 = vmatpush1.bf16.xpose.msra.mxu0 0
  %5350 = vmatprep.subr.bf16.mxu0 0
  %5351 = vmatpush1.bf16.xpose.msra.mxu0 0
  %5352 = vmatprep.subr.bf16.mxu0 0
  %5353 = vmatpush1.bf16.xpose.msra.mxu0 0
  %5354 = vmatprep.subr.bf16.mxu0 0
  %5355 = vmatpush1.bf16.xpose.msra.mxu0 0
  %5356 = vmatprep.subr.bf16.mxu0 0
  %5357 = vmatpush1.bf16.xpose.msra.mxu0 0
  %5358 = vmatprep.subr.bf16.mxu0 0
  %5359 = vmatpush1.bf16.xpose.msra.mxu0 0
  %5360 = vmatprep.subr.bf16.mxu0 0
  %5361 = vmatpush1.bf16.xpose.msra.mxu0 0
  %5362 = vmatprep.subr.bf16.mxu0 0
  %5363 = vmatpush1.bf16.xpose.msra.mxu0 0
  %5364 = vmatprep.subr.bf16.mxu0 0
  %5365 = vmatpush1.bf16.xpose.msra.mxu0 0
  %5366 = vmatprep.subr.bf16.mxu0 0
  %5367 = vmatpush1.bf16.xpose.msra.mxu0 0
  %5368 = vmatprep.subr.bf16.mxu0 0
  %5369 = vmatpush1.bf16.xpose.msra.mxu0 0
  %5370 = vmatprep.subr.bf16.mxu0 0
  %5371 = vmatpush1.bf16.xpose.msra.mxu0 0
  %5372 = vmatprep.subr.bf16.mxu0 0
  %5373 = vmatpush1.bf16.xpose.msra.mxu0 0
  %5374 = vmatprep.subr.bf16.mxu0 0
  %5375 = vmatpush1.bf16.xpose.msra.mxu0 0
  %5376 = vmatprep.mubr.bf16.mxu0 0
  %5377 = vmatmul.mubr.bf16.gmra.mrb[0].mxu0 %v5339
  %v5378 = vpop.f32.mrb[0].mxu0
  %v5379 = vadd.f32 0.0, %v5378
  %v5380 = vpop.f32.mrb[0].mxu0
  %v5381 = vpop.f32.mrb[0].mxu0
  %v5382 = vadd.f32 0.0, %v5381
  %v5383 = vpop.f32.mrb[0].mxu0
  %5384 = vdwg.mxu0
  %v5386 = vsel %vm871, %v5093, 0
  %v5389 = vsel %vm871, %v5101, 0
  %5391 = vmatprep.subr.bf16.mxu0 0
  %5392 = vmatpush1.bf16.xpose.msra.mxu0 %v5389
  %5393 = vmatprep.subr.bf16.mxu0 0
  %5394 = vmatpush1.bf16.xpose.msra.mxu0 0
  %5395 = vmatprep.subr.bf16.mxu0 0
  %5396 = vmatpush1.bf16.xpose.msra.mxu0 0
  %5397 = vmatprep.subr.bf16.mxu0 0
  %5398 = vmatpush1.bf16.xpose.msra.mxu0 0
  %5399 = vmatprep.subr.bf16.mxu0 0
  %5400 = vmatpush1.bf16.xpose.msra.mxu0 0
  %5401 = vmatprep.subr.bf16.mxu0 0
  %5402 = vmatpush1.bf16.xpose.msra.mxu0 0
  %5403 = vmatprep.subr.bf16.mxu0 0
  %5404 = vmatpush1.bf16.xpose.msra.mxu0 0
  %5405 = vmatprep.subr.bf16.mxu0 0
  %5406 = vmatpush1.bf16.xpose.msra.mxu0 0
  %5407 = vmatprep.subr.bf16.mxu0 0
  %5408 = vmatpush1.bf16.xpose.msra.mxu0 0
  %5409 = vmatprep.subr.bf16.mxu0 0
  %5410 = vmatpush1.bf16.xpose.msra.mxu0 0
  %5411 = vmatprep.subr.bf16.mxu0 0
  %5412 = vmatpush1.bf16.xpose.msra.mxu0 0
  %5413 = vmatprep.subr.bf16.mxu0 0
  %5414 = vmatpush1.bf16.xpose.msra.mxu0 0
  %5415 = vmatprep.subr.bf16.mxu0 0
  %5416 = vmatpush1.bf16.xpose.msra.mxu0 0
  %5417 = vmatprep.subr.bf16.mxu0 0
  %5418 = vmatpush1.bf16.xpose.msra.mxu0 0
  %5419 = vmatprep.subr.bf16.mxu0 0
  %5420 = vmatpush1.bf16.xpose.msra.mxu0 0
  %5421 = vmatprep.subr.bf16.mxu0 0
  %5422 = vmatpush1.bf16.xpose.msra.mxu0 0
  %5423 = vmatprep.mubr.bf16.mxu0 0
  %5424 = vmatmul.mubr.bf16.gmra.mrb[0].mxu0 %v5386
  %v5425 = vpop.f32.mrb[0].mxu0
  %v5426 = vadd.f32 0.0, %v5425
  %v5427 = vpop.f32.mrb[0].mxu0
  %v5428 = vpop.f32.mrb[0].mxu0
  %v5429 = vadd.f32 0.0, %v5428
  %v5430 = vpop.f32.mrb[0].mxu0
  %5431 = vdwg.mxu0
  %v5433 = vsel %vm871, %v5094, 0
  %v5436 = vsel %vm871, %v5102, 0
  %5438 = vmatprep.subr.bf16.mxu0 0
  %5439 = vmatpush1.bf16.xpose.msra.mxu0 %v5436
  %5440 = vmatprep.subr.bf16.mxu0 0
  %5441 = vmatpush1.bf16.xpose.msra.mxu0 0
  %5442 = vmatprep.subr.bf16.mxu0 0
  %5443 = vmatpush1.bf16.xpose.msra.mxu0 0
  %5444 = vmatprep.subr.bf16.mxu0 0
  %5445 = vmatpush1.bf16.xpose.msra.mxu0 0
  %5446 = vmatprep.subr.bf16.mxu0 0
  %5447 = vmatpush1.bf16.xpose.msra.mxu0 0
  %5448 = vmatprep.subr.bf16.mxu0 0
  %5449 = vmatpush1.bf16.xpose.msra.mxu0 0
  %5450 = vmatprep.subr.bf16.mxu0 0
  %5451 = vmatpush1.bf16.xpose.msra.mxu0 0
  %5452 = vmatprep.subr.bf16.mxu0 0
  %5453 = vmatpush1.bf16.xpose.msra.mxu0 0
  %5454 = vmatprep.subr.bf16.mxu0 0
  %5455 = vmatpush1.bf16.xpose.msra.mxu0 0
  %5456 = vmatprep.subr.bf16.mxu0 0
  %5457 = vmatpush1.bf16.xpose.msra.mxu0 0
  %5458 = vmatprep.subr.bf16.mxu0 0
  %5459 = vmatpush1.bf16.xpose.msra.mxu0 0
  %5460 = vmatprep.subr.bf16.mxu0 0
  %5461 = vmatpush1.bf16.xpose.msra.mxu0 0
  %5462 = vmatprep.subr.bf16.mxu0 0
  %5463 = vmatpush1.bf16.xpose.msra.mxu0 0
  %5464 = vmatprep.subr.bf16.mxu0 0
  %5465 = vmatpush1.bf16.xpose.msra.mxu0 0
  %5466 = vmatprep.subr.bf16.mxu0 0
  %5467 = vmatpush1.bf16.xpose.msra.mxu0 0
  %5468 = vmatprep.subr.bf16.mxu0 0
  %5469 = vmatpush1.bf16.xpose.msra.mxu0 0
  %5470 = vmatprep.mubr.bf16.mxu0 0
  %5471 = vmatmul.mubr.bf16.gmra.mrb[0].mxu0 %v5433
  %v5472 = vpop.f32.mrb[0].mxu0
  %v5473 = vadd.f32 0.0, %v5472
  %v5474 = vpop.f32.mrb[0].mxu0
  %v5475 = vpop.f32.mrb[0].mxu0
  %v5476 = vadd.f32 0.0, %v5475
  %v5477 = vpop.f32.mrb[0].mxu0
  %5478 = vdwg.mxu0
  %5479 = vxpose.xlu0.b32.start [1/16] %v5144, 128
  %5480 = vxpose.xlu0.b32.cont [2/16] %v5147, 128
  %5481 = vxpose.xlu0.b32.cont [3/16] 0.0, 128
  %5482 = vxpose.xlu0.b32.cont [4/16] 0.0, 128
  %5483 = vxpose.xlu0.b32.cont [5/16] 0.0, 128
  %5484 = vxpose.xlu0.b32.cont [6/16] 0.0, 128
  %5485 = vxpose.xlu0.b32.cont [7/16] 0.0, 128
  %5486 = vxpose.xlu0.b32.cont [8/16] 0.0, 128
  %5487 = vxpose.xlu0.b32.cont [9/16] 0.0, 128
  %5488 = vxpose.xlu0.b32.cont [10/16] 0.0, 128
  %5489 = vxpose.xlu0.b32.cont [11/16] 0.0, 128
  %5490 = vxpose.xlu0.b32.cont [12/16] 0.0, 128
  %5491 = vxpose.xlu0.b32.cont [13/16] 0.0, 128
  %5492 = vxpose.xlu0.b32.cont [14/16] 0.0, 128
  %5493 = vxpose.xlu0.b32.cont [15/16] 0.0, 128
  %5494 = vxpose.xlu0.b32.end [16/16] 0.0, 128
  %v5495 = vpop.trf.xlu0
  %v5496 = vpop.trf.xlu0
  %v5497 = vpop.trf.xlu0
  %v5498 = vpop.trf.xlu0
  %v5499 = vpop.trf.xlu0
  %v5500 = vpop.trf.xlu0
  %v5501 = vpop.trf.xlu0
  %v5502 = vpop.trf.xlu0
  %v5503 = vpop.trf.xlu0
  %v5504 = vpop.trf.xlu0
  %v5505 = vpop.trf.xlu0
  %v5506 = vpop.trf.xlu0
  %v5507 = vpop.trf.xlu0
  %v5508 = vpop.trf.xlu0
  %v5509 = vpop.trf.xlu0
  %v5510 = vpop.trf.xlu0
  %5511 = vxpose.xlu0.b32.start [1/16] %v5191, 128
  %5512 = vxpose.xlu0.b32.cont [2/16] %v5194, 128
  %5513 = vxpose.xlu0.b32.cont [3/16] 0.0, 128
  %5514 = vxpose.xlu0.b32.cont [4/16] 0.0, 128
  %5515 = vxpose.xlu0.b32.cont [5/16] 0.0, 128
  %5516 = vxpose.xlu0.b32.cont [6/16] 0.0, 128
  %5517 = vxpose.xlu0.b32.cont [7/16] 0.0, 128
  %5518 = vxpose.xlu0.b32.cont [8/16] 0.0, 128
  %5519 = vxpose.xlu0.b32.cont [9/16] 0.0, 128
  %5520 = vxpose.xlu0.b32.cont [10/16] 0.0, 128
  %5521 = vxpose.xlu0.b32.cont [11/16] 0.0, 128
  %5522 = vxpose.xlu0.b32.cont [12/16] 0.0, 128
  %5523 = vxpose.xlu0.b32.cont [13/16] 0.0, 128
  %5524 = vxpose.xlu0.b32.cont [14/16] 0.0, 128
  %5525 = vxpose.xlu0.b32.cont [15/16] 0.0, 128
  %5526 = vxpose.xlu0.b32.end [16/16] 0.0, 128
  %v5527 = vpop.trf.xlu0
  %v5528 = vpop.trf.xlu0
  %v5529 = vpop.trf.xlu0
  %v5530 = vpop.trf.xlu0
  %v5531 = vpop.trf.xlu0
  %v5532 = vpop.trf.xlu0
  %v5533 = vpop.trf.xlu0
  %v5534 = vpop.trf.xlu0
  %v5535 = vpop.trf.xlu0
  %v5536 = vpop.trf.xlu0
  %v5537 = vpop.trf.xlu0
  %v5538 = vpop.trf.xlu0
  %v5539 = vpop.trf.xlu0
  %v5540 = vpop.trf.xlu0
  %v5541 = vpop.trf.xlu0
  %v5542 = vpop.trf.xlu0
  %5543 = vxpose.xlu0.b32.start [1/16] %v5238, 128
  %5544 = vxpose.xlu0.b32.cont [2/16] %v5241, 128
  %5545 = vxpose.xlu0.b32.cont [3/16] 0.0, 128
  %5546 = vxpose.xlu0.b32.cont [4/16] 0.0, 128
  %5547 = vxpose.xlu0.b32.cont [5/16] 0.0, 128
  %5548 = vxpose.xlu0.b32.cont [6/16] 0.0, 128
  %5549 = vxpose.xlu0.b32.cont [7/16] 0.0, 128
  %5550 = vxpose.xlu0.b32.cont [8/16] 0.0, 128
  %5551 = vxpose.xlu0.b32.cont [9/16] 0.0, 128
  %5552 = vxpose.xlu0.b32.cont [10/16] 0.0, 128
  %5553 = vxpose.xlu0.b32.cont [11/16] 0.0, 128
  %5554 = vxpose.xlu0.b32.cont [12/16] 0.0, 128
  %5555 = vxpose.xlu0.b32.cont [13/16] 0.0, 128
  %5556 = vxpose.xlu0.b32.cont [14/16] 0.0, 128
  %5557 = vxpose.xlu0.b32.cont [15/16] 0.0, 128
  %5558 = vxpose.xlu0.b32.end [16/16] 0.0, 128
  %v5559 = vpop.trf.xlu0
  %v5560 = vpop.trf.xlu0
  %v5561 = vpop.trf.xlu0
  %v5562 = vpop.trf.xlu0
  %v5563 = vpop.trf.xlu0
  %v5564 = vpop.trf.xlu0
  %v5565 = vpop.trf.xlu0
  %v5566 = vpop.trf.xlu0
  %v5567 = vpop.trf.xlu0
  %v5568 = vpop.trf.xlu0
  %v5569 = vpop.trf.xlu0
  %v5570 = vpop.trf.xlu0
  %v5571 = vpop.trf.xlu0
  %v5572 = vpop.trf.xlu0
  %v5573 = vpop.trf.xlu0
  %v5574 = vpop.trf.xlu0
  %5575 = vxpose.xlu0.b32.start [1/16] %v5285, 128
  %5576 = vxpose.xlu0.b32.cont [2/16] %v5288, 128
  %5577 = vxpose.xlu0.b32.cont [3/16] 0.0, 128
  %5578 = vxpose.xlu0.b32.cont [4/16] 0.0, 128
  %5579 = vxpose.xlu0.b32.cont [5/16] 0.0, 128
  %5580 = vxpose.xlu0.b32.cont [6/16] 0.0, 128
  %5581 = vxpose.xlu0.b32.cont [7/16] 0.0, 128
  %5582 = vxpose.xlu0.b32.cont [8/16] 0.0, 128
  %5583 = vxpose.xlu0.b32.cont [9/16] 0.0, 128
  %5584 = vxpose.xlu0.b32.cont [10/16] 0.0, 128
  %5585 = vxpose.xlu0.b32.cont [11/16] 0.0, 128
  %5586 = vxpose.xlu0.b32.cont [12/16] 0.0, 128
  %5587 = vxpose.xlu0.b32.cont [13/16] 0.0, 128
  %5588 = vxpose.xlu0.b32.cont [14/16] 0.0, 128
  %5589 = vxpose.xlu0.b32.cont [15/16] 0.0, 128
  %5590 = vxpose.xlu0.b32.end [16/16] 0.0, 128
  %v5591 = vpop.trf.xlu0
  %v5592 = vpop.trf.xlu0
  %v5593 = vpop.trf.xlu0
  %v5594 = vpop.trf.xlu0
  %v5595 = vpop.trf.xlu0
  %v5596 = vpop.trf.xlu0
  %v5597 = vpop.trf.xlu0
  %v5598 = vpop.trf.xlu0
  %v5599 = vpop.trf.xlu0
  %v5600 = vpop.trf.xlu0
  %v5601 = vpop.trf.xlu0
  %v5602 = vpop.trf.xlu0
  %v5603 = vpop.trf.xlu0
  %v5604 = vpop.trf.xlu0
  %v5605 = vpop.trf.xlu0
  %v5606 = vpop.trf.xlu0
  %5607 = vxpose.xlu0.b32.start [1/16] %v5332, 128
  %5608 = vxpose.xlu0.b32.cont [2/16] %v5335, 128
  %5609 = vxpose.xlu0.b32.cont [3/16] 0.0, 128
  %5610 = vxpose.xlu0.b32.cont [4/16] 0.0, 128
  %5611 = vxpose.xlu0.b32.cont [5/16] 0.0, 128
  %5612 = vxpose.xlu0.b32.cont [6/16] 0.0, 128
  %5613 = vxpose.xlu0.b32.cont [7/16] 0.0, 128
  %5614 = vxpose.xlu0.b32.cont [8/16] 0.0, 128
  %5615 = vxpose.xlu0.b32.cont [9/16] 0.0, 128
  %5616 = vxpose.xlu0.b32.cont [10/16] 0.0, 128
  %5617 = vxpose.xlu0.b32.cont [11/16] 0.0, 128
  %5618 = vxpose.xlu0.b32.cont [12/16] 0.0, 128
  %5619 = vxpose.xlu0.b32.cont [13/16] 0.0, 128
  %5620 = vxpose.xlu0.b32.cont [14/16] 0.0, 128
  %5621 = vxpose.xlu0.b32.cont [15/16] 0.0, 128
  %5622 = vxpose.xlu0.b32.end [16/16] 0.0, 128
  %v5623 = vpop.trf.xlu0
  %v5624 = vpop.trf.xlu0
  %v5625 = vpop.trf.xlu0
  %v5626 = vpop.trf.xlu0
  %v5627 = vpop.trf.xlu0
  %v5628 = vpop.trf.xlu0
  %v5629 = vpop.trf.xlu0
  %v5630 = vpop.trf.xlu0
  %v5631 = vpop.trf.xlu0
  %v5632 = vpop.trf.xlu0
  %v5633 = vpop.trf.xlu0
  %v5634 = vpop.trf.xlu0
  %v5635 = vpop.trf.xlu0
  %v5636 = vpop.trf.xlu0
  %v5637 = vpop.trf.xlu0
  %v5638 = vpop.trf.xlu0
  %5639 = vxpose.xlu0.b32.start [1/16] %v5379, 128
  %5640 = vxpose.xlu0.b32.cont [2/16] %v5382, 128
  %5641 = vxpose.xlu0.b32.cont [3/16] 0.0, 128
  %5642 = vxpose.xlu0.b32.cont [4/16] 0.0, 128
  %5643 = vxpose.xlu0.b32.cont [5/16] 0.0, 128
  %5644 = vxpose.xlu0.b32.cont [6/16] 0.0, 128
  %5645 = vxpose.xlu0.b32.cont [7/16] 0.0, 128
  %5646 = vxpose.xlu0.b32.cont [8/16] 0.0, 128
  %5647 = vxpose.xlu0.b32.cont [9/16] 0.0, 128
  %5648 = vxpose.xlu0.b32.cont [10/16] 0.0, 128
  %5649 = vxpose.xlu0.b32.cont [11/16] 0.0, 128
  %5650 = vxpose.xlu0.b32.cont [12/16] 0.0, 128
  %5651 = vxpose.xlu0.b32.cont [13/16] 0.0, 128
  %5652 = vxpose.xlu0.b32.cont [14/16] 0.0, 128
  %5653 = vxpose.xlu0.b32.cont [15/16] 0.0, 128
  %5654 = vxpose.xlu0.b32.end [16/16] 0.0, 128
  %v5655 = vpop.trf.xlu0
  %v5656 = vpop.trf.xlu0
  %v5657 = vpop.trf.xlu0
  %v5658 = vpop.trf.xlu0
  %v5659 = vpop.trf.xlu0
  %v5660 = vpop.trf.xlu0
  %v5661 = vpop.trf.xlu0
  %v5662 = vpop.trf.xlu0
  %v5663 = vpop.trf.xlu0
  %v5664 = vpop.trf.xlu0
  %v5665 = vpop.trf.xlu0
  %v5666 = vpop.trf.xlu0
  %v5667 = vpop.trf.xlu0
  %v5668 = vpop.trf.xlu0
  %v5669 = vpop.trf.xlu0
  %v5670 = vpop.trf.xlu0
  %5671 = vxpose.xlu0.b32.start [1/16] %v5426, 128
  %5672 = vxpose.xlu0.b32.cont [2/16] %v5429, 128
  %5673 = vxpose.xlu0.b32.cont [3/16] 0.0, 128
  %5674 = vxpose.xlu0.b32.cont [4/16] 0.0, 128
  %5675 = vxpose.xlu0.b32.cont [5/16] 0.0, 128
  %5676 = vxpose.xlu0.b32.cont [6/16] 0.0, 128
  %5677 = vxpose.xlu0.b32.cont [7/16] 0.0, 128
  %5678 = vxpose.xlu0.b32.cont [8/16] 0.0, 128
  %5679 = vxpose.xlu0.b32.cont [9/16] 0.0, 128
  %5680 = vxpose.xlu0.b32.cont [10/16] 0.0, 128
  %5681 = vxpose.xlu0.b32.cont [11/16] 0.0, 128
  %5682 = vxpose.xlu0.b32.cont [12/16] 0.0, 128
  %5683 = vxpose.xlu0.b32.cont [13/16] 0.0, 128
  %5684 = vxpose.xlu0.b32.cont [14/16] 0.0, 128
  %5685 = vxpose.xlu0.b32.cont [15/16] 0.0, 128
  %5686 = vxpose.xlu0.b32.end [16/16] 0.0, 128
  %v5687 = vpop.trf.xlu0
  %v5688 = vpop.trf.xlu0
  %v5689 = vpop.trf.xlu0
  %v5690 = vpop.trf.xlu0
  %v5691 = vpop.trf.xlu0
  %v5692 = vpop.trf.xlu0
  %v5693 = vpop.trf.xlu0
  %v5694 = vpop.trf.xlu0
  %v5695 = vpop.trf.xlu0
  %v5696 = vpop.trf.xlu0
  %v5697 = vpop.trf.xlu0
  %v5698 = vpop.trf.xlu0
  %v5699 = vpop.trf.xlu0
  %v5700 = vpop.trf.xlu0
  %v5701 = vpop.trf.xlu0
  %v5702 = vpop.trf.xlu0
  %5703 = vxpose.xlu0.b32.start [1/16] %v5473, 128
  %5704 = vxpose.xlu0.b32.cont [2/16] %v5476, 128
  %5705 = vxpose.xlu0.b32.cont [3/16] 0.0, 128
  %5706 = vxpose.xlu0.b32.cont [4/16] 0.0, 128
  %5707 = vxpose.xlu0.b32.cont [5/16] 0.0, 128
  %5708 = vxpose.xlu0.b32.cont [6/16] 0.0, 128
  %5709 = vxpose.xlu0.b32.cont [7/16] 0.0, 128
  %5710 = vxpose.xlu0.b32.cont [8/16] 0.0, 128
  %5711 = vxpose.xlu0.b32.cont [9/16] 0.0, 128
  %5712 = vxpose.xlu0.b32.cont [10/16] 0.0, 128
  %5713 = vxpose.xlu0.b32.cont [11/16] 0.0, 128
  %5714 = vxpose.xlu0.b32.cont [12/16] 0.0, 128
  %5715 = vxpose.xlu0.b32.cont [13/16] 0.0, 128
  %5716 = vxpose.xlu0.b32.cont [14/16] 0.0, 128
  %5717 = vxpose.xlu0.b32.cont [15/16] 0.0, 128
  %5718 = vxpose.xlu0.b32.end [16/16] 0.0, 128
  %v5719 = vpop.trf.xlu0
  %v5720 = vpop.trf.xlu0
  %v5721 = vpop.trf.xlu0
  %v5722 = vpop.trf.xlu0
  %v5723 = vpop.trf.xlu0
  %v5724 = vpop.trf.xlu0
  %v5725 = vpop.trf.xlu0
  %v5726 = vpop.trf.xlu0
  %v5727 = vpop.trf.xlu0
  %v5728 = vpop.trf.xlu0
  %v5729 = vpop.trf.xlu0
  %v5730 = vpop.trf.xlu0
  %v5731 = vpop.trf.xlu0
  %v5732 = vpop.trf.xlu0
  %v5733 = vpop.trf.xlu0
  %v5734 = vpop.trf.xlu0
  %5735 = vxpose.xlu0.b32.start [1/16] %v5495, 128
  %5736 = vxpose.xlu0.b32.cont [2/16] %v5527, 128
  %5737 = vxpose.xlu0.b32.cont [3/16] %v5559, 128
  %5738 = vxpose.xlu0.b32.cont [4/16] %v5591, 128
  %5739 = vxpose.xlu0.b32.cont [5/16] %v5623, 128
  %5740 = vxpose.xlu0.b32.cont [6/16] %v5655, 128
  %5741 = vxpose.xlu0.b32.cont [7/16] %v5687, 128
  %5742 = vxpose.xlu0.b32.cont [8/16] %v5719, 128
  %5743 = vxpose.xlu0.b32.cont [9/16] 0.0, 128
  %5744 = vxpose.xlu0.b32.cont [10/16] 0.0, 128
  %5745 = vxpose.xlu0.b32.cont [11/16] 0.0, 128
  %5746 = vxpose.xlu0.b32.cont [12/16] 0.0, 128
  %5747 = vxpose.xlu0.b32.cont [13/16] 0.0, 128
  %5748 = vxpose.xlu0.b32.cont [14/16] 0.0, 128
  %5749 = vxpose.xlu0.b32.cont [15/16] 0.0, 128
  %5750 = vxpose.xlu0.b32.end [16/16] 0.0, 128
  %v5751 = vpop.trf.xlu0
  %v5752 = vpop.trf.xlu0
  %v5753 = vpop.trf.xlu0
  %v5754 = vpop.trf.xlu0
  %v5755 = vpop.trf.xlu0
  %v5756 = vpop.trf.xlu0
  %v5757 = vpop.trf.xlu0
  %v5758 = vpop.trf.xlu0
  %v5759 = vpop.trf.xlu0
  %v5760 = vpop.trf.xlu0
  %v5761 = vpop.trf.xlu0
  %v5762 = vpop.trf.xlu0
  %v5763 = vpop.trf.xlu0
  %v5764 = vpop.trf.xlu0
  %v5765 = vpop.trf.xlu0
  %v5766 = vpop.trf.xlu0
  %v5767 = vpack.c.bf16 %v5752, %v5751
  %s5768 = scalar_lea.vmem %s17, 64
  %v5769 = vld [vmem:[%s5768] sm:$0xf]
  %v5770 = vld [vmem:[%s5768 + $0x4] sm:$0xf]
  %v5771 = vld [vmem:[%s5768 + $0x8] sm:$0xf]
  %v5772 = vld [vmem:[%s5768 + $0xc] sm:$0xf]
  %v5773 = vld [vmem:[%s5768 + $0x10] sm:$0xf]
  %v5774 = vld [vmem:[%s5768 + $0x14] sm:$0xf]
  %v5775 = vld [vmem:[%s5768 + $0x18] sm:$0xf]
  %v5776 = vld [vmem:[%s5768 + $0x1c] sm:$0xf]
  %s5777 = scalar_lea.vmem %s19, 2
  %v5778 = vld [vmem:[%s5777] sm:$0x1]
  %v5780 = vlaneseq
  %v5781 = vshrl.u32 %v5780, 7
  %v5782 = vsub.s32 0, %v5781
  %v5783 = vrot.slane %v5778, %v5782
  %v5793 = vunpack.c.l.b16 %v5769
  %v5794 = vunpack.c.l.b16 %v5770
  %v5795 = vunpack.c.l.b16 %v5771
  %v5796 = vunpack.c.l.b16 %v5772
  %v5797 = vunpack.c.l.b16 %v5773
  %v5798 = vunpack.c.l.b16 %v5774
  %v5799 = vunpack.c.l.b16 %v5775
  %v5800 = vunpack.c.l.b16 %v5776
  %v5801 = vpack.c.b16 %v5794, %v5793
  %v5802 = vpack.c.b16 %v5796, %v5795
  %v5803 = vpack.c.b16 %v5798, %v5797
  %v5804 = vpack.c.b16 %v5800, %v5799
  %v5810 = vsel %vm238, %v5767, 0
  %5812 = vmatprep.subr.bf16.mxu0 0
  %5813 = vmatpush1.bf16.msra.mxu0 %v5801
  %5814 = vmatprep.subr.bf16.mxu0 0
  %5815 = vmatpush1.bf16.msra.mxu0 %v5802
  %5816 = vmatprep.subr.bf16.mxu0 0
  %5817 = vmatpush1.bf16.msra.mxu0 %v5803
  %5818 = vmatprep.subr.bf16.mxu0 0
  %5819 = vmatpush1.bf16.msra.mxu0 %v5804
  %5820 = vmatprep.subr.bf16.mxu0 0
  %5821 = vmatpush1.bf16.msra.mxu0 0
  %5822 = vmatprep.subr.bf16.mxu0 0
  %5823 = vmatpush1.bf16.msra.mxu0 0
  %5824 = vmatprep.subr.bf16.mxu0 0
  %5825 = vmatpush1.bf16.msra.mxu0 0
  %5826 = vmatprep.subr.bf16.mxu0 0
  %5827 = vmatpush1.bf16.msra.mxu0 0
  %5828 = vmatprep.subr.bf16.mxu0 0
  %5829 = vmatpush1.bf16.msra.mxu0 0
  %5830 = vmatprep.subr.bf16.mxu0 0
  %5831 = vmatpush1.bf16.msra.mxu0 0
  %5832 = vmatprep.subr.bf16.mxu0 0
  %5833 = vmatpush1.bf16.msra.mxu0 0
  %5834 = vmatprep.subr.bf16.mxu0 0
  %5835 = vmatpush1.bf16.msra.mxu0 0
  %5836 = vmatprep.subr.bf16.mxu0 0
  %5837 = vmatpush1.bf16.msra.mxu0 0
  %5838 = vmatprep.subr.bf16.mxu0 0
  %5839 = vmatpush1.bf16.msra.mxu0 0
  %5840 = vmatprep.subr.bf16.mxu0 0
  %5841 = vmatpush1.bf16.msra.mxu0 0
  %5842 = vmatprep.subr.bf16.mxu0 0
  %5843 = vmatpush1.bf16.msra.mxu0 0
  %5844 = vmatprep.mubr.bf16.mxu0 0
  %5845 = vmatmul.mubr.bf16.gmra.mrb[0].mxu0 %v5810
  %v5846 = vpop.f32.mrb[0].mxu0
  %v5847 = vadd.f32 %v5783, %v5846
  %v5848 = vpop.f32.mrb[0].mxu0
  %v5849 = vpop.f32.mrb[0].mxu0
  %v5850 = vadd.f32 %v5783, %v5849
  %v5851 = vpop.f32.mrb[0].mxu0
  %5852 = vdwg.mxu0
  %v5853 = vadd.f32 %v4216, %v5847
  %v5854 = vadd.f32 %v4217, %v5850
  %s5855 = scalar_lea.vmem %s21, 2
  %v5856 = vld [vmem:[%s5855] sm:$0x1]
  %s5857 = scalar_lea.vmem %s23, 2
  %v5858 = vld [vmem:[%s5857] sm:$0x1]
  %v5859 = vsel %vm238, %v5853, 0.0
  %5860 = vadd.xlane.f32.xlu0 %v5859
  %v5861 = vpop.xlane.xlu0 %5860
  %v5862 = vsel %vm238, %v5854, 0.0
  %5863 = vadd.xlane.f32.xlu0 %v5862
  %v5864 = vpop.xlane.xlu0 %5863
  %v5865 = vmul.f32 %v5861, %v1822
  %v5866 = vmul.f32 %v5864, %v1822
  %v5867 = vsub.f32 %v5853, %v5865
  %v5868 = vsub.f32 %v5854, %v5866
  %v5869 = vmul.f32 %v5867, %v5867
  %v5870 = vmul.f32 %v5868, %v5868
  %v5871 = vsel %vm238, %v5869, 0.0
  %5872 = vadd.xlane.f32.xlu0 %v5871
  %v5873 = vpop.xlane.xlu0 %5872
  %v5874 = vsel %vm238, %v5870, 0.0
  %5875 = vadd.xlane.f32.xlu0 %v5874
  %v5876 = vpop.xlane.xlu0 %5875
  %v5877 = vmul.f32 %v5873, %v1822
  %v5878 = vmul.f32 %v5876, %v1822
  %v5879 = vadd.f32 %v5877, 1e-05
  %v5880 = vadd.f32 %v5878, 1e-05
  %v5881 = vrsqrt.pop %v5879
  %v5882 = vrsqrt.pop %v5880
  %v5883 = vmul.f32 %v5867, %v5881
  %v5884 = vmul.f32 %v5868, %v5882
  %v5886 = vlaneseq
  %v5887 = vshrl.u32 %v5886, 7
  %v5888 = vsub.s32 0, %v5887
  %v5889 = vrot.slane %v5856, %v5888
  %v5891 = vmul.f32 %v5883, %v5889
  %v5892 = vmul.f32 %v5884, %v5889
  %v5894 = vlaneseq
  %v5895 = vshrl.u32 %v5894, 7
  %v5896 = vsub.s32 0, %v5895
  %v5897 = vrot.slane %v5858, %v5896
  %v5899 = vadd.f32 %v5891, %v5897
  %v5900 = vadd.f32 %v5892, %v5897
  %v5901 = vpack.c.bf16 %v5900, %v5899
  %s5902 = scalar_lea.vmem %s25, 128
  %v5903 = vld [vmem:[%s5902] sm:$0xff]
  %v5904 = vld [vmem:[%s5902 + $0x8] sm:$0xff]
  %v5905 = vld [vmem:[%s5902 + $0x10] sm:$0xff]
  %v5906 = vld [vmem:[%s5902 + $0x18] sm:$0xff]
  %v5907 = vld [vmem:[%s5902 + $0x20] sm:$0xff]
  %v5908 = vld [vmem:[%s5902 + $0x28] sm:$0xff]
  %v5909 = vld [vmem:[%s5902 + $0x30] sm:$0xff]
  %v5910 = vld [vmem:[%s5902 + $0x38] sm:$0xff]
  %s5911 = scalar_lea.vmem %s27, 4
  %v5912 = vld [vmem:[%s5911] sm:$0x3]
  %v5914 = vlaneseq
  %v5915 = vshrl.u32 %v5914, 7
  %v5916 = vsub.s32 0, %v5915
  %v5917 = vrot.slane %v5912, %v5916
  %v5918 = vlaneseq
  %v5919 = vshrl.u32 %v5918, 7
  %v5920 = vsub.s32 1, %v5919
  %v5921 = vrot.slane %v5912, %v5920
  %v5932 = vunpack.c.l.b16 %v5903
  %v5933 = vunpack.c.h.b16 %v5903
  %v5934 = vunpack.c.l.b16 %v5904
  %v5935 = vunpack.c.h.b16 %v5904
  %v5936 = vunpack.c.l.b16 %v5905
  %v5937 = vunpack.c.h.b16 %v5905
  %v5938 = vunpack.c.l.b16 %v5906
  %v5939 = vunpack.c.h.b16 %v5906
  %v5940 = vunpack.c.l.b16 %v5907
  %v5941 = vunpack.c.h.b16 %v5907
  %v5942 = vunpack.c.l.b16 %v5908
  %v5943 = vunpack.c.h.b16 %v5908
  %v5944 = vunpack.c.l.b16 %v5909
  %v5945 = vunpack.c.h.b16 %v5909
  %v5946 = vunpack.c.l.b16 %v5910
  %v5947 = vunpack.c.h.b16 %v5910
  %v5948 = vpack.c.b16 %v5934, %v5932
  %v5949 = vpack.c.b16 %v5935, %v5933
  %v5950 = vpack.c.b16 %v5938, %v5936
  %v5951 = vpack.c.b16 %v5939, %v5937
  %v5952 = vpack.c.b16 %v5942, %v5940
  %v5953 = vpack.c.b16 %v5943, %v5941
  %v5954 = vpack.c.b16 %v5946, %v5944
  %v5955 = vpack.c.b16 %v5947, %v5945
  %v5965 = vsel %vm238, %v5901, 0
  %5967 = vmatprep.subr.bf16.mxu0 %v5949
  %5968 = vmatpush1.bf16.msra.mxu0 %v5948
  %5969 = vmatprep.subr.bf16.mxu0 %v5951
  %5970 = vmatpush1.bf16.msra.mxu0 %v5950
  %5971 = vmatprep.subr.bf16.mxu0 %v5953
  %5972 = vmatpush1.bf16.msra.mxu0 %v5952
  %5973 = vmatprep.subr.bf16.mxu0 %v5955
  %5974 = vmatpush1.bf16.msra.mxu0 %v5954
  %5975 = vmatprep.subr.bf16.mxu0 0
  %5976 = vmatpush1.bf16.msra.mxu0 0
  %5977 = vmatprep.subr.bf16.mxu0 0
  %5978 = vmatpush1.bf16.msra.mxu0 0
  %5979 = vmatprep.subr.bf16.mxu0 0
  %5980 = vmatpush1.bf16.msra.mxu0 0
  %5981 = vmatprep.subr.bf16.mxu0 0
  %5982 = vmatpush1.bf16.msra.mxu0 0
  %5983 = vmatprep.subr.bf16.mxu0 0
  %5984 = vmatpush1.bf16.msra.mxu0 0
  %5985 = vmatprep.subr.bf16.mxu0 0
  %5986 = vmatpush1.bf16.msra.mxu0 0
  %5987 = vmatprep.subr.bf16.mxu0 0
  %5988 = vmatpush1.bf16.msra.mxu0 0
  %5989 = vmatprep.subr.bf16.mxu0 0
  %5990 = vmatpush1.bf16.msra.mxu0 0
  %5991 = vmatprep.subr.bf16.mxu0 0
  %5992 = vmatpush1.bf16.msra.mxu0 0
  %5993 = vmatprep.subr.bf16.mxu0 0
  %5994 = vmatpush1.bf16.msra.mxu0 0
  %5995 = vmatprep.subr.bf16.mxu0 0
  %5996 = vmatpush1.bf16.msra.mxu0 0
  %5997 = vmatprep.subr.bf16.mxu0 0
  %5998 = vmatpush1.bf16.msra.mxu0 0
  %5999 = vmatprep.mubr.bf16.mxu0 0
  %6000 = vmatmul.mubr.bf16.gmra.mrb[0].mxu0 %v5965
  %v6001 = vpop.f32.mrb[0].mxu0
  %v6002 = vadd.f32 %v5917, %v6001
  %v6003 = vpop.f32.mrb[0].mxu0
  %v6004 = vadd.f32 %v5921, %v6003
  %v6005 = vpop.f32.mrb[0].mxu0
  %v6006 = vadd.f32 %v5917, %v6005
  %v6007 = vpop.f32.mrb[0].mxu0
  %v6008 = vadd.f32 %v5921, %v6007
  %6009 = vdwg.mxu0
  %v6010 = vmax.f32 %v6002, 0.0
  %v6011 = vmax.f32 %v6004, 0.0
  %v6012 = vmax.f32 %v6006, 0.0
  %v6013 = vmax.f32 %v6008, 0.0
  %v6014 = vpack.c.bf16 %v6012, %v6010
  %v6015 = vpack.c.bf16 %v6013, %v6011
  %s6016 = scalar_lea.vmem %s29, 256
  %v6017 = vld [vmem:[%s6016] sm:$0xf]
  %v6018 = vld [vmem:[%s6016 + $0x4] sm:$0xf]
  %v6019 = vld [vmem:[%s6016 + $0x8] sm:$0xf]
  %v6020 = vld [vmem:[%s6016 + $0xc] sm:$0xf]
  %v6021 = vld [vmem:[%s6016 + $0x10] sm:$0xf]
  %v6022 = vld [vmem:[%s6016 + $0x14] sm:$0xf]
  %v6023 = vld [vmem:[%s6016 + $0x18] sm:$0xf]
  %v6024 = vld [vmem:[%s6016 + $0x1c] sm:$0xf]
  %v6025 = vld [vmem:[%s6016 + $0x20] sm:$0xf]
  %v6026 = vld [vmem:[%s6016 + $0x24] sm:$0xf]
  %v6027 = vld [vmem:[%s6016 + $0x28] sm:$0xf]
  %v6028 = vld [vmem:[%s6016 + $0x2c] sm:$0xf]
  %v6029 = vld [vmem:[%s6016 + $0x30] sm:$0xf]
  %v6030 = vld [vmem:[%s6016 + $0x34] sm:$0xf]
  %v6031 = vld [vmem:[%s6016 + $0x38] sm:$0xf]
  %v6032 = vld [vmem:[%s6016 + $0x3c] sm:$0xf]
  %v6033 = vld [vmem:[%s6016 + $0x40] sm:$0xf]
  %v6034 = vld [vmem:[%s6016 + $0x44] sm:$0xf]
  %v6035 = vld [vmem:[%s6016 + $0x48] sm:$0xf]
  %v6036 = vld [vmem:[%s6016 + $0x4c] sm:$0xf]
  %v6037 = vld [vmem:[%s6016 + $0x50] sm:$0xf]
  %v6038 = vld [vmem:[%s6016 + $0x54] sm:$0xf]
  %v6039 = vld [vmem:[%s6016 + $0x58] sm:$0xf]
  %v6040 = vld [vmem:[%s6016 + $0x5c] sm:$0xf]
  %v6041 = vld [vmem:[%s6016 + $0x60] sm:$0xf]
  %v6042 = vld [vmem:[%s6016 + $0x64] sm:$0xf]
  %v6043 = vld [vmem:[%s6016 + $0x68] sm:$0xf]
  %v6044 = vld [vmem:[%s6016 + $0x6c] sm:$0xf]
  %v6045 = vld [vmem:[%s6016 + $0x70] sm:$0xf]
  %v6046 = vld [vmem:[%s6016 + $0x74] sm:$0xf]
  %v6047 = vld [vmem:[%s6016 + $0x78] sm:$0xf]
  %v6048 = vld [vmem:[%s6016 + $0x7c] sm:$0xf]
  %s6049 = scalar_lea.vmem %s31, 2
  %v6050 = vld [vmem:[%s6049] sm:$0x1]
  %v6052 = vlaneseq
  %v6053 = vshrl.u32 %v6052, 7
  %v6054 = vsub.s32 0, %v6053
  %v6055 = vrot.slane %v6050, %v6054
  %v6089 = vunpack.c.l.b16 %v6017
  %v6090 = vunpack.c.l.b16 %v6018
  %v6091 = vunpack.c.l.b16 %v6019
  %v6092 = vunpack.c.l.b16 %v6020
  %v6093 = vunpack.c.l.b16 %v6021
  %v6094 = vunpack.c.l.b16 %v6022
  %v6095 = vunpack.c.l.b16 %v6023
  %v6096 = vunpack.c.l.b16 %v6024
  %v6097 = vunpack.c.l.b16 %v6025
  %v6098 = vunpack.c.l.b16 %v6026
  %v6099 = vunpack.c.l.b16 %v6027
  %v6100 = vunpack.c.l.b16 %v6028
  %v6101 = vunpack.c.l.b16 %v6029
  %v6102 = vunpack.c.l.b16 %v6030
  %v6103 = vunpack.c.l.b16 %v6031
  %v6104 = vunpack.c.l.b16 %v6032
  %v6105 = vunpack.c.l.b16 %v6033
  %v6106 = vunpack.c.l.b16 %v6034
  %v6107 = vunpack.c.l.b16 %v6035
  %v6108 = vunpack.c.l.b16 %v6036
  %v6109 = vunpack.c.l.b16 %v6037
  %v6110 = vunpack.c.l.b16 %v6038
  %v6111 = vunpack.c.l.b16 %v6039
  %v6112 = vunpack.c.l.b16 %v6040
  %v6113 = vunpack.c.l.b16 %v6041
  %v6114 = vunpack.c.l.b16 %v6042
  %v6115 = vunpack.c.l.b16 %v6043
  %v6116 = vunpack.c.l.b16 %v6044
  %v6117 = vunpack.c.l.b16 %v6045
  %v6118 = vunpack.c.l.b16 %v6046
  %v6119 = vunpack.c.l.b16 %v6047
  %v6120 = vunpack.c.l.b16 %v6048
  %v6121 = vpack.c.b16 %v6090, %v6089
  %v6122 = vpack.c.b16 %v6092, %v6091
  %v6123 = vpack.c.b16 %v6094, %v6093
  %v6124 = vpack.c.b16 %v6096, %v6095
  %v6125 = vpack.c.b16 %v6098, %v6097
  %v6126 = vpack.c.b16 %v6100, %v6099
  %v6127 = vpack.c.b16 %v6102, %v6101
  %v6128 = vpack.c.b16 %v6104, %v6103
  %v6129 = vpack.c.b16 %v6106, %v6105
  %v6130 = vpack.c.b16 %v6108, %v6107
  %v6131 = vpack.c.b16 %v6110, %v6109
  %v6132 = vpack.c.b16 %v6112, %v6111
  %v6133 = vpack.c.b16 %v6114, %v6113
  %v6134 = vpack.c.b16 %v6116, %v6115
  %v6135 = vpack.c.b16 %v6118, %v6117
  %v6136 = vpack.c.b16 %v6120, %v6119
  %6153 = vmatprep.subr.bf16.mxu0 0
  %6154 = vmatpush1.bf16.msra.mxu0 %v6121
  %6155 = vmatprep.subr.bf16.mxu0 0
  %6156 = vmatpush1.bf16.msra.mxu0 %v6122
  %6157 = vmatprep.subr.bf16.mxu0 0
  %6158 = vmatpush1.bf16.msra.mxu0 %v6123
  %6159 = vmatprep.subr.bf16.mxu0 0
  %6160 = vmatpush1.bf16.msra.mxu0 %v6124
  %6161 = vmatprep.subr.bf16.mxu0 0
  %6162 = vmatpush1.bf16.msra.mxu0 %v6125
  %6163 = vmatprep.subr.bf16.mxu0 0
  %6164 = vmatpush1.bf16.msra.mxu0 %v6126
  %6165 = vmatprep.subr.bf16.mxu0 0
  %6166 = vmatpush1.bf16.msra.mxu0 %v6127
  %6167 = vmatprep.subr.bf16.mxu0 0
  %6168 = vmatpush1.bf16.msra.mxu0 %v6128
  %6169 = vmatprep.subr.bf16.mxu0 0
  %6170 = vmatpush1.bf16.msra.mxu0 %v6129
  %6171 = vmatprep.subr.bf16.mxu0 0
  %6172 = vmatpush1.bf16.msra.mxu0 %v6130
  %6173 = vmatprep.subr.bf16.mxu0 0
  %6174 = vmatpush1.bf16.msra.mxu0 %v6131
  %6175 = vmatprep.subr.bf16.mxu0 0
  %6176 = vmatpush1.bf16.msra.mxu0 %v6132
  %6177 = vmatprep.subr.bf16.mxu0 0
  %6178 = vmatpush1.bf16.msra.mxu0 %v6133
  %6179 = vmatprep.subr.bf16.mxu0 0
  %6180 = vmatpush1.bf16.msra.mxu0 %v6134
  %6181 = vmatprep.subr.bf16.mxu0 0
  %6182 = vmatpush1.bf16.msra.mxu0 %v6135
  %6183 = vmatprep.subr.bf16.mxu0 0
  %6184 = vmatpush1.bf16.msra.mxu0 %v6136
  %6185 = vmatprep.mubr.bf16.mxu0 %v6015
  %6186 = vmatmul.mubr.bf16.gmra.mrb[0].mxu0 %v6014
  %v6187 = vpop.f32.mrb[0].mxu0
  %v6188 = vadd.f32 %v6055, %v6187
  %v6189 = vpop.f32.mrb[0].mxu0
  %v6190 = vpop.f32.mrb[0].mxu0
  %v6191 = vadd.f32 %v6055, %v6190
  %v6192 = vpop.f32.mrb[0].mxu0
  %6193 = vdwg.mxu0
  %v6194 = vadd.f32 %v5899, %v6188
  %v6195 = vadd.f32 %v5900, %v6191
  %s6196 = scalar_lea.vmem %s33, 2
  %v6197 = vld [vmem:[%s6196] sm:$0x1]
  %s6198 = scalar_lea.vmem %s35, 2
  %v6199 = vld [vmem:[%s6198] sm:$0x1]
  %v6200 = vsel %vm238, %v6194, 0.0
  %6201 = vadd.xlane.f32.xlu0 %v6200
  %v6202 = vpop.xlane.xlu0 %6201
  %v6203 = vsel %vm238, %v6195, 0.0
  %6204 = vadd.xlane.f32.xlu0 %v6203
  %v6205 = vpop.xlane.xlu0 %6204
  %v6206 = vmul.f32 %v6202, %v1822
  %v6207 = vmul.f32 %v6205, %v1822
  %v6208 = vsub.f32 %v6194, %v6206
  %v6209 = vsub.f32 %v6195, %v6207
  %v6210 = vmul.f32 %v6208, %v6208
  %v6211 = vmul.f32 %v6209, %v6209
  %v6212 = vsel %vm238, %v6210, 0.0
  %6213 = vadd.xlane.f32.xlu0 %v6212
  %v6214 = vpop.xlane.xlu0 %6213
  %v6215 = vsel %vm238, %v6211, 0.0
  %6216 = vadd.xlane.f32.xlu0 %v6215
  %v6217 = vpop.xlane.xlu0 %6216
  %v6218 = vmul.f32 %v6214, %v1822
  %v6219 = vmul.f32 %v6217, %v1822
  %v6220 = vadd.f32 %v6218, 1e-05
  %v6221 = vadd.f32 %v6219, 1e-05
  %v6222 = vrsqrt.pop %v6220
  %v6223 = vrsqrt.pop %v6221
  %v6224 = vmul.f32 %v6208, %v6222
  %v6225 = vmul.f32 %v6209, %v6223
  %v6227 = vlaneseq
  %v6228 = vshrl.u32 %v6227, 7
  %v6229 = vsub.s32 0, %v6228
  %v6230 = vrot.slane %v6197, %v6229
  %v6232 = vmul.f32 %v6224, %v6230
  %v6233 = vmul.f32 %v6225, %v6230
  %v6235 = vlaneseq
  %v6236 = vshrl.u32 %v6235, 7
  %v6237 = vsub.s32 0, %v6236
  %v6238 = vrot.slane %v6199, %v6237
  %v6240 = vadd.f32 %v6232, %v6238
  %v6241 = vadd.f32 %v6233, %v6238
  %v6242 = vpack.c.bf16 %v6241, %v6240
  %s6243 = scalar_lea.vmem %s13, 192
  %v6244 = vld [vmem:[%s6243] sm:$0xff]
  %v6245 = vld [vmem:[%s6243 + $0x8] sm:$0xff]
  %v6246 = vld [vmem:[%s6243 + $0x10] sm:$0xff]
  %v6247 = vld [vmem:[%s6243 + $0x18] sm:$0xff]
  %v6248 = vld [vmem:[%s6243 + $0x20] sm:$0xff]
  %v6249 = vld [vmem:[%s6243 + $0x28] sm:$0xff]
  %v6250 = vld [vmem:[%s6243 + $0x30] sm:$0xff]
  %v6251 = vld [vmem:[%s6243 + $0x38] sm:$0xff]
  %s6252 = scalar_lea.vmem %s15, 6
  %v6253 = vld [vmem:[%s6252] sm:$0x3]
  %v6255 = vlaneseq
  %v6256 = vshrl.u32 %v6255, 7
  %v6257 = vsub.s32 0, %v6256
  %v6258 = vrot.slane %v6253, %v6257
  %v6259 = vlaneseq
  %v6260 = vshrl.u32 %v6259, 7
  %v6261 = vsub.s32 1, %v6260
  %v6262 = vrot.slane %v6253, %v6261
  %v6273 = vunpack.c.l.b16 %v6244
  %v6274 = vunpack.c.h.b16 %v6244
  %v6275 = vunpack.c.l.b16 %v6245
  %v6276 = vunpack.c.h.b16 %v6245
  %v6277 = vunpack.c.l.b16 %v6246
  %v6278 = vunpack.c.h.b16 %v6246
  %v6279 = vunpack.c.l.b16 %v6247
  %v6280 = vunpack.c.h.b16 %v6247
  %v6281 = vunpack.c.l.b16 %v6248
  %v6282 = vunpack.c.h.b16 %v6248
  %v6283 = vunpack.c.l.b16 %v6249
  %v6284 = vunpack.c.h.b16 %v6249
  %v6285 = vunpack.c.l.b16 %v6250
  %v6286 = vunpack.c.h.b16 %v6250
  %v6287 = vunpack.c.l.b16 %v6251
  %v6288 = vunpack.c.h.b16 %v6251
  %v6289 = vpack.c.b16 %v6275, %v6273
  %v6290 = vpack.c.b16 %v6276, %v6274
  %v6291 = vpack.c.b16 %v6279, %v6277
  %v6292 = vpack.c.b16 %v6280, %v6278
  %v6293 = vpack.c.b16 %v6283, %v6281
  %v6294 = vpack.c.b16 %v6284, %v6282
  %v6295 = vpack.c.b16 %v6287, %v6285
  %v6296 = vpack.c.b16 %v6288, %v6286
  %v6306 = vsel %vm238, %v6242, 0
  %6308 = vmatprep.subr.bf16.mxu0 %v6290
  %6309 = vmatpush1.bf16.msra.mxu0 %v6289
  %6310 = vmatprep.subr.bf16.mxu0 %v6292
  %6311 = vmatpush1.bf16.msra.mxu0 %v6291
  %6312 = vmatprep.subr.bf16.mxu0 %v6294
  %6313 = vmatpush1.bf16.msra.mxu0 %v6293
  %6314 = vmatprep.subr.bf16.mxu0 %v6296
  %6315 = vmatpush1.bf16.msra.mxu0 %v6295
  %6316 = vmatprep.subr.bf16.mxu0 0
  %6317 = vmatpush1.bf16.msra.mxu0 0
  %6318 = vmatprep.subr.bf16.mxu0 0
  %6319 = vmatpush1.bf16.msra.mxu0 0
  %6320 = vmatprep.subr.bf16.mxu0 0
  %6321 = vmatpush1.bf16.msra.mxu0 0
  %6322 = vmatprep.subr.bf16.mxu0 0
  %6323 = vmatpush1.bf16.msra.mxu0 0
  %6324 = vmatprep.subr.bf16.mxu0 0
  %6325 = vmatpush1.bf16.msra.mxu0 0
  %6326 = vmatprep.subr.bf16.mxu0 0
  %6327 = vmatpush1.bf16.msra.mxu0 0
  %6328 = vmatprep.subr.bf16.mxu0 0
  %6329 = vmatpush1.bf16.msra.mxu0 0
  %6330 = vmatprep.subr.bf16.mxu0 0
  %6331 = vmatpush1.bf16.msra.mxu0 0
  %6332 = vmatprep.subr.bf16.mxu0 0
  %6333 = vmatpush1.bf16.msra.mxu0 0
  %6334 = vmatprep.subr.bf16.mxu0 0
  %6335 = vmatpush1.bf16.msra.mxu0 0
  %6336 = vmatprep.subr.bf16.mxu0 0
  %6337 = vmatpush1.bf16.msra.mxu0 0
  %6338 = vmatprep.subr.bf16.mxu0 0
  %6339 = vmatpush1.bf16.msra.mxu0 0
  %6340 = vmatprep.mubr.bf16.mxu0 0
  %6341 = vmatmul.mubr.bf16.gmra.mrb[0].mxu0 %v6306
  %v6342 = vpop.f32.mrb[0].mxu0
  %v6343 = vadd.f32 %v6258, %v6342
  %v6344 = vpop.f32.mrb[0].mxu0
  %v6345 = vadd.f32 %v6262, %v6344
  %v6346 = vpop.f32.mrb[0].mxu0
  %v6347 = vadd.f32 %v6258, %v6346
  %v6348 = vpop.f32.mrb[0].mxu0
  %v6349 = vadd.f32 %v6262, %v6348
  %6350 = vdwg.mxu0
  %6351 = vxpose.xlu0.b32.start [1/16] %v6343, 128
  %6352 = vxpose.xlu0.b32.cont [2/16] %v6347, 128
  %6353 = vxpose.xlu0.b32.cont [3/16] 0.0, 128
  %6354 = vxpose.xlu0.b32.cont [4/16] 0.0, 128
  %6355 = vxpose.xlu0.b32.cont [5/16] 0.0, 128
  %6356 = vxpose.xlu0.b32.cont [6/16] 0.0, 128
  %6357 = vxpose.xlu0.b32.cont [7/16] 0.0, 128
  %6358 = vxpose.xlu0.b32.cont [8/16] 0.0, 128
  %6359 = vxpose.xlu0.b32.cont [9/16] 0.0, 128
  %6360 = vxpose.xlu0.b32.cont [10/16] 0.0, 128
  %6361 = vxpose.xlu0.b32.cont [11/16] 0.0, 128
  %6362 = vxpose.xlu0.b32.cont [12/16] 0.0, 128
  %6363 = vxpose.xlu0.b32.cont [13/16] 0.0, 128
  %6364 = vxpose.xlu0.b32.cont [14/16] 0.0, 128
  %6365 = vxpose.xlu0.b32.cont [15/16] 0.0, 128
  %6366 = vxpose.xlu0.b32.end [16/16] 0.0, 128
  %v6367 = vpop.trf.xlu0
  %v6368 = vpop.trf.xlu0
  %v6369 = vpop.trf.xlu0
  %v6370 = vpop.trf.xlu0
  %v6371 = vpop.trf.xlu0
  %v6372 = vpop.trf.xlu0
  %v6373 = vpop.trf.xlu0
  %v6374 = vpop.trf.xlu0
  %v6375 = vpop.trf.xlu0
  %v6376 = vpop.trf.xlu0
  %v6377 = vpop.trf.xlu0
  %v6378 = vpop.trf.xlu0
  %v6379 = vpop.trf.xlu0
  %v6380 = vpop.trf.xlu0
  %v6381 = vpop.trf.xlu0
  %v6382 = vpop.trf.xlu0
  %6383 = vxpose.xlu0.b32.start [1/16] %v6345, 128
  %6384 = vxpose.xlu0.b32.cont [2/16] %v6349, 128
  %6385 = vxpose.xlu0.b32.cont [3/16] 0.0, 128
  %6386 = vxpose.xlu0.b32.cont [4/16] 0.0, 128
  %6387 = vxpose.xlu0.b32.cont [5/16] 0.0, 128
  %6388 = vxpose.xlu0.b32.cont [6/16] 0.0, 128
  %6389 = vxpose.xlu0.b32.cont [7/16] 0.0, 128
  %6390 = vxpose.xlu0.b32.cont [8/16] 0.0, 128
  %6391 = vxpose.xlu0.b32.cont [9/16] 0.0, 128
  %6392 = vxpose.xlu0.b32.cont [10/16] 0.0, 128
  %6393 = vxpose.xlu0.b32.cont [11/16] 0.0, 128
  %6394 = vxpose.xlu0.b32.cont [12/16] 0.0, 128
  %6395 = vxpose.xlu0.b32.cont [13/16] 0.0, 128
  %6396 = vxpose.xlu0.b32.cont [14/16] 0.0, 128
  %6397 = vxpose.xlu0.b32.cont [15/16] 0.0, 128
  %6398 = vxpose.xlu0.b32.end [16/16] 0.0, 128
  %v6399 = vpop.trf.xlu0
  %v6400 = vpop.trf.xlu0
  %v6401 = vpop.trf.xlu0
  %v6402 = vpop.trf.xlu0
  %v6403 = vpop.trf.xlu0
  %v6404 = vpop.trf.xlu0
  %v6405 = vpop.trf.xlu0
  %v6406 = vpop.trf.xlu0
  %v6407 = vpop.trf.xlu0
  %v6408 = vpop.trf.xlu0
  %v6409 = vpop.trf.xlu0
  %v6410 = vpop.trf.xlu0
  %v6411 = vpop.trf.xlu0
  %v6412 = vpop.trf.xlu0
  %v6413 = vpop.trf.xlu0
  %v6414 = vpop.trf.xlu0
  %v6415 = vpack.c.bf16 %v6367, %v6367
  %v6416 = vpack.c.bf16 %v6368, %v6368
  %v6417 = vpack.c.bf16 %v6369, %v6369
  %v6418 = vpack.c.bf16 %v6370, %v6370
  %v6419 = vpack.c.bf16 %v6371, %v6371
  %v6420 = vpack.c.bf16 %v6372, %v6372
  %v6421 = vpack.c.bf16 %v6373, %v6373
  %v6422 = vpack.c.bf16 %v6374, %v6374
  %v6423 = vpack.c.bf16 %v6375, %v6375
  %v6424 = vpack.c.bf16 %v6376, %v6376
  %v6425 = vpack.c.bf16 %v6377, %v6377
  %v6426 = vpack.c.bf16 %v6378, %v6378
  %v6427 = vpack.c.bf16 %v6379, %v6379
  %v6428 = vpack.c.bf16 %v6380, %v6380
  %v6429 = vpack.c.bf16 %v6381, %v6381
  %v6430 = vpack.c.bf16 %v6382, %v6382
  %6431 = vxpose.xlu0.c.b16.start [1/8] %v6415, 128
  %6432 = vxpose.xlu0.c.b16.cont [2/8] 0, 128
  %6433 = vxpose.xlu0.c.b16.cont [3/8] 0, 128
  %6434 = vxpose.xlu0.c.b16.cont [4/8] 0, 128
  %6435 = vxpose.xlu0.c.b16.cont [5/8] 0, 128
  %6436 = vxpose.xlu0.c.b16.cont [6/8] 0, 128
  %6437 = vxpose.xlu0.c.b16.cont [7/8] 0, 128
  %6438 = vxpose.xlu0.c.b16.end [8/8] 0, 128
  %v6439 = vpop.trf.xlu0
  %v6440 = vpop.trf.xlu0
  %v6441 = vpop.trf.xlu0
  %v6442 = vpop.trf.xlu0
  %v6443 = vpop.trf.xlu0
  %v6444 = vpop.trf.xlu0
  %v6445 = vpop.trf.xlu0
  %v6446 = vpop.trf.xlu0
  %v6448 = vsel %vm381, %v6439, 0
  %v6451 = vsel %vm385, %v6423, 0
  %6453 = vmatprep.subr.bf16.mxu0 0
  %6454 = vmatpush1.bf16.msra.mxu0 %v6451
  %6455 = vmatprep.subr.bf16.mxu0 0
  %6456 = vmatpush1.bf16.msra.mxu0 0
  %6457 = vmatprep.subr.bf16.mxu0 0
  %6458 = vmatpush1.bf16.msra.mxu0 0
  %6459 = vmatprep.subr.bf16.mxu0 0
  %6460 = vmatpush1.bf16.msra.mxu0 0
  %6461 = vmatprep.subr.bf16.mxu0 0
  %6462 = vmatpush1.bf16.msra.mxu0 0
  %6463 = vmatprep.subr.bf16.mxu0 0
  %6464 = vmatpush1.bf16.msra.mxu0 0
  %6465 = vmatprep.subr.bf16.mxu0 0
  %6466 = vmatpush1.bf16.msra.mxu0 0
  %6467 = vmatprep.subr.bf16.mxu0 0
  %6468 = vmatpush1.bf16.msra.mxu0 0
  %6469 = vmatprep.subr.bf16.mxu0 0
  %6470 = vmatpush1.bf16.msra.mxu0 0
  %6471 = vmatprep.subr.bf16.mxu0 0
  %6472 = vmatpush1.bf16.msra.mxu0 0
  %6473 = vmatprep.subr.bf16.mxu0 0
  %6474 = vmatpush1.bf16.msra.mxu0 0
  %6475 = vmatprep.subr.bf16.mxu0 0
  %6476 = vmatpush1.bf16.msra.mxu0 0
  %6477 = vmatprep.subr.bf16.mxu0 0
  %6478 = vmatpush1.bf16.msra.mxu0 0
  %6479 = vmatprep.subr.bf16.mxu0 0
  %6480 = vmatpush1.bf16.msra.mxu0 0
  %6481 = vmatprep.subr.bf16.mxu0 0
  %6482 = vmatpush1.bf16.msra.mxu0 0
  %6483 = vmatprep.subr.bf16.mxu0 0
  %6484 = vmatpush1.bf16.msra.mxu0 0
  %6485 = vmatprep.mubr.bf16.mxu0 0
  %6486 = vmatmul.mubr.bf16.gmra.mrb[0].mxu0 %v6448
  %v6487 = vpop.f32.mrb[0].mxu0
  %v6488 = vadd.f32 %v175, %v6487
  %v6489 = vpop.f32.mrb[0].mxu0
  %v6490 = vpop.f32.mrb[0].mxu0
  %v6491 = vadd.f32 %v176, %v6490
  %v6492 = vpop.f32.mrb[0].mxu0
  %6493 = vdwg.mxu0
  %6494 = vxpose.xlu0.c.b16.start [1/8] %v6416, 128
  %6495 = vxpose.xlu0.c.b16.cont [2/8] 0, 128
  %6496 = vxpose.xlu0.c.b16.cont [3/8] 0, 128
  %6497 = vxpose.xlu0.c.b16.cont [4/8] 0, 128
  %6498 = vxpose.xlu0.c.b16.cont [5/8] 0, 128
  %6499 = vxpose.xlu0.c.b16.cont [6/8] 0, 128
  %6500 = vxpose.xlu0.c.b16.cont [7/8] 0, 128
  %6501 = vxpose.xlu0.c.b16.end [8/8] 0, 128
  %v6502 = vpop.trf.xlu0
  %v6503 = vpop.trf.xlu0
  %v6504 = vpop.trf.xlu0
  %v6505 = vpop.trf.xlu0
  %v6506 = vpop.trf.xlu0
  %v6507 = vpop.trf.xlu0
  %v6508 = vpop.trf.xlu0
  %v6509 = vpop.trf.xlu0
  %v6511 = vsel %vm381, %v6502, 0
  %v6514 = vsel %vm385, %v6424, 0
  %6516 = vmatprep.subr.bf16.mxu0 0
  %6517 = vmatpush1.bf16.msra.mxu0 %v6514
  %6518 = vmatprep.subr.bf16.mxu0 0
  %6519 = vmatpush1.bf16.msra.mxu0 0
  %6520 = vmatprep.subr.bf16.mxu0 0
  %6521 = vmatpush1.bf16.msra.mxu0 0
  %6522 = vmatprep.subr.bf16.mxu0 0
  %6523 = vmatpush1.bf16.msra.mxu0 0
  %6524 = vmatprep.subr.bf16.mxu0 0
  %6525 = vmatpush1.bf16.msra.mxu0 0
  %6526 = vmatprep.subr.bf16.mxu0 0
  %6527 = vmatpush1.bf16.msra.mxu0 0
  %6528 = vmatprep.subr.bf16.mxu0 0
  %6529 = vmatpush1.bf16.msra.mxu0 0
  %6530 = vmatprep.subr.bf16.mxu0 0
  %6531 = vmatpush1.bf16.msra.mxu0 0
  %6532 = vmatprep.subr.bf16.mxu0 0
  %6533 = vmatpush1.bf16.msra.mxu0 0
  %6534 = vmatprep.subr.bf16.mxu0 0
  %6535 = vmatpush1.bf16.msra.mxu0 0
  %6536 = vmatprep.subr.bf16.mxu0 0
  %6537 = vmatpush1.bf16.msra.mxu0 0
  %6538 = vmatprep.subr.bf16.mxu0 0
  %6539 = vmatpush1.bf16.msra.mxu0 0
  %6540 = vmatprep.subr.bf16.mxu0 0
  %6541 = vmatpush1.bf16.msra.mxu0 0
  %6542 = vmatprep.subr.bf16.mxu0 0
  %6543 = vmatpush1.bf16.msra.mxu0 0
  %6544 = vmatprep.subr.bf16.mxu0 0
  %6545 = vmatpush1.bf16.msra.mxu0 0
  %6546 = vmatprep.subr.bf16.mxu0 0
  %6547 = vmatpush1.bf16.msra.mxu0 0
  %6548 = vmatprep.mubr.bf16.mxu0 0
  %6549 = vmatmul.mubr.bf16.gmra.mrb[0].mxu0 %v6511
  %v6550 = vpop.f32.mrb[0].mxu0
  %v6551 = vadd.f32 %v175, %v6550
  %v6552 = vpop.f32.mrb[0].mxu0
  %v6553 = vpop.f32.mrb[0].mxu0
  %v6554 = vadd.f32 %v176, %v6553
  %v6555 = vpop.f32.mrb[0].mxu0
  %6556 = vdwg.mxu0
  %6557 = vxpose.xlu0.c.b16.start [1/8] %v6417, 128
  %6558 = vxpose.xlu0.c.b16.cont [2/8] 0, 128
  %6559 = vxpose.xlu0.c.b16.cont [3/8] 0, 128
  %6560 = vxpose.xlu0.c.b16.cont [4/8] 0, 128
  %6561 = vxpose.xlu0.c.b16.cont [5/8] 0, 128
  %6562 = vxpose.xlu0.c.b16.cont [6/8] 0, 128
  %6563 = vxpose.xlu0.c.b16.cont [7/8] 0, 128
  %6564 = vxpose.xlu0.c.b16.end [8/8] 0, 128
  %v6565 = vpop.trf.xlu0
  %v6566 = vpop.trf.xlu0
  %v6567 = vpop.trf.xlu0
  %v6568 = vpop.trf.xlu0
  %v6569 = vpop.trf.xlu0
  %v6570 = vpop.trf.xlu0
  %v6571 = vpop.trf.xlu0
  %v6572 = vpop.trf.xlu0
  %v6574 = vsel %vm381, %v6565, 0
  %v6577 = vsel %vm385, %v6425, 0
  %6579 = vmatprep.subr.bf16.mxu0 0
  %6580 = vmatpush1.bf16.msra.mxu0 %v6577
  %6581 = vmatprep.subr.bf16.mxu0 0
  %6582 = vmatpush1.bf16.msra.mxu0 0
  %6583 = vmatprep.subr.bf16.mxu0 0
  %6584 = vmatpush1.bf16.msra.mxu0 0
  %6585 = vmatprep.subr.bf16.mxu0 0
  %6586 = vmatpush1.bf16.msra.mxu0 0
  %6587 = vmatprep.subr.bf16.mxu0 0
  %6588 = vmatpush1.bf16.msra.mxu0 0
  %6589 = vmatprep.subr.bf16.mxu0 0
  %6590 = vmatpush1.bf16.msra.mxu0 0
  %6591 = vmatprep.subr.bf16.mxu0 0
  %6592 = vmatpush1.bf16.msra.mxu0 0
  %6593 = vmatprep.subr.bf16.mxu0 0
  %6594 = vmatpush1.bf16.msra.mxu0 0
  %6595 = vmatprep.subr.bf16.mxu0 0
  %6596 = vmatpush1.bf16.msra.mxu0 0
  %6597 = vmatprep.subr.bf16.mxu0 0
  %6598 = vmatpush1.bf16.msra.mxu0 0
  %6599 = vmatprep.subr.bf16.mxu0 0
  %6600 = vmatpush1.bf16.msra.mxu0 0
  %6601 = vmatprep.subr.bf16.mxu0 0
  %6602 = vmatpush1.bf16.msra.mxu0 0
  %6603 = vmatprep.subr.bf16.mxu0 0
  %6604 = vmatpush1.bf16.msra.mxu0 0
  %6605 = vmatprep.subr.bf16.mxu0 0
  %6606 = vmatpush1.bf16.msra.mxu0 0
  %6607 = vmatprep.subr.bf16.mxu0 0
  %6608 = vmatpush1.bf16.msra.mxu0 0
  %6609 = vmatprep.subr.bf16.mxu0 0
  %6610 = vmatpush1.bf16.msra.mxu0 0
  %6611 = vmatprep.mubr.bf16.mxu0 0
  %6612 = vmatmul.mubr.bf16.gmra.mrb[0].mxu0 %v6574
  %v6613 = vpop.f32.mrb[0].mxu0
  %v6614 = vadd.f32 %v175, %v6613
  %v6615 = vpop.f32.mrb[0].mxu0
  %v6616 = vpop.f32.mrb[0].mxu0
  %v6617 = vadd.f32 %v176, %v6616
  %v6618 = vpop.f32.mrb[0].mxu0
  %6619 = vdwg.mxu0
  %6620 = vxpose.xlu0.c.b16.start [1/8] %v6418, 128
  %6621 = vxpose.xlu0.c.b16.cont [2/8] 0, 128
  %6622 = vxpose.xlu0.c.b16.cont [3/8] 0, 128
  %6623 = vxpose.xlu0.c.b16.cont [4/8] 0, 128
  %6624 = vxpose.xlu0.c.b16.cont [5/8] 0, 128
  %6625 = vxpose.xlu0.c.b16.cont [6/8] 0, 128
  %6626 = vxpose.xlu0.c.b16.cont [7/8] 0, 128
  %6627 = vxpose.xlu0.c.b16.end [8/8] 0, 128
  %v6628 = vpop.trf.xlu0
  %v6629 = vpop.trf.xlu0
  %v6630 = vpop.trf.xlu0
  %v6631 = vpop.trf.xlu0
  %v6632 = vpop.trf.xlu0
  %v6633 = vpop.trf.xlu0
  %v6634 = vpop.trf.xlu0
  %v6635 = vpop.trf.xlu0
  %v6637 = vsel %vm381, %v6628, 0
  %v6640 = vsel %vm385, %v6426, 0
  %6642 = vmatprep.subr.bf16.mxu0 0
  %6643 = vmatpush1.bf16.msra.mxu0 %v6640
  %6644 = vmatprep.subr.bf16.mxu0 0
  %6645 = vmatpush1.bf16.msra.mxu0 0
  %6646 = vmatprep.subr.bf16.mxu0 0
  %6647 = vmatpush1.bf16.msra.mxu0 0
  %6648 = vmatprep.subr.bf16.mxu0 0
  %6649 = vmatpush1.bf16.msra.mxu0 0
  %6650 = vmatprep.subr.bf16.mxu0 0
  %6651 = vmatpush1.bf16.msra.mxu0 0
  %6652 = vmatprep.subr.bf16.mxu0 0
  %6653 = vmatpush1.bf16.msra.mxu0 0
  %6654 = vmatprep.subr.bf16.mxu0 0
  %6655 = vmatpush1.bf16.msra.mxu0 0
  %6656 = vmatprep.subr.bf16.mxu0 0
  %6657 = vmatpush1.bf16.msra.mxu0 0
  %6658 = vmatprep.subr.bf16.mxu0 0
  %6659 = vmatpush1.bf16.msra.mxu0 0
  %6660 = vmatprep.subr.bf16.mxu0 0
  %6661 = vmatpush1.bf16.msra.mxu0 0
  %6662 = vmatprep.subr.bf16.mxu0 0
  %6663 = vmatpush1.bf16.msra.mxu0 0
  %6664 = vmatprep.subr.bf16.mxu0 0
  %6665 = vmatpush1.bf16.msra.mxu0 0
  %6666 = vmatprep.subr.bf16.mxu0 0
  %6667 = vmatpush1.bf16.msra.mxu0 0
  %6668 = vmatprep.subr.bf16.mxu0 0
  %6669 = vmatpush1.bf16.msra.mxu0 0
  %6670 = vmatprep.subr.bf16.mxu0 0
  %6671 = vmatpush1.bf16.msra.mxu0 0
  %6672 = vmatprep.subr.bf16.mxu0 0
  %6673 = vmatpush1.bf16.msra.mxu0 0
  %6674 = vmatprep.mubr.bf16.mxu0 0
  %6675 = vmatmul.mubr.bf16.gmra.mrb[0].mxu0 %v6637
  %v6676 = vpop.f32.mrb[0].mxu0
  %v6677 = vadd.f32 %v175, %v6676
  %v6678 = vpop.f32.mrb[0].mxu0
  %v6679 = vpop.f32.mrb[0].mxu0
  %v6680 = vadd.f32 %v176, %v6679
  %v6681 = vpop.f32.mrb[0].mxu0
  %6682 = vdwg.mxu0
  %6683 = vxpose.xlu0.c.b16.start [1/8] %v6419, 128
  %6684 = vxpose.xlu0.c.b16.cont [2/8] 0, 128
  %6685 = vxpose.xlu0.c.b16.cont [3/8] 0, 128
  %6686 = vxpose.xlu0.c.b16.cont [4/8] 0, 128
  %6687 = vxpose.xlu0.c.b16.cont [5/8] 0, 128
  %6688 = vxpose.xlu0.c.b16.cont [6/8] 0, 128
  %6689 = vxpose.xlu0.c.b16.cont [7/8] 0, 128
  %6690 = vxpose.xlu0.c.b16.end [8/8] 0, 128
  %v6691 = vpop.trf.xlu0
  %v6692 = vpop.trf.xlu0
  %v6693 = vpop.trf.xlu0
  %v6694 = vpop.trf.xlu0
  %v6695 = vpop.trf.xlu0
  %v6696 = vpop.trf.xlu0
  %v6697 = vpop.trf.xlu0
  %v6698 = vpop.trf.xlu0
  %v6700 = vsel %vm381, %v6691, 0
  %v6703 = vsel %vm385, %v6427, 0
  %6705 = vmatprep.subr.bf16.mxu0 0
  %6706 = vmatpush1.bf16.msra.mxu0 %v6703
  %6707 = vmatprep.subr.bf16.mxu0 0
  %6708 = vmatpush1.bf16.msra.mxu0 0
  %6709 = vmatprep.subr.bf16.mxu0 0
  %6710 = vmatpush1.bf16.msra.mxu0 0
  %6711 = vmatprep.subr.bf16.mxu0 0
  %6712 = vmatpush1.bf16.msra.mxu0 0
  %6713 = vmatprep.subr.bf16.mxu0 0
  %6714 = vmatpush1.bf16.msra.mxu0 0
  %6715 = vmatprep.subr.bf16.mxu0 0
  %6716 = vmatpush1.bf16.msra.mxu0 0
  %6717 = vmatprep.subr.bf16.mxu0 0
  %6718 = vmatpush1.bf16.msra.mxu0 0
  %6719 = vmatprep.subr.bf16.mxu0 0
  %6720 = vmatpush1.bf16.msra.mxu0 0
  %6721 = vmatprep.subr.bf16.mxu0 0
  %6722 = vmatpush1.bf16.msra.mxu0 0
  %6723 = vmatprep.subr.bf16.mxu0 0
  %6724 = vmatpush1.bf16.msra.mxu0 0
  %6725 = vmatprep.subr.bf16.mxu0 0
  %6726 = vmatpush1.bf16.msra.mxu0 0
  %6727 = vmatprep.subr.bf16.mxu0 0
  %6728 = vmatpush1.bf16.msra.mxu0 0
  %6729 = vmatprep.subr.bf16.mxu0 0
  %6730 = vmatpush1.bf16.msra.mxu0 0
  %6731 = vmatprep.subr.bf16.mxu0 0
  %6732 = vmatpush1.bf16.msra.mxu0 0
  %6733 = vmatprep.subr.bf16.mxu0 0
  %6734 = vmatpush1.bf16.msra.mxu0 0
  %6735 = vmatprep.subr.bf16.mxu0 0
  %6736 = vmatpush1.bf16.msra.mxu0 0
  %6737 = vmatprep.mubr.bf16.mxu0 0
  %6738 = vmatmul.mubr.bf16.gmra.mrb[0].mxu0 %v6700
  %v6739 = vpop.f32.mrb[0].mxu0
  %v6740 = vadd.f32 %v175, %v6739
  %v6741 = vpop.f32.mrb[0].mxu0
  %v6742 = vpop.f32.mrb[0].mxu0
  %v6743 = vadd.f32 %v176, %v6742
  %v6744 = vpop.f32.mrb[0].mxu0
  %6745 = vdwg.mxu0
  %6746 = vxpose.xlu0.c.b16.start [1/8] %v6420, 128
  %6747 = vxpose.xlu0.c.b16.cont [2/8] 0, 128
  %6748 = vxpose.xlu0.c.b16.cont [3/8] 0, 128
  %6749 = vxpose.xlu0.c.b16.cont [4/8] 0, 128
  %6750 = vxpose.xlu0.c.b16.cont [5/8] 0, 128
  %6751 = vxpose.xlu0.c.b16.cont [6/8] 0, 128
  %6752 = vxpose.xlu0.c.b16.cont [7/8] 0, 128
  %6753 = vxpose.xlu0.c.b16.end [8/8] 0, 128
  %v6754 = vpop.trf.xlu0
  %v6755 = vpop.trf.xlu0
  %v6756 = vpop.trf.xlu0
  %v6757 = vpop.trf.xlu0
  %v6758 = vpop.trf.xlu0
  %v6759 = vpop.trf.xlu0
  %v6760 = vpop.trf.xlu0
  %v6761 = vpop.trf.xlu0
  %v6763 = vsel %vm381, %v6754, 0
  %v6766 = vsel %vm385, %v6428, 0
  %6768 = vmatprep.subr.bf16.mxu0 0
  %6769 = vmatpush1.bf16.msra.mxu0 %v6766
  %6770 = vmatprep.subr.bf16.mxu0 0
  %6771 = vmatpush1.bf16.msra.mxu0 0
  %6772 = vmatprep.subr.bf16.mxu0 0
  %6773 = vmatpush1.bf16.msra.mxu0 0
  %6774 = vmatprep.subr.bf16.mxu0 0
  %6775 = vmatpush1.bf16.msra.mxu0 0
  %6776 = vmatprep.subr.bf16.mxu0 0
  %6777 = vmatpush1.bf16.msra.mxu0 0
  %6778 = vmatprep.subr.bf16.mxu0 0
  %6779 = vmatpush1.bf16.msra.mxu0 0
  %6780 = vmatprep.subr.bf16.mxu0 0
  %6781 = vmatpush1.bf16.msra.mxu0 0
  %6782 = vmatprep.subr.bf16.mxu0 0
  %6783 = vmatpush1.bf16.msra.mxu0 0
  %6784 = vmatprep.subr.bf16.mxu0 0
  %6785 = vmatpush1.bf16.msra.mxu0 0
  %6786 = vmatprep.subr.bf16.mxu0 0
  %6787 = vmatpush1.bf16.msra.mxu0 0
  %6788 = vmatprep.subr.bf16.mxu0 0
  %6789 = vmatpush1.bf16.msra.mxu0 0
  %6790 = vmatprep.subr.bf16.mxu0 0
  %6791 = vmatpush1.bf16.msra.mxu0 0
  %6792 = vmatprep.subr.bf16.mxu0 0
  %6793 = vmatpush1.bf16.msra.mxu0 0
  %6794 = vmatprep.subr.bf16.mxu0 0
  %6795 = vmatpush1.bf16.msra.mxu0 0
  %6796 = vmatprep.subr.bf16.mxu0 0
  %6797 = vmatpush1.bf16.msra.mxu0 0
  %6798 = vmatprep.subr.bf16.mxu0 0
  %6799 = vmatpush1.bf16.msra.mxu0 0
  %6800 = vmatprep.mubr.bf16.mxu0 0
  %6801 = vmatmul.mubr.bf16.gmra.mrb[0].mxu0 %v6763
  %v6802 = vpop.f32.mrb[0].mxu0
  %v6803 = vadd.f32 %v175, %v6802
  %v6804 = vpop.f32.mrb[0].mxu0
  %v6805 = vpop.f32.mrb[0].mxu0
  %v6806 = vadd.f32 %v176, %v6805
  %v6807 = vpop.f32.mrb[0].mxu0
  %6808 = vdwg.mxu0
  %6809 = vxpose.xlu0.c.b16.start [1/8] %v6421, 128
  %6810 = vxpose.xlu0.c.b16.cont [2/8] 0, 128
  %6811 = vxpose.xlu0.c.b16.cont [3/8] 0, 128
  %6812 = vxpose.xlu0.c.b16.cont [4/8] 0, 128
  %6813 = vxpose.xlu0.c.b16.cont [5/8] 0, 128
  %6814 = vxpose.xlu0.c.b16.cont [6/8] 0, 128
  %6815 = vxpose.xlu0.c.b16.cont [7/8] 0, 128
  %6816 = vxpose.xlu0.c.b16.end [8/8] 0, 128
  %v6817 = vpop.trf.xlu0
  %v6818 = vpop.trf.xlu0
  %v6819 = vpop.trf.xlu0
  %v6820 = vpop.trf.xlu0
  %v6821 = vpop.trf.xlu0
  %v6822 = vpop.trf.xlu0
  %v6823 = vpop.trf.xlu0
  %v6824 = vpop.trf.xlu0
  %v6826 = vsel %vm381, %v6817, 0
  %v6829 = vsel %vm385, %v6429, 0
  %6831 = vmatprep.subr.bf16.mxu0 0
  %6832 = vmatpush1.bf16.msra.mxu0 %v6829
  %6833 = vmatprep.subr.bf16.mxu0 0
  %6834 = vmatpush1.bf16.msra.mxu0 0
  %6835 = vmatprep.subr.bf16.mxu0 0
  %6836 = vmatpush1.bf16.msra.mxu0 0
  %6837 = vmatprep.subr.bf16.mxu0 0
  %6838 = vmatpush1.bf16.msra.mxu0 0
  %6839 = vmatprep.subr.bf16.mxu0 0
  %6840 = vmatpush1.bf16.msra.mxu0 0
  %6841 = vmatprep.subr.bf16.mxu0 0
  %6842 = vmatpush1.bf16.msra.mxu0 0
  %6843 = vmatprep.subr.bf16.mxu0 0
  %6844 = vmatpush1.bf16.msra.mxu0 0
  %6845 = vmatprep.subr.bf16.mxu0 0
  %6846 = vmatpush1.bf16.msra.mxu0 0
  %6847 = vmatprep.subr.bf16.mxu0 0
  %6848 = vmatpush1.bf16.msra.mxu0 0
  %6849 = vmatprep.subr.bf16.mxu0 0
  %6850 = vmatpush1.bf16.msra.mxu0 0
  %6851 = vmatprep.subr.bf16.mxu0 0
  %6852 = vmatpush1.bf16.msra.mxu0 0
  %6853 = vmatprep.subr.bf16.mxu0 0
  %6854 = vmatpush1.bf16.msra.mxu0 0
  %6855 = vmatprep.subr.bf16.mxu0 0
  %6856 = vmatpush1.bf16.msra.mxu0 0
  %6857 = vmatprep.subr.bf16.mxu0 0
  %6858 = vmatpush1.bf16.msra.mxu0 0
  %6859 = vmatprep.subr.bf16.mxu0 0
  %6860 = vmatpush1.bf16.msra.mxu0 0
  %6861 = vmatprep.subr.bf16.mxu0 0
  %6862 = vmatpush1.bf16.msra.mxu0 0
  %6863 = vmatprep.mubr.bf16.mxu0 0
  %6864 = vmatmul.mubr.bf16.gmra.mrb[0].mxu0 %v6826
  %v6865 = vpop.f32.mrb[0].mxu0
  %v6866 = vadd.f32 %v175, %v6865
  %v6867 = vpop.f32.mrb[0].mxu0
  %v6868 = vpop.f32.mrb[0].mxu0
  %v6869 = vadd.f32 %v176, %v6868
  %v6870 = vpop.f32.mrb[0].mxu0
  %6871 = vdwg.mxu0
  %6872 = vxpose.xlu0.c.b16.start [1/8] %v6422, 128
  %6873 = vxpose.xlu0.c.b16.cont [2/8] 0, 128
  %6874 = vxpose.xlu0.c.b16.cont [3/8] 0, 128
  %6875 = vxpose.xlu0.c.b16.cont [4/8] 0, 128
  %6876 = vxpose.xlu0.c.b16.cont [5/8] 0, 128
  %6877 = vxpose.xlu0.c.b16.cont [6/8] 0, 128
  %6878 = vxpose.xlu0.c.b16.cont [7/8] 0, 128
  %6879 = vxpose.xlu0.c.b16.end [8/8] 0, 128
  %v6880 = vpop.trf.xlu0
  %v6881 = vpop.trf.xlu0
  %v6882 = vpop.trf.xlu0
  %v6883 = vpop.trf.xlu0
  %v6884 = vpop.trf.xlu0
  %v6885 = vpop.trf.xlu0
  %v6886 = vpop.trf.xlu0
  %v6887 = vpop.trf.xlu0
  %v6889 = vsel %vm381, %v6880, 0
  %v6892 = vsel %vm385, %v6430, 0
  %6894 = vmatprep.subr.bf16.mxu0 0
  %6895 = vmatpush1.bf16.msra.mxu0 %v6892
  %6896 = vmatprep.subr.bf16.mxu0 0
  %6897 = vmatpush1.bf16.msra.mxu0 0
  %6898 = vmatprep.subr.bf16.mxu0 0
  %6899 = vmatpush1.bf16.msra.mxu0 0
  %6900 = vmatprep.subr.bf16.mxu0 0
  %6901 = vmatpush1.bf16.msra.mxu0 0
  %6902 = vmatprep.subr.bf16.mxu0 0
  %6903 = vmatpush1.bf16.msra.mxu0 0
  %6904 = vmatprep.subr.bf16.mxu0 0
  %6905 = vmatpush1.bf16.msra.mxu0 0
  %6906 = vmatprep.subr.bf16.mxu0 0
  %6907 = vmatpush1.bf16.msra.mxu0 0
  %6908 = vmatprep.subr.bf16.mxu0 0
  %6909 = vmatpush1.bf16.msra.mxu0 0
  %6910 = vmatprep.subr.bf16.mxu0 0
  %6911 = vmatpush1.bf16.msra.mxu0 0
  %6912 = vmatprep.subr.bf16.mxu0 0
  %6913 = vmatpush1.bf16.msra.mxu0 0
  %6914 = vmatprep.subr.bf16.mxu0 0
  %6915 = vmatpush1.bf16.msra.mxu0 0
  %6916 = vmatprep.subr.bf16.mxu0 0
  %6917 = vmatpush1.bf16.msra.mxu0 0
  %6918 = vmatprep.subr.bf16.mxu0 0
  %6919 = vmatpush1.bf16.msra.mxu0 0
  %6920 = vmatprep.subr.bf16.mxu0 0
  %6921 = vmatpush1.bf16.msra.mxu0 0
  %6922 = vmatprep.subr.bf16.mxu0 0
  %6923 = vmatpush1.bf16.msra.mxu0 0
  %6924 = vmatprep.subr.bf16.mxu0 0
  %6925 = vmatpush1.bf16.msra.mxu0 0
  %6926 = vmatprep.mubr.bf16.mxu0 0
  %6927 = vmatmul.mubr.bf16.gmra.mrb[0].mxu0 %v6889
  %v6928 = vpop.f32.mrb[0].mxu0
  %v6929 = vadd.f32 %v175, %v6928
  %v6930 = vpop.f32.mrb[0].mxu0
  %v6931 = vpop.f32.mrb[0].mxu0
  %v6932 = vadd.f32 %v176, %v6931
  %v6933 = vpop.f32.mrb[0].mxu0
  %6934 = vdwg.mxu0
  %v6935 = vsel %vm871, %v6488, -inf
  %6936 = vmax.xlane.f32.xlu0 %v6935
  %v6937 = vpop.xlane.xlu0 %6936
  %v6938 = vsel %vm871, %v6491, -inf
  %6939 = vmax.xlane.f32.xlu0 %v6938
  %v6940 = vpop.xlane.xlu0 %6939
  %v6941 = vsel %vm871, %v6551, -inf
  %6942 = vmax.xlane.f32.xlu0 %v6941
  %v6943 = vpop.xlane.xlu0 %6942
  %v6944 = vsel %vm871, %v6554, -inf
  %6945 = vmax.xlane.f32.xlu0 %v6944
  %v6946 = vpop.xlane.xlu0 %6945
  %v6947 = vsel %vm871, %v6614, -inf
  %6948 = vmax.xlane.f32.xlu0 %v6947
  %v6949 = vpop.xlane.xlu0 %6948
  %v6950 = vsel %vm871, %v6617, -inf
  %6951 = vmax.xlane.f32.xlu0 %v6950
  %v6952 = vpop.xlane.xlu0 %6951
  %v6953 = vsel %vm871, %v6677, -inf
  %6954 = vmax.xlane.f32.xlu0 %v6953
  %v6955 = vpop.xlane.xlu0 %6954
  %v6956 = vsel %vm871, %v6680, -inf
  %6957 = vmax.xlane.f32.xlu0 %v6956
  %v6958 = vpop.xlane.xlu0 %6957
  %v6959 = vsel %vm871, %v6740, -inf
  %6960 = vmax.xlane.f32.xlu0 %v6959
  %v6961 = vpop.xlane.xlu0 %6960
  %v6962 = vsel %vm871, %v6743, -inf
  %6963 = vmax.xlane.f32.xlu0 %v6962
  %v6964 = vpop.xlane.xlu0 %6963
  %v6965 = vsel %vm871, %v6803, -inf
  %6966 = vmax.xlane.f32.xlu0 %v6965
  %v6967 = vpop.xlane.xlu0 %6966
  %v6968 = vsel %vm871, %v6806, -inf
  %6969 = vmax.xlane.f32.xlu0 %v6968
  %v6970 = vpop.xlane.xlu0 %6969
  %v6971 = vsel %vm871, %v6866, -inf
  %6972 = vmax.xlane.f32.xlu0 %v6971
  %v6973 = vpop.xlane.xlu0 %6972
  %v6974 = vsel %vm871, %v6869, -inf
  %6975 = vmax.xlane.f32.xlu0 %v6974
  %v6976 = vpop.xlane.xlu0 %6975
  %v6977 = vsel %vm871, %v6929, -inf
  %6978 = vmax.xlane.f32.xlu0 %v6977
  %v6979 = vpop.xlane.xlu0 %6978
  %v6980 = vsel %vm871, %v6932, -inf
  %6981 = vmax.xlane.f32.xlu0 %v6980
  %v6982 = vpop.xlane.xlu0 %6981
  %v6983 = vsub.f32 %v6488, %v6937
  %v6984 = vsub.f32 %v6491, %v6940
  %v6985 = vsub.f32 %v6551, %v6943
  %v6986 = vsub.f32 %v6554, %v6946
  %v6987 = vsub.f32 %v6614, %v6949
  %v6988 = vsub.f32 %v6617, %v6952
  %v6989 = vsub.f32 %v6677, %v6955
  %v6990 = vsub.f32 %v6680, %v6958
  %v6991 = vsub.f32 %v6740, %v6961
  %v6992 = vsub.f32 %v6743, %v6964
  %v6993 = vsub.f32 %v6803, %v6967
  %v6994 = vsub.f32 %v6806, %v6970
  %v6995 = vsub.f32 %v6866, %v6973
  %v6996 = vsub.f32 %v6869, %v6976
  %v6997 = vsub.f32 %v6929, %v6979
  %v6998 = vsub.f32 %v6932, %v6982
  %v6999 = vmul.f32 %v6983, 1.442695
  %v7000 = vpow.pop %v6999
  %v7001 = vmul.f32 %v6984, 1.442695
  %v7002 = vpow.pop %v7001
  %v7003 = vmul.f32 %v6985, 1.442695
  %v7004 = vpow.pop %v7003
  %v7005 = vmul.f32 %v6986, 1.442695
  %v7006 = vpow.pop %v7005
  %v7007 = vmul.f32 %v6987, 1.442695
  %v7008 = vpow.pop %v7007
  %v7009 = vmul.f32 %v6988, 1.442695
  %v7010 = vpow.pop %v7009
  %v7011 = vmul.f32 %v6989, 1.442695
  %v7012 = vpow.pop %v7011
  %v7013 = vmul.f32 %v6990, 1.442695
  %v7014 = vpow.pop %v7013
  %v7015 = vmul.f32 %v6991, 1.442695
  %v7016 = vpow.pop %v7015
  %v7017 = vmul.f32 %v6992, 1.442695
  %v7018 = vpow.pop %v7017
  %v7019 = vmul.f32 %v6993, 1.442695
  %v7020 = vpow.pop %v7019
  %v7021 = vmul.f32 %v6994, 1.442695
  %v7022 = vpow.pop %v7021
  %v7023 = vmul.f32 %v6995, 1.442695
  %v7024 = vpow.pop %v7023
  %v7025 = vmul.f32 %v6996, 1.442695
  %v7026 = vpow.pop %v7025
  %v7027 = vmul.f32 %v6997, 1.442695
  %v7028 = vpow.pop %v7027
  %v7029 = vmul.f32 %v6998, 1.442695
  %v7030 = vpow.pop %v7029
  %v7031 = vsel %vm871, %v7000, 0.0
  %7032 = vadd.xlane.f32.xlu0 %v7031
  %v7033 = vpop.xlane.xlu0 %7032
  %v7034 = vsel %vm871, %v7002, 0.0
  %7035 = vadd.xlane.f32.xlu0 %v7034
  %v7036 = vpop.xlane.xlu0 %7035
  %v7037 = vsel %vm871, %v7004, 0.0
  %7038 = vadd.xlane.f32.xlu0 %v7037
  %v7039 = vpop.xlane.xlu0 %7038
  %v7040 = vsel %vm871, %v7006, 0.0
  %7041 = vadd.xlane.f32.xlu0 %v7040
  %v7042 = vpop.xlane.xlu0 %7041
  %v7043 = vsel %vm871, %v7008, 0.0
  %7044 = vadd.xlane.f32.xlu0 %v7043
  %v7045 = vpop.xlane.xlu0 %7044
  %v7046 = vsel %vm871, %v7010, 0.0
  %7047 = vadd.xlane.f32.xlu0 %v7046
  %v7048 = vpop.xlane.xlu0 %7047
  %v7049 = vsel %vm871, %v7012, 0.0
  %7050 = vadd.xlane.f32.xlu0 %v7049
  %v7051 = vpop.xlane.xlu0 %7050
  %v7052 = vsel %vm871, %v7014, 0.0
  %7053 = vadd.xlane.f32.xlu0 %v7052
  %v7054 = vpop.xlane.xlu0 %7053
  %v7055 = vsel %vm871, %v7016, 0.0
  %7056 = vadd.xlane.f32.xlu0 %v7055
  %v7057 = vpop.xlane.xlu0 %7056
  %v7058 = vsel %vm871, %v7018, 0.0
  %7059 = vadd.xlane.f32.xlu0 %v7058
  %v7060 = vpop.xlane.xlu0 %7059
  %v7061 = vsel %vm871, %v7020, 0.0
  %7062 = vadd.xlane.f32.xlu0 %v7061
  %v7063 = vpop.xlane.xlu0 %7062
  %v7064 = vsel %vm871, %v7022, 0.0
  %7065 = vadd.xlane.f32.xlu0 %v7064
  %v7066 = vpop.xlane.xlu0 %7065
  %v7067 = vsel %vm871, %v7024, 0.0
  %7068 = vadd.xlane.f32.xlu0 %v7067
  %v7069 = vpop.xlane.xlu0 %7068
  %v7070 = vsel %vm871, %v7026, 0.0
  %7071 = vadd.xlane.f32.xlu0 %v7070
  %v7072 = vpop.xlane.xlu0 %7071
  %v7073 = vsel %vm871, %v7028, 0.0
  %7074 = vadd.xlane.f32.xlu0 %v7073
  %v7075 = vpop.xlane.xlu0 %7074
  %v7076 = vsel %vm871, %v7030, 0.0
  %7077 = vadd.xlane.f32.xlu0 %v7076
  %v7078 = vpop.xlane.xlu0 %7077
  %v7079 = vrcp.pop %v7033
  %v7080 = vmul.f32 %v7000, %v7079
  %v7081 = vrcp.pop %v7036
  %v7082 = vmul.f32 %v7002, %v7081
  %v7083 = vrcp.pop %v7039
  %v7084 = vmul.f32 %v7004, %v7083
  %v7085 = vrcp.pop %v7042
  %v7086 = vmul.f32 %v7006, %v7085
  %v7087 = vrcp.pop %v7045
  %v7088 = vmul.f32 %v7008, %v7087
  %v7089 = vrcp.pop %v7048
  %v7090 = vmul.f32 %v7010, %v7089
  %v7091 = vrcp.pop %v7051
  %v7092 = vmul.f32 %v7012, %v7091
  %v7093 = vrcp.pop %v7054
  %v7094 = vmul.f32 %v7014, %v7093
  %v7095 = vrcp.pop %v7057
  %v7096 = vmul.f32 %v7016, %v7095
  %v7097 = vrcp.pop %v7060
  %v7098 = vmul.f32 %v7018, %v7097
  %v7099 = vrcp.pop %v7063
  %v7100 = vmul.f32 %v7020, %v7099
  %v7101 = vrcp.pop %v7066
  %v7102 = vmul.f32 %v7022, %v7101
  %v7103 = vrcp.pop %v7069
  %v7104 = vmul.f32 %v7024, %v7103
  %v7105 = vrcp.pop %v7072
  %v7106 = vmul.f32 %v7026, %v7105
  %v7107 = vrcp.pop %v7075
  %v7108 = vmul.f32 %v7028, %v7107
  %v7109 = vrcp.pop %v7078
  %v7110 = vmul.f32 %v7030, %v7109
  %v7111 = vpack.c.bf16 %v7082, %v7080
  %v7112 = vpack.c.bf16 %v7086, %v7084
  %v7113 = vpack.c.bf16 %v7090, %v7088
  %v7114 = vpack.c.bf16 %v7094, %v7092
  %v7115 = vpack.c.bf16 %v7098, %v7096
  %v7116 = vpack.c.bf16 %v7102, %v7100
  %v7117 = vpack.c.bf16 %v7106, %v7104
  %v7118 = vpack.c.bf16 %v7110, %v7108
  %v7119 = vpack.c.bf16 %v6399, %v6399
  %v7120 = vpack.c.bf16 %v6400, %v6400
  %v7121 = vpack.c.bf16 %v6401, %v6401
  %v7122 = vpack.c.bf16 %v6402, %v6402
  %v7123 = vpack.c.bf16 %v6403, %v6403
  %v7124 = vpack.c.bf16 %v6404, %v6404
  %v7125 = vpack.c.bf16 %v6405, %v6405
  %v7126 = vpack.c.bf16 %v6406, %v6406
  %v7128 = vsel %vm871, %v7111, 0
  %v7131 = vsel %vm871, %v7119, 0
  %7133 = vmatprep.subr.bf16.mxu0 0
  %7134 = vmatpush1.bf16.xpose.msra.mxu0 %v7131
  %7135 = vmatprep.subr.bf16.mxu0 0
  %7136 = vmatpush1.bf16.xpose.msra.mxu0 0
  %7137 = vmatprep.subr.bf16.mxu0 0
  %7138 = vmatpush1.bf16.xpose.msra.mxu0 0
  %7139 = vmatprep.subr.bf16.mxu0 0
  %7140 = vmatpush1.bf16.xpose.msra.mxu0 0
  %7141 = vmatprep.subr.bf16.mxu0 0
  %7142 = vmatpush1.bf16.xpose.msra.mxu0 0
  %7143 = vmatprep.subr.bf16.mxu0 0
  %7144 = vmatpush1.bf16.xpose.msra.mxu0 0
  %7145 = vmatprep.subr.bf16.mxu0 0
  %7146 = vmatpush1.bf16.xpose.msra.mxu0 0
  %7147 = vmatprep.subr.bf16.mxu0 0
  %7148 = vmatpush1.bf16.xpose.msra.mxu0 0
  %7149 = vmatprep.subr.bf16.mxu0 0
  %7150 = vmatpush1.bf16.xpose.msra.mxu0 0
  %7151 = vmatprep.subr.bf16.mxu0 0
  %7152 = vmatpush1.bf16.xpose.msra.mxu0 0
  %7153 = vmatprep.subr.bf16.mxu0 0
  %7154 = vmatpush1.bf16.xpose.msra.mxu0 0
  %7155 = vmatprep.subr.bf16.mxu0 0
  %7156 = vmatpush1.bf16.xpose.msra.mxu0 0
  %7157 = vmatprep.subr.bf16.mxu0 0
  %7158 = vmatpush1.bf16.xpose.msra.mxu0 0
  %7159 = vmatprep.subr.bf16.mxu0 0
  %7160 = vmatpush1.bf16.xpose.msra.mxu0 0
  %7161 = vmatprep.subr.bf16.mxu0 0
  %7162 = vmatpush1.bf16.xpose.msra.mxu0 0
  %7163 = vmatprep.subr.bf16.mxu0 0
  %7164 = vmatpush1.bf16.xpose.msra.mxu0 0
  %7165 = vmatprep.mubr.bf16.mxu0 0
  %7166 = vmatmul.mubr.bf16.gmra.mrb[0].mxu0 %v7128
  %v7167 = vpop.f32.mrb[0].mxu0
  %v7168 = vadd.f32 0.0, %v7167
  %v7169 = vpop.f32.mrb[0].mxu0
  %v7170 = vpop.f32.mrb[0].mxu0
  %v7171 = vadd.f32 0.0, %v7170
  %v7172 = vpop.f32.mrb[0].mxu0
  %7173 = vdwg.mxu0
  %v7175 = vsel %vm871, %v7112, 0
  %v7178 = vsel %vm871, %v7120, 0
  %7180 = vmatprep.subr.bf16.mxu0 0
  %7181 = vmatpush1.bf16.xpose.msra.mxu0 %v7178
  %7182 = vmatprep.subr.bf16.mxu0 0
  %7183 = vmatpush1.bf16.xpose.msra.mxu0 0
  %7184 = vmatprep.subr.bf16.mxu0 0
  %7185 = vmatpush1.bf16.xpose.msra.mxu0 0
  %7186 = vmatprep.subr.bf16.mxu0 0
  %7187 = vmatpush1.bf16.xpose.msra.mxu0 0
  %7188 = vmatprep.subr.bf16.mxu0 0
  %7189 = vmatpush1.bf16.xpose.msra.mxu0 0
  %7190 = vmatprep.subr.bf16.mxu0 0
  %7191 = vmatpush1.bf16.xpose.msra.mxu0 0
  %7192 = vmatprep.subr.bf16.mxu0 0
  %7193 = vmatpush1.bf16.xpose.msra.mxu0 0
  %7194 = vmatprep.subr.bf16.mxu0 0
  %7195 = vmatpush1.bf16.xpose.msra.mxu0 0
  %7196 = vmatprep.subr.bf16.mxu0 0
  %7197 = vmatpush1.bf16.xpose.msra.mxu0 0
  %7198 = vmatprep.subr.bf16.mxu0 0
  %7199 = vmatpush1.bf16.xpose.msra.mxu0 0
  %7200 = vmatprep.subr.bf16.mxu0 0
  %7201 = vmatpush1.bf16.xpose.msra.mxu0 0
  %7202 = vmatprep.subr.bf16.mxu0 0
  %7203 = vmatpush1.bf16.xpose.msra.mxu0 0
  %7204 = vmatprep.subr.bf16.mxu0 0
  %7205 = vmatpush1.bf16.xpose.msra.mxu0 0
  %7206 = vmatprep.subr.bf16.mxu0 0
  %7207 = vmatpush1.bf16.xpose.msra.mxu0 0
  %7208 = vmatprep.subr.bf16.mxu0 0
  %7209 = vmatpush1.bf16.xpose.msra.mxu0 0
  %7210 = vmatprep.subr.bf16.mxu0 0
  %7211 = vmatpush1.bf16.xpose.msra.mxu0 0
  %7212 = vmatprep.mubr.bf16.mxu0 0
  %7213 = vmatmul.mubr.bf16.gmra.mrb[0].mxu0 %v7175
  %v7214 = vpop.f32.mrb[0].mxu0
  %v7215 = vadd.f32 0.0, %v7214
  %v7216 = vpop.f32.mrb[0].mxu0
  %v7217 = vpop.f32.mrb[0].mxu0
  %v7218 = vadd.f32 0.0, %v7217
  %v7219 = vpop.f32.mrb[0].mxu0
  %7220 = vdwg.mxu0
  %v7222 = vsel %vm871, %v7113, 0
  %v7225 = vsel %vm871, %v7121, 0
  %7227 = vmatprep.subr.bf16.mxu0 0
  %7228 = vmatpush1.bf16.xpose.msra.mxu0 %v7225
  %7229 = vmatprep.subr.bf16.mxu0 0
  %7230 = vmatpush1.bf16.xpose.msra.mxu0 0
  %7231 = vmatprep.subr.bf16.mxu0 0
  %7232 = vmatpush1.bf16.xpose.msra.mxu0 0
  %7233 = vmatprep.subr.bf16.mxu0 0
  %7234 = vmatpush1.bf16.xpose.msra.mxu0 0
  %7235 = vmatprep.subr.bf16.mxu0 0
  %7236 = vmatpush1.bf16.xpose.msra.mxu0 0
  %7237 = vmatprep.subr.bf16.mxu0 0
  %7238 = vmatpush1.bf16.xpose.msra.mxu0 0
  %7239 = vmatprep.subr.bf16.mxu0 0
  %7240 = vmatpush1.bf16.xpose.msra.mxu0 0
  %7241 = vmatprep.subr.bf16.mxu0 0
  %7242 = vmatpush1.bf16.xpose.msra.mxu0 0
  %7243 = vmatprep.subr.bf16.mxu0 0
  %7244 = vmatpush1.bf16.xpose.msra.mxu0 0
  %7245 = vmatprep.subr.bf16.mxu0 0
  %7246 = vmatpush1.bf16.xpose.msra.mxu0 0
  %7247 = vmatprep.subr.bf16.mxu0 0
  %7248 = vmatpush1.bf16.xpose.msra.mxu0 0
  %7249 = vmatprep.subr.bf16.mxu0 0
  %7250 = vmatpush1.bf16.xpose.msra.mxu0 0
  %7251 = vmatprep.subr.bf16.mxu0 0
  %7252 = vmatpush1.bf16.xpose.msra.mxu0 0
  %7253 = vmatprep.subr.bf16.mxu0 0
  %7254 = vmatpush1.bf16.xpose.msra.mxu0 0
  %7255 = vmatprep.subr.bf16.mxu0 0
  %7256 = vmatpush1.bf16.xpose.msra.mxu0 0
  %7257 = vmatprep.subr.bf16.mxu0 0
  %7258 = vmatpush1.bf16.xpose.msra.mxu0 0
  %7259 = vmatprep.mubr.bf16.mxu0 0
  %7260 = vmatmul.mubr.bf16.gmra.mrb[0].mxu0 %v7222
  %v7261 = vpop.f32.mrb[0].mxu0
  %v7262 = vadd.f32 0.0, %v7261
  %v7263 = vpop.f32.mrb[0].mxu0
  %v7264 = vpop.f32.mrb[0].mxu0
  %v7265 = vadd.f32 0.0, %v7264
  %v7266 = vpop.f32.mrb[0].mxu0
  %7267 = vdwg.mxu0
  %v7269 = vsel %vm871, %v7114, 0
  %v7272 = vsel %vm871, %v7122, 0
  %7274 = vmatprep.subr.bf16.mxu0 0
  %7275 = vmatpush1.bf16.xpose.msra.mxu0 %v7272
  %7276 = vmatprep.subr.bf16.mxu0 0
  %7277 = vmatpush1.bf16.xpose.msra.mxu0 0
  %7278 = vmatprep.subr.bf16.mxu0 0
  %7279 = vmatpush1.bf16.xpose.msra.mxu0 0
  %7280 = vmatprep.subr.bf16.mxu0 0
  %7281 = vmatpush1.bf16.xpose.msra.mxu0 0
  %7282 = vmatprep.subr.bf16.mxu0 0
  %7283 = vmatpush1.bf16.xpose.msra.mxu0 0
  %7284 = vmatprep.subr.bf16.mxu0 0
  %7285 = vmatpush1.bf16.xpose.msra.mxu0 0
  %7286 = vmatprep.subr.bf16.mxu0 0
  %7287 = vmatpush1.bf16.xpose.msra.mxu0 0
  %7288 = vmatprep.subr.bf16.mxu0 0
  %7289 = vmatpush1.bf16.xpose.msra.mxu0 0
  %7290 = vmatprep.subr.bf16.mxu0 0
  %7291 = vmatpush1.bf16.xpose.msra.mxu0 0
  %7292 = vmatprep.subr.bf16.mxu0 0
  %7293 = vmatpush1.bf16.xpose.msra.mxu0 0
  %7294 = vmatprep.subr.bf16.mxu0 0
  %7295 = vmatpush1.bf16.xpose.msra.mxu0 0
  %7296 = vmatprep.subr.bf16.mxu0 0
  %7297 = vmatpush1.bf16.xpose.msra.mxu0 0
  %7298 = vmatprep.subr.bf16.mxu0 0
  %7299 = vmatpush1.bf16.xpose.msra.mxu0 0
  %7300 = vmatprep.subr.bf16.mxu0 0
  %7301 = vmatpush1.bf16.xpose.msra.mxu0 0
  %7302 = vmatprep.subr.bf16.mxu0 0
  %7303 = vmatpush1.bf16.xpose.msra.mxu0 0
  %7304 = vmatprep.subr.bf16.mxu0 0
  %7305 = vmatpush1.bf16.xpose.msra.mxu0 0
  %7306 = vmatprep.mubr.bf16.mxu0 0
  %7307 = vmatmul.mubr.bf16.gmra.mrb[0].mxu0 %v7269
  %v7308 = vpop.f32.mrb[0].mxu0
  %v7309 = vadd.f32 0.0, %v7308
  %v7310 = vpop.f32.mrb[0].mxu0
  %v7311 = vpop.f32.mrb[0].mxu0
  %v7312 = vadd.f32 0.0, %v7311
  %v7313 = vpop.f32.mrb[0].mxu0
  %7314 = vdwg.mxu0
  %v7316 = vsel %vm871, %v7115, 0
  %v7319 = vsel %vm871, %v7123, 0
  %7321 = vmatprep.subr.bf16.mxu0 0
  %7322 = vmatpush1.bf16.xpose.msra.mxu0 %v7319
  %7323 = vmatprep.subr.bf16.mxu0 0
  %7324 = vmatpush1.bf16.xpose.msra.mxu0 0
  %7325 = vmatprep.subr.bf16.mxu0 0
  %7326 = vmatpush1.bf16.xpose.msra.mxu0 0
  %7327 = vmatprep.subr.bf16.mxu0 0
  %7328 = vmatpush1.bf16.xpose.msra.mxu0 0
  %7329 = vmatprep.subr.bf16.mxu0 0
  %7330 = vmatpush1.bf16.xpose.msra.mxu0 0
  %7331 = vmatprep.subr.bf16.mxu0 0
  %7332 = vmatpush1.bf16.xpose.msra.mxu0 0
  %7333 = vmatprep.subr.bf16.mxu0 0
  %7334 = vmatpush1.bf16.xpose.msra.mxu0 0
  %7335 = vmatprep.subr.bf16.mxu0 0
  %7336 = vmatpush1.bf16.xpose.msra.mxu0 0
  %7337 = vmatprep.subr.bf16.mxu0 0
  %7338 = vmatpush1.bf16.xpose.msra.mxu0 0
  %7339 = vmatprep.subr.bf16.mxu0 0
  %7340 = vmatpush1.bf16.xpose.msra.mxu0 0
  %7341 = vmatprep.subr.bf16.mxu0 0
  %7342 = vmatpush1.bf16.xpose.msra.mxu0 0
  %7343 = vmatprep.subr.bf16.mxu0 0
  %7344 = vmatpush1.bf16.xpose.msra.mxu0 0
  %7345 = vmatprep.subr.bf16.mxu0 0
  %7346 = vmatpush1.bf16.xpose.msra.mxu0 0
  %7347 = vmatprep.subr.bf16.mxu0 0
  %7348 = vmatpush1.bf16.xpose.msra.mxu0 0
  %7349 = vmatprep.subr.bf16.mxu0 0
  %7350 = vmatpush1.bf16.xpose.msra.mxu0 0
  %7351 = vmatprep.subr.bf16.mxu0 0
  %7352 = vmatpush1.bf16.xpose.msra.mxu0 0
  %7353 = vmatprep.mubr.bf16.mxu0 0
  %7354 = vmatmul.mubr.bf16.gmra.mrb[0].mxu0 %v7316
  %v7355 = vpop.f32.mrb[0].mxu0
  %v7356 = vadd.f32 0.0, %v7355
  %v7357 = vpop.f32.mrb[0].mxu0
  %v7358 = vpop.f32.mrb[0].mxu0
  %v7359 = vadd.f32 0.0, %v7358
  %v7360 = vpop.f32.mrb[0].mxu0
  %7361 = vdwg.mxu0
  %v7363 = vsel %vm871, %v7116, 0
  %v7366 = vsel %vm871, %v7124, 0
  %7368 = vmatprep.subr.bf16.mxu0 0
  %7369 = vmatpush1.bf16.xpose.msra.mxu0 %v7366
  %7370 = vmatprep.subr.bf16.mxu0 0
  %7371 = vmatpush1.bf16.xpose.msra.mxu0 0
  %7372 = vmatprep.subr.bf16.mxu0 0
  %7373 = vmatpush1.bf16.xpose.msra.mxu0 0
  %7374 = vmatprep.subr.bf16.mxu0 0
  %7375 = vmatpush1.bf16.xpose.msra.mxu0 0
  %7376 = vmatprep.subr.bf16.mxu0 0
  %7377 = vmatpush1.bf16.xpose.msra.mxu0 0
  %7378 = vmatprep.subr.bf16.mxu0 0
  %7379 = vmatpush1.bf16.xpose.msra.mxu0 0
  %7380 = vmatprep.subr.bf16.mxu0 0
  %7381 = vmatpush1.bf16.xpose.msra.mxu0 0
  %7382 = vmatprep.subr.bf16.mxu0 0
  %7383 = vmatpush1.bf16.xpose.msra.mxu0 0
  %7384 = vmatprep.subr.bf16.mxu0 0
  %7385 = vmatpush1.bf16.xpose.msra.mxu0 0
  %7386 = vmatprep.subr.bf16.mxu0 0
  %7387 = vmatpush1.bf16.xpose.msra.mxu0 0
  %7388 = vmatprep.subr.bf16.mxu0 0
  %7389 = vmatpush1.bf16.xpose.msra.mxu0 0
  %7390 = vmatprep.subr.bf16.mxu0 0
  %7391 = vmatpush1.bf16.xpose.msra.mxu0 0
  %7392 = vmatprep.subr.bf16.mxu0 0
  %7393 = vmatpush1.bf16.xpose.msra.mxu0 0
  %7394 = vmatprep.subr.bf16.mxu0 0
  %7395 = vmatpush1.bf16.xpose.msra.mxu0 0
  %7396 = vmatprep.subr.bf16.mxu0 0
  %7397 = vmatpush1.bf16.xpose.msra.mxu0 0
  %7398 = vmatprep.subr.bf16.mxu0 0
  %7399 = vmatpush1.bf16.xpose.msra.mxu0 0
  %7400 = vmatprep.mubr.bf16.mxu0 0
  %7401 = vmatmul.mubr.bf16.gmra.mrb[0].mxu0 %v7363
  %v7402 = vpop.f32.mrb[0].mxu0
  %v7403 = vadd.f32 0.0, %v7402
  %v7404 = vpop.f32.mrb[0].mxu0
  %v7405 = vpop.f32.mrb[0].mxu0
  %v7406 = vadd.f32 0.0, %v7405
  %v7407 = vpop.f32.mrb[0].mxu0
  %7408 = vdwg.mxu0
  %v7410 = vsel %vm871, %v7117, 0
  %v7413 = vsel %vm871, %v7125, 0
  %7415 = vmatprep.subr.bf16.mxu0 0
  %7416 = vmatpush1.bf16.xpose.msra.mxu0 %v7413
  %7417 = vmatprep.subr.bf16.mxu0 0
  %7418 = vmatpush1.bf16.xpose.msra.mxu0 0
  %7419 = vmatprep.subr.bf16.mxu0 0
  %7420 = vmatpush1.bf16.xpose.msra.mxu0 0
  %7421 = vmatprep.subr.bf16.mxu0 0
  %7422 = vmatpush1.bf16.xpose.msra.mxu0 0
  %7423 = vmatprep.subr.bf16.mxu0 0
  %7424 = vmatpush1.bf16.xpose.msra.mxu0 0
  %7425 = vmatprep.subr.bf16.mxu0 0
  %7426 = vmatpush1.bf16.xpose.msra.mxu0 0
  %7427 = vmatprep.subr.bf16.mxu0 0
  %7428 = vmatpush1.bf16.xpose.msra.mxu0 0
  %7429 = vmatprep.subr.bf16.mxu0 0
  %7430 = vmatpush1.bf16.xpose.msra.mxu0 0
  %7431 = vmatprep.subr.bf16.mxu0 0
  %7432 = vmatpush1.bf16.xpose.msra.mxu0 0
  %7433 = vmatprep.subr.bf16.mxu0 0
  %7434 = vmatpush1.bf16.xpose.msra.mxu0 0
  %7435 = vmatprep.subr.bf16.mxu0 0
  %7436 = vmatpush1.bf16.xpose.msra.mxu0 0
  %7437 = vmatprep.subr.bf16.mxu0 0
  %7438 = vmatpush1.bf16.xpose.msra.mxu0 0
  %7439 = vmatprep.subr.bf16.mxu0 0
  %7440 = vmatpush1.bf16.xpose.msra.mxu0 0
  %7441 = vmatprep.subr.bf16.mxu0 0
  %7442 = vmatpush1.bf16.xpose.msra.mxu0 0
  %7443 = vmatprep.subr.bf16.mxu0 0
  %7444 = vmatpush1.bf16.xpose.msra.mxu0 0
  %7445 = vmatprep.subr.bf16.mxu0 0
  %7446 = vmatpush1.bf16.xpose.msra.mxu0 0
  %7447 = vmatprep.mubr.bf16.mxu0 0
  %7448 = vmatmul.mubr.bf16.gmra.mrb[0].mxu0 %v7410
  %v7449 = vpop.f32.mrb[0].mxu0
  %v7450 = vadd.f32 0.0, %v7449
  %v7451 = vpop.f32.mrb[0].mxu0
  %v7452 = vpop.f32.mrb[0].mxu0
  %v7453 = vadd.f32 0.0, %v7452
  %v7454 = vpop.f32.mrb[0].mxu0
  %7455 = vdwg.mxu0
  %v7457 = vsel %vm871, %v7118, 0
  %v7460 = vsel %vm871, %v7126, 0
  %7462 = vmatprep.subr.bf16.mxu0 0
  %7463 = vmatpush1.bf16.xpose.msra.mxu0 %v7460
  %7464 = vmatprep.subr.bf16.mxu0 0
  %7465 = vmatpush1.bf16.xpose.msra.mxu0 0
  %7466 = vmatprep.subr.bf16.mxu0 0
  %7467 = vmatpush1.bf16.xpose.msra.mxu0 0
  %7468 = vmatprep.subr.bf16.mxu0 0
  %7469 = vmatpush1.bf16.xpose.msra.mxu0 0
  %7470 = vmatprep.subr.bf16.mxu0 0
  %7471 = vmatpush1.bf16.xpose.msra.mxu0 0
  %7472 = vmatprep.subr.bf16.mxu0 0
  %7473 = vmatpush1.bf16.xpose.msra.mxu0 0
  %7474 = vmatprep.subr.bf16.mxu0 0
  %7475 = vmatpush1.bf16.xpose.msra.mxu0 0
  %7476 = vmatprep.subr.bf16.mxu0 0
  %7477 = vmatpush1.bf16.xpose.msra.mxu0 0
  %7478 = vmatprep.subr.bf16.mxu0 0
  %7479 = vmatpush1.bf16.xpose.msra.mxu0 0
  %7480 = vmatprep.subr.bf16.mxu0 0
  %7481 = vmatpush1.bf16.xpose.msra.mxu0 0
  %7482 = vmatprep.subr.bf16.mxu0 0
  %7483 = vmatpush1.bf16.xpose.msra.mxu0 0
  %7484 = vmatprep.subr.bf16.mxu0 0
  %7485 = vmatpush1.bf16.xpose.msra.mxu0 0
  %7486 = vmatprep.subr.bf16.mxu0 0
  %7487 = vmatpush1.bf16.xpose.msra.mxu0 0
  %7488 = vmatprep.subr.bf16.mxu0 0
  %7489 = vmatpush1.bf16.xpose.msra.mxu0 0
  %7490 = vmatprep.subr.bf16.mxu0 0
  %7491 = vmatpush1.bf16.xpose.msra.mxu0 0
  %7492 = vmatprep.subr.bf16.mxu0 0
  %7493 = vmatpush1.bf16.xpose.msra.mxu0 0
  %7494 = vmatprep.mubr.bf16.mxu0 0
  %7495 = vmatmul.mubr.bf16.gmra.mrb[0].mxu0 %v7457
  %v7496 = vpop.f32.mrb[0].mxu0
  %v7497 = vadd.f32 0.0, %v7496
  %v7498 = vpop.f32.mrb[0].mxu0
  %v7499 = vpop.f32.mrb[0].mxu0
  %v7500 = vadd.f32 0.0, %v7499
  %v7501 = vpop.f32.mrb[0].mxu0
  %7502 = vdwg.mxu0
  %7503 = vxpose.xlu0.b32.start [1/16] %v7168, 128
  %7504 = vxpose.xlu0.b32.cont [2/16] %v7171, 128
  %7505 = vxpose.xlu0.b32.cont [3/16] 0.0, 128
  %7506 = vxpose.xlu0.b32.cont [4/16] 0.0, 128
  %7507 = vxpose.xlu0.b32.cont [5/16] 0.0, 128
  %7508 = vxpose.xlu0.b32.cont [6/16] 0.0, 128
  %7509 = vxpose.xlu0.b32.cont [7/16] 0.0, 128
  %7510 = vxpose.xlu0.b32.cont [8/16] 0.0, 128
  %7511 = vxpose.xlu0.b32.cont [9/16] 0.0, 128
  %7512 = vxpose.xlu0.b32.cont [10/16] 0.0, 128
  %7513 = vxpose.xlu0.b32.cont [11/16] 0.0, 128
  %7514 = vxpose.xlu0.b32.cont [12/16] 0.0, 128
  %7515 = vxpose.xlu0.b32.cont [13/16] 0.0, 128
  %7516 = vxpose.xlu0.b32.cont [14/16] 0.0, 128
  %7517 = vxpose.xlu0.b32.cont [15/16] 0.0, 128
  %7518 = vxpose.xlu0.b32.end [16/16] 0.0, 128
  %v7519 = vpop.trf.xlu0
  %v7520 = vpop.trf.xlu0
  %v7521 = vpop.trf.xlu0
  %v7522 = vpop.trf.xlu0
  %v7523 = vpop.trf.xlu0
  %v7524 = vpop.trf.xlu0
  %v7525 = vpop.trf.xlu0
  %v7526 = vpop.trf.xlu0
  %v7527 = vpop.trf.xlu0
  %v7528 = vpop.trf.xlu0
  %v7529 = vpop.trf.xlu0
  %v7530 = vpop.trf.xlu0
  %v7531 = vpop.trf.xlu0
  %v7532 = vpop.trf.xlu0
  %v7533 = vpop.trf.xlu0
  %v7534 = vpop.trf.xlu0
  %7535 = vxpose.xlu0.b32.start [1/16] %v7215, 128
  %7536 = vxpose.xlu0.b32.cont [2/16] %v7218, 128
  %7537 = vxpose.xlu0.b32.cont [3/16] 0.0, 128
  %7538 = vxpose.xlu0.b32.cont [4/16] 0.0, 128
  %7539 = vxpose.xlu0.b32.cont [5/16] 0.0, 128
  %7540 = vxpose.xlu0.b32.cont [6/16] 0.0, 128
  %7541 = vxpose.xlu0.b32.cont [7/16] 0.0, 128
  %7542 = vxpose.xlu0.b32.cont [8/16] 0.0, 128
  %7543 = vxpose.xlu0.b32.cont [9/16] 0.0, 128
  %7544 = vxpose.xlu0.b32.cont [10/16] 0.0, 128
  %7545 = vxpose.xlu0.b32.cont [11/16] 0.0, 128
  %7546 = vxpose.xlu0.b32.cont [12/16] 0.0, 128
  %7547 = vxpose.xlu0.b32.cont [13/16] 0.0, 128
  %7548 = vxpose.xlu0.b32.cont [14/16] 0.0, 128
  %7549 = vxpose.xlu0.b32.cont [15/16] 0.0, 128
  %7550 = vxpose.xlu0.b32.end [16/16] 0.0, 128
  %v7551 = vpop.trf.xlu0
  %v7552 = vpop.trf.xlu0
  %v7553 = vpop.trf.xlu0
  %v7554 = vpop.trf.xlu0
  %v7555 = vpop.trf.xlu0
  %v7556 = vpop.trf.xlu0
  %v7557 = vpop.trf.xlu0
  %v7558 = vpop.trf.xlu0
  %v7559 = vpop.trf.xlu0
  %v7560 = vpop.trf.xlu0
  %v7561 = vpop.trf.xlu0
  %v7562 = vpop.trf.xlu0
  %v7563 = vpop.trf.xlu0
  %v7564 = vpop.trf.xlu0
  %v7565 = vpop.trf.xlu0
  %v7566 = vpop.trf.xlu0
  %7567 = vxpose.xlu0.b32.start [1/16] %v7262, 128
  %7568 = vxpose.xlu0.b32.cont [2/16] %v7265, 128
  %7569 = vxpose.xlu0.b32.cont [3/16] 0.0, 128
  %7570 = vxpose.xlu0.b32.cont [4/16] 0.0, 128
  %7571 = vxpose.xlu0.b32.cont [5/16] 0.0, 128
  %7572 = vxpose.xlu0.b32.cont [6/16] 0.0, 128
  %7573 = vxpose.xlu0.b32.cont [7/16] 0.0, 128
  %7574 = vxpose.xlu0.b32.cont [8/16] 0.0, 128
  %7575 = vxpose.xlu0.b32.cont [9/16] 0.0, 128
  %7576 = vxpose.xlu0.b32.cont [10/16] 0.0, 128
  %7577 = vxpose.xlu0.b32.cont [11/16] 0.0, 128
  %7578 = vxpose.xlu0.b32.cont [12/16] 0.0, 128
  %7579 = vxpose.xlu0.b32.cont [13/16] 0.0, 128
  %7580 = vxpose.xlu0.b32.cont [14/16] 0.0, 128
  %7581 = vxpose.xlu0.b32.cont [15/16] 0.0, 128
  %7582 = vxpose.xlu0.b32.end [16/16] 0.0, 128
  %v7583 = vpop.trf.xlu0
  %v7584 = vpop.trf.xlu0
  %v7585 = vpop.trf.xlu0
  %v7586 = vpop.trf.xlu0
  %v7587 = vpop.trf.xlu0
  %v7588 = vpop.trf.xlu0
  %v7589 = vpop.trf.xlu0
  %v7590 = vpop.trf.xlu0
  %v7591 = vpop.trf.xlu0
  %v7592 = vpop.trf.xlu0
  %v7593 = vpop.trf.xlu0
  %v7594 = vpop.trf.xlu0
  %v7595 = vpop.trf.xlu0
  %v7596 = vpop.trf.xlu0
  %v7597 = vpop.trf.xlu0
  %v7598 = vpop.trf.xlu0
  %7599 = vxpose.xlu0.b32.start [1/16] %v7309, 128
  %7600 = vxpose.xlu0.b32.cont [2/16] %v7312, 128
  %7601 = vxpose.xlu0.b32.cont [3/16] 0.0, 128
  %7602 = vxpose.xlu0.b32.cont [4/16] 0.0, 128
  %7603 = vxpose.xlu0.b32.cont [5/16] 0.0, 128
  %7604 = vxpose.xlu0.b32.cont [6/16] 0.0, 128
  %7605 = vxpose.xlu0.b32.cont [7/16] 0.0, 128
  %7606 = vxpose.xlu0.b32.cont [8/16] 0.0, 128
  %7607 = vxpose.xlu0.b32.cont [9/16] 0.0, 128
  %7608 = vxpose.xlu0.b32.cont [10/16] 0.0, 128
  %7609 = vxpose.xlu0.b32.cont [11/16] 0.0, 128
  %7610 = vxpose.xlu0.b32.cont [12/16] 0.0, 128
  %7611 = vxpose.xlu0.b32.cont [13/16] 0.0, 128
  %7612 = vxpose.xlu0.b32.cont [14/16] 0.0, 128
  %7613 = vxpose.xlu0.b32.cont [15/16] 0.0, 128
  %7614 = vxpose.xlu0.b32.end [16/16] 0.0, 128
  %v7615 = vpop.trf.xlu0
  %v7616 = vpop.trf.xlu0
  %v7617 = vpop.trf.xlu0
  %v7618 = vpop.trf.xlu0
  %v7619 = vpop.trf.xlu0
  %v7620 = vpop.trf.xlu0
  %v7621 = vpop.trf.xlu0
  %v7622 = vpop.trf.xlu0
  %v7623 = vpop.trf.xlu0
  %v7624 = vpop.trf.xlu0
  %v7625 = vpop.trf.xlu0
  %v7626 = vpop.trf.xlu0
  %v7627 = vpop.trf.xlu0
  %v7628 = vpop.trf.xlu0
  %v7629 = vpop.trf.xlu0
  %v7630 = vpop.trf.xlu0
  %7631 = vxpose.xlu0.b32.start [1/16] %v7356, 128
  %7632 = vxpose.xlu0.b32.cont [2/16] %v7359, 128
  %7633 = vxpose.xlu0.b32.cont [3/16] 0.0, 128
  %7634 = vxpose.xlu0.b32.cont [4/16] 0.0, 128
  %7635 = vxpose.xlu0.b32.cont [5/16] 0.0, 128
  %7636 = vxpose.xlu0.b32.cont [6/16] 0.0, 128
  %7637 = vxpose.xlu0.b32.cont [7/16] 0.0, 128
  %7638 = vxpose.xlu0.b32.cont [8/16] 0.0, 128
  %7639 = vxpose.xlu0.b32.cont [9/16] 0.0, 128
  %7640 = vxpose.xlu0.b32.cont [10/16] 0.0, 128
  %7641 = vxpose.xlu0.b32.cont [11/16] 0.0, 128
  %7642 = vxpose.xlu0.b32.cont [12/16] 0.0, 128
  %7643 = vxpose.xlu0.b32.cont [13/16] 0.0, 128
  %7644 = vxpose.xlu0.b32.cont [14/16] 0.0, 128
  %7645 = vxpose.xlu0.b32.cont [15/16] 0.0, 128
  %7646 = vxpose.xlu0.b32.end [16/16] 0.0, 128
  %v7647 = vpop.trf.xlu0
  %v7648 = vpop.trf.xlu0
  %v7649 = vpop.trf.xlu0
  %v7650 = vpop.trf.xlu0
  %v7651 = vpop.trf.xlu0
  %v7652 = vpop.trf.xlu0
  %v7653 = vpop.trf.xlu0
  %v7654 = vpop.trf.xlu0
  %v7655 = vpop.trf.xlu0
  %v7656 = vpop.trf.xlu0
  %v7657 = vpop.trf.xlu0
  %v7658 = vpop.trf.xlu0
  %v7659 = vpop.trf.xlu0
  %v7660 = vpop.trf.xlu0
  %v7661 = vpop.trf.xlu0
  %v7662 = vpop.trf.xlu0
  %7663 = vxpose.xlu0.b32.start [1/16] %v7403, 128
  %7664 = vxpose.xlu0.b32.cont [2/16] %v7406, 128
  %7665 = vxpose.xlu0.b32.cont [3/16] 0.0, 128
  %7666 = vxpose.xlu0.b32.cont [4/16] 0.0, 128
  %7667 = vxpose.xlu0.b32.cont [5/16] 0.0, 128
  %7668 = vxpose.xlu0.b32.cont [6/16] 0.0, 128
  %7669 = vxpose.xlu0.b32.cont [7/16] 0.0, 128
  %7670 = vxpose.xlu0.b32.cont [8/16] 0.0, 128
  %7671 = vxpose.xlu0.b32.cont [9/16] 0.0, 128
  %7672 = vxpose.xlu0.b32.cont [10/16] 0.0, 128
  %7673 = vxpose.xlu0.b32.cont [11/16] 0.0, 128
  %7674 = vxpose.xlu0.b32.cont [12/16] 0.0, 128
  %7675 = vxpose.xlu0.b32.cont [13/16] 0.0, 128
  %7676 = vxpose.xlu0.b32.cont [14/16] 0.0, 128
  %7677 = vxpose.xlu0.b32.cont [15/16] 0.0, 128
  %7678 = vxpose.xlu0.b32.end [16/16] 0.0, 128
  %v7679 = vpop.trf.xlu0
  %v7680 = vpop.trf.xlu0
  %v7681 = vpop.trf.xlu0
  %v7682 = vpop.trf.xlu0
  %v7683 = vpop.trf.xlu0
  %v7684 = vpop.trf.xlu0
  %v7685 = vpop.trf.xlu0
  %v7686 = vpop.trf.xlu0
  %v7687 = vpop.trf.xlu0
  %v7688 = vpop.trf.xlu0
  %v7689 = vpop.trf.xlu0
  %v7690 = vpop.trf.xlu0
  %v7691 = vpop.trf.xlu0
  %v7692 = vpop.trf.xlu0
  %v7693 = vpop.trf.xlu0
  %v7694 = vpop.trf.xlu0
  %7695 = vxpose.xlu0.b32.start [1/16] %v7450, 128
  %7696 = vxpose.xlu0.b32.cont [2/16] %v7453, 128
  %7697 = vxpose.xlu0.b32.cont [3/16] 0.0, 128
  %7698 = vxpose.xlu0.b32.cont [4/16] 0.0, 128
  %7699 = vxpose.xlu0.b32.cont [5/16] 0.0, 128
  %7700 = vxpose.xlu0.b32.cont [6/16] 0.0, 128
  %7701 = vxpose.xlu0.b32.cont [7/16] 0.0, 128
  %7702 = vxpose.xlu0.b32.cont [8/16] 0.0, 128
  %7703 = vxpose.xlu0.b32.cont [9/16] 0.0, 128
  %7704 = vxpose.xlu0.b32.cont [10/16] 0.0, 128
  %7705 = vxpose.xlu0.b32.cont [11/16] 0.0, 128
  %7706 = vxpose.xlu0.b32.cont [12/16] 0.0, 128
  %7707 = vxpose.xlu0.b32.cont [13/16] 0.0, 128
  %7708 = vxpose.xlu0.b32.cont [14/16] 0.0, 128
  %7709 = vxpose.xlu0.b32.cont [15/16] 0.0, 128
  %7710 = vxpose.xlu0.b32.end [16/16] 0.0, 128
  %v7711 = vpop.trf.xlu0
  %v7712 = vpop.trf.xlu0
  %v7713 = vpop.trf.xlu0
  %v7714 = vpop.trf.xlu0
  %v7715 = vpop.trf.xlu0
  %v7716 = vpop.trf.xlu0
  %v7717 = vpop.trf.xlu0
  %v7718 = vpop.trf.xlu0
  %v7719 = vpop.trf.xlu0
  %v7720 = vpop.trf.xlu0
  %v7721 = vpop.trf.xlu0
  %v7722 = vpop.trf.xlu0
  %v7723 = vpop.trf.xlu0
  %v7724 = vpop.trf.xlu0
  %v7725 = vpop.trf.xlu0
  %v7726 = vpop.trf.xlu0
  %7727 = vxpose.xlu0.b32.start [1/16] %v7497, 128
  %7728 = vxpose.xlu0.b32.cont [2/16] %v7500, 128
  %7729 = vxpose.xlu0.b32.cont [3/16] 0.0, 128
  %7730 = vxpose.xlu0.b32.cont [4/16] 0.0, 128
  %7731 = vxpose.xlu0.b32.cont [5/16] 0.0, 128
  %7732 = vxpose.xlu0.b32.cont [6/16] 0.0, 128
  %7733 = vxpose.xlu0.b32.cont [7/16] 0.0, 128
  %7734 = vxpose.xlu0.b32.cont [8/16] 0.0, 128
  %7735 = vxpose.xlu0.b32.cont [9/16] 0.0, 128
  %7736 = vxpose.xlu0.b32.cont [10/16] 0.0, 128
  %7737 = vxpose.xlu0.b32.cont [11/16] 0.0, 128
  %7738 = vxpose.xlu0.b32.cont [12/16] 0.0, 128
  %7739 = vxpose.xlu0.b32.cont [13/16] 0.0, 128
  %7740 = vxpose.xlu0.b32.cont [14/16] 0.0, 128
  %7741 = vxpose.xlu0.b32.cont [15/16] 0.0, 128
  %7742 = vxpose.xlu0.b32.end [16/16] 0.0, 128
  %v7743 = vpop.trf.xlu0
  %v7744 = vpop.trf.xlu0
  %v7745 = vpop.trf.xlu0
  %v7746 = vpop.trf.xlu0
  %v7747 = vpop.trf.xlu0
  %v7748 = vpop.trf.xlu0
  %v7749 = vpop.trf.xlu0
  %v7750 = vpop.trf.xlu0
  %v7751 = vpop.trf.xlu0
  %v7752 = vpop.trf.xlu0
  %v7753 = vpop.trf.xlu0
  %v7754 = vpop.trf.xlu0
  %v7755 = vpop.trf.xlu0
  %v7756 = vpop.trf.xlu0
  %v7757 = vpop.trf.xlu0
  %v7758 = vpop.trf.xlu0
  %7759 = vxpose.xlu0.b32.start [1/16] %v7519, 128
  %7760 = vxpose.xlu0.b32.cont [2/16] %v7551, 128
  %7761 = vxpose.xlu0.b32.cont [3/16] %v7583, 128
  %7762 = vxpose.xlu0.b32.cont [4/16] %v7615, 128
  %7763 = vxpose.xlu0.b32.cont [5/16] %v7647, 128
  %7764 = vxpose.xlu0.b32.cont [6/16] %v7679, 128
  %7765 = vxpose.xlu0.b32.cont [7/16] %v7711, 128
  %7766 = vxpose.xlu0.b32.cont [8/16] %v7743, 128
  %7767 = vxpose.xlu0.b32.cont [9/16] 0.0, 128
  %7768 = vxpose.xlu0.b32.cont [10/16] 0.0, 128
  %7769 = vxpose.xlu0.b32.cont [11/16] 0.0, 128
  %7770 = vxpose.xlu0.b32.cont [12/16] 0.0, 128
  %7771 = vxpose.xlu0.b32.cont [13/16] 0.0, 128
  %7772 = vxpose.xlu0.b32.cont [14/16] 0.0, 128
  %7773 = vxpose.xlu0.b32.cont [15/16] 0.0, 128
  %7774 = vxpose.xlu0.b32.end [16/16] 0.0, 128
  %v7775 = vpop.trf.xlu0
  %v7776 = vpop.trf.xlu0
  %v7777 = vpop.trf.xlu0
  %v7778 = vpop.trf.xlu0
  %v7779 = vpop.trf.xlu0
  %v7780 = vpop.trf.xlu0
  %v7781 = vpop.trf.xlu0
  %v7782 = vpop.trf.xlu0
  %v7783 = vpop.trf.xlu0
  %v7784 = vpop.trf.xlu0
  %v7785 = vpop.trf.xlu0
  %v7786 = vpop.trf.xlu0
  %v7787 = vpop.trf.xlu0
  %v7788 = vpop.trf.xlu0
  %v7789 = vpop.trf.xlu0
  %v7790 = vpop.trf.xlu0
  %v7791 = vpack.c.bf16 %v7776, %v7775
  %s7792 = scalar_lea.vmem %s17, 96
  %v7793 = vld [vmem:[%s7792] sm:$0xf]
  %v7794 = vld [vmem:[%s7792 + $0x4] sm:$0xf]
  %v7795 = vld [vmem:[%s7792 + $0x8] sm:$0xf]
  %v7796 = vld [vmem:[%s7792 + $0xc] sm:$0xf]
  %v7797 = vld [vmem:[%s7792 + $0x10] sm:$0xf]
  %v7798 = vld [vmem:[%s7792 + $0x14] sm:$0xf]
  %v7799 = vld [vmem:[%s7792 + $0x18] sm:$0xf]
  %v7800 = vld [vmem:[%s7792 + $0x1c] sm:$0xf]
  %s7801 = scalar_lea.vmem %s19, 3
  %v7802 = vld [vmem:[%s7801] sm:$0x1]
  %v7804 = vlaneseq
  %v7805 = vshrl.u32 %v7804, 7
  %v7806 = vsub.s32 0, %v7805
  %v7807 = vrot.slane %v7802, %v7806
  %v7817 = vunpack.c.l.b16 %v7793
  %v7818 = vunpack.c.l.b16 %v7794
  %v7819 = vunpack.c.l.b16 %v7795
  %v7820 = vunpack.c.l.b16 %v7796
  %v7821 = vunpack.c.l.b16 %v7797
  %v7822 = vunpack.c.l.b16 %v7798
  %v7823 = vunpack.c.l.b16 %v7799
  %v7824 = vunpack.c.l.b16 %v7800
  %v7825 = vpack.c.b16 %v7818, %v7817
  %v7826 = vpack.c.b16 %v7820, %v7819
  %v7827 = vpack.c.b16 %v7822, %v7821
  %v7828 = vpack.c.b16 %v7824, %v7823
  %v7834 = vsel %vm238, %v7791, 0
  %7836 = vmatprep.subr.bf16.mxu0 0
  %7837 = vmatpush1.bf16.msra.mxu0 %v7825
  %7838 = vmatprep.subr.bf16.mxu0 0
  %7839 = vmatpush1.bf16.msra.mxu0 %v7826
  %7840 = vmatprep.subr.bf16.mxu0 0
  %7841 = vmatpush1.bf16.msra.mxu0 %v7827
  %7842 = vmatprep.subr.bf16.mxu0 0
  %7843 = vmatpush1.bf16.msra.mxu0 %v7828
  %7844 = vmatprep.subr.bf16.mxu0 0
  %7845 = vmatpush1.bf16.msra.mxu0 0
  %7846 = vmatprep.subr.bf16.mxu0 0
  %7847 = vmatpush1.bf16.msra.mxu0 0
  %7848 = vmatprep.subr.bf16.mxu0 0
  %7849 = vmatpush1.bf16.msra.mxu0 0
  %7850 = vmatprep.subr.bf16.mxu0 0
  %7851 = vmatpush1.bf16.msra.mxu0 0
  %7852 = vmatprep.subr.bf16.mxu0 0
  %7853 = vmatpush1.bf16.msra.mxu0 0
  %7854 = vmatprep.subr.bf16.mxu0 0
  %7855 = vmatpush1.bf16.msra.mxu0 0
  %7856 = vmatprep.subr.bf16.mxu0 0
  %7857 = vmatpush1.bf16.msra.mxu0 0
  %7858 = vmatprep.subr.bf16.mxu0 0
  %7859 = vmatpush1.bf16.msra.mxu0 0
  %7860 = vmatprep.subr.bf16.mxu0 0
  %7861 = vmatpush1.bf16.msra.mxu0 0
  %7862 = vmatprep.subr.bf16.mxu0 0
  %7863 = vmatpush1.bf16.msra.mxu0 0
  %7864 = vmatprep.subr.bf16.mxu0 0
  %7865 = vmatpush1.bf16.msra.mxu0 0
  %7866 = vmatprep.subr.bf16.mxu0 0
  %7867 = vmatpush1.bf16.msra.mxu0 0
  %7868 = vmatprep.mubr.bf16.mxu0 0
  %7869 = vmatmul.mubr.bf16.gmra.mrb[0].mxu0 %v7834
  %v7870 = vpop.f32.mrb[0].mxu0
  %v7871 = vadd.f32 %v7807, %v7870
  %v7872 = vpop.f32.mrb[0].mxu0
  %v7873 = vpop.f32.mrb[0].mxu0
  %v7874 = vadd.f32 %v7807, %v7873
  %v7875 = vpop.f32.mrb[0].mxu0
  %7876 = vdwg.mxu0
  %v7877 = vadd.f32 %v6240, %v7871
  %v7878 = vadd.f32 %v6241, %v7874
  %s7879 = scalar_lea.vmem %s21, 3
  %v7880 = vld [vmem:[%s7879] sm:$0x1]
  %s7881 = scalar_lea.vmem %s23, 3
  %v7882 = vld [vmem:[%s7881] sm:$0x1]
  %v7883 = vsel %vm238, %v7877, 0.0
  %7884 = vadd.xlane.f32.xlu0 %v7883
  %v7885 = vpop.xlane.xlu0 %7884
  %v7886 = vsel %vm238, %v7878, 0.0
  %7887 = vadd.xlane.f32.xlu0 %v7886
  %v7888 = vpop.xlane.xlu0 %7887
  %v7889 = vmul.f32 %v7885, %v1822
  %v7890 = vmul.f32 %v7888, %v1822
  %v7891 = vsub.f32 %v7877, %v7889
  %v7892 = vsub.f32 %v7878, %v7890
  %v7893 = vmul.f32 %v7891, %v7891
  %v7894 = vmul.f32 %v7892, %v7892
  %v7895 = vsel %vm238, %v7893, 0.0
  %7896 = vadd.xlane.f32.xlu0 %v7895
  %v7897 = vpop.xlane.xlu0 %7896
  %v7898 = vsel %vm238, %v7894, 0.0
  %7899 = vadd.xlane.f32.xlu0 %v7898
  %v7900 = vpop.xlane.xlu0 %7899
  %v7901 = vmul.f32 %v7897, %v1822
  %v7902 = vmul.f32 %v7900, %v1822
  %v7903 = vadd.f32 %v7901, 1e-05
  %v7904 = vadd.f32 %v7902, 1e-05
  %v7905 = vrsqrt.pop %v7903
  %v7906 = vrsqrt.pop %v7904
  %v7907 = vmul.f32 %v7891, %v7905
  %v7908 = vmul.f32 %v7892, %v7906
  %v7910 = vlaneseq
  %v7911 = vshrl.u32 %v7910, 7
  %v7912 = vsub.s32 0, %v7911
  %v7913 = vrot.slane %v7880, %v7912
  %v7915 = vmul.f32 %v7907, %v7913
  %v7916 = vmul.f32 %v7908, %v7913
  %v7918 = vlaneseq
  %v7919 = vshrl.u32 %v7918, 7
  %v7920 = vsub.s32 0, %v7919
  %v7921 = vrot.slane %v7882, %v7920
  %v7923 = vadd.f32 %v7915, %v7921
  %v7924 = vadd.f32 %v7916, %v7921
  %v7925 = vpack.c.bf16 %v7924, %v7923
  %s7926 = scalar_lea.vmem %s25, 192
  %v7927 = vld [vmem:[%s7926] sm:$0xff]
  %v7928 = vld [vmem:[%s7926 + $0x8] sm:$0xff]
  %v7929 = vld [vmem:[%s7926 + $0x10] sm:$0xff]
  %v7930 = vld [vmem:[%s7926 + $0x18] sm:$0xff]
  %v7931 = vld [vmem:[%s7926 + $0x20] sm:$0xff]
  %v7932 = vld [vmem:[%s7926 + $0x28] sm:$0xff]
  %v7933 = vld [vmem:[%s7926 + $0x30] sm:$0xff]
  %v7934 = vld [vmem:[%s7926 + $0x38] sm:$0xff]
  %s7935 = scalar_lea.vmem %s27, 6
  %v7936 = vld [vmem:[%s7935] sm:$0x3]
  %v7938 = vlaneseq
  %v7939 = vshrl.u32 %v7938, 7
  %v7940 = vsub.s32 0, %v7939
  %v7941 = vrot.slane %v7936, %v7940
  %v7942 = vlaneseq
  %v7943 = vshrl.u32 %v7942, 7
  %v7944 = vsub.s32 1, %v7943
  %v7945 = vrot.slane %v7936, %v7944
  %v7956 = vunpack.c.l.b16 %v7927
  %v7957 = vunpack.c.h.b16 %v7927
  %v7958 = vunpack.c.l.b16 %v7928
  %v7959 = vunpack.c.h.b16 %v7928
  %v7960 = vunpack.c.l.b16 %v7929
  %v7961 = vunpack.c.h.b16 %v7929
  %v7962 = vunpack.c.l.b16 %v7930
  %v7963 = vunpack.c.h.b16 %v7930
  %v7964 = vunpack.c.l.b16 %v7931
  %v7965 = vunpack.c.h.b16 %v7931
  %v7966 = vunpack.c.l.b16 %v7932
  %v7967 = vunpack.c.h.b16 %v7932
  %v7968 = vunpack.c.l.b16 %v7933
  %v7969 = vunpack.c.h.b16 %v7933
  %v7970 = vunpack.c.l.b16 %v7934
  %v7971 = vunpack.c.h.b16 %v7934
  %v7972 = vpack.c.b16 %v7958, %v7956
  %v7973 = vpack.c.b16 %v7959, %v7957
  %v7974 = vpack.c.b16 %v7962, %v7960
  %v7975 = vpack.c.b16 %v7963, %v7961
  %v7976 = vpack.c.b16 %v7966, %v7964
  %v7977 = vpack.c.b16 %v7967, %v7965
  %v7978 = vpack.c.b16 %v7970, %v7968
  %v7979 = vpack.c.b16 %v7971, %v7969
  %v7989 = vsel %vm238, %v7925, 0
  %7991 = vmatprep.subr.bf16.mxu0 %v7973
  %7992 = vmatpush1.bf16.msra.mxu0 %v7972
  %7993 = vmatprep.subr.bf16.mxu0 %v7975
  %7994 = vmatpush1.bf16.msra.mxu0 %v7974
  %7995 = vmatprep.subr.bf16.mxu0 %v7977
  %7996 = vmatpush1.bf16.msra.mxu0 %v7976
  %7997 = vmatprep.subr.bf16.mxu0 %v7979
  %7998 = vmatpush1.bf16.msra.mxu0 %v7978
  %7999 = vmatprep.subr.bf16.mxu0 0
  %8000 = vmatpush1.bf16.msra.mxu0 0
  %8001 = vmatprep.subr.bf16.mxu0 0
  %8002 = vmatpush1.bf16.msra.mxu0 0
  %8003 = vmatprep.subr.bf16.mxu0 0
  %8004 = vmatpush1.bf16.msra.mxu0 0
  %8005 = vmatprep.subr.bf16.mxu0 0
  %8006 = vmatpush1.bf16.msra.mxu0 0
  %8007 = vmatprep.subr.bf16.mxu0 0
  %8008 = vmatpush1.bf16.msra.mxu0 0
  %8009 = vmatprep.subr.bf16.mxu0 0
  %8010 = vmatpush1.bf16.msra.mxu0 0
  %8011 = vmatprep.subr.bf16.mxu0 0
  %8012 = vmatpush1.bf16.msra.mxu0 0
  %8013 = vmatprep.subr.bf16.mxu0 0
  %8014 = vmatpush1.bf16.msra.mxu0 0
  %8015 = vmatprep.subr.bf16.mxu0 0
  %8016 = vmatpush1.bf16.msra.mxu0 0
  %8017 = vmatprep.subr.bf16.mxu0 0
  %8018 = vmatpush1.bf16.msra.mxu0 0
  %8019 = vmatprep.subr.bf16.mxu0 0
  %8020 = vmatpush1.bf16.msra.mxu0 0
  %8021 = vmatprep.subr.bf16.mxu0 0
  %8022 = vmatpush1.bf16.msra.mxu0 0
  %8023 = vmatprep.mubr.bf16.mxu0 0
  %8024 = vmatmul.mubr.bf16.gmra.mrb[0].mxu0 %v7989
  %v8025 = vpop.f32.mrb[0].mxu0
  %v8026 = vadd.f32 %v7941, %v8025
  %v8027 = vpop.f32.mrb[0].mxu0
  %v8028 = vadd.f32 %v7945, %v8027
  %v8029 = vpop.f32.mrb[0].mxu0
  %v8030 = vadd.f32 %v7941, %v8029
  %v8031 = vpop.f32.mrb[0].mxu0
  %v8032 = vadd.f32 %v7945, %v8031
  %8033 = vdwg.mxu0
  %v8034 = vmax.f32 %v8026, 0.0
  %v8035 = vmax.f32 %v8028, 0.0
  %v8036 = vmax.f32 %v8030, 0.0
  %v8037 = vmax.f32 %v8032, 0.0
  %v8038 = vpack.c.bf16 %v8036, %v8034
  %v8039 = vpack.c.bf16 %v8037, %v8035
  %s8040 = scalar_lea.vmem %s29, 384
  %v8041 = vld [vmem:[%s8040] sm:$0xf]
  %v8042 = vld [vmem:[%s8040 + $0x4] sm:$0xf]
  %v8043 = vld [vmem:[%s8040 + $0x8] sm:$0xf]
  %v8044 = vld [vmem:[%s8040 + $0xc] sm:$0xf]
  %v8045 = vld [vmem:[%s8040 + $0x10] sm:$0xf]
  %v8046 = vld [vmem:[%s8040 + $0x14] sm:$0xf]
  %v8047 = vld [vmem:[%s8040 + $0x18] sm:$0xf]
  %v8048 = vld [vmem:[%s8040 + $0x1c] sm:$0xf]
  %v8049 = vld [vmem:[%s8040 + $0x20] sm:$0xf]
  %v8050 = vld [vmem:[%s8040 + $0x24] sm:$0xf]
  %v8051 = vld [vmem:[%s8040 + $0x28] sm:$0xf]
  %v8052 = vld [vmem:[%s8040 + $0x2c] sm:$0xf]
  %v8053 = vld [vmem:[%s8040 + $0x30] sm:$0xf]
  %v8054 = vld [vmem:[%s8040 + $0x34] sm:$0xf]
  %v8055 = vld [vmem:[%s8040 + $0x38] sm:$0xf]
  %v8056 = vld [vmem:[%s8040 + $0x3c] sm:$0xf]
  %v8057 = vld [vmem:[%s8040 + $0x40] sm:$0xf]
  %v8058 = vld [vmem:[%s8040 + $0x44] sm:$0xf]
  %v8059 = vld [vmem:[%s8040 + $0x48] sm:$0xf]
  %v8060 = vld [vmem:[%s8040 + $0x4c] sm:$0xf]
  %v8061 = vld [vmem:[%s8040 + $0x50] sm:$0xf]
  %v8062 = vld [vmem:[%s8040 + $0x54] sm:$0xf]
  %v8063 = vld [vmem:[%s8040 + $0x58] sm:$0xf]
  %v8064 = vld [vmem:[%s8040 + $0x5c] sm:$0xf]
  %v8065 = vld [vmem:[%s8040 + $0x60] sm:$0xf]
  %v8066 = vld [vmem:[%s8040 + $0x64] sm:$0xf]
  %v8067 = vld [vmem:[%s8040 + $0x68] sm:$0xf]
  %v8068 = vld [vmem:[%s8040 + $0x6c] sm:$0xf]
  %v8069 = vld [vmem:[%s8040 + $0x70] sm:$0xf]
  %v8070 = vld [vmem:[%s8040 + $0x74] sm:$0xf]
  %v8071 = vld [vmem:[%s8040 + $0x78] sm:$0xf]
  %v8072 = vld [vmem:[%s8040 + $0x7c] sm:$0xf]
  %s8073 = scalar_lea.vmem %s31, 3
  %v8074 = vld [vmem:[%s8073] sm:$0x1]
  %v8076 = vlaneseq
  %v8077 = vshrl.u32 %v8076, 7
  %v8078 = vsub.s32 0, %v8077
  %v8079 = vrot.slane %v8074, %v8078
  %v8113 = vunpack.c.l.b16 %v8041
  %v8114 = vunpack.c.l.b16 %v8042
  %v8115 = vunpack.c.l.b16 %v8043
  %v8116 = vunpack.c.l.b16 %v8044
  %v8117 = vunpack.c.l.b16 %v8045
  %v8118 = vunpack.c.l.b16 %v8046
  %v8119 = vunpack.c.l.b16 %v8047
  %v8120 = vunpack.c.l.b16 %v8048
  %v8121 = vunpack.c.l.b16 %v8049
  %v8122 = vunpack.c.l.b16 %v8050
  %v8123 = vunpack.c.l.b16 %v8051
  %v8124 = vunpack.c.l.b16 %v8052
  %v8125 = vunpack.c.l.b16 %v8053
  %v8126 = vunpack.c.l.b16 %v8054
  %v8127 = vunpack.c.l.b16 %v8055
  %v8128 = vunpack.c.l.b16 %v8056
  %v8129 = vunpack.c.l.b16 %v8057
  %v8130 = vunpack.c.l.b16 %v8058
  %v8131 = vunpack.c.l.b16 %v8059
  %v8132 = vunpack.c.l.b16 %v8060
  %v8133 = vunpack.c.l.b16 %v8061
  %v8134 = vunpack.c.l.b16 %v8062
  %v8135 = vunpack.c.l.b16 %v8063
  %v8136 = vunpack.c.l.b16 %v8064
  %v8137 = vunpack.c.l.b16 %v8065
  %v8138 = vunpack.c.l.b16 %v8066
  %v8139 = vunpack.c.l.b16 %v8067
  %v8140 = vunpack.c.l.b16 %v8068
  %v8141 = vunpack.c.l.b16 %v8069
  %v8142 = vunpack.c.l.b16 %v8070
  %v8143 = vunpack.c.l.b16 %v8071
  %v8144 = vunpack.c.l.b16 %v8072
  %v8145 = vpack.c.b16 %v8114, %v8113
  %v8146 = vpack.c.b16 %v8116, %v8115
  %v8147 = vpack.c.b16 %v8118, %v8117
  %v8148 = vpack.c.b16 %v8120, %v8119
  %v8149 = vpack.c.b16 %v8122, %v8121
  %v8150 = vpack.c.b16 %v8124, %v8123
  %v8151 = vpack.c.b16 %v8126, %v8125
  %v8152 = vpack.c.b16 %v8128, %v8127
  %v8153 = vpack.c.b16 %v8130, %v8129
  %v8154 = vpack.c.b16 %v8132, %v8131
  %v8155 = vpack.c.b16 %v8134, %v8133
  %v8156 = vpack.c.b16 %v8136, %v8135
  %v8157 = vpack.c.b16 %v8138, %v8137
  %v8158 = vpack.c.b16 %v8140, %v8139
  %v8159 = vpack.c.b16 %v8142, %v8141
  %v8160 = vpack.c.b16 %v8144, %v8143
  %8177 = vmatprep.subr.bf16.mxu0 0
  %8178 = vmatpush1.bf16.msra.mxu0 %v8145
  %8179 = vmatprep.subr.bf16.mxu0 0
  %8180 = vmatpush1.bf16.msra.mxu0 %v8146
  %8181 = vmatprep.subr.bf16.mxu0 0
  %8182 = vmatpush1.bf16.msra.mxu0 %v8147
  %8183 = vmatprep.subr.bf16.mxu0 0
  %8184 = vmatpush1.bf16.msra.mxu0 %v8148
  %8185 = vmatprep.subr.bf16.mxu0 0
  %8186 = vmatpush1.bf16.msra.mxu0 %v8149
  %8187 = vmatprep.subr.bf16.mxu0 0
  %8188 = vmatpush1.bf16.msra.mxu0 %v8150
  %8189 = vmatprep.subr.bf16.mxu0 0
  %8190 = vmatpush1.bf16.msra.mxu0 %v8151
  %8191 = vmatprep.subr.bf16.mxu0 0
  %8192 = vmatpush1.bf16.msra.mxu0 %v8152
  %8193 = vmatprep.subr.bf16.mxu0 0
  %8194 = vmatpush1.bf16.msra.mxu0 %v8153
  %8195 = vmatprep.subr.bf16.mxu0 0
  %8196 = vmatpush1.bf16.msra.mxu0 %v8154
  %8197 = vmatprep.subr.bf16.mxu0 0
  %8198 = vmatpush1.bf16.msra.mxu0 %v8155
  %8199 = vmatprep.subr.bf16.mxu0 0
  %8200 = vmatpush1.bf16.msra.mxu0 %v8156
  %8201 = vmatprep.subr.bf16.mxu0 0
  %8202 = vmatpush1.bf16.msra.mxu0 %v8157
  %8203 = vmatprep.subr.bf16.mxu0 0
  %8204 = vmatpush1.bf16.msra.mxu0 %v8158
  %8205 = vmatprep.subr.bf16.mxu0 0
  %8206 = vmatpush1.bf16.msra.mxu0 %v8159
  %8207 = vmatprep.subr.bf16.mxu0 0
  %8208 = vmatpush1.bf16.msra.mxu0 %v8160
  %8209 = vmatprep.mubr.bf16.mxu0 %v8039
  %8210 = vmatmul.mubr.bf16.gmra.mrb[0].mxu0 %v8038
  %v8211 = vpop.f32.mrb[0].mxu0
  %v8212 = vadd.f32 %v8079, %v8211
  %v8213 = vpop.f32.mrb[0].mxu0
  %v8214 = vpop.f32.mrb[0].mxu0
  %v8215 = vadd.f32 %v8079, %v8214
  %v8216 = vpop.f32.mrb[0].mxu0
  %8217 = vdwg.mxu0
  %v8218 = vadd.f32 %v7923, %v8212
  %v8219 = vadd.f32 %v7924, %v8215
  %s8220 = scalar_lea.vmem %s33, 3
  %v8221 = vld [vmem:[%s8220] sm:$0x1]
  %s8222 = scalar_lea.vmem %s35, 3
  %v8223 = vld [vmem:[%s8222] sm:$0x1]
  %v8224 = vsel %vm238, %v8218, 0.0
  %8225 = vadd.xlane.f32.xlu0 %v8224
  %v8226 = vpop.xlane.xlu0 %8225
  %v8227 = vsel %vm238, %v8219, 0.0
  %8228 = vadd.xlane.f32.xlu0 %v8227
  %v8229 = vpop.xlane.xlu0 %8228
  %v8230 = vmul.f32 %v8226, %v1822
  %v8231 = vmul.f32 %v8229, %v1822
  %v8232 = vsub.f32 %v8218, %v8230
  %v8233 = vsub.f32 %v8219, %v8231
  %v8234 = vmul.f32 %v8232, %v8232
  %v8235 = vmul.f32 %v8233, %v8233
  %v8236 = vsel %vm238, %v8234, 0.0
  %8237 = vadd.xlane.f32.xlu0 %v8236
  %v8238 = vpop.xlane.xlu0 %8237
  %v8239 = vsel %vm238, %v8235, 0.0
  %8240 = vadd.xlane.f32.xlu0 %v8239
  %v8241 = vpop.xlane.xlu0 %8240
  %v8242 = vmul.f32 %v8238, %v1822
  %v8243 = vmul.f32 %v8241, %v1822
  %v8244 = vadd.f32 %v8242, 1e-05
  %v8245 = vadd.f32 %v8243, 1e-05
  %v8246 = vrsqrt.pop %v8244
  %v8247 = vrsqrt.pop %v8245
  %v8248 = vmul.f32 %v8232, %v8246
  %v8249 = vmul.f32 %v8233, %v8247
  %v8251 = vlaneseq
  %v8252 = vshrl.u32 %v8251, 7
  %v8253 = vsub.s32 0, %v8252
  %v8254 = vrot.slane %v8221, %v8253
  %v8256 = vmul.f32 %v8248, %v8254
  %v8257 = vmul.f32 %v8249, %v8254
  %v8259 = vlaneseq
  %v8260 = vshrl.u32 %v8259, 7
  %v8261 = vsub.s32 0, %v8260
  %v8262 = vrot.slane %v8223, %v8261
  %v8264 = vadd.f32 %v8256, %v8262
  %v8265 = vadd.f32 %v8257, %v8262
  %v8266 = vld [vmem:[%s3] sm:$0x3]
  %v8267 = vpack.c.bf16 %v8266, %v8266
  %v8268 = vld [vmem:[%s37] sm:$0xf]
  %v8269 = vld [vmem:[%s37 + $0x4] sm:$0xf]
  %v8270 = vld [vmem:[%s37 + $0x8] sm:$0xf]
  %v8271 = vld [vmem:[%s37 + $0xc] sm:$0x7]
  %v8272 = vld [vmem:[%s39] sm:$0x1]
  %v8274 = vlaneseq
  %v8275 = vshrl.u32 %v8274, 7
  %v8276 = vsub.s32 0, %v8275
  %v8277 = vrot.slane %v8272, %v8276
  %v8283 = vunpack.c.l.b16 %v8268
  %v8284 = vunpack.c.l.b16 %v8269
  %v8285 = vunpack.c.l.b16 %v8270
  %v8286 = vunpack.c.l.b16 %v8271
  %v8287 = vpack.c.b16 %v8284, %v8283
  %v8288 = vpack.c.b16 %v8286, %v8285
  %vm8290 = vcmask 244736
  %v8292 = vsel %vm8290, %v8267, 0
  %vm8294 = vcmask 1046528
  %v8296 = vsel %vm8294, %v8288, 0
  %8298 = vmatprep.subr.bf16.mxu0 0
  %8299 = vmatpush1.bf16.msra.mxu0 %v8287
  %8300 = vmatprep.subr.bf16.mxu0 0
  %8301 = vmatpush1.bf16.msra.mxu0 %v8296
  %8302 = vmatprep.subr.bf16.mxu0 0
  %8303 = vmatpush1.bf16.msra.mxu0 0
  %8304 = vmatprep.subr.bf16.mxu0 0
  %8305 = vmatpush1.bf16.msra.mxu0 0
  %8306 = vmatprep.subr.bf16.mxu0 0
  %8307 = vmatpush1.bf16.msra.mxu0 0
  %8308 = vmatprep.subr.bf16.mxu0 0
  %8309 = vmatpush1.bf16.msra.mxu0 0
  %8310 = vmatprep.subr.bf16.mxu0 0
  %8311 = vmatpush1.bf16.msra.mxu0 0
  %8312 = vmatprep.subr.bf16.mxu0 0
  %8313 = vmatpush1.bf16.msra.mxu0 0
  %8314 = vmatprep.subr.bf16.mxu0 0
  %8315 = vmatpush1.bf16.msra.mxu0 0
  %8316 = vmatprep.subr.bf16.mxu0 0
  %8317 = vmatpush1.bf16.msra.mxu0 0
  %8318 = vmatprep.subr.bf16.mxu0 0
  %8319 = vmatpush1.bf16.msra.mxu0 0
  %8320 = vmatprep.subr.bf16.mxu0 0
  %8321 = vmatpush1.bf16.msra.mxu0 0
  %8322 = vmatprep.subr.bf16.mxu0 0
  %8323 = vmatpush1.bf16.msra.mxu0 0
  %8324 = vmatprep.subr.bf16.mxu0 0
  %8325 = vmatpush1.bf16.msra.mxu0 0
  %8326 = vmatprep.subr.bf16.mxu0 0
  %8327 = vmatpush1.bf16.msra.mxu0 0
  %8328 = vmatprep.subr.bf16.mxu0 0
  %8329 = vmatpush1.bf16.msra.mxu0 0
  %8330 = vmatprep.mubr.bf16.mxu0 0
  %8331 = vmatmul.mubr.bf16.gmra.mrb[0].mxu0 %v8292
  %v8332 = vpop.f32.mrb[0].mxu0
  %v8333 = vadd.f32 %v8277, %v8332
  %v8334 = vpop.f32.mrb[0].mxu0
  %v8335 = vpop.f32.mrb[0].mxu0
  %v8336 = vpop.f32.mrb[0].mxu0
  %8337 = vdwg.mxu0
  %v8338 = vmax.f32 %v8333, 0.0
  %v8339 = vpack.c.bf16 %v8338, %v8338
  %v8340 = vld [vmem:[%s41] sm:$0xf]
  %v8341 = vld [vmem:[%s41 + $0x4] sm:$0xf]
  %v8342 = vld [vmem:[%s41 + $0x8] sm:$0xf]
  %v8343 = vld [vmem:[%s41 + $0xc] sm:$0xf]
  %v8344 = vld [vmem:[%s41 + $0x10] sm:$0xf]
  %v8345 = vld [vmem:[%s41 + $0x14] sm:$0xf]
  %v8346 = vld [vmem:[%s41 + $0x18] sm:$0xf]
  %v8347 = vld [vmem:[%s41 + $0x1c] sm:$0xf]
  %v8348 = vld [vmem:[%s43] sm:$0x1]
  %v8350 = vlaneseq
  %v8351 = vshrl.u32 %v8350, 7
  %v8352 = vsub.s32 0, %v8351
  %v8353 = vrot.slane %v8348, %v8352
  %v8363 = vunpack.c.l.b16 %v8340
  %v8364 = vunpack.c.l.b16 %v8341
  %v8365 = vunpack.c.l.b16 %v8342
  %v8366 = vunpack.c.l.b16 %v8343
  %v8367 = vunpack.c.l.b16 %v8344
  %v8368 = vunpack.c.l.b16 %v8345
  %v8369 = vunpack.c.l.b16 %v8346
  %v8370 = vunpack.c.l.b16 %v8347
  %v8371 = vpack.c.b16 %v8364, %v8363
  %v8372 = vpack.c.b16 %v8366, %v8365
  %v8373 = vpack.c.b16 %v8368, %v8367
  %v8374 = vpack.c.b16 %v8370, %v8369
  %v8380 = vsel %vm238, %v8339, 0
  %8382 = vmatprep.subr.bf16.mxu0 0
  %8383 = vmatpush1.bf16.msra.mxu0 %v8371
  %8384 = vmatprep.subr.bf16.mxu0 0
  %8385 = vmatpush1.bf16.msra.mxu0 %v8372
  %8386 = vmatprep.subr.bf16.mxu0 0
  %8387 = vmatpush1.bf16.msra.mxu0 %v8373
  %8388 = vmatprep.subr.bf16.mxu0 0
  %8389 = vmatpush1.bf16.msra.mxu0 %v8374
  %8390 = vmatprep.subr.bf16.mxu0 0
  %8391 = vmatpush1.bf16.msra.mxu0 0
  %8392 = vmatprep.subr.bf16.mxu0 0
  %8393 = vmatpush1.bf16.msra.mxu0 0
  %8394 = vmatprep.subr.bf16.mxu0 0
  %8395 = vmatpush1.bf16.msra.mxu0 0
  %8396 = vmatprep.subr.bf16.mxu0 0
  %8397 = vmatpush1.bf16.msra.mxu0 0
  %8398 = vmatprep.subr.bf16.mxu0 0
  %8399 = vmatpush1.bf16.msra.mxu0 0
  %8400 = vmatprep.subr.bf16.mxu0 0
  %8401 = vmatpush1.bf16.msra.mxu0 0
  %8402 = vmatprep.subr.bf16.mxu0 0
  %8403 = vmatpush1.bf16.msra.mxu0 0
  %8404 = vmatprep.subr.bf16.mxu0 0
  %8405 = vmatpush1.bf16.msra.mxu0 0
  %8406 = vmatprep.subr.bf16.mxu0 0
  %8407 = vmatpush1.bf16.msra.mxu0 0
  %8408 = vmatprep.subr.bf16.mxu0 0
  %8409 = vmatpush1.bf16.msra.mxu0 0
  %8410 = vmatprep.subr.bf16.mxu0 0
  %8411 = vmatpush1.bf16.msra.mxu0 0
  %8412 = vmatprep.subr.bf16.mxu0 0
  %8413 = vmatpush1.bf16.msra.mxu0 0
  %8414 = vmatprep.mubr.bf16.mxu0 0
  %8415 = vmatmul.mubr.bf16.gmra.mrb[0].mxu0 %v8380
  %v8416 = vpop.f32.mrb[0].mxu0
  %v8417 = vadd.f32 %v8353, %v8416
  %v8418 = vpop.f32.mrb[0].mxu0
  %v8419 = vpop.f32.mrb[0].mxu0
  %v8420 = vpop.f32.mrb[0].mxu0
  %8421 = vdwg.mxu0
  %v8422 = vmax.f32 %v8417, 0.0
  %v8423 = vpack.c.bf16 %v8422, %v8422
  %v8424 = vld [vmem:[%s45] sm:$0xf]
  %v8425 = vld [vmem:[%s45 + $0x4] sm:$0xf]
  %v8426 = vld [vmem:[%s45 + $0x8] sm:$0xf]
  %v8427 = vld [vmem:[%s45 + $0xc] sm:$0xf]
  %v8428 = vld [vmem:[%s45 + $0x10] sm:$0xf]
  %v8429 = vld [vmem:[%s45 + $0x14] sm:$0xf]
  %v8430 = vld [vmem:[%s45 + $0x18] sm:$0xf]
  %v8431 = vld [vmem:[%s45 + $0x1c] sm:$0xf]
  %v8432 = vld [vmem:[%s47] sm:$0x1]
  %v8434 = vlaneseq
  %v8435 = vshrl.u32 %v8434, 7
  %v8436 = vsub.s32 0, %v8435
  %v8437 = vrot.slane %v8432, %v8436
  %v8447 = vunpack.c.l.b16 %v8424
  %v8448 = vunpack.c.l.b16 %v8425
  %v8449 = vunpack.c.l.b16 %v8426
  %v8450 = vunpack.c.l.b16 %v8427
  %v8451 = vunpack.c.l.b16 %v8428
  %v8452 = vunpack.c.l.b16 %v8429
  %v8453 = vunpack.c.l.b16 %v8430
  %v8454 = vunpack.c.l.b16 %v8431
  %v8455 = vpack.c.b16 %v8448, %v8447
  %v8456 = vpack.c.b16 %v8450, %v8449
  %v8457 = vpack.c.b16 %v8452, %v8451
  %v8458 = vpack.c.b16 %v8454, %v8453
  %v8464 = vsel %vm238, %v8423, 0
  %8466 = vmatprep.subr.bf16.mxu0 0
  %8467 = vmatpush1.bf16.msra.mxu0 %v8455
  %8468 = vmatprep.subr.bf16.mxu0 0
  %8469 = vmatpush1.bf16.msra.mxu0 %v8456
  %8470 = vmatprep.subr.bf16.mxu0 0
  %8471 = vmatpush1.bf16.msra.mxu0 %v8457
  %8472 = vmatprep.subr.bf16.mxu0 0
  %8473 = vmatpush1.bf16.msra.mxu0 %v8458
  %8474 = vmatprep.subr.bf16.mxu0 0
  %8475 = vmatpush1.bf16.msra.mxu0 0
  %8476 = vmatprep.subr.bf16.mxu0 0
  %8477 = vmatpush1.bf16.msra.mxu0 0
  %8478 = vmatprep.subr.bf16.mxu0 0
  %8479 = vmatpush1.bf16.msra.mxu0 0
  %8480 = vmatprep.subr.bf16.mxu0 0
  %8481 = vmatpush1.bf16.msra.mxu0 0
  %8482 = vmatprep.subr.bf16.mxu0 0
  %8483 = vmatpush1.bf16.msra.mxu0 0
  %8484 = vmatprep.subr.bf16.mxu0 0
  %8485 = vmatpush1.bf16.msra.mxu0 0
  %8486 = vmatprep.subr.bf16.mxu0 0
  %8487 = vmatpush1.bf16.msra.mxu0 0
  %8488 = vmatprep.subr.bf16.mxu0 0
  %8489 = vmatpush1.bf16.msra.mxu0 0
  %8490 = vmatprep.subr.bf16.mxu0 0
  %8491 = vmatpush1.bf16.msra.mxu0 0
  %8492 = vmatprep.subr.bf16.mxu0 0
  %8493 = vmatpush1.bf16.msra.mxu0 0
  %8494 = vmatprep.subr.bf16.mxu0 0
  %8495 = vmatpush1.bf16.msra.mxu0 0
  %8496 = vmatprep.subr.bf16.mxu0 0
  %8497 = vmatpush1.bf16.msra.mxu0 0
  %8498 = vmatprep.mubr.bf16.mxu0 0
  %8499 = vmatmul.mubr.bf16.gmra.mrb[0].mxu0 %v8464
  %v8500 = vpop.f32.mrb[0].mxu0
  %v8501 = vadd.f32 %v8437, %v8500
  %v8502 = vpop.f32.mrb[0].mxu0
  %v8503 = vpop.f32.mrb[0].mxu0
  %v8504 = vpop.f32.mrb[0].mxu0
  %8505 = vdwg.mxu0
  %v8506 = vpack.c.bf16 %v8501, %v8501
  %v8507 = vld [vmem:[%s49] sm:$0xf]
  %v8508 = vld [vmem:[%s49 + $0x4] sm:$0xf]
  %v8509 = vld [vmem:[%s49 + $0x8] sm:$0xf]
  %v8510 = vld [vmem:[%s49 + $0xc] sm:$0xf]
  %v8511 = vld [vmem:[%s49 + $0x10] sm:$0xf]
  %v8512 = vld [vmem:[%s49 + $0x14] sm:$0xf]
  %v8513 = vld [vmem:[%s49 + $0x18] sm:$0xf]
  %v8514 = vld [vmem:[%s49 + $0x1c] sm:$0xf]
  %v8515 = vld [vmem:[%s51] sm:$0x1]
  %v8517 = vlaneseq
  %v8518 = vshrl.u32 %v8517, 7
  %v8519 = vsub.s32 0, %v8518
  %v8520 = vrot.slane %v8515, %v8519
  %v8530 = vunpack.c.l.b16 %v8507
  %v8531 = vunpack.c.l.b16 %v8508
  %v8532 = vunpack.c.l.b16 %v8509
  %v8533 = vunpack.c.l.b16 %v8510
  %v8534 = vunpack.c.l.b16 %v8511
  %v8535 = vunpack.c.l.b16 %v8512
  %v8536 = vunpack.c.l.b16 %v8513
  %v8537 = vunpack.c.l.b16 %v8514
  %v8538 = vpack.c.b16 %v8531, %v8530
  %v8539 = vpack.c.b16 %v8533, %v8532
  %v8540 = vpack.c.b16 %v8535, %v8534
  %v8541 = vpack.c.b16 %v8537, %v8536
  %v8547 = vsel %vm238, %v8506, 0
  %8549 = vmatprep.subr.bf16.mxu0 0
  %8550 = vmatpush1.bf16.msra.mxu0 %v8538
  %8551 = vmatprep.subr.bf16.mxu0 0
  %8552 = vmatpush1.bf16.msra.mxu0 %v8539
  %8553 = vmatprep.subr.bf16.mxu0 0
  %8554 = vmatpush1.bf16.msra.mxu0 %v8540
  %8555 = vmatprep.subr.bf16.mxu0 0
  %8556 = vmatpush1.bf16.msra.mxu0 %v8541
  %8557 = vmatprep.subr.bf16.mxu0 0
  %8558 = vmatpush1.bf16.msra.mxu0 0
  %8559 = vmatprep.subr.bf16.mxu0 0
  %8560 = vmatpush1.bf16.msra.mxu0 0
  %8561 = vmatprep.subr.bf16.mxu0 0
  %8562 = vmatpush1.bf16.msra.mxu0 0
  %8563 = vmatprep.subr.bf16.mxu0 0
  %8564 = vmatpush1.bf16.msra.mxu0 0
  %8565 = vmatprep.subr.bf16.mxu0 0
  %8566 = vmatpush1.bf16.msra.mxu0 0
  %8567 = vmatprep.subr.bf16.mxu0 0
  %8568 = vmatpush1.bf16.msra.mxu0 0
  %8569 = vmatprep.subr.bf16.mxu0 0
  %8570 = vmatpush1.bf16.msra.mxu0 0
  %8571 = vmatprep.subr.bf16.mxu0 0
  %8572 = vmatpush1.bf16.msra.mxu0 0
  %8573 = vmatprep.subr.bf16.mxu0 0
  %8574 = vmatpush1.bf16.msra.mxu0 0
  %8575 = vmatprep.subr.bf16.mxu0 0
  %8576 = vmatpush1.bf16.msra.mxu0 0
  %8577 = vmatprep.subr.bf16.mxu0 0
  %8578 = vmatpush1.bf16.msra.mxu0 0
  %8579 = vmatprep.subr.bf16.mxu0 0
  %8580 = vmatpush1.bf16.msra.mxu0 0
  %8581 = vmatprep.mubr.bf16.mxu0 0
  %8582 = vmatmul.mubr.bf16.gmra.mrb[0].mxu0 %v8547
  %v8583 = vpop.f32.mrb[0].mxu0
  %v8584 = vadd.f32 %v8520, %v8583
  %v8585 = vpop.f32.mrb[0].mxu0
  %v8586 = vpop.f32.mrb[0].mxu0
  %v8587 = vpop.f32.mrb[0].mxu0
  %8588 = vdwg.mxu0
  %v8589 = vmax.f32 %v8584, 0.0
  %v8590 = vpack.c.bf16 %v8589, %v8589
  %v8591 = vld [vmem:[%s53] sm:$0xf]
  %v8592 = vld [vmem:[%s53 + $0x4] sm:$0xf]
  %v8593 = vld [vmem:[%s55] sm:$0x1]
  %v8595 = vlaneseq
  %v8596 = vshrl.u32 %v8595, 7
  %v8597 = vsub.s32 0, %v8596
  %v8598 = vrot.slane %v8593, %v8597
  %v8602 = vunpack.c.l.b16 %v8591
  %v8603 = vunpack.c.l.b16 %v8592
  %v8604 = vpack.c.b16 %v8603, %v8602
  %v8607 = vsel %vm871, %v8590, 0
  %8609 = vmatprep.subr.bf16.mxu0 0
  %8610 = vmatpush1.bf16.msra.mxu0 %v8604
  %8611 = vmatprep.subr.bf16.mxu0 0
  %8612 = vmatpush1.bf16.msra.mxu0 0
  %8613 = vmatprep.subr.bf16.mxu0 0
  %8614 = vmatpush1.bf16.msra.mxu0 0
  %8615 = vmatprep.subr.bf16.mxu0 0
  %8616 = vmatpush1.bf16.msra.mxu0 0
  %8617 = vmatprep.subr.bf16.mxu0 0
  %8618 = vmatpush1.bf16.msra.mxu0 0
  %8619 = vmatprep.subr.bf16.mxu0 0
  %8620 = vmatpush1.bf16.msra.mxu0 0
  %8621 = vmatprep.subr.bf16.mxu0 0
  %8622 = vmatpush1.bf16.msra.mxu0 0
  %8623 = vmatprep.subr.bf16.mxu0 0
  %8624 = vmatpush1.bf16.msra.mxu0 0
  %8625 = vmatprep.subr.bf16.mxu0 0
  %8626 = vmatpush1.bf16.msra.mxu0 0
  %8627 = vmatprep.subr.bf16.mxu0 0
  %8628 = vmatpush1.bf16.msra.mxu0 0
  %8629 = vmatprep.subr.bf16.mxu0 0
  %8630 = vmatpush1.bf16.msra.mxu0 0
  %8631 = vmatprep.subr.bf16.mxu0 0
  %8632 = vmatpush1.bf16.msra.mxu0 0
  %8633 = vmatprep.subr.bf16.mxu0 0
  %8634 = vmatpush1.bf16.msra.mxu0 0
  %8635 = vmatprep.subr.bf16.mxu0 0
  %8636 = vmatpush1.bf16.msra.mxu0 0
  %8637 = vmatprep.subr.bf16.mxu0 0
  %8638 = vmatpush1.bf16.msra.mxu0 0
  %8639 = vmatprep.subr.bf16.mxu0 0
  %8640 = vmatpush1.bf16.msra.mxu0 0
  %8641 = vmatprep.mubr.bf16.mxu0 0
  %8642 = vmatmul.mubr.bf16.gmra.mrb[0].mxu0 %v8607
  %v8643 = vpop.f32.mrb[0].mxu0
  %v8644 = vadd.f32 %v8598, %v8643
  %v8645 = vpop.f32.mrb[0].mxu0
  %v8646 = vpop.f32.mrb[0].mxu0
  %v8647 = vpop.f32.mrb[0].mxu0
  %8648 = vdwg.mxu0
  %v8649 = vsub.f32 0.0, %v8644
  %v8650 = vmul.f32 %v8649, 1.442695
  %v8651 = vpow.pop %v8650
  %v8652 = vadd.f32 %v8651, 1.0
  %v8653 = vrcp.pop %v8652
  %v8654 = vmul.f32 1.0, %v8653
  %v8655 = vmul.f32 %v8501, %v8654
  %v8656 = vadd.f32 %v8338, %v8655
  %v8657 = vmax.f32 %v8656, 0.0
  %v8658 = vpack.c.bf16 %v8657, %v8657
  %v8659 = vld [vmem:[%s59] sm:$0xf]
  %v8660 = vld [vmem:[%s59 + $0x4] sm:$0xf]
  %v8661 = vld [vmem:[%s59 + $0x8] sm:$0xf]
  %v8662 = vld [vmem:[%s59 + $0xc] sm:$0xf]
  %v8663 = vld [vmem:[%s59 + $0x10] sm:$0xf]
  %v8664 = vld [vmem:[%s59 + $0x14] sm:$0xf]
  %v8665 = vld [vmem:[%s59 + $0x18] sm:$0xf]
  %v8666 = vld [vmem:[%s59 + $0x1c] sm:$0xf]
  %v8675 = vunpack.c.l.b16 %v8659
  %v8676 = vunpack.c.l.b16 %v8660
  %v8677 = vunpack.c.l.b16 %v8661
  %v8678 = vunpack.c.l.b16 %v8662
  %v8679 = vunpack.c.l.b16 %v8663
  %v8680 = vunpack.c.l.b16 %v8664
  %v8681 = vunpack.c.l.b16 %v8665
  %v8682 = vunpack.c.l.b16 %v8666
  %v8683 = vpack.c.b16 %v8676, %v8675
  %v8684 = vpack.c.b16 %v8678, %v8677
  %v8685 = vpack.c.b16 %v8680, %v8679
  %v8686 = vpack.c.b16 %v8682, %v8681
  %v8692 = vsel %vm238, %v8658, 0
  %8694 = vmatprep.subr.bf16.mxu0 0
  %8695 = vmatpush1.bf16.msra.mxu0 %v8683
  %8696 = vmatprep.subr.bf16.mxu0 0
  %8697 = vmatpush1.bf16.msra.mxu0 %v8684
  %8698 = vmatprep.subr.bf16.mxu0 0
  %8699 = vmatpush1.bf16.msra.mxu0 %v8685
  %8700 = vmatprep.subr.bf16.mxu0 0
  %8701 = vmatpush1.bf16.msra.mxu0 %v8686
  %8702 = vmatprep.subr.bf16.mxu0 0
  %8703 = vmatpush1.bf16.msra.mxu0 0
  %8704 = vmatprep.subr.bf16.mxu0 0
  %8705 = vmatpush1.bf16.msra.mxu0 0
  %8706 = vmatprep.subr.bf16.mxu0 0
  %8707 = vmatpush1.bf16.msra.mxu0 0
  %8708 = vmatprep.subr.bf16.mxu0 0
  %8709 = vmatpush1.bf16.msra.mxu0 0
  %8710 = vmatprep.subr.bf16.mxu0 0
  %8711 = vmatpush1.bf16.msra.mxu0 0
  %8712 = vmatprep.subr.bf16.mxu0 0
  %8713 = vmatpush1.bf16.msra.mxu0 0
  %8714 = vmatprep.subr.bf16.mxu0 0
  %8715 = vmatpush1.bf16.msra.mxu0 0
  %8716 = vmatprep.subr.bf16.mxu0 0
  %8717 = vmatpush1.bf16.msra.mxu0 0
  %8718 = vmatprep.subr.bf16.mxu0 0
  %8719 = vmatpush1.bf16.msra.mxu0 0
  %8720 = vmatprep.subr.bf16.mxu0 0
  %8721 = vmatpush1.bf16.msra.mxu0 0
  %8722 = vmatprep.subr.bf16.mxu0 0
  %8723 = vmatpush1.bf16.msra.mxu0 0
  %8724 = vmatprep.subr.bf16.mxu0 0
  %8725 = vmatpush1.bf16.msra.mxu0 0
  %8726 = vmatprep.mubr.bf16.mxu0 0
  %8727 = vmatmul.mubr.bf16.gmra.mrb[0].mxu0 %v8692
  %v8728 = vpop.f32.mrb[0].mxu0
  %v8729 = vadd.f32 0.0, %v8728
  %v8730 = vpop.f32.mrb[0].mxu0
  %v8731 = vpop.f32.mrb[0].mxu0
  %v8732 = vpop.f32.mrb[0].mxu0
  %8733 = vdwg.mxu0
  %v8734 = vlaneseq
  %v8735 = vshrl.u32 %v8734, 7
  %v8736 = vsub.s32 0, %v8735
  %v8737 = vrot.slane %v8729, %v8736
  %v8738 = vlaneseq
  %v8739 = vshrl.u32 %v8738, 7
  %v8740 = vsub.s32 1, %v8739
  %v8741 = vrot.slane %v8729, %v8740
  %v8742 = vpack.c.bf16 %v8265, %v8264
  %v8743 = vld [vmem:[%s57] sm:$0xf]
  %v8744 = vld [vmem:[%s57 + $0x4] sm:$0xf]
  %v8745 = vld [vmem:[%s57 + $0x8] sm:$0xf]
  %v8746 = vld [vmem:[%s57 + $0xc] sm:$0xf]
  %v8747 = vld [vmem:[%s57 + $0x10] sm:$0xf]
  %v8748 = vld [vmem:[%s57 + $0x14] sm:$0xf]
  %v8749 = vld [vmem:[%s57 + $0x18] sm:$0xf]
  %v8750 = vld [vmem:[%s57 + $0x1c] sm:$0xf]
  %v8759 = vunpack.c.l.b16 %v8743
  %v8760 = vunpack.c.l.b16 %v8744
  %v8761 = vunpack.c.l.b16 %v8745
  %v8762 = vunpack.c.l.b16 %v8746
  %v8763 = vunpack.c.l.b16 %v8747
  %v8764 = vunpack.c.l.b16 %v8748
  %v8765 = vunpack.c.l.b16 %v8749
  %v8766 = vunpack.c.l.b16 %v8750
  %v8767 = vpack.c.b16 %v8760, %v8759
  %v8768 = vpack.c.b16 %v8762, %v8761
  %v8769 = vpack.c.b16 %v8764, %v8763
  %v8770 = vpack.c.b16 %v8766, %v8765
  %v8776 = vsel %vm238, %v8742, 0
  %8778 = vmatprep.subr.bf16.mxu0 0
  %8779 = vmatpush1.bf16.msra.mxu0 %v8767
  %8780 = vmatprep.subr.bf16.mxu0 0
  %8781 = vmatpush1.bf16.msra.mxu0 %v8768
  %8782 = vmatprep.subr.bf16.mxu0 0
  %8783 = vmatpush1.bf16.msra.mxu0 %v8769
  %8784 = vmatprep.subr.bf16.mxu0 0
  %8785 = vmatpush1.bf16.msra.mxu0 %v8770
  %8786 = vmatprep.subr.bf16.mxu0 0
  %8787 = vmatpush1.bf16.msra.mxu0 0
  %8788 = vmatprep.subr.bf16.mxu0 0
  %8789 = vmatpush1.bf16.msra.mxu0 0
  %8790 = vmatprep.subr.bf16.mxu0 0
  %8791 = vmatpush1.bf16.msra.mxu0 0
  %8792 = vmatprep.subr.bf16.mxu0 0
  %8793 = vmatpush1.bf16.msra.mxu0 0
  %8794 = vmatprep.subr.bf16.mxu0 0
  %8795 = vmatpush1.bf16.msra.mxu0 0
  %8796 = vmatprep.subr.bf16.mxu0 0
  %8797 = vmatpush1.bf16.msra.mxu0 0
  %8798 = vmatprep.subr.bf16.mxu0 0
  %8799 = vmatpush1.bf16.msra.mxu0 0
  %8800 = vmatprep.subr.bf16.mxu0 0
  %8801 = vmatpush1.bf16.msra.mxu0 0
  %8802 = vmatprep.subr.bf16.mxu0 0
  %8803 = vmatpush1.bf16.msra.mxu0 0
  %8804 = vmatprep.subr.bf16.mxu0 0
  %8805 = vmatpush1.bf16.msra.mxu0 0
  %8806 = vmatprep.subr.bf16.mxu0 0
  %8807 = vmatpush1.bf16.msra.mxu0 0
  %8808 = vmatprep.subr.bf16.mxu0 0
  %8809 = vmatpush1.bf16.msra.mxu0 0
  %8810 = vmatprep.mubr.bf16.mxu0 0
  %8811 = vmatmul.mubr.bf16.gmra.mrb[0].mxu0 %v8776
  %v8812 = vpop.f32.mrb[0].mxu0
  %v8813 = vadd.f32 %v8737, %v8812
  %v8814 = vpop.f32.mrb[0].mxu0
  %v8815 = vpop.f32.mrb[0].mxu0
  %v8816 = vadd.f32 %v8741, %v8815
  %v8817 = vpop.f32.mrb[0].mxu0
  %8818 = vdwg.mxu0
  %v8819 = vld [vmem:[%s61] sm:$0x1]
  %v8821 = vlaneseq
  %v8822 = vshrl.u32 %v8821, 7
  %v8823 = vsub.s32 0, %v8822
  %v8824 = vrot.slane %v8819, %v8823
  %v8826 = vadd.f32 %v8813, %v8824
  %v8827 = vadd.f32 %v8816, %v8824
  %v8828 = vmax.f32 %v8826, 0.0
  %v8829 = vmax.f32 %v8827, 0.0
  %v8830 = vld [vmem:[%s63] sm:$0x1]
  %v8831 = vpack.c.bf16 %v8829, %v8828
  %v8832 = vld [vmem:[#allocation2] sm:$0x1]
  %8834 = vset.pattern.permute.xlu0 0
  %8835 = vperm.xlu0 %8834, %v8832
  %v8836 = vpop.permute.xlu0 %8835
  %v8838 = vlaneseq
  %v8839 = vshrl.u32 %v8838, 7
  %v8840 = vsub.s32 0, %v8839
  %v8841 = vrot.slane %v8836, %v8840
  %v8843 = vsel %vm238, %v8830, 0
  %v8846 = vsel %vm238, %v8831, 0
  %8848 = vmatprep.subr.bf16.mxu0 0
  %8849 = vmatpush1.bf16.xpose.msra.mxu0 %v8846
  %8850 = vmatprep.subr.bf16.mxu0 0
  %8851 = vmatpush1.bf16.xpose.msra.mxu0 0
  %8852 = vmatprep.subr.bf16.mxu0 0
  %8853 = vmatpush1.bf16.xpose.msra.mxu0 0
  %8854 = vmatprep.subr.bf16.mxu0 0
  %8855 = vmatpush1.bf16.xpose.msra.mxu0 0
  %8856 = vmatprep.subr.bf16.mxu0 0
  %8857 = vmatpush1.bf16.xpose.msra.mxu0 0
  %8858 = vmatprep.subr.bf16.mxu0 0
  %8859 = vmatpush1.bf16.xpose.msra.mxu0 0
  %8860 = vmatprep.subr.bf16.mxu0 0
  %8861 = vmatpush1.bf16.xpose.msra.mxu0 0
  %8862 = vmatprep.subr.bf16.mxu0 0
  %8863 = vmatpush1.bf16.xpose.msra.mxu0 0
  %8864 = vmatprep.subr.bf16.mxu0 0
  %8865 = vmatpush1.bf16.xpose.msra.mxu0 0
  %8866 = vmatprep.subr.bf16.mxu0 0
  %8867 = vmatpush1.bf16.xpose.msra.mxu0 0
  %8868 = vmatprep.subr.bf16.mxu0 0
  %8869 = vmatpush1.bf16.xpose.msra.mxu0 0
  %8870 = vmatprep.subr.bf16.mxu0 0
  %8871 = vmatpush1.bf16.xpose.msra.mxu0 0
  %8872 = vmatprep.subr.bf16.mxu0 0
  %8873 = vmatpush1.bf16.xpose.msra.mxu0 0
  %8874 = vmatprep.subr.bf16.mxu0 0
  %8875 = vmatpush1.bf16.xpose.msra.mxu0 0
  %8876 = vmatprep.subr.bf16.mxu0 0
  %8877 = vmatpush1.bf16.xpose.msra.mxu0 0
  %8878 = vmatprep.subr.bf16.mxu0 0
  %8879 = vmatpush1.bf16.xpose.msra.mxu0 0
  %8880 = vmatprep.mubr.bf16.mxu0 0
  %8881 = vmatmul.mubr.bf16.gmra.mrb[0].mxu0 %v8843
  %v8882 = vpop.f32.mrb[0].mxu0
  %v8883 = vadd.f32 %v8841, %v8882
  %v8884 = vpop.f32.mrb[0].mxu0
  %v8885 = vpop.f32.mrb[0].mxu0
  %v8886 = vpop.f32.mrb[0].mxu0
  %8887 = vdwg.mxu0
  %vm8888 = vcmask 122880
  %8889 = vst.msk [vmem:[%s67] sm:$0x1] %vm8888, %v8883
  // Predicated region
  $region134: #{teacher_forward.1} parent=0 // pred_check
    _
  $region135: #{teacher_forward.1} parent=0 // pred_check_branch
    %8891 = sbr.rel (0) target = $region137
  $region136: #{teacher_forward.1} parent=0 // pred_region
    _
  $region137: #{teacher_forward.1} parent=0 // pred_fallthru
    _
  // Predicated region
  $region138: #{teacher_forward.1} parent=0 // pred_check
    _
  $region139: #{teacher_forward.1} parent=0 // pred_check_branch
    %8893 = sbr.rel (0) target = $region141
  $region140: #{teacher_forward.1} parent=0 // pred_region
    _
  $region141: #{teacher_forward.1} parent=0 // pred_fallthru
    _

</llo_original>
